<compile_context>
chip_gen: v7x
topology: tpu7x:2x2x1
jax: 0.10.0
libtpu: 0.0.40
codegen_flags: <defaults>
</compile_context>

<pallas_src>
import functools

import jax
import jax.numpy as jnp
from jax.experimental import pallas as pl
from jax.experimental.pallas import tpu as pltpu


VTHR = (0.5, 0.5, 0.5, 0.5, 0.5, 0.5, 0.5)   # v_threshold per IF layer
CHANNELS = 4


def _cost(flops, bytes_accessed):
    return pl.CostEstimate(flops=flops, transcendentals=0,
                           bytes_accessed=bytes_accessed)


# ---------------------------------------------------------------------------
# Conv (im2col matmul, all T timesteps in ONE MXU call) + IF recurrence
# ---------------------------------------------------------------------------

def _conv_if_kernel(cols_ref, w_ref, b_ref, spike_ref, *, vthr, n_steps):
    """cur_all[Co, T*M] = W @ cols + b ; then unrolled IF charge/fire/reset."""
    Co, TM = spike_ref.shape
    M = TM // n_steps

    # One matmul for the whole sequence; bias hoisted out of the T loop.
    cur_all = jnp.dot(w_ref[...], cols_ref[...],
                      preferred_element_type=jnp.float32) + b_ref[...]

    v = jnp.zeros((Co, M), jnp.float32)          # membrane starts at 0
    for t in range(n_steps):                     # static unroll (T is small)
        h = v + cur_all[:, t * M:(t + 1) * M]    # charge
        spike = h >= vthr                        # fire (Heaviside, >= at vthr)
        spike_ref[:, t * M:(t + 1) * M] = spike.astype(spike_ref.dtype)
        v = jnp.where(spike, 0.0, h)             # hard reset to v_reset = 0


def conv_if_layer(cols, wT, b, vthr, n_steps):
    """cols:[K, T*M] bf16 (cols order (t,n,ho,wo)), wT:[Co,K] bf16, b:[Co,1] f32
    -> spikes [Co, T*M] bf16."""
    K, TM = cols.shape
    Co = wT.shape[0]
    kernel = functools.partial(_conv_if_kernel, vthr=float(vthr),
                               n_steps=n_steps)
    return pl.pallas_call(
        kernel,
        grid=(1,),
        in_specs=[
            pl.BlockSpec((K, TM), lambda i: (0, 0)),    # whole-sequence cols
            pl.BlockSpec((Co, K), lambda i: (0, 0)),    # weight
            pl.BlockSpec((Co, 1), lambda i: (0, 0)),    # bias
        ],
        out_specs=pl.BlockSpec((Co, TM), lambda i: (0, 0)),
        out_shape=jax.ShapeDtypeStruct((Co, TM), jnp.bfloat16),
        compiler_params=pltpu.CompilerParams(
            dimension_semantics=("arbitrary",)),
        cost_estimate=_cost(
            flops=2 * Co * TM * K,
            bytes_accessed=cols.size * 2 + wT.size * 2 + b.size * 4
            + Co * TM * 2),
    )(cols, wT, b)


# ---------------------------------------------------------------------------
# Fused fc1 + fc2 + fc3 + VotingLayer (+ mean over T), one kernel, grid=(1,)
# ---------------------------------------------------------------------------

def _fc_stack_kernel(flat_ref, w1_ref, w2_ref, w3_ref, vote_ref, out_ref,
                     *, vthr1, vthr2, vthr3, n_steps, voter_num):
    TN = flat_ref.shape[0]
    N = TN // n_steps
    D1 = w1_ref.shape[1]
    D2 = w2_ref.shape[1]
    D3 = w3_ref.shape[1]

    # fc1's input spikes for all T are known upfront -> one matmul.
    cur1_all = jnp.dot(flat_ref[...], w1_ref[...],
                       preferred_element_type=jnp.float32)       # [T*N, D1]

    v1 = jnp.zeros((N, D1), jnp.float32)
    v2 = jnp.zeros((N, D2), jnp.float32)
    v3 = jnp.zeros((N, D3), jnp.float32)
    s3_sum = jnp.zeros((N, D3), jnp.float32)

    for t in range(n_steps):                     # static unroll (T is small)
        h1 = v1 + cur1_all[t * N:(t + 1) * N, :]
        s1 = h1 >= vthr1
        v1 = jnp.where(s1, 0.0, h1)              # hard reset to 0

        h2 = v2 + jnp.dot(s1.astype(jnp.bfloat16), w2_ref[...],
                          preferred_element_type=jnp.float32)
        s2 = h2 >= vthr2
        v2 = jnp.where(s2, 0.0, h2)

        h3 = v3 + jnp.dot(s2.astype(jnp.bfloat16), w3_ref[...],
                          preferred_element_type=jnp.float32)
        s3 = h3 >= vthr3
        v3 = jnp.where(s3, 0.0, h3)

        s3_sum = s3_sum + s3.astype(jnp.float32)

    # VotingLayer(10) is linear: apply it once to the spike sum with a bf16
    # 0/1 membership matrix (counts <= T*10 are exact in bf16), then one f32
    # scale of 1/(voter_num * T)  == (sum_t group-mean) / T.
    counts = jnp.dot(s3_sum.astype(jnp.bfloat16), vote_ref[...],
                     preferred_element_type=jnp.float32)
    out_ref[...] = counts * (1.0 / float(voter_num * n_steps))


def fc_stack(flat, w1, w2, w3, vthr1, vthr2, vthr3, n_steps, voter_num=10):
    """flat:[T*N, D0] bf16 spikes, w*:[din,dout] bf16 -> voted mean [N, D3/10]."""
    TN, D0 = flat.shape
    N = TN // n_steps
    D1, D2, D3 = w1.shape[1], w2.shape[1], w3.shape[1]
    G = D3 // voter_num
    vote01 = (jnp.arange(D3)[:, None] // voter_num
              == jnp.arange(G)[None, :]).astype(jnp.bfloat16)   # 0/1 membership

    kernel = functools.partial(_fc_stack_kernel, vthr1=float(vthr1),
                               vthr2=float(vthr2), vthr3=float(vthr3),
                               n_steps=n_steps, voter_num=voter_num)
    return pl.pallas_call(
        kernel,
        grid=(1,),
        in_specs=[
            pl.BlockSpec((TN, D0), lambda i: (0, 0)),   # all-T fc1 input spikes
            pl.BlockSpec((D0, D1), lambda i: (0, 0)),
            pl.BlockSpec((D1, D2), lambda i: (0, 0)),
            pl.BlockSpec((D2, D3), lambda i: (0, 0)),
            pl.BlockSpec((D3, G), lambda i: (0, 0)),
        ],
        out_specs=pl.BlockSpec((N, G), lambda i: (0, 0)),
        out_shape=jax.ShapeDtypeStruct((N, G), jnp.float32),
        compiler_params=pltpu.CompilerParams(
            dimension_semantics=("arbitrary",),
            vmem_limit_bytes=32 * 1024 * 1024),
        cost_estimate=_cost(
            flops=2 * (TN * D0 * D1 + TN * D1 * D2 + TN * D2 * D3 + N * D3 * G),
            bytes_accessed=flat.size * 2 + (w1.size + w2.size + w3.size) * 2
            + D3 * G * 2 + N * G * 4),
    )(flat, w1, w2, w3, vote01)


# ---------------------------------------------------------------------------
# XLA glue: maxpool, im2col (all T at once), layout shuffles (tiny tensors)
# ---------------------------------------------------------------------------

def im2col_all(x, k, stride, pad):
    """x:[T,N,H,W,C] -> cols [k*k*C, T*N*Ho*Wo].
    K order = (kh*k + kw)*C + ci ; column order = (t, n, ho, wo)."""
    T, N, H, W, C = x.shape
    Ho = (H + 2 * pad - k) // stride + 1
    Wo = (W + 2 * pad - k) // stride + 1
    xp = jnp.pad(x, ((0, 0), (0, 0), (pad, pad), (pad, pad), (0, 0)))
    patches = []
    for kh in range(k):
        for kw in range(k):
            patches.append(
                xp[:, :, kh: kh + stride * (Ho - 1) + 1: stride,
                         kw: kw + stride * (Wo - 1) + 1: stride, :])
    cols = jnp.stack(patches, axis=0)                 # [k*k, T, N, Ho, Wo, C]
    cols = jnp.transpose(cols, (0, 5, 1, 2, 3, 4))    # [k*k, C, T, N, Ho, Wo]
    return cols.reshape(k * k * C, T * N * Ho * Wo), (Ho, Wo)


def spikes_to_nhwc(s, T, N, Ho, Wo):
    """[Co, T*N*Ho*Wo] (cols order (t,n,ho,wo)) -> [T, N, Ho, Wo, Co]."""
    Co = s.shape[0]
    return jnp.transpose(s.reshape(Co, T, N, Ho, Wo), (1, 2, 3, 4, 0))


# ---------------------------------------------------------------------------
# Parameters (deterministic; layouts pre-baked for the kernels)
# ---------------------------------------------------------------------------

def init_params(key, channels, hc, wc):
    c2, c4, c8 = channels * 2, channels * 4, channels * 8
    keys = jax.random.split(key, 7)

    def conv_p(k, ci, co):
        k1, k2 = jax.random.split(k)
        w = jax.random.normal(k1, (co, ci, 5, 5), jnp.float32) / jnp.sqrt(ci * 25.0)
        b = jax.random.normal(k2, (co,), jnp.float32) * 0.01
        # [Co,Ci,kh,kw] -> [Co,kh,kw,Ci] -> [Co, k*k*Ci]  (matches im2col K order)
        wT = jnp.transpose(w, (0, 2, 3, 1)).reshape(co, 25 * ci).astype(jnp.bfloat16)
        return wT, b.reshape(co, 1).astype(jnp.float32)

    def fc_p(k, din, dout):   # stored [in, out] == torch weight.T; bias=False
        return (jax.random.normal(k, (din, dout), jnp.float32)
                / jnp.sqrt(float(din))).astype(jnp.bfloat16)

    p = {}
    p["conv1_wT"], p["conv1_b"] = conv_p(keys[0], 2, c2)
    p["conv2_wT"], p["conv2_b"] = conv_p(keys[1], c2, c2)
    p["conv3_wT"], p["conv3_b"] = conv_p(keys[2], c2, c4)
    p["conv4_wT"], p["conv4_b"] = conv_p(keys[3], c4, c4)
    p["fc1_w"] = fc_p(keys[4], c4 * hc * wc, c8 * 8 * 8)
    p["fc2_w"] = fc_p(keys[5], c8 * 8 * 8, c8 * 4 * 4)
    p["fc3_w"] = fc_p(keys[6], c8 * 4 * 4, 90)
    return p


# ---------------------------------------------------------------------------
# PythonNet forward
# ---------------------------------------------------------------------------

def python_net_forward(params, x):
    # x: [N, T, 2, H, W]  (torch module does x.permute(1,0,2,3,4))
    x = jnp.transpose(x, (1, 0, 2, 3, 4)).astype(jnp.float32)   # [T, N, 2, H, W]
    T, N, C, H, W = x.shape

    # NCHW -> NHWC, MaxPool2d(5,5) (floor mode, no padding), all T frames at once
    x = jnp.transpose(x, (0, 1, 3, 4, 2))                       # [T, N, H, W, 2]
    Hp, Wp = H // 5, W // 5
    pooled = (x[:, :, :Hp * 5, :Wp * 5, :]
              .reshape(T, N, Hp, 5, Wp, 5, C).max(axis=(3, 5)))
    act = pooled.astype(jnp.bfloat16)

    # conv1 (k5, p2, s2) + IF
    cols, (h1, w1) = im2col_all(act, 5, 2, 2)
    s = conv_if_layer(cols, params["conv1_wT"], params["conv1_b"], VTHR[0], T)
    act = spikes_to_nhwc(s, T, N, h1, w1)

    # conv2 (k5, p2, s1) + IF
    cols, _ = im2col_all(act, 5, 1, 2)
    s = conv_if_layer(cols, params["conv2_wT"], params["conv2_b"], VTHR[1], T)
    act = spikes_to_nhwc(s, T, N, h1, w1)

    # conv3 (k5, p2, s2) + IF
    cols, (h3, w3) = im2col_all(act, 5, 2, 2)
    s = conv_if_layer(cols, params["conv3_wT"], params["conv3_b"], VTHR[2], T)
    act = spikes_to_nhwc(s, T, N, h3, w3)

    # conv4 (k5, p2, s1) + IF
    cols, _ = im2col_all(act, 5, 1, 2)
    s4 = conv_if_layer(cols, params["conv4_wT"], params["conv4_b"], VTHR[3], T)

    # nn.Flatten flattens NCHW per sample: [C4, (t,n,hw)] -> [T*N, C4*hw]
    # TODO(synk): fold this transpose into the fc1 weight-row order + conv4
    # output orientation to drop the last XLA transpose / HBM round trip.
    C4 = s4.shape[0]
    flat = jnp.transpose(s4.reshape(C4, T, N, h3 * w3), (1, 2, 0, 3))
    flat = flat.reshape(T * N, C4 * h3 * w3)

    # Dropout(0.5) is identity at inference.
    # fc1 -> IF -> fc2 -> IF -> fc3 -> IF -> VotingLayer(10), mean over T.
    return fc_stack(flat, params["fc1_w"], params["fc2_w"], params["fc3_w"],
                    VTHR[4], VTHR[5], VTHR[6], n_steps=T, voter_num=10)


# ---------------------------------------------------------------------------
# Main
# ---------------------------------------------------------------------------

if __name__ == "__main__":
    N, T, H, W = 2, 4, 80, 80

    key = jax.random.PRNGKey(0)
    k_in, k_par = jax.random.split(key)

    # binary DVS-like event frames: [N, T, 2, H, W]
    x = (jax.random.uniform(k_in, (N, T, 2, H, W)) < 0.5).astype(jnp.float32)

    hp, wp = H // 5, W // 5
    h1, w1 = (hp - 1) // 2 + 1, (wp - 1) // 2 + 1        # convpool (k5,p2,s2)
    hc, wc = (h1 - 1) // 2 + 1, (w1 - 1) // 2 + 1        # conv stack output
    params = init_params(k_par, CHANNELS, hc, wc)

    fwd = jax.jit(python_net_forward)
    out = fwd(params, x)
    jax.block_until_ready(out)

    assert out.shape == (N, 9), out.shape
    # voted spike means are bounded in [0, 1] and finite
    assert bool(jnp.all(jnp.isfinite(out)))
    assert bool(jnp.all(out >= 0.0)) and bool(jnp.all(out <= 1.0))
    print("KERNEL_OK")
</pallas_src>

<mosaic_0001>
module attributes {stable_mosaic.version = 11 : i64} {
  func.func @_conv_if_kernel(%arg0: i32, %arg1: memref<50x512xbf16, #tpu.memory_space<vmem>>, %arg2: memref<8x50xbf16, #tpu.memory_space<vmem>>, %arg3: memref<8x1xf32, #tpu.memory_space<vmem>>, %arg4: memref<8x512xbf16, #tpu.memory_space<vmem>>) attributes {dimension_semantics = [#tpu.dimension_semantics<arbitrary>], iteration_bounds = array<i64: 1>, scalar_prefetch = 0 : i64, scratch_operands = 0 : i64, tpu.core_type = #tpu.core_type<tc>, window_params = [{pipeline_mode = #tpu.pipeline_mode<synchronous>, transform_indices = @transform_0, window_bounds = array<i64: 50, 512>}, {pipeline_mode = #tpu.pipeline_mode<synchronous>, transform_indices = @transform_1, window_bounds = array<i64: 8, 50>}, {pipeline_mode = #tpu.pipeline_mode<synchronous>, transform_indices = @transform_2, window_bounds = array<i64: 8, 1>}, {pipeline_mode = #tpu.pipeline_mode<synchronous>, transform_indices = @transform_3, window_bounds = array<i64: 8, 512>}]} {
    %c0 = arith.constant 0 : index
    %c0_0 = arith.constant 0 : index
    %0 = vector.load %arg2[%c0, %c0_0] : memref<8x50xbf16, #tpu.memory_space<vmem>>, vector<8x50xbf16>
    %c0_1 = arith.constant 0 : index
    %c0_2 = arith.constant 0 : index
    %1 = vector.load %arg1[%c0_1, %c0_2] : memref<50x512xbf16, #tpu.memory_space<vmem>>, vector<50x512xbf16>
    %cst = arith.constant dense<0.000000e+00> : vector<8x512xf32>
    %2 = tpu.matmul %0, %1, %cst {dimension_numbers = #tpu.dot_dimension_numbers<[1], [0], [0], [1], [0, 0, 1, 1], [], []>} : vector<8x50xbf16>, vector<50x512xbf16>, vector<8x512xf32> -> vector<8x512xf32>
    %c0_3 = arith.constant 0 : index
    %c0_4 = arith.constant 0 : index
    %3 = vector.load %arg3[%c0_3, %c0_4] : memref<8x1xf32, #tpu.memory_space<vmem>>, vector<8x1xf32>
    %4 = vector.broadcast %3 : vector<8x1xf32> to vector<8x512xf32>
    %5 = arith.addf %2, %4 : vector<8x512xf32>
    %cst_5 = arith.constant 0.000000e+00 : f32
    %6 = vector.broadcast %cst_5 : f32 to vector<8x128xf32>
    %7 = vector.extract_strided_slice %5 {offsets = [0, 0], sizes = [8, 128], strides = [1, 1]} : vector<8x512xf32> to vector<8x128xf32>
    %8 = arith.addf %6, %7 : vector<8x128xf32>
    %cst_6 = arith.constant 5.000000e-01 : f32
    %9 = vector.broadcast %cst_6 : f32 to vector<8x128xf32>
    %10 = arith.cmpf oge, %8, %9 : vector<8x128xf32>
    %11 = arith.extui %10 : vector<8x128xi1> to vector<8x128xi32>
    %12 = arith.sitofp %11 : vector<8x128xi32> to vector<8x128xf32>
    %13 = arith.truncf %12 : vector<8x128xf32> to vector<8x128xbf16>
    %c0_7 = arith.constant 0 : index
    %c0_8 = arith.constant 0 : index
    %14 = vector.load %arg4[%c0_7, %c0_8] : memref<8x512xbf16, #tpu.memory_space<vmem>>, vector<8x128xbf16>
    tpu.vector_store %arg4[%c0_7, %c0_8], %13 {strides = array<i32>} : memref<8x512xbf16, #tpu.memory_space<vmem>>, vector<8x128xbf16>,
    %cst_9 = arith.constant 0.000000e+00 : f32
    %15 = vector.broadcast %cst_9 : f32 to vector<8x128xf32>
    %16 = arith.select %10, %15, %8 : vector<8x128xi1>, vector<8x128xf32>
    %17 = vector.extract_strided_slice %5 {offsets = [0, 128], sizes = [8, 128], strides = [1, 1]} : vector<8x512xf32> to vector<8x128xf32>
    %18 = arith.addf %16, %17 : vector<8x128xf32>
    %cst_10 = arith.constant 5.000000e-01 : f32
    %19 = vector.broadcast %cst_10 : f32 to vector<8x128xf32>
    %20 = arith.cmpf oge, %18, %19 : vector<8x128xf32>
    %21 = arith.extui %20 : vector<8x128xi1> to vector<8x128xi32>
    %22 = arith.sitofp %21 : vector<8x128xi32> to vector<8x128xf32>
    %23 = arith.truncf %22 : vector<8x128xf32> to vector<8x128xbf16>
    %c0_11 = arith.constant 0 : index
    %c128 = arith.constant 128 : index
    %24 = vector.load %arg4[%c0_11, %c128] : memref<8x512xbf16, #tpu.memory_space<vmem>>, vector<8x128xbf16>
    tpu.vector_store %arg4[%c0_11, %c128], %23 {strides = array<i32>} : memref<8x512xbf16, #tpu.memory_space<vmem>>, vector<8x128xbf16>,
    %cst_12 = arith.constant 0.000000e+00 : f32
    %25 = vector.broadcast %cst_12 : f32 to vector<8x128xf32>
    %26 = arith.select %20, %25, %18 : vector<8x128xi1>, vector<8x128xf32>
    %27 = vector.extract_strided_slice %5 {offsets = [0, 256], sizes = [8, 128], strides = [1, 1]} : vector<8x512xf32> to vector<8x128xf32>
    %28 = arith.addf %26, %27 : vector<8x128xf32>
    %cst_13 = arith.constant 5.000000e-01 : f32
    %29 = vector.broadcast %cst_13 : f32 to vector<8x128xf32>
    %30 = arith.cmpf oge, %28, %29 : vector<8x128xf32>
    %31 = arith.extui %30 : vector<8x128xi1> to vector<8x128xi32>
    %32 = arith.sitofp %31 : vector<8x128xi32> to vector<8x128xf32>
    %33 = arith.truncf %32 : vector<8x128xf32> to vector<8x128xbf16>
    %c0_14 = arith.constant 0 : index
    %c256 = arith.constant 256 : index
    %34 = vector.load %arg4[%c0_14, %c256] : memref<8x512xbf16, #tpu.memory_space<vmem>>, vector<8x128xbf16>
    tpu.vector_store %arg4[%c0_14, %c256], %33 {strides = array<i32>} : memref<8x512xbf16, #tpu.memory_space<vmem>>, vector<8x128xbf16>,
    %cst_15 = arith.constant 0.000000e+00 : f32
    %35 = vector.broadcast %cst_15 : f32 to vector<8x128xf32>
    %36 = arith.select %30, %35, %28 : vector<8x128xi1>, vector<8x128xf32>
    %37 = vector.extract_strided_slice %5 {offsets = [0, 384], sizes = [8, 128], strides = [1, 1]} : vector<8x512xf32> to vector<8x128xf32>
    %38 = arith.addf %36, %37 : vector<8x128xf32>
    %cst_16 = arith.constant 5.000000e-01 : f32
    %39 = vector.broadcast %cst_16 : f32 to vector<8x128xf32>
    %40 = arith.cmpf oge, %38, %39 : vector<8x128xf32>
    %41 = arith.extui %40 : vector<8x128xi1> to vector<8x128xi32>
    %42 = arith.sitofp %41 : vector<8x128xi32> to vector<8x128xf32>
    %43 = arith.truncf %42 : vector<8x128xf32> to vector<8x128xbf16>
    %c0_17 = arith.constant 0 : index
    %c384 = arith.constant 384 : index
    %44 = vector.load %arg4[%c0_17, %c384] : memref<8x512xbf16, #tpu.memory_space<vmem>>, vector<8x128xbf16>
    tpu.vector_store %arg4[%c0_17, %c384], %43 {strides = array<i32>} : memref<8x512xbf16, #tpu.memory_space<vmem>>, vector<8x128xbf16>,
    return
  }
  func.func @transform_0(%arg0: i32) -> (i32, i32) {
    %c0_i32 = arith.constant 0 : i32
    %c0_i32_0 = arith.constant 0 : i32
    %c0_i32_1 = arith.constant 0 : i32
    return %c0_i32, %c0_i32_0 : i32, i32
  }
  func.func @transform_1(%arg0: i32) -> (i32, i32) {
    %c0_i32 = arith.constant 0 : i32
    %c0_i32_0 = arith.constant 0 : i32
    %c0_i32_1 = arith.constant 0 : i32
    return %c0_i32, %c0_i32_0 : i32, i32
  }
  func.func @transform_2(%arg0: i32) -> (i32, i32) {
    %c0_i32 = arith.constant 0 : i32
    %c0_i32_0 = arith.constant 0 : i32
    %c0_i32_1 = arith.constant 0 : i32
    return %c0_i32, %c0_i32_0 : i32, i32
  }
  func.func @transform_3(%arg0: i32) -> (i32, i32) {
    %c0_i32 = arith.constant 0 : i32
    %c0_i32_0 = arith.constant 0 : i32
    %c0_i32_1 = arith.constant 0 : i32
    return %c0_i32, %c0_i32_0 : i32, i32
  }
}

module attributes {stable_mosaic.version = 11 : i64} {
  func.func @_conv_if_kernel(%arg0: i32, %arg1: memref<200x512xbf16, #tpu.memory_space<vmem>>, %arg2: memref<8x200xbf16, #tpu.memory_space<vmem>>, %arg3: memref<8x1xf32, #tpu.memory_space<vmem>>, %arg4: memref<8x512xbf16, #tpu.memory_space<vmem>>) attributes {dimension_semantics = [#tpu.dimension_semantics<arbitrary>], iteration_bounds = array<i64: 1>, scalar_prefetch = 0 : i64, scratch_operands = 0 : i64, tpu.core_type = #tpu.core_type<tc>, window_params = [{pipeline_mode = #tpu.pipeline_mode<synchronous>, transform_indices = @transform_0, window_bounds = array<i64: 200, 512>}, {pipeline_mode = #tpu.pipeline_mode<synchronous>, transform_indices = @transform_1, window_bounds = array<i64: 8, 200>}, {pipeline_mode = #tpu.pipeline_mode<synchronous>, transform_indices = @transform_2, window_bounds = array<i64: 8, 1>}, {pipeline_mode = #tpu.pipeline_mode<synchronous>, transform_indices = @transform_3, window_bounds = array<i64: 8, 512>}]} {
    %c0 = arith.constant 0 : index
    %c0_0 = arith.constant 0 : index
    %0 = vector.load %arg2[%c0, %c0_0] : memref<8x200xbf16, #tpu.memory_space<vmem>>, vector<8x200xbf16>
    %c0_1 = arith.constant 0 : index
    %c0_2 = arith.constant 0 : index
    %1 = vector.load %arg1[%c0_1, %c0_2] : memref<200x512xbf16, #tpu.memory_space<vmem>>, vector<200x512xbf16>
    %cst = arith.constant dense<0.000000e+00> : vector<8x512xf32>
    %2 = tpu.matmul %0, %1, %cst {dimension_numbers = #tpu.dot_dimension_numbers<[1], [0], [0], [1], [0, 0, 1, 1], [], []>} : vector<8x200xbf16>, vector<200x512xbf16>, vector<8x512xf32> -> vector<8x512xf32>
    %c0_3 = arith.constant 0 : index
    %c0_4 = arith.constant 0 : index
    %3 = vector.load %arg3[%c0_3, %c0_4] : memref<8x1xf32, #tpu.memory_space<vmem>>, vector<8x1xf32>
    %4 = vector.broadcast %3 : vector<8x1xf32> to vector<8x512xf32>
    %5 = arith.addf %2, %4 : vector<8x512xf32>
    %cst_5 = arith.constant 0.000000e+00 : f32
    %6 = vector.broadcast %cst_5 : f32 to vector<8x128xf32>
    %7 = vector.extract_strided_slice %5 {offsets = [0, 0], sizes = [8, 128], strides = [1, 1]} : vector<8x512xf32> to vector<8x128xf32>
    %8 = arith.addf %6, %7 : vector<8x128xf32>
    %cst_6 = arith.constant 5.000000e-01 : f32
    %9 = vector.broadcast %cst_6 : f32 to vector<8x128xf32>
    %10 = arith.cmpf oge, %8, %9 : vector<8x128xf32>
    %11 = arith.extui %10 : vector<8x128xi1> to vector<8x128xi32>
    %12 = arith.sitofp %11 : vector<8x128xi32> to vector<8x128xf32>
    %13 = arith.truncf %12 : vector<8x128xf32> to vector<8x128xbf16>
    %c0_7 = arith.constant 0 : index
    %c0_8 = arith.constant 0 : index
    %14 = vector.load %arg4[%c0_7, %c0_8] : memref<8x512xbf16, #tpu.memory_space<vmem>>, vector<8x128xbf16>
    tpu.vector_store %arg4[%c0_7, %c0_8], %13 {strides = array<i32>} : memref<8x512xbf16, #tpu.memory_space<vmem>>, vector<8x128xbf16>,
    %cst_9 = arith.constant 0.000000e+00 : f32
    %15 = vector.broadcast %cst_9 : f32 to vector<8x128xf32>
    %16 = arith.select %10, %15, %8 : vector<8x128xi1>, vector<8x128xf32>
    %17 = vector.extract_strided_slice %5 {offsets = [0, 128], sizes = [8, 128], strides = [1, 1]} : vector<8x512xf32> to vector<8x128xf32>
    %18 = arith.addf %16, %17 : vector<8x128xf32>
    %cst_10 = arith.constant 5.000000e-01 : f32
    %19 = vector.broadcast %cst_10 : f32 to vector<8x128xf32>
    %20 = arith.cmpf oge, %18, %19 : vector<8x128xf32>
    %21 = arith.extui %20 : vector<8x128xi1> to vector<8x128xi32>
    %22 = arith.sitofp %21 : vector<8x128xi32> to vector<8x128xf32>
    %23 = arith.truncf %22 : vector<8x128xf32> to vector<8x128xbf16>
    %c0_11 = arith.constant 0 : index
    %c128 = arith.constant 128 : index
    %24 = vector.load %arg4[%c0_11, %c128] : memref<8x512xbf16, #tpu.memory_space<vmem>>, vector<8x128xbf16>
    tpu.vector_store %arg4[%c0_11, %c128], %23 {strides = array<i32>} : memref<8x512xbf16, #tpu.memory_space<vmem>>, vector<8x128xbf16>,
    %cst_12 = arith.constant 0.000000e+00 : f32
    %25 = vector.broadcast %cst_12 : f32 to vector<8x128xf32>
    %26 = arith.select %20, %25, %18 : vector<8x128xi1>, vector<8x128xf32>
    %27 = vector.extract_strided_slice %5 {offsets = [0, 256], sizes = [8, 128], strides = [1, 1]} : vector<8x512xf32> to vector<8x128xf32>
    %28 = arith.addf %26, %27 : vector<8x128xf32>
    %cst_13 = arith.constant 5.000000e-01 : f32
    %29 = vector.broadcast %cst_13 : f32 to vector<8x128xf32>
    %30 = arith.cmpf oge, %28, %29 : vector<8x128xf32>
    %31 = arith.extui %30 : vector<8x128xi1> to vector<8x128xi32>
    %32 = arith.sitofp %31 : vector<8x128xi32> to vector<8x128xf32>
    %33 = arith.truncf %32 : vector<8x128xf32> to vector<8x128xbf16>
    %c0_14 = arith.constant 0 : index
    %c256 = arith.constant 256 : index
    %34 = vector.load %arg4[%c0_14, %c256] : memref<8x512xbf16, #tpu.memory_space<vmem>>, vector<8x128xbf16>
    tpu.vector_store %arg4[%c0_14, %c256], %33 {strides = array<i32>} : memref<8x512xbf16, #tpu.memory_space<vmem>>, vector<8x128xbf16>,
    %cst_15 = arith.constant 0.000000e+00 : f32
    %35 = vector.broadcast %cst_15 : f32 to vector<8x128xf32>
    %36 = arith.select %30, %35, %28 : vector<8x128xi1>, vector<8x128xf32>
    %37 = vector.extract_strided_slice %5 {offsets = [0, 384], sizes = [8, 128], strides = [1, 1]} : vector<8x512xf32> to vector<8x128xf32>
    %38 = arith.addf %36, %37 : vector<8x128xf32>
    %cst_16 = arith.constant 5.000000e-01 : f32
    %39 = vector.broadcast %cst_16 : f32 to vector<8x128xf32>
    %40 = arith.cmpf oge, %38, %39 : vector<8x128xf32>
    %41 = arith.extui %40 : vector<8x128xi1> to vector<8x128xi32>
    %42 = arith.sitofp %41 : vector<8x128xi32> to vector<8x128xf32>
    %43 = arith.truncf %42 : vector<8x128xf32> to vector<8x128xbf16>
    %c0_17 = arith.constant 0 : index
    %c384 = arith.constant 384 : index
    %44 = vector.load %arg4[%c0_17, %c384] : memref<8x512xbf16, #tpu.memory_space<vmem>>, vector<8x128xbf16>
    tpu.vector_store %arg4[%c0_17, %c384], %43 {strides = array<i32>} : memref<8x512xbf16, #tpu.memory_space<vmem>>, vector<8x128xbf16>,
    return
  }
  func.func @transform_0(%arg0: i32) -> (i32, i32) {
    %c0_i32 = arith.constant 0 : i32
    %c0_i32_0 = arith.constant 0 : i32
    %c0_i32_1 = arith.constant 0 : i32
    return %c0_i32, %c0_i32_0 : i32, i32
  }
  func.func @transform_1(%arg0: i32) -> (i32, i32) {
    %c0_i32 = arith.constant 0 : i32
    %c0_i32_0 = arith.constant 0 : i32
    %c0_i32_1 = arith.constant 0 : i32
    return %c0_i32, %c0_i32_0 : i32, i32
  }
  func.func @transform_2(%arg0: i32) -> (i32, i32) {
    %c0_i32 = arith.constant 0 : i32
    %c0_i32_0 = arith.constant 0 : i32
    %c0_i32_1 = arith.constant 0 : i32
    return %c0_i32, %c0_i32_0 : i32, i32
  }
  func.func @transform_3(%arg0: i32) -> (i32, i32) {
    %c0_i32 = arith.constant 0 : i32
    %c0_i32_0 = arith.constant 0 : i32
    %c0_i32_1 = arith.constant 0 : i32
    return %c0_i32, %c0_i32_0 : i32, i32
  }
}

module attributes {stable_mosaic.version = 11 : i64} {
  func.func @_conv_if_kernel(%arg0: i32, %arg1: memref<200x128xbf16, #tpu.memory_space<vmem>>, %arg2: memref<16x200xbf16, #tpu.memory_space<vmem>>, %arg3: memref<16x1xf32, #tpu.memory_space<vmem>>, %arg4: memref<16x128xbf16, #tpu.memory_space<vmem>>) attributes {dimension_semantics = [#tpu.dimension_semantics<arbitrary>], iteration_bounds = array<i64: 1>, scalar_prefetch = 0 : i64, scratch_operands = 0 : i64, tpu.core_type = #tpu.core_type<tc>, window_params = [{pipeline_mode = #tpu.pipeline_mode<synchronous>, transform_indices = @transform_0, window_bounds = array<i64: 200, 128>}, {pipeline_mode = #tpu.pipeline_mode<synchronous>, transform_indices = @transform_1, window_bounds = array<i64: 16, 200>}, {pipeline_mode = #tpu.pipeline_mode<synchronous>, transform_indices = @transform_2, window_bounds = array<i64: 16, 1>}, {pipeline_mode = #tpu.pipeline_mode<synchronous>, transform_indices = @transform_3, window_bounds = array<i64: 16, 128>}]} {
    %c0 = arith.constant 0 : index
    %c0_0 = arith.constant 0 : index
    %0 = vector.load %arg2[%c0, %c0_0] : memref<16x200xbf16, #tpu.memory_space<vmem>>, vector<16x200xbf16>
    %c0_1 = arith.constant 0 : index
    %c0_2 = arith.constant 0 : index
    %1 = vector.load %arg1[%c0_1, %c0_2] : memref<200x128xbf16, #tpu.memory_space<vmem>>, vector<200x128xbf16>
    %cst = arith.constant dense<0.000000e+00> : vector<16x128xf32>
    %2 = tpu.matmul %0, %1, %cst {dimension_numbers = #tpu.dot_dimension_numbers<[1], [0], [0], [1], [0, 0, 1, 1], [], []>} : vector<16x200xbf16>, vector<200x128xbf16>, vector<16x128xf32> -> vector<16x128xf32>
    %c0_3 = arith.constant 0 : index
    %c0_4 = arith.constant 0 : index
    %3 = vector.load %arg3[%c0_3, %c0_4] : memref<16x1xf32, #tpu.memory_space<vmem>>, vector<16x1xf32>
    %4 = vector.broadcast %3 : vector<16x1xf32> to vector<16x128xf32>
    %5 = arith.addf %2, %4 : vector<16x128xf32>
    %cst_5 = arith.constant 0.000000e+00 : f32
    %6 = vector.broadcast %cst_5 : f32 to vector<16x32xf32>
    %7 = vector.extract_strided_slice %5 {offsets = [0, 0], sizes = [16, 32], strides = [1, 1]} : vector<16x128xf32> to vector<16x32xf32>
    %8 = arith.addf %6, %7 : vector<16x32xf32>
    %cst_6 = arith.constant 5.000000e-01 : f32
    %9 = vector.broadcast %cst_6 : f32 to vector<16x32xf32>
    %10 = arith.cmpf oge, %8, %9 : vector<16x32xf32>
    %11 = arith.extui %10 : vector<16x32xi1> to vector<16x32xi32>
    %12 = arith.sitofp %11 : vector<16x32xi32> to vector<16x32xf32>
    %13 = arith.truncf %12 : vector<16x32xf32> to vector<16x32xbf16>
    %c0_7 = arith.constant 0 : index
    %c0_8 = arith.constant 0 : index
    %14 = vector.load %arg4[%c0_7, %c0_8] : memref<16x128xbf16, #tpu.memory_space<vmem>>, vector<16x32xbf16>
    tpu.vector_store %arg4[%c0_7, %c0_8], %13 {strides = array<i32>} : memref<16x128xbf16, #tpu.memory_space<vmem>>, vector<16x32xbf16>,
    %cst_9 = arith.constant 0.000000e+00 : f32
    %15 = vector.broadcast %cst_9 : f32 to vector<16x32xf32>
    %16 = arith.select %10, %15, %8 : vector<16x32xi1>, vector<16x32xf32>
    %17 = vector.extract_strided_slice %5 {offsets = [0, 32], sizes = [16, 32], strides = [1, 1]} : vector<16x128xf32> to vector<16x32xf32>
    %18 = arith.addf %16, %17 : vector<16x32xf32>
    %cst_10 = arith.constant 5.000000e-01 : f32
    %19 = vector.broadcast %cst_10 : f32 to vector<16x32xf32>
    %20 = arith.cmpf oge, %18, %19 : vector<16x32xf32>
    %21 = arith.extui %20 : vector<16x32xi1> to vector<16x32xi32>
    %22 = arith.sitofp %21 : vector<16x32xi32> to vector<16x32xf32>
    %23 = arith.truncf %22 : vector<16x32xf32> to vector<16x32xbf16>
    %c0_11 = arith.constant 0 : index
    %c32 = arith.constant 32 : index
    %24 = vector.load %arg4[%c0_11, %c32] : memref<16x128xbf16, #tpu.memory_space<vmem>>, vector<16x32xbf16>
    tpu.vector_store %arg4[%c0_11, %c32], %23 {strides = array<i32>} : memref<16x128xbf16, #tpu.memory_space<vmem>>, vector<16x32xbf16>,
    %cst_12 = arith.constant 0.000000e+00 : f32
    %25 = vector.broadcast %cst_12 : f32 to vector<16x32xf32>
    %26 = arith.select %20, %25, %18 : vector<16x32xi1>, vector<16x32xf32>
    %27 = vector.extract_strided_slice %5 {offsets = [0, 64], sizes = [16, 32], strides = [1, 1]} : vector<16x128xf32> to vector<16x32xf32>
    %28 = arith.addf %26, %27 : vector<16x32xf32>
    %cst_13 = arith.constant 5.000000e-01 : f32
    %29 = vector.broadcast %cst_13 : f32 to vector<16x32xf32>
    %30 = arith.cmpf oge, %28, %29 : vector<16x32xf32>
    %31 = arith.extui %30 : vector<16x32xi1> to vector<16x32xi32>
    %32 = arith.sitofp %31 : vector<16x32xi32> to vector<16x32xf32>
    %33 = arith.truncf %32 : vector<16x32xf32> to vector<16x32xbf16>
    %c0_14 = arith.constant 0 : index
    %c64 = arith.constant 64 : index
    %34 = vector.load %arg4[%c0_14, %c64] : memref<16x128xbf16, #tpu.memory_space<vmem>>, vector<16x32xbf16>
    tpu.vector_store %arg4[%c0_14, %c64], %33 {strides = array<i32>} : memref<16x128xbf16, #tpu.memory_space<vmem>>, vector<16x32xbf16>,
    %cst_15 = arith.constant 0.000000e+00 : f32
    %35 = vector.broadcast %cst_15 : f32 to vector<16x32xf32>
    %36 = arith.select %30, %35, %28 : vector<16x32xi1>, vector<16x32xf32>
    %37 = vector.extract_strided_slice %5 {offsets = [0, 96], sizes = [16, 32], strides = [1, 1]} : vector<16x128xf32> to vector<16x32xf32>
    %38 = arith.addf %36, %37 : vector<16x32xf32>
    %cst_16 = arith.constant 5.000000e-01 : f32
    %39 = vector.broadcast %cst_16 : f32 to vector<16x32xf32>
    %40 = arith.cmpf oge, %38, %39 : vector<16x32xf32>
    %41 = arith.extui %40 : vector<16x32xi1> to vector<16x32xi32>
    %42 = arith.sitofp %41 : vector<16x32xi32> to vector<16x32xf32>
    %43 = arith.truncf %42 : vector<16x32xf32> to vector<16x32xbf16>
    %c0_17 = arith.constant 0 : index
    %c96 = arith.constant 96 : index
    %44 = vector.load %arg4[%c0_17, %c96] : memref<16x128xbf16, #tpu.memory_space<vmem>>, vector<16x32xbf16>
    tpu.vector_store %arg4[%c0_17, %c96], %43 {strides = array<i32>} : memref<16x128xbf16, #tpu.memory_space<vmem>>, vector<16x32xbf16>,
    return
  }
  func.func @transform_0(%arg0: i32) -> (i32, i32) {
    %c0_i32 = arith.constant 0 : i32
    %c0_i32_0 = arith.constant 0 : i32
    %c0_i32_1 = arith.constant 0 : i32
    return %c0_i32, %c0_i32_0 : i32, i32
  }
  func.func @transform_1(%arg0: i32) -> (i32, i32) {
    %c0_i32 = arith.constant 0 : i32
    %c0_i32_0 = arith.constant 0 : i32
    %c0_i32_1 = arith.constant 0 : i32
    return %c0_i32, %c0_i32_0 : i32, i32
  }
  func.func @transform_2(%arg0: i32) -> (i32, i32) {
    %c0_i32 = arith.constant 0 : i32
    %c0_i32_0 = arith.constant 0 : i32
    %c0_i32_1 = arith.constant 0 : i32
    return %c0_i32, %c0_i32_0 : i32, i32
  }
  func.func @transform_3(%arg0: i32) -> (i32, i32) {
    %c0_i32 = arith.constant 0 : i32
    %c0_i32_0 = arith.constant 0 : i32
    %c0_i32_1 = arith.constant 0 : i32
    return %c0_i32, %c0_i32_0 : i32, i32
  }
}

module attributes {stable_mosaic.version = 11 : i64} {
  func.func @_conv_if_kernel(%arg0: i32, %arg1: memref<400x128xbf16, #tpu.memory_space<vmem>>, %arg2: memref<16x400xbf16, #tpu.memory_space<vmem>>, %arg3: memref<16x1xf32, #tpu.memory_space<vmem>>, %arg4: memref<16x128xbf16, #tpu.memory_space<vmem>>) attributes {dimension_semantics = [#tpu.dimension_semantics<arbitrary>], iteration_bounds = array<i64: 1>, scalar_prefetch = 0 : i64, scratch_operands = 0 : i64, tpu.core_type = #tpu.core_type<tc>, window_params = [{pipeline_mode = #tpu.pipeline_mode<synchronous>, transform_indices = @transform_0, window_bounds = array<i64: 400, 128>}, {pipeline_mode = #tpu.pipeline_mode<synchronous>, transform_indices = @transform_1, window_bounds = array<i64: 16, 400>}, {pipeline_mode = #tpu.pipeline_mode<synchronous>, transform_indices = @transform_2, window_bounds = array<i64: 16, 1>}, {pipeline_mode = #tpu.pipeline_mode<synchronous>, transform_indices = @transform_3, window_bounds = array<i64: 16, 128>}]} {
    %c0 = arith.constant 0 : index
    %c0_0 = arith.constant 0 : index
    %0 = vector.load %arg2[%c0, %c0_0] : memref<16x400xbf16, #tpu.memory_space<vmem>>, vector<16x400xbf16>
    %c0_1 = arith.constant 0 : index
    %c0_2 = arith.constant 0 : index
    %1 = vector.load %arg1[%c0_1, %c0_2] : memref<400x128xbf16, #tpu.memory_space<vmem>>, vector<400x128xbf16>
    %cst = arith.constant dense<0.000000e+00> : vector<16x128xf32>
    %2 = tpu.matmul %0, %1, %cst {dimension_numbers = #tpu.dot_dimension_numbers<[1], [0], [0], [1], [0, 0, 1, 1], [], []>} : vector<16x400xbf16>, vector<400x128xbf16>, vector<16x128xf32> -> vector<16x128xf32>
    %c0_3 = arith.constant 0 : index
    %c0_4 = arith.constant 0 : index
    %3 = vector.load %arg3[%c0_3, %c0_4] : memref<16x1xf32, #tpu.memory_space<vmem>>, vector<16x1xf32>
    %4 = vector.broadcast %3 : vector<16x1xf32> to vector<16x128xf32>
    %5 = arith.addf %2, %4 : vector<16x128xf32>
    %cst_5 = arith.constant 0.000000e+00 : f32
    %6 = vector.broadcast %cst_5 : f32 to vector<16x32xf32>
    %7 = vector.extract_strided_slice %5 {offsets = [0, 0], sizes = [16, 32], strides = [1, 1]} : vector<16x128xf32> to vector<16x32xf32>
    %8 = arith.addf %6, %7 : vector<16x32xf32>
    %cst_6 = arith.constant 5.000000e-01 : f32
    %9 = vector.broadcast %cst_6 : f32 to vector<16x32xf32>
    %10 = arith.cmpf oge, %8, %9 : vector<16x32xf32>
    %11 = arith.extui %10 : vector<16x32xi1> to vector<16x32xi32>
    %12 = arith.sitofp %11 : vector<16x32xi32> to vector<16x32xf32>
    %13 = arith.truncf %12 : vector<16x32xf32> to vector<16x32xbf16>
    %c0_7 = arith.constant 0 : index
    %c0_8 = arith.constant 0 : index
    %14 = vector.load %arg4[%c0_7, %c0_8] : memref<16x128xbf16, #tpu.memory_space<vmem>>, vector<16x32xbf16>
    tpu.vector_store %arg4[%c0_7, %c0_8], %13 {strides = array<i32>} : memref<16x128xbf16, #tpu.memory_space<vmem>>, vector<16x32xbf16>,
    %cst_9 = arith.constant 0.000000e+00 : f32
    %15 = vector.broadcast %cst_9 : f32 to vector<16x32xf32>
    %16 = arith.select %10, %15, %8 : vector<16x32xi1>, vector<16x32xf32>
    %17 = vector.extract_strided_slice %5 {offsets = [0, 32], sizes = [16, 32], strides = [1, 1]} : vector<16x128xf32> to vector<16x32xf32>
    %18 = arith.addf %16, %17 : vector<16x32xf32>
    %cst_10 = arith.constant 5.000000e-01 : f32
    %19 = vector.broadcast %cst_10 : f32 to vector<16x32xf32>
    %20 = arith.cmpf oge, %18, %19 : vector<16x32xf32>
    %21 = arith.extui %20 : vector<16x32xi1> to vector<16x32xi32>
    %22 = arith.sitofp %21 : vector<16x32xi32> to vector<16x32xf32>
    %23 = arith.truncf %22 : vector<16x32xf32> to vector<16x32xbf16>
    %c0_11 = arith.constant 0 : index
    %c32 = arith.constant 32 : index
    %24 = vector.load %arg4[%c0_11, %c32] : memref<16x128xbf16, #tpu.memory_space<vmem>>, vector<16x32xbf16>
    tpu.vector_store %arg4[%c0_11, %c32], %23 {strides = array<i32>} : memref<16x128xbf16, #tpu.memory_space<vmem>>, vector<16x32xbf16>,
    %cst_12 = arith.constant 0.000000e+00 : f32
    %25 = vector.broadcast %cst_12 : f32 to vector<16x32xf32>
    %26 = arith.select %20, %25, %18 : vector<16x32xi1>, vector<16x32xf32>
    %27 = vector.extract_strided_slice %5 {offsets = [0, 64], sizes = [16, 32], strides = [1, 1]} : vector<16x128xf32> to vector<16x32xf32>
    %28 = arith.addf %26, %27 : vector<16x32xf32>
    %cst_13 = arith.constant 5.000000e-01 : f32
    %29 = vector.broadcast %cst_13 : f32 to vector<16x32xf32>
    %30 = arith.cmpf oge, %28, %29 : vector<16x32xf32>
    %31 = arith.extui %30 : vector<16x32xi1> to vector<16x32xi32>
    %32 = arith.sitofp %31 : vector<16x32xi32> to vector<16x32xf32>
    %33 = arith.truncf %32 : vector<16x32xf32> to vector<16x32xbf16>
    %c0_14 = arith.constant 0 : index
    %c64 = arith.constant 64 : index
    %34 = vector.load %arg4[%c0_14, %c64] : memref<16x128xbf16, #tpu.memory_space<vmem>>, vector<16x32xbf16>
    tpu.vector_store %arg4[%c0_14, %c64], %33 {strides = array<i32>} : memref<16x128xbf16, #tpu.memory_space<vmem>>, vector<16x32xbf16>,
    %cst_15 = arith.constant 0.000000e+00 : f32
    %35 = vector.broadcast %cst_15 : f32 to vector<16x32xf32>
    %36 = arith.select %30, %35, %28 : vector<16x32xi1>, vector<16x32xf32>
    %37 = vector.extract_strided_slice %5 {offsets = [0, 96], sizes = [16, 32], strides = [1, 1]} : vector<16x128xf32> to vector<16x32xf32>
    %38 = arith.addf %36, %37 : vector<16x32xf32>
    %cst_16 = arith.constant 5.000000e-01 : f32
    %39 = vector.broadcast %cst_16 : f32 to vector<16x32xf32>
    %40 = arith.cmpf oge, %38, %39 : vector<16x32xf32>
    %41 = arith.extui %40 : vector<16x32xi1> to vector<16x32xi32>
    %42 = arith.sitofp %41 : vector<16x32xi32> to vector<16x32xf32>
    %43 = arith.truncf %42 : vector<16x32xf32> to vector<16x32xbf16>
    %c0_17 = arith.constant 0 : index
    %c96 = arith.constant 96 : index
    %44 = vector.load %arg4[%c0_17, %c96] : memref<16x128xbf16, #tpu.memory_space<vmem>>, vector<16x32xbf16>
    tpu.vector_store %arg4[%c0_17, %c96], %43 {strides = array<i32>} : memref<16x128xbf16, #tpu.memory_space<vmem>>, vector<16x32xbf16>,
    return
  }
  func.func @transform_0(%arg0: i32) -> (i32, i32) {
    %c0_i32 = arith.constant 0 : i32
    %c0_i32_0 = arith.constant 0 : i32
    %c0_i32_1 = arith.constant 0 : i32
    return %c0_i32, %c0_i32_0 : i32, i32
  }
  func.func @transform_1(%arg0: i32) -> (i32, i32) {
    %c0_i32 = arith.constant 0 : i32
    %c0_i32_0 = arith.constant 0 : i32
    %c0_i32_1 = arith.constant 0 : i32
    return %c0_i32, %c0_i32_0 : i32, i32
  }
  func.func @transform_2(%arg0: i32) -> (i32, i32) {
    %c0_i32 = arith.constant 0 : i32
    %c0_i32_0 = arith.constant 0 : i32
    %c0_i32_1 = arith.constant 0 : i32
    return %c0_i32, %c0_i32_0 : i32, i32
  }
  func.func @transform_3(%arg0: i32) -> (i32, i32) {
    %c0_i32 = arith.constant 0 : i32
    %c0_i32_0 = arith.constant 0 : i32
    %c0_i32_1 = arith.constant 0 : i32
    return %c0_i32, %c0_i32_0 : i32, i32
  }
}

module attributes {stable_mosaic.version = 11 : i64} {
  func.func @_fc_stack_kernel(%arg0: i32, %arg1: memref<8x256xbf16, #tpu.memory_space<vmem>>, %arg2: memref<256x2048xbf16, #tpu.memory_space<vmem>>, %arg3: memref<2048x512xbf16, #tpu.memory_space<vmem>>, %arg4: memref<512x90xbf16, #tpu.memory_space<vmem>>, %arg5: memref<90x9xbf16, #tpu.memory_space<vmem>>, %arg6: memref<2x9xf32, #tpu.memory_space<vmem>>) attributes {dimension_semantics = [#tpu.dimension_semantics<arbitrary>], iteration_bounds = array<i64: 1>, scalar_prefetch = 0 : i64, scratch_operands = 0 : i64, tpu.core_type = #tpu.core_type<tc>, window_params = [{pipeline_mode = #tpu.pipeline_mode<synchronous>, transform_indices = @transform_0, window_bounds = array<i64: 8, 256>}, {pipeline_mode = #tpu.pipeline_mode<synchronous>, transform_indices = @transform_1, window_bounds = array<i64: 256, 2048>}, {pipeline_mode = #tpu.pipeline_mode<synchronous>, transform_indices = @transform_2, window_bounds = array<i64: 2048, 512>}, {pipeline_mode = #tpu.pipeline_mode<synchronous>, transform_indices = @transform_3, window_bounds = array<i64: 512, 90>}, {pipeline_mode = #tpu.pipeline_mode<synchronous>, transform_indices = @transform_4, window_bounds = array<i64: 90, 9>}, {pipeline_mode = #tpu.pipeline_mode<synchronous>, transform_indices = @transform_5, window_bounds = array<i64: 2, 9>}]} {
    %c0 = arith.constant 0 : index
    %c0_0 = arith.constant 0 : index
    %0 = vector.load %arg1[%c0, %c0_0] : memref<8x256xbf16, #tpu.memory_space<vmem>>, vector<8x256xbf16>
    %c0_1 = arith.constant 0 : index
    %c0_2 = arith.constant 0 : index
    %1 = vector.load %arg2[%c0_1, %c0_2] : memref<256x2048xbf16, #tpu.memory_space<vmem>>, vector<256x2048xbf16>
    %cst = arith.constant dense<0.000000e+00> : vector<8x2048xf32>
    %2 = tpu.matmul %0, %1, %cst {dimension_numbers = #tpu.dot_dimension_numbers<[1], [0], [0], [1], [0, 0, 1, 1], [], []>} : vector<8x256xbf16>, vector<256x2048xbf16>, vector<8x2048xf32> -> vector<8x2048xf32>
    %cst_3 = arith.constant 0.000000e+00 : f32
    %3 = vector.broadcast %cst_3 : f32 to vector<2x2048xf32>
    %cst_4 = arith.constant 0.000000e+00 : f32
    %4 = vector.broadcast %cst_4 : f32 to vector<2x512xf32>
    %cst_5 = arith.constant 0.000000e+00 : f32
    %5 = vector.broadcast %cst_5 : f32 to vector<2x90xf32>
    %cst_6 = arith.constant 0.000000e+00 : f32
    %6 = vector.broadcast %cst_6 : f32 to vector<2x90xf32>
    %7 = vector.extract_strided_slice %2 {offsets = [0, 0], sizes = [2, 2048], strides = [1, 1]} : vector<8x2048xf32> to vector<2x2048xf32>
    %8 = arith.addf %3, %7 : vector<2x2048xf32>
    %cst_7 = arith.constant 5.000000e-01 : f32
    %9 = vector.broadcast %cst_7 : f32 to vector<2x2048xf32>
    %10 = arith.cmpf oge, %8, %9 : vector<2x2048xf32>
    %cst_8 = arith.constant 0.000000e+00 : f32
    %11 = vector.broadcast %cst_8 : f32 to vector<2x2048xf32>
    %12 = arith.select %10, %11, %8 : vector<2x2048xi1>, vector<2x2048xf32>
    %13 = arith.extui %10 : vector<2x2048xi1> to vector<2x2048xi32>
    %14 = arith.sitofp %13 : vector<2x2048xi32> to vector<2x2048xf32>
    %15 = arith.truncf %14 : vector<2x2048xf32> to vector<2x2048xbf16>
    %c0_9 = arith.constant 0 : index
    %c0_10 = arith.constant 0 : index
    %16 = vector.load %arg3[%c0_9, %c0_10] : memref<2048x512xbf16, #tpu.memory_space<vmem>>, vector<2048x512xbf16>
    %cst_11 = arith.constant dense<0.000000e+00> : vector<2x512xf32>
    %17 = tpu.matmul %15, %16, %cst_11 {dimension_numbers = #tpu.dot_dimension_numbers<[1], [0], [0], [1], [0, 0, 1, 1], [], []>} : vector<2x2048xbf16>, vector<2048x512xbf16>, vector<2x512xf32> -> vector<2x512xf32>
    %18 = arith.addf %4, %17 : vector<2x512xf32>
    %cst_12 = arith.constant 5.000000e-01 : f32
    %19 = vector.broadcast %cst_12 : f32 to vector<2x512xf32>
    %20 = arith.cmpf oge, %18, %19 : vector<2x512xf32>
    %cst_13 = arith.constant 0.000000e+00 : f32
    %21 = vector.broadcast %cst_13 : f32 to vector<2x512xf32>
    %22 = arith.select %20, %21, %18 : vector<2x512xi1>, vector<2x512xf32>
    %23 = arith.extui %20 : vector<2x512xi1> to vector<2x512xi32>
    %24 = arith.sitofp %23 : vector<2x512xi32> to vector<2x512xf32>
    %25 = arith.truncf %24 : vector<2x512xf32> to vector<2x512xbf16>
    %c0_14 = arith.constant 0 : index
    %c0_15 = arith.constant 0 : index
    %26 = vector.load %arg4[%c0_14, %c0_15] : memref<512x90xbf16, #tpu.memory_space<vmem>>, vector<512x90xbf16>
    %cst_16 = arith.constant dense<0.000000e+00> : vector<2x90xf32>
    %27 = tpu.matmul %25, %26, %cst_16 {dimension_numbers = #tpu.dot_dimension_numbers<[1], [0], [0], [1], [0, 0, 1, 1], [], []>} : vector<2x512xbf16>, vector<512x90xbf16>, vector<2x90xf32> -> vector<2x90xf32>
    %28 = arith.addf %5, %27 : vector<2x90xf32>
    %cst_17 = arith.constant 5.000000e-01 : f32
    %29 = vector.broadcast %cst_17 : f32 to vector<2x90xf32>
    %30 = arith.cmpf oge, %28, %29 : vector<2x90xf32>
    %cst_18 = arith.constant 0.000000e+00 : f32
    %31 = vector.broadcast %cst_18 : f32 to vector<2x90xf32>
    %32 = arith.select %30, %31, %28 : vector<2x90xi1>, vector<2x90xf32>
    %33 = arith.extui %30 : vector<2x90xi1> to vector<2x90xi32>
    %34 = arith.sitofp %33 : vector<2x90xi32> to vector<2x90xf32>
    %35 = arith.addf %6, %34 : vector<2x90xf32>
    %36 = vector.extract_strided_slice %2 {offsets = [2, 0], sizes = [2, 2048], strides = [1, 1]} : vector<8x2048xf32> to vector<2x2048xf32>
    %37 = arith.addf %12, %36 : vector<2x2048xf32>
    %cst_19 = arith.constant 5.000000e-01 : f32
    %38 = vector.broadcast %cst_19 : f32 to vector<2x2048xf32>
    %39 = arith.cmpf oge, %37, %38 : vector<2x2048xf32>
    %cst_20 = arith.constant 0.000000e+00 : f32
    %40 = vector.broadcast %cst_20 : f32 to vector<2x2048xf32>
    %41 = arith.select %39, %40, %37 : vector<2x2048xi1>, vector<2x2048xf32>
    %42 = arith.extui %39 : vector<2x2048xi1> to vector<2x2048xi32>
    %43 = arith.sitofp %42 : vector<2x2048xi32> to vector<2x2048xf32>
    %44 = arith.truncf %43 : vector<2x2048xf32> to vector<2x2048xbf16>
    %c0_21 = arith.constant 0 : index
    %c0_22 = arith.constant 0 : index
    %45 = vector.load %arg3[%c0_21, %c0_22] : memref<2048x512xbf16, #tpu.memory_space<vmem>>, vector<2048x512xbf16>
    %cst_23 = arith.constant dense<0.000000e+00> : vector<2x512xf32>
    %46 = tpu.matmul %44, %45, %cst_23 {dimension_numbers = #tpu.dot_dimension_numbers<[1], [0], [0], [1], [0, 0, 1, 1], [], []>} : vector<2x2048xbf16>, vector<2048x512xbf16>, vector<2x512xf32> -> vector<2x512xf32>
    %47 = arith.addf %22, %46 : vector<2x512xf32>
    %cst_24 = arith.constant 5.000000e-01 : f32
    %48 = vector.broadcast %cst_24 : f32 to vector<2x512xf32>
    %49 = arith.cmpf oge, %47, %48 : vector<2x512xf32>
    %cst_25 = arith.constant 0.000000e+00 : f32
    %50 = vector.broadcast %cst_25 : f32 to vector<2x512xf32>
    %51 = arith.select %49, %50, %47 : vector<2x512xi1>, vector<2x512xf32>
    %52 = arith.extui %49 : vector<2x512xi1> to vector<2x512xi32>
    %53 = arith.sitofp %52 : vector<2x512xi32> to vector<2x512xf32>
    %54 = arith.truncf %53 : vector<2x512xf32> to vector<2x512xbf16>
    %c0_26 = arith.constant 0 : index
    %c0_27 = arith.constant 0 : index
    %55 = vector.load %arg4[%c0_26, %c0_27] : memref<512x90xbf16, #tpu.memory_space<vmem>>, vector<512x90xbf16>
    %cst_28 = arith.constant dense<0.000000e+00> : vector<2x90xf32>
    %56 = tpu.matmul %54, %55, %cst_28 {dimension_numbers = #tpu.dot_dimension_numbers<[1], [0], [0], [1], [0, 0, 1, 1], [], []>} : vector<2x512xbf16>, vector<512x90xbf16>, vector<2x90xf32> -> vector<2x90xf32>
    %57 = arith.addf %32, %56 : vector<2x90xf32>
    %cst_29 = arith.constant 5.000000e-01 : f32
    %58 = vector.broadcast %cst_29 : f32 to vector<2x90xf32>
    %59 = arith.cmpf oge, %57, %58 : vector<2x90xf32>
    %cst_30 = arith.constant 0.000000e+00 : f32
    %60 = vector.broadcast %cst_30 : f32 to vector<2x90xf32>
    %61 = arith.select %59, %60, %57 : vector<2x90xi1>, vector<2x90xf32>
    %62 = arith.extui %59 : vector<2x90xi1> to vector<2x90xi32>
    %63 = arith.sitofp %62 : vector<2x90xi32> to vector<2x90xf32>
    %64 = arith.addf %35, %63 : vector<2x90xf32>
    %65 = vector.extract_strided_slice %2 {offsets = [4, 0], sizes = [2, 2048], strides = [1, 1]} : vector<8x2048xf32> to vector<2x2048xf32>
    %66 = arith.addf %41, %65 : vector<2x2048xf32>
    %cst_31 = arith.constant 5.000000e-01 : f32
    %67 = vector.broadcast %cst_31 : f32 to vector<2x2048xf32>
    %68 = arith.cmpf oge, %66, %67 : vector<2x2048xf32>
    %cst_32 = arith.constant 0.000000e+00 : f32
    %69 = vector.broadcast %cst_32 : f32 to vector<2x2048xf32>
    %70 = arith.select %68, %69, %66 : vector<2x2048xi1>, vector<2x2048xf32>
    %71 = arith.extui %68 : vector<2x2048xi1> to vector<2x2048xi32>
    %72 = arith.sitofp %71 : vector<2x2048xi32> to vector<2x2048xf32>
    %73 = arith.truncf %72 : vector<2x2048xf32> to vector<2x2048xbf16>
    %c0_33 = arith.constant 0 : index
    %c0_34 = arith.constant 0 : index
    %74 = vector.load %arg3[%c0_33, %c0_34] : memref<2048x512xbf16, #tpu.memory_space<vmem>>, vector<2048x512xbf16>
    %cst_35 = arith.constant dense<0.000000e+00> : vector<2x512xf32>
    %75 = tpu.matmul %73, %74, %cst_35 {dimension_numbers = #tpu.dot_dimension_numbers<[1], [0], [0], [1], [0, 0, 1, 1], [], []>} : vector<2x2048xbf16>, vector<2048x512xbf16>, vector<2x512xf32> -> vector<2x512xf32>
    %76 = arith.addf %51, %75 : vector<2x512xf32>
    %cst_36 = arith.constant 5.000000e-01 : f32
    %77 = vector.broadcast %cst_36 : f32 to vector<2x512xf32>
    %78 = arith.cmpf oge, %76, %77 : vector<2x512xf32>
    %cst_37 = arith.constant 0.000000e+00 : f32
    %79 = vector.broadcast %cst_37 : f32 to vector<2x512xf32>
    %80 = arith.select %78, %79, %76 : vector<2x512xi1>, vector<2x512xf32>
    %81 = arith.extui %78 : vector<2x512xi1> to vector<2x512xi32>
    %82 = arith.sitofp %81 : vector<2x512xi32> to vector<2x512xf32>
    %83 = arith.truncf %82 : vector<2x512xf32> to vector<2x512xbf16>
    %c0_38 = arith.constant 0 : index
    %c0_39 = arith.constant 0 : index
    %84 = vector.load %arg4[%c0_38, %c0_39] : memref<512x90xbf16, #tpu.memory_space<vmem>>, vector<512x90xbf16>
    %cst_40 = arith.constant dense<0.000000e+00> : vector<2x90xf32>
    %85 = tpu.matmul %83, %84, %cst_40 {dimension_numbers = #tpu.dot_dimension_numbers<[1], [0], [0], [1], [0, 0, 1, 1], [], []>} : vector<2x512xbf16>, vector<512x90xbf16>, vector<2x90xf32> -> vector<2x90xf32>
    %86 = arith.addf %61, %85 : vector<2x90xf32>
    %cst_41 = arith.constant 5.000000e-01 : f32
    %87 = vector.broadcast %cst_41 : f32 to vector<2x90xf32>
    %88 = arith.cmpf oge, %86, %87 : vector<2x90xf32>
    %cst_42 = arith.constant 0.000000e+00 : f32
    %89 = vector.broadcast %cst_42 : f32 to vector<2x90xf32>
    %90 = arith.select %88, %89, %86 : vector<2x90xi1>, vector<2x90xf32>
    %91 = arith.extui %88 : vector<2x90xi1> to vector<2x90xi32>
    %92 = arith.sitofp %91 : vector<2x90xi32> to vector<2x90xf32>
    %93 = arith.addf %64, %92 : vector<2x90xf32>
    %94 = vector.extract_strided_slice %2 {offsets = [6, 0], sizes = [2, 2048], strides = [1, 1]} : vector<8x2048xf32> to vector<2x2048xf32>
    %95 = arith.addf %70, %94 : vector<2x2048xf32>
    %cst_43 = arith.constant 5.000000e-01 : f32
    %96 = vector.broadcast %cst_43 : f32 to vector<2x2048xf32>
    %97 = arith.cmpf oge, %95, %96 : vector<2x2048xf32>
    %98 = arith.extui %97 : vector<2x2048xi1> to vector<2x2048xi32>
    %99 = arith.sitofp %98 : vector<2x2048xi32> to vector<2x2048xf32>
    %100 = arith.truncf %99 : vector<2x2048xf32> to vector<2x2048xbf16>
    %c0_44 = arith.constant 0 : index
    %c0_45 = arith.constant 0 : index
    %101 = vector.load %arg3[%c0_44, %c0_45] : memref<2048x512xbf16, #tpu.memory_space<vmem>>, vector<2048x512xbf16>
    %cst_46 = arith.constant dense<0.000000e+00> : vector<2x512xf32>
    %102 = tpu.matmul %100, %101, %cst_46 {dimension_numbers = #tpu.dot_dimension_numbers<[1], [0], [0], [1], [0, 0, 1, 1], [], []>} : vector<2x2048xbf16>, vector<2048x512xbf16>, vector<2x512xf32> -> vector<2x512xf32>
    %103 = arith.addf %80, %102 : vector<2x512xf32>
    %cst_47 = arith.constant 5.000000e-01 : f32
    %104 = vector.broadcast %cst_47 : f32 to vector<2x512xf32>
    %105 = arith.cmpf oge, %103, %104 : vector<2x512xf32>
    %106 = arith.extui %105 : vector<2x512xi1> to vector<2x512xi32>
    %107 = arith.sitofp %106 : vector<2x512xi32> to vector<2x512xf32>
    %108 = arith.truncf %107 : vector<2x512xf32> to vector<2x512xbf16>
    %c0_48 = arith.constant 0 : index
    %c0_49 = arith.constant 0 : index
    %109 = vector.load %arg4[%c0_48, %c0_49] : memref<512x90xbf16, #tpu.memory_space<vmem>>, vector<512x90xbf16>
    %cst_50 = arith.constant dense<0.000000e+00> : vector<2x90xf32>
    %110 = tpu.matmul %108, %109, %cst_50 {dimension_numbers = #tpu.dot_dimension_numbers<[1], [0], [0], [1], [0, 0, 1, 1], [], []>} : vector<2x512xbf16>, vector<512x90xbf16>, vector<2x90xf32> -> vector<2x90xf32>
    %111 = arith.addf %90, %110 : vector<2x90xf32>
    %cst_51 = arith.constant 5.000000e-01 : f32
    %112 = vector.broadcast %cst_51 : f32 to vector<2x90xf32>
    %113 = arith.cmpf oge, %111, %112 : vector<2x90xf32>
    %114 = arith.extui %113 : vector<2x90xi1> to vector<2x90xi32>
    %115 = arith.sitofp %114 : vector<2x90xi32> to vector<2x90xf32>
    %116 = arith.addf %93, %115 : vector<2x90xf32>
    %117 = arith.truncf %116 : vector<2x90xf32> to vector<2x90xbf16>
    %c0_52 = arith.constant 0 : index
    %c0_53 = arith.constant 0 : index
    %118 = vector.load %arg5[%c0_52, %c0_53] : memref<90x9xbf16, #tpu.memory_space<vmem>>, vector<90x9xbf16>
    %cst_54 = arith.constant dense<0.000000e+00> : vector<2x9xf32>
    %119 = tpu.matmul %117, %118, %cst_54 {dimension_numbers = #tpu.dot_dimension_numbers<[1], [0], [0], [1], [0, 0, 1, 1], [], []>} : vector<2x90xbf16>, vector<90x9xbf16>, vector<2x9xf32> -> vector<2x9xf32>
    %cst_55 = arith.constant 2.500000e-02 : f32
    %120 = vector.broadcast %cst_55 : f32 to vector<2x9xf32>
    %121 = arith.mulf %119, %120 : vector<2x9xf32>
    %c0_56 = arith.constant 0 : index
    %c0_57 = arith.constant 0 : index
    %122 = vector.load %arg6[%c0_56, %c0_57] : memref<2x9xf32, #tpu.memory_space<vmem>>, vector<2x9xf32>
    tpu.vector_store %arg6[%c0_56, %c0_57], %121 {strides = array<i32>} : memref<2x9xf32, #tpu.memory_space<vmem>>, vector<2x9xf32>,
    return
  }
  func.func @transform_0(%arg0: i32) -> (i32, i32) {
    %c0_i32 = arith.constant 0 : i32
    %c0_i32_0 = arith.constant 0 : i32
    %c0_i32_1 = arith.constant 0 : i32
    return %c0_i32, %c0_i32_0 : i32, i32
  }
  func.func @transform_1(%arg0: i32) -> (i32, i32) {
    %c0_i32 = arith.constant 0 : i32
    %c0_i32_0 = arith.constant 0 : i32
    %c0_i32_1 = arith.constant 0 : i32
    return %c0_i32, %c0_i32_0 : i32, i32
  }
  func.func @transform_2(%arg0: i32) -> (i32, i32) {
    %c0_i32 = arith.constant 0 : i32
    %c0_i32_0 = arith.constant 0 : i32
    %c0_i32_1 = arith.constant 0 : i32
    return %c0_i32, %c0_i32_0 : i32, i32
  }
  func.func @transform_3(%arg0: i32) -> (i32, i32) {
    %c0_i32 = arith.constant 0 : i32
    %c0_i32_0 = arith.constant 0 : i32
    %c0_i32_1 = arith.constant 0 : i32
    return %c0_i32, %c0_i32_0 : i32, i32
  }
  func.func @transform_4(%arg0: i32) -> (i32, i32) {
    %c0_i32 = arith.constant 0 : i32
    %c0_i32_0 = arith.constant 0 : i32
    %c0_i32_1 = arith.constant 0 : i32
    return %c0_i32, %c0_i32_0 : i32, i32
  }
  func.func @transform_5(%arg0: i32) -> (i32, i32) {
    %c0_i32 = arith.constant 0 : i32
    %c0_i32_0 = arith.constant 0 : i32
    %c0_i32_1 = arith.constant 0 : i32
    return %c0_i32, %c0_i32_0 : i32, i32
  }
}

</mosaic_0001>

<llo_original>
// kernel: python_net_forward.5
$region0: #{python_net_forward.5}
  #allocation0 [shape = 'u32[]', space=smem, size = 0x4, offset = 0x4, fixed_abs, tag = 'smem constant byte address 0x4 - core index']
  #allocation1 [shape = 'u32[144,128]{1,0:T(1,128)}', space=vmem, size = 0x12000, scoped, tag = 'internal scratch']
  %s0 = inlined_call_operand.vmem [shape: bf16[50,512], index: 0, kind: input, shape index: {}]
  %s1 = inlined_call_operand.vmem [shape: bf16[8,50], index: 1, kind: input, shape index: {}]
  %s2 = inlined_call_operand.vmem [shape: f32[8,1], index: 2, kind: input, shape index: {}]
  %s3 = inlined_call_operand.vmem [shape: bf16[8,512], index: 3, kind: output, shape index: {}]
  %s4 = sld [smem:[#allocation0]]
  $region22: #{python_net_forward.5} parent=0
    _
  %s6 = ssub.s32 1, %s4
  %s7 = scalar_select 0, %s6, %s4
  // Predicated region
  $region2: #{python_net_forward.5} parent=0 // pred_check
    _
  $region3: #{python_net_forward.5} parent=0 // pred_check_branch
    %9 = sbr.rel (0) target = $region5
  $region4: #{python_net_forward.5} parent=0 // pred_region
    _
  $region5: #{python_net_forward.5} parent=0 // pred_fallthru
    _
  // Predicated region
  $region6: #{python_net_forward.5} parent=0 // pred_check
    _
  $region7: #{python_net_forward.5} parent=0 // pred_check_branch
    %11 = sbr.rel (0) target = $region9
  $region8: #{python_net_forward.5} parent=0 // pred_region
    _
  $region9: #{python_net_forward.5} parent=0 // pred_fallthru
    _
  // Predicated region
  $region10: #{python_net_forward.5} parent=0 // pred_check
    _
  $region11: #{python_net_forward.5} parent=0 // pred_check_branch
    %13 = sbr.rel (0) target = $region13
  $region12: #{python_net_forward.5} parent=0 // pred_region
    _
  $region13: #{python_net_forward.5} parent=0 // pred_fallthru
    _
  %v15 = vld [vmem:[%s1] sm:$0xf]
  %v16 = vld [vmem:[%s0] sm:$0xff]
  %v17 = vld [vmem:[%s0 + $0x8] sm:$0xff]
  %v18 = vld [vmem:[%s0 + $0x10] sm:$0xff]
  %v19 = vld [vmem:[%s0 + $0x18] sm:$0xff]
  %v20 = vld [vmem:[%s0 + $0x20] sm:$0xff]
  %v21 = vld [vmem:[%s0 + $0x28] sm:$0xff]
  %v22 = vld [vmem:[%s0 + $0x30] sm:$0xff]
  %v23 = vld [vmem:[%s0 + $0x38] sm:$0xff]
  %v24 = vld [vmem:[%s0 + $0x40] sm:$0xff]
  %v25 = vld [vmem:[%s0 + $0x48] sm:$0xff]
  %v26 = vld [vmem:[%s0 + $0x50] sm:$0xff]
  %v27 = vld [vmem:[%s0 + $0x58] sm:$0xff]
  %v28 = vld [vmem:[%s0 + $0x60] sm:$0x11]
  %v29 = vld [vmem:[%s0 + $0x68] sm:$0x11]
  %v30 = vld [vmem:[%s2] sm:$0xff]
  %32 = vset.pattern.permute.xlu0 0
  %33 = vperm.xlu0 %32, %v30
  %v34 = vpop.permute.xlu0 %33
  %v50 = vunpack.c.l.b16 %v16
  %v51 = vunpack.c.h.b16 %v16
  %v52 = vunpack.c.l.b16 %v17
  %v53 = vunpack.c.h.b16 %v17
  %v54 = vunpack.c.l.b16 %v18
  %v55 = vunpack.c.h.b16 %v18
  %v56 = vunpack.c.l.b16 %v19
  %v57 = vunpack.c.h.b16 %v19
  %v58 = vunpack.c.l.b16 %v20
  %v59 = vunpack.c.h.b16 %v20
  %v60 = vunpack.c.l.b16 %v21
  %v61 = vunpack.c.h.b16 %v21
  %v62 = vunpack.c.l.b16 %v22
  %v63 = vunpack.c.h.b16 %v22
  %v64 = vunpack.c.l.b16 %v23
  %v65 = vunpack.c.h.b16 %v23
  %v66 = vunpack.c.l.b16 %v24
  %v67 = vunpack.c.h.b16 %v24
  %v68 = vunpack.c.l.b16 %v25
  %v69 = vunpack.c.h.b16 %v25
  %v70 = vunpack.c.l.b16 %v26
  %v71 = vunpack.c.h.b16 %v26
  %v72 = vunpack.c.l.b16 %v27
  %v73 = vunpack.c.h.b16 %v27
  %v74 = vunpack.c.l.b16 %v28
  %v75 = vunpack.c.h.b16 %v28
  %v76 = vunpack.c.l.b16 %v29
  %v77 = vunpack.c.h.b16 %v29
  %v78 = vpack.c.b16 %v54, %v50
  %v79 = vpack.c.b16 %v55, %v51
  %v80 = vpack.c.b16 %v56, %v52
  %v81 = vpack.c.b16 %v57, %v53
  %v82 = vpack.c.b16 %v62, %v58
  %v83 = vpack.c.b16 %v63, %v59
  %v84 = vpack.c.b16 %v64, %v60
  %v85 = vpack.c.b16 %v65, %v61
  %v86 = vpack.c.b16 %v70, %v66
  %v87 = vpack.c.b16 %v71, %v67
  %v88 = vpack.c.b16 %v72, %v68
  %v89 = vpack.c.b16 %v73, %v69
  %v90 = vpack.c.b16 %v74, %v74
  %v91 = vpack.c.b16 %v75, %v75
  %v92 = vpack.c.b16 %v76, %v76
  %v93 = vpack.c.b16 %v77, %v77
  %vm106 = vcmask 408576
  %v108 = vsel %vm106, %v15, 0
  %vm110 = vcmask 1040384
  %v112 = vsel %vm110, %v90, 0
  %v115 = vsel %vm110, %v91, 0
  %v118 = vsel %vm110, %v92, 0
  %v121 = vsel %vm110, %v93, 0
  %123 = vmatprep.subr.bf16.mxu0 %v79
  %124 = vmatpush1.bf16.msra.mxu0 %v78
  %125 = vmatprep.subr.bf16.mxu0 %v83
  %126 = vmatpush1.bf16.msra.mxu0 %v82
  %127 = vmatprep.subr.bf16.mxu0 %v87
  %128 = vmatpush1.bf16.msra.mxu0 %v86
  %129 = vmatprep.subr.bf16.mxu0 %v115
  %130 = vmatpush1.bf16.msra.mxu0 %v112
  %131 = vmatprep.subr.bf16.mxu0 0
  %132 = vmatpush1.bf16.msra.mxu0 0
  %133 = vmatprep.subr.bf16.mxu0 0
  %134 = vmatpush1.bf16.msra.mxu0 0
  %135 = vmatprep.subr.bf16.mxu0 0
  %136 = vmatpush1.bf16.msra.mxu0 0
  %137 = vmatprep.subr.bf16.mxu0 0
  %138 = vmatpush1.bf16.msra.mxu0 0
  %139 = vmatprep.subr.bf16.mxu0 0
  %140 = vmatpush1.bf16.msra.mxu0 0
  %141 = vmatprep.subr.bf16.mxu0 0
  %142 = vmatpush1.bf16.msra.mxu0 0
  %143 = vmatprep.subr.bf16.mxu0 0
  %144 = vmatpush1.bf16.msra.mxu0 0
  %145 = vmatprep.subr.bf16.mxu0 0
  %146 = vmatpush1.bf16.msra.mxu0 0
  %147 = vmatprep.subr.bf16.mxu0 0
  %148 = vmatpush1.bf16.msra.mxu0 0
  %149 = vmatprep.subr.bf16.mxu0 0
  %150 = vmatpush1.bf16.msra.mxu0 0
  %151 = vmatprep.subr.bf16.mxu0 0
  %152 = vmatpush1.bf16.msra.mxu0 0
  %153 = vmatprep.subr.bf16.mxu0 0
  %154 = vmatpush1.bf16.msra.mxu0 0
  %155 = vmatprep.mubr.bf16.mxu0 0
  %156 = vmatmul.mubr.bf16.gmra.mrb[0].mxu0 %v108
  %v157 = vpop.f32.mrb[0].mxu0
  %v158 = vadd.f32 %v34, %v157
  %v159 = vpop.f32.mrb[0].mxu0
  %v160 = vadd.f32 %v34, %v159
  %v161 = vpop.f32.mrb[0].mxu0
  %v162 = vpop.f32.mrb[0].mxu0
  %163 = vdwg.mxu0
  %164 = vmatprep.subr.bf16.mxu0 %v81
  %165 = vmatpush1.bf16.msra.mxu0 %v80
  %166 = vmatprep.subr.bf16.mxu0 %v85
  %167 = vmatpush1.bf16.msra.mxu0 %v84
  %168 = vmatprep.subr.bf16.mxu0 %v89
  %169 = vmatpush1.bf16.msra.mxu0 %v88
  %170 = vmatprep.subr.bf16.mxu0 %v121
  %171 = vmatpush1.bf16.msra.mxu0 %v118
  %172 = vmatprep.subr.bf16.mxu0 0
  %173 = vmatpush1.bf16.msra.mxu0 0
  %174 = vmatprep.subr.bf16.mxu0 0
  %175 = vmatpush1.bf16.msra.mxu0 0
  %176 = vmatprep.subr.bf16.mxu0 0
  %177 = vmatpush1.bf16.msra.mxu0 0
  %178 = vmatprep.subr.bf16.mxu0 0
  %179 = vmatpush1.bf16.msra.mxu0 0
  %180 = vmatprep.subr.bf16.mxu0 0
  %181 = vmatpush1.bf16.msra.mxu0 0
  %182 = vmatprep.subr.bf16.mxu0 0
  %183 = vmatpush1.bf16.msra.mxu0 0
  %184 = vmatprep.subr.bf16.mxu0 0
  %185 = vmatpush1.bf16.msra.mxu0 0
  %186 = vmatprep.subr.bf16.mxu0 0
  %187 = vmatpush1.bf16.msra.mxu0 0
  %188 = vmatprep.subr.bf16.mxu0 0
  %189 = vmatpush1.bf16.msra.mxu0 0
  %190 = vmatprep.subr.bf16.mxu0 0
  %191 = vmatpush1.bf16.msra.mxu0 0
  %192 = vmatprep.subr.bf16.mxu0 0
  %193 = vmatpush1.bf16.msra.mxu0 0
  %194 = vmatprep.subr.bf16.mxu0 0
  %195 = vmatpush1.bf16.msra.mxu0 0
  %196 = vmatprep.mubr.bf16.mxu0 0
  %197 = vmatmul.mubr.bf16.gmra.mrb[0].mxu0 %v108
  %v198 = vpop.f32.mrb[0].mxu0
  %v199 = vadd.f32 %v34, %v198
  %v200 = vpop.f32.mrb[0].mxu0
  %v201 = vadd.f32 %v34, %v200
  %v202 = vpop.f32.mrb[0].mxu0
  %v203 = vpop.f32.mrb[0].mxu0
  %204 = vdwg.mxu0
  %v205 = vadd.f32 %v158, 0.0
  %vm206 = vcmp.ge.f32.partialorder %v205, 0.5
  %v207 = vsel %vm206, 1, 0
  %v208 = vcvt.s32.f32 %v207
  %v209 = vpack.c.bf16 %v208, %v208
  %210 = vst [vmem:[%s3] sm:$0xf] %v209
  %v211 = vsel %vm206, 0.0, %v205
  %v212 = vadd.f32 %v211, %v160
  %vm213 = vcmp.ge.f32.partialorder %v212, 0.5
  %v214 = vsel %vm213, 1, 0
  %v215 = vcvt.s32.f32 %v214
  %v216 = vpack.c.bf16 %v215, %v215
  %217 = vst [vmem:[%s3 + $0x4] sm:$0xf] %v216
  %v218 = vsel %vm213, 0.0, %v212
  %v219 = vadd.f32 %v218, %v199
  %vm220 = vcmp.ge.f32.partialorder %v219, 0.5
  %v221 = vsel %vm220, 1, 0
  %v222 = vcvt.s32.f32 %v221
  %v223 = vpack.c.bf16 %v222, %v222
  %224 = vst [vmem:[%s3 + $0x8] sm:$0xf] %v223
  %v225 = vsel %vm220, 0.0, %v219
  %v226 = vadd.f32 %v225, %v201
  %vm227 = vcmp.ge.f32.partialorder %v226, 0.5
  %v228 = vsel %vm227, 1, 0
  %v229 = vcvt.s32.f32 %v228
  %v230 = vpack.c.bf16 %v229, %v229
  %231 = vst [vmem:[%s3 + $0xc] sm:$0xf] %v230
  // Predicated region
  $region14: #{python_net_forward.5} parent=0 // pred_check
    _
  $region15: #{python_net_forward.5} parent=0 // pred_check_branch
    %233 = sbr.rel (0) target = $region17
  $region16: #{python_net_forward.5} parent=0 // pred_region
    _
  $region17: #{python_net_forward.5} parent=0 // pred_fallthru
    _
  // Predicated region
  $region18: #{python_net_forward.5} parent=0 // pred_check
    _
  $region19: #{python_net_forward.5} parent=0 // pred_check_branch
    %235 = sbr.rel (0) target = $region21
  $region20: #{python_net_forward.5} parent=0 // pred_region
    _
  $region21: #{python_net_forward.5} parent=0 // pred_fallthru
    _

// kernel: python_net_forward.6
$region0: #{python_net_forward.6}
  #allocation0 [shape = 'u32[]', space=smem, size = 0x4, offset = 0x4, fixed_abs, tag = 'smem constant byte address 0x4 - core index']
  #allocation1 [shape = 'u32[144,128]{1,0:T(1,128)}', space=vmem, size = 0x12000, scoped, tag = 'internal scratch']
  %s0 = inlined_call_operand.vmem [shape: bf16[200,512], index: 0, kind: input, shape index: {}]
  %s1 = inlined_call_operand.vmem [shape: bf16[8,200], index: 1, kind: input, shape index: {}]
  %s2 = inlined_call_operand.vmem [shape: f32[8,1], index: 2, kind: input, shape index: {}]
  %s3 = inlined_call_operand.vmem [shape: bf16[8,512], index: 3, kind: output, shape index: {}]
  %s4 = sld [smem:[#allocation0]]
  $region22: #{python_net_forward.6} parent=0
    _
  %s6 = ssub.s32 1, %s4
  %s7 = scalar_select 0, %s6, %s4
  // Predicated region
  $region2: #{python_net_forward.6} parent=0 // pred_check
    _
  $region3: #{python_net_forward.6} parent=0 // pred_check_branch
    %9 = sbr.rel (0) target = $region5
  $region4: #{python_net_forward.6} parent=0 // pred_region
    _
  $region5: #{python_net_forward.6} parent=0 // pred_fallthru
    _
  // Predicated region
  $region6: #{python_net_forward.6} parent=0 // pred_check
    _
  $region7: #{python_net_forward.6} parent=0 // pred_check_branch
    %11 = sbr.rel (0) target = $region9
  $region8: #{python_net_forward.6} parent=0 // pred_region
    _
  $region9: #{python_net_forward.6} parent=0 // pred_fallthru
    _
  // Predicated region
  $region10: #{python_net_forward.6} parent=0 // pred_check
    _
  $region11: #{python_net_forward.6} parent=0 // pred_check_branch
    %13 = sbr.rel (0) target = $region13
  $region12: #{python_net_forward.6} parent=0 // pred_region
    _
  $region13: #{python_net_forward.6} parent=0 // pred_fallthru
    _
  %v15 = vld [vmem:[%s1] sm:$0xff]
  %v16 = vld [vmem:[%s0] sm:$0xff]
  %v17 = vld [vmem:[%s0 + $0x8] sm:$0xff]
  %v18 = vld [vmem:[%s0 + $0x10] sm:$0xff]
  %v19 = vld [vmem:[%s0 + $0x18] sm:$0xff]
  %v20 = vld [vmem:[%s0 + $0x20] sm:$0xff]
  %v21 = vld [vmem:[%s0 + $0x28] sm:$0xff]
  %v22 = vld [vmem:[%s0 + $0x30] sm:$0xff]
  %v23 = vld [vmem:[%s0 + $0x38] sm:$0xff]
  %v24 = vld [vmem:[%s0 + $0x40] sm:$0xff]
  %v25 = vld [vmem:[%s0 + $0x48] sm:$0xff]
  %v26 = vld [vmem:[%s0 + $0x50] sm:$0xff]
  %v27 = vld [vmem:[%s0 + $0x58] sm:$0xff]
  %v28 = vld [vmem:[%s0 + $0x60] sm:$0xff]
  %v29 = vld [vmem:[%s0 + $0x68] sm:$0xff]
  %v30 = vld [vmem:[%s0 + $0x70] sm:$0xff]
  %v31 = vld [vmem:[%s0 + $0x78] sm:$0xff]
  %v32 = vld [vmem:[%s0 + $0x80] sm:$0xff]
  %v33 = vld [vmem:[%s0 + $0x88] sm:$0xff]
  %v34 = vld [vmem:[%s0 + $0x90] sm:$0xff]
  %v35 = vld [vmem:[%s0 + $0x98] sm:$0xff]
  %v36 = vld [vmem:[%s0 + $0xa0] sm:$0xff]
  %v37 = vld [vmem:[%s0 + $0xa8] sm:$0xff]
  %v38 = vld [vmem:[%s0 + $0xb0] sm:$0xff]
  %v39 = vld [vmem:[%s0 + $0xb8] sm:$0xff]
  %v40 = vld [vmem:[%s0 + $0xc0] sm:$0xff]
  %v41 = vld [vmem:[%s0 + $0xc8] sm:$0xff]
  %v42 = vld [vmem:[%s0 + $0xd0] sm:$0xff]
  %v43 = vld [vmem:[%s0 + $0xd8] sm:$0xff]
  %v44 = vld [vmem:[%s0 + $0xe0] sm:$0xff]
  %v45 = vld [vmem:[%s0 + $0xe8] sm:$0xff]
  %v46 = vld [vmem:[%s0 + $0xf0] sm:$0xff]
  %v47 = vld [vmem:[%s0 + $0xf8] sm:$0xff]
  %v48 = vld [vmem:[%s0 + $0x100] sm:$0xff]
  %v49 = vld [vmem:[%s0 + $0x108] sm:$0xff]
  %v50 = vld [vmem:[%s0 + $0x110] sm:$0xff]
  %v51 = vld [vmem:[%s0 + $0x118] sm:$0xff]
  %v52 = vld [vmem:[%s0 + $0x120] sm:$0xff]
  %v53 = vld [vmem:[%s0 + $0x128] sm:$0xff]
  %v54 = vld [vmem:[%s0 + $0x130] sm:$0xff]
  %v55 = vld [vmem:[%s0 + $0x138] sm:$0xff]
  %v56 = vld [vmem:[%s0 + $0x140] sm:$0xff]
  %v57 = vld [vmem:[%s0 + $0x148] sm:$0xff]
  %v58 = vld [vmem:[%s0 + $0x150] sm:$0xff]
  %v59 = vld [vmem:[%s0 + $0x158] sm:$0xff]
  %v60 = vld [vmem:[%s0 + $0x160] sm:$0xff]
  %v61 = vld [vmem:[%s0 + $0x168] sm:$0xff]
  %v62 = vld [vmem:[%s0 + $0x170] sm:$0xff]
  %v63 = vld [vmem:[%s0 + $0x178] sm:$0xff]
  %v64 = vld [vmem:[%s0 + $0x180] sm:$0xff]
  %v65 = vld [vmem:[%s0 + $0x188] sm:$0xff]
  %v66 = vld [vmem:[%s2] sm:$0xff]
  %68 = vset.pattern.permute.xlu0 0
  %69 = vperm.xlu0 %68, %v66
  %v70 = vpop.permute.xlu0 %69
  %v73 = vunpack.c.l.b16 %v15
  %v74 = vunpack.c.h.b16 %v15
  %v75 = vpack.c.b16 %v73, %v73
  %v76 = vpack.c.b16 %v74, %v74
  %v128 = vunpack.c.l.b16 %v16
  %v129 = vunpack.c.h.b16 %v16
  %v130 = vunpack.c.l.b16 %v17
  %v131 = vunpack.c.h.b16 %v17
  %v132 = vunpack.c.l.b16 %v18
  %v133 = vunpack.c.h.b16 %v18
  %v134 = vunpack.c.l.b16 %v19
  %v135 = vunpack.c.h.b16 %v19
  %v136 = vunpack.c.l.b16 %v20
  %v137 = vunpack.c.h.b16 %v20
  %v138 = vunpack.c.l.b16 %v21
  %v139 = vunpack.c.h.b16 %v21
  %v140 = vunpack.c.l.b16 %v22
  %v141 = vunpack.c.h.b16 %v22
  %v142 = vunpack.c.l.b16 %v23
  %v143 = vunpack.c.h.b16 %v23
  %v144 = vunpack.c.l.b16 %v24
  %v145 = vunpack.c.h.b16 %v24
  %v146 = vunpack.c.l.b16 %v25
  %v147 = vunpack.c.h.b16 %v25
  %v148 = vunpack.c.l.b16 %v26
  %v149 = vunpack.c.h.b16 %v26
  %v150 = vunpack.c.l.b16 %v27
  %v151 = vunpack.c.h.b16 %v27
  %v152 = vunpack.c.l.b16 %v28
  %v153 = vunpack.c.h.b16 %v28
  %v154 = vunpack.c.l.b16 %v29
  %v155 = vunpack.c.h.b16 %v29
  %v156 = vunpack.c.l.b16 %v30
  %v157 = vunpack.c.h.b16 %v30
  %v158 = vunpack.c.l.b16 %v31
  %v159 = vunpack.c.h.b16 %v31
  %v160 = vunpack.c.l.b16 %v32
  %v161 = vunpack.c.h.b16 %v32
  %v162 = vunpack.c.l.b16 %v33
  %v163 = vunpack.c.h.b16 %v33
  %v164 = vunpack.c.l.b16 %v34
  %v165 = vunpack.c.h.b16 %v34
  %v166 = vunpack.c.l.b16 %v35
  %v167 = vunpack.c.h.b16 %v35
  %v168 = vunpack.c.l.b16 %v36
  %v169 = vunpack.c.h.b16 %v36
  %v170 = vunpack.c.l.b16 %v37
  %v171 = vunpack.c.h.b16 %v37
  %v172 = vunpack.c.l.b16 %v38
  %v173 = vunpack.c.h.b16 %v38
  %v174 = vunpack.c.l.b16 %v39
  %v175 = vunpack.c.h.b16 %v39
  %v176 = vunpack.c.l.b16 %v40
  %v177 = vunpack.c.h.b16 %v40
  %v178 = vunpack.c.l.b16 %v41
  %v179 = vunpack.c.h.b16 %v41
  %v180 = vunpack.c.l.b16 %v42
  %v181 = vunpack.c.h.b16 %v42
  %v182 = vunpack.c.l.b16 %v43
  %v183 = vunpack.c.h.b16 %v43
  %v184 = vunpack.c.l.b16 %v44
  %v185 = vunpack.c.h.b16 %v44
  %v186 = vunpack.c.l.b16 %v45
  %v187 = vunpack.c.h.b16 %v45
  %v188 = vunpack.c.l.b16 %v46
  %v189 = vunpack.c.h.b16 %v46
  %v190 = vunpack.c.l.b16 %v47
  %v191 = vunpack.c.h.b16 %v47
  %v192 = vunpack.c.l.b16 %v48
  %v193 = vunpack.c.h.b16 %v48
  %v194 = vunpack.c.l.b16 %v49
  %v195 = vunpack.c.h.b16 %v49
  %v196 = vunpack.c.l.b16 %v50
  %v197 = vunpack.c.h.b16 %v50
  %v198 = vunpack.c.l.b16 %v51
  %v199 = vunpack.c.h.b16 %v51
  %v200 = vunpack.c.l.b16 %v52
  %v201 = vunpack.c.h.b16 %v52
  %v202 = vunpack.c.l.b16 %v53
  %v203 = vunpack.c.h.b16 %v53
  %v204 = vunpack.c.l.b16 %v54
  %v205 = vunpack.c.h.b16 %v54
  %v206 = vunpack.c.l.b16 %v55
  %v207 = vunpack.c.h.b16 %v55
  %v208 = vunpack.c.l.b16 %v56
  %v209 = vunpack.c.h.b16 %v56
  %v210 = vunpack.c.l.b16 %v57
  %v211 = vunpack.c.h.b16 %v57
  %v212 = vunpack.c.l.b16 %v58
  %v213 = vunpack.c.h.b16 %v58
  %v214 = vunpack.c.l.b16 %v59
  %v215 = vunpack.c.h.b16 %v59
  %v216 = vunpack.c.l.b16 %v60
  %v217 = vunpack.c.h.b16 %v60
  %v218 = vunpack.c.l.b16 %v61
  %v219 = vunpack.c.h.b16 %v61
  %v220 = vunpack.c.l.b16 %v62
  %v221 = vunpack.c.h.b16 %v62
  %v222 = vunpack.c.l.b16 %v63
  %v223 = vunpack.c.h.b16 %v63
  %v224 = vunpack.c.l.b16 %v64
  %v225 = vunpack.c.h.b16 %v64
  %v226 = vunpack.c.l.b16 %v65
  %v227 = vunpack.c.h.b16 %v65
  %v228 = vpack.c.b16 %v132, %v128
  %v229 = vpack.c.b16 %v133, %v129
  %v230 = vpack.c.b16 %v134, %v130
  %v231 = vpack.c.b16 %v135, %v131
  %v232 = vpack.c.b16 %v140, %v136
  %v233 = vpack.c.b16 %v141, %v137
  %v234 = vpack.c.b16 %v142, %v138
  %v235 = vpack.c.b16 %v143, %v139
  %v236 = vpack.c.b16 %v148, %v144
  %v237 = vpack.c.b16 %v149, %v145
  %v238 = vpack.c.b16 %v150, %v146
  %v239 = vpack.c.b16 %v151, %v147
  %v240 = vpack.c.b16 %v156, %v152
  %v241 = vpack.c.b16 %v157, %v153
  %v242 = vpack.c.b16 %v158, %v154
  %v243 = vpack.c.b16 %v159, %v155
  %v244 = vpack.c.b16 %v164, %v160
  %v245 = vpack.c.b16 %v165, %v161
  %v246 = vpack.c.b16 %v166, %v162
  %v247 = vpack.c.b16 %v167, %v163
  %v248 = vpack.c.b16 %v172, %v168
  %v249 = vpack.c.b16 %v173, %v169
  %v250 = vpack.c.b16 %v174, %v170
  %v251 = vpack.c.b16 %v175, %v171
  %v252 = vpack.c.b16 %v180, %v176
  %v253 = vpack.c.b16 %v181, %v177
  %v254 = vpack.c.b16 %v182, %v178
  %v255 = vpack.c.b16 %v183, %v179
  %v256 = vpack.c.b16 %v188, %v184
  %v257 = vpack.c.b16 %v189, %v185
  %v258 = vpack.c.b16 %v190, %v186
  %v259 = vpack.c.b16 %v191, %v187
  %v260 = vpack.c.b16 %v196, %v192
  %v261 = vpack.c.b16 %v197, %v193
  %v262 = vpack.c.b16 %v198, %v194
  %v263 = vpack.c.b16 %v199, %v195
  %v264 = vpack.c.b16 %v204, %v200
  %v265 = vpack.c.b16 %v205, %v201
  %v266 = vpack.c.b16 %v206, %v202
  %v267 = vpack.c.b16 %v207, %v203
  %v268 = vpack.c.b16 %v212, %v208
  %v269 = vpack.c.b16 %v213, %v209
  %v270 = vpack.c.b16 %v214, %v210
  %v271 = vpack.c.b16 %v215, %v211
  %v272 = vpack.c.b16 %v220, %v216
  %v273 = vpack.c.b16 %v221, %v217
  %v274 = vpack.c.b16 %v222, %v218
  %v275 = vpack.c.b16 %v223, %v219
  %v276 = vpack.c.b16 %v224, %v224
  %v277 = vpack.c.b16 %v225, %v225
  %v278 = vpack.c.b16 %v226, %v226
  %v279 = vpack.c.b16 %v227, %v227
  %vm328 = vcmask 588800
  %v330 = vsel %vm328, %v76, 0
  %vm332 = vcmask 1043456
  %v334 = vsel %vm332, %v276, 0
  %v337 = vsel %vm332, %v277, 0
  %v340 = vsel %vm332, %v278, 0
  %v343 = vsel %vm332, %v279, 0
  %345 = vmatprep.subr.bf16.mxu0 %v229
  %346 = vmatpush1.bf16.msra.mxu0 %v228
  %347 = vmatprep.subr.bf16.mxu0 %v233
  %348 = vmatpush1.bf16.msra.mxu0 %v232
  %349 = vmatprep.subr.bf16.mxu0 %v237
  %350 = vmatpush1.bf16.msra.mxu0 %v236
  %351 = vmatprep.subr.bf16.mxu0 %v241
  %352 = vmatpush1.bf16.msra.mxu0 %v240
  %353 = vmatprep.subr.bf16.mxu0 %v245
  %354 = vmatpush1.bf16.msra.mxu0 %v244
  %355 = vmatprep.subr.bf16.mxu0 %v249
  %356 = vmatpush1.bf16.msra.mxu0 %v248
  %357 = vmatprep.subr.bf16.mxu0 %v253
  %358 = vmatpush1.bf16.msra.mxu0 %v252
  %359 = vmatprep.subr.bf16.mxu0 %v257
  %360 = vmatpush1.bf16.msra.mxu0 %v256
  %361 = vmatprep.subr.bf16.mxu0 %v261
  %362 = vmatpush1.bf16.msra.mxu0 %v260
  %363 = vmatprep.subr.bf16.mxu0 %v265
  %364 = vmatpush1.bf16.msra.mxu0 %v264
  %365 = vmatprep.subr.bf16.mxu0 %v269
  %366 = vmatpush1.bf16.msra.mxu0 %v268
  %367 = vmatprep.subr.bf16.mxu0 %v273
  %368 = vmatpush1.bf16.msra.mxu0 %v272
  %369 = vmatprep.subr.bf16.mxu0 %v337
  %370 = vmatpush1.bf16.msra.mxu0 %v334
  %371 = vmatprep.subr.bf16.mxu0 0
  %372 = vmatpush1.bf16.msra.mxu0 0
  %373 = vmatprep.subr.bf16.mxu0 0
  %374 = vmatpush1.bf16.msra.mxu0 0
  %375 = vmatprep.subr.bf16.mxu0 0
  %376 = vmatpush1.bf16.msra.mxu0 0
  %377 = vmatprep.mubr.bf16.mxu0 %v330
  %378 = vmatmul.mubr.bf16.gmra.mrb[0].mxu0 %v75
  %v379 = vpop.f32.mrb[0].mxu0
  %v380 = vadd.f32 %v70, %v379
  %v381 = vpop.f32.mrb[0].mxu0
  %v382 = vadd.f32 %v70, %v381
  %v383 = vpop.f32.mrb[0].mxu0
  %v384 = vpop.f32.mrb[0].mxu0
  %385 = vdwg.mxu0
  %386 = vmatprep.subr.bf16.mxu0 %v231
  %387 = vmatpush1.bf16.msra.mxu0 %v230
  %388 = vmatprep.subr.bf16.mxu0 %v235
  %389 = vmatpush1.bf16.msra.mxu0 %v234
  %390 = vmatprep.subr.bf16.mxu0 %v239
  %391 = vmatpush1.bf16.msra.mxu0 %v238
  %392 = vmatprep.subr.bf16.mxu0 %v243
  %393 = vmatpush1.bf16.msra.mxu0 %v242
  %394 = vmatprep.subr.bf16.mxu0 %v247
  %395 = vmatpush1.bf16.msra.mxu0 %v246
  %396 = vmatprep.subr.bf16.mxu0 %v251
  %397 = vmatpush1.bf16.msra.mxu0 %v250
  %398 = vmatprep.subr.bf16.mxu0 %v255
  %399 = vmatpush1.bf16.msra.mxu0 %v254
  %400 = vmatprep.subr.bf16.mxu0 %v259
  %401 = vmatpush1.bf16.msra.mxu0 %v258
  %402 = vmatprep.subr.bf16.mxu0 %v263
  %403 = vmatpush1.bf16.msra.mxu0 %v262
  %404 = vmatprep.subr.bf16.mxu0 %v267
  %405 = vmatpush1.bf16.msra.mxu0 %v266
  %406 = vmatprep.subr.bf16.mxu0 %v271
  %407 = vmatpush1.bf16.msra.mxu0 %v270
  %408 = vmatprep.subr.bf16.mxu0 %v275
  %409 = vmatpush1.bf16.msra.mxu0 %v274
  %410 = vmatprep.subr.bf16.mxu0 %v343
  %411 = vmatpush1.bf16.msra.mxu0 %v340
  %412 = vmatprep.subr.bf16.mxu0 0
  %413 = vmatpush1.bf16.msra.mxu0 0
  %414 = vmatprep.subr.bf16.mxu0 0
  %415 = vmatpush1.bf16.msra.mxu0 0
  %416 = vmatprep.subr.bf16.mxu0 0
  %417 = vmatpush1.bf16.msra.mxu0 0
  %418 = vmatprep.mubr.bf16.mxu0 %v330
  %419 = vmatmul.mubr.bf16.gmra.mrb[0].mxu0 %v75
  %v420 = vpop.f32.mrb[0].mxu0
  %v421 = vadd.f32 %v70, %v420
  %v422 = vpop.f32.mrb[0].mxu0
  %v423 = vadd.f32 %v70, %v422
  %v424 = vpop.f32.mrb[0].mxu0
  %v425 = vpop.f32.mrb[0].mxu0
  %426 = vdwg.mxu0
  %v427 = vadd.f32 %v380, 0.0
  %vm428 = vcmp.ge.f32.partialorder %v427, 0.5
  %v429 = vsel %vm428, 1, 0
  %v430 = vcvt.s32.f32 %v429
  %v431 = vpack.c.bf16 %v430, %v430
  %432 = vst [vmem:[%s3] sm:$0xf] %v431
  %v433 = vsel %vm428, 0.0, %v427
  %v434 = vadd.f32 %v433, %v382
  %vm435 = vcmp.ge.f32.partialorder %v434, 0.5
  %v436 = vsel %vm435, 1, 0
  %v437 = vcvt.s32.f32 %v436
  %v438 = vpack.c.bf16 %v437, %v437
  %439 = vst [vmem:[%s3 + $0x4] sm:$0xf] %v438
  %v440 = vsel %vm435, 0.0, %v434
  %v441 = vadd.f32 %v440, %v421
  %vm442 = vcmp.ge.f32.partialorder %v441, 0.5
  %v443 = vsel %vm442, 1, 0
  %v444 = vcvt.s32.f32 %v443
  %v445 = vpack.c.bf16 %v444, %v444
  %446 = vst [vmem:[%s3 + $0x8] sm:$0xf] %v445
  %v447 = vsel %vm442, 0.0, %v441
  %v448 = vadd.f32 %v447, %v423
  %vm449 = vcmp.ge.f32.partialorder %v448, 0.5
  %v450 = vsel %vm449, 1, 0
  %v451 = vcvt.s32.f32 %v450
  %v452 = vpack.c.bf16 %v451, %v451
  %453 = vst [vmem:[%s3 + $0xc] sm:$0xf] %v452
  // Predicated region
  $region14: #{python_net_forward.6} parent=0 // pred_check
    _
  $region15: #{python_net_forward.6} parent=0 // pred_check_branch
    %455 = sbr.rel (0) target = $region17
  $region16: #{python_net_forward.6} parent=0 // pred_region
    _
  $region17: #{python_net_forward.6} parent=0 // pred_fallthru
    _
  // Predicated region
  $region18: #{python_net_forward.6} parent=0 // pred_check
    _
  $region19: #{python_net_forward.6} parent=0 // pred_check_branch
    %457 = sbr.rel (0) target = $region21
  $region20: #{python_net_forward.6} parent=0 // pred_region
    _
  $region21: #{python_net_forward.6} parent=0 // pred_fallthru
    _

// kernel: python_net_forward.7
$region0: #{python_net_forward.7}
  #allocation0 [shape = 'u32[]', space=smem, size = 0x4, offset = 0x4, fixed_abs, tag = 'smem constant byte address 0x4 - core index']
  #allocation1 [shape = 'u32[144,128]{1,0:T(1,128)}', space=vmem, size = 0x12000, scoped, tag = 'internal scratch']
  %s0 = inlined_call_operand.vmem [shape: bf16[200,128], index: 0, kind: input, shape index: {}]
  %s1 = inlined_call_operand.vmem [shape: bf16[16,200], index: 1, kind: input, shape index: {}]
  %s2 = inlined_call_operand.vmem [shape: f32[16,1], index: 2, kind: input, shape index: {}]
  %s3 = inlined_call_operand.vmem [shape: bf16[16,128], index: 3, kind: output, shape index: {}]
  %s4 = sld [smem:[#allocation0]]
  $region22: #{python_net_forward.7} parent=0
    _
  %s6 = ssub.s32 1, %s4
  %s7 = scalar_select 0, %s6, %s4
  // Predicated region
  $region2: #{python_net_forward.7} parent=0 // pred_check
    _
  $region3: #{python_net_forward.7} parent=0 // pred_check_branch
    %9 = sbr.rel (0) target = $region5
  $region4: #{python_net_forward.7} parent=0 // pred_region
    _
  $region5: #{python_net_forward.7} parent=0 // pred_fallthru
    _
  // Predicated region
  $region6: #{python_net_forward.7} parent=0 // pred_check
    _
  $region7: #{python_net_forward.7} parent=0 // pred_check_branch
    %11 = sbr.rel (0) target = $region9
  $region8: #{python_net_forward.7} parent=0 // pred_region
    _
  $region9: #{python_net_forward.7} parent=0 // pred_fallthru
    _
  // Predicated region
  $region10: #{python_net_forward.7} parent=0 // pred_check
    _
  $region11: #{python_net_forward.7} parent=0 // pred_check_branch
    %13 = sbr.rel (0) target = $region13
  $region12: #{python_net_forward.7} parent=0 // pred_region
    _
  $region13: #{python_net_forward.7} parent=0 // pred_fallthru
    _
  %v15 = vld [vmem:[%s1] sm:$0xff]
  %v16 = vld [vmem:[%s1 + $0x8] sm:$0xff]
  %v17 = vld [vmem:[%s0] sm:$0xf]
  %v18 = vld [vmem:[%s0 + $0x4] sm:$0xf]
  %v19 = vld [vmem:[%s0 + $0x8] sm:$0xf]
  %v20 = vld [vmem:[%s0 + $0xc] sm:$0xf]
  %v21 = vld [vmem:[%s0 + $0x10] sm:$0xf]
  %v22 = vld [vmem:[%s0 + $0x14] sm:$0xf]
  %v23 = vld [vmem:[%s0 + $0x18] sm:$0xf]
  %v24 = vld [vmem:[%s0 + $0x1c] sm:$0xf]
  %v25 = vld [vmem:[%s0 + $0x20] sm:$0xf]
  %v26 = vld [vmem:[%s0 + $0x24] sm:$0xf]
  %v27 = vld [vmem:[%s0 + $0x28] sm:$0xf]
  %v28 = vld [vmem:[%s0 + $0x2c] sm:$0xf]
  %v29 = vld [vmem:[%s0 + $0x30] sm:$0xf]
  %v30 = vld [vmem:[%s0 + $0x34] sm:$0xf]
  %v31 = vld [vmem:[%s0 + $0x38] sm:$0xf]
  %v32 = vld [vmem:[%s0 + $0x3c] sm:$0xf]
  %v33 = vld [vmem:[%s0 + $0x40] sm:$0xf]
  %v34 = vld [vmem:[%s0 + $0x44] sm:$0xf]
  %v35 = vld [vmem:[%s0 + $0x48] sm:$0xf]
  %v36 = vld [vmem:[%s0 + $0x4c] sm:$0xf]
  %v37 = vld [vmem:[%s0 + $0x50] sm:$0xf]
  %v38 = vld [vmem:[%s0 + $0x54] sm:$0xf]
  %v39 = vld [vmem:[%s0 + $0x58] sm:$0xf]
  %v40 = vld [vmem:[%s0 + $0x5c] sm:$0xf]
  %v41 = vld [vmem:[%s0 + $0x60] sm:$0xf]
  %v42 = vld [vmem:[%s2] sm:$0xff]
  %v43 = vld [vmem:[%s2 + $0x8] sm:$0xff]
  %45 = vset.pattern.permute.xlu0 0
  %46 = vperm.xlu0 %45, %v42
  %v47 = vpop.permute.xlu0 %46
  %50 = vset.pattern.permute.xlu0 0
  %51 = vperm.xlu0 %50, %v43
  %v52 = vpop.permute.xlu0 %51
  %v56 = vunpack.c.l.b16 %v15
  %v57 = vunpack.c.h.b16 %v15
  %v58 = vunpack.c.l.b16 %v16
  %v59 = vunpack.c.h.b16 %v16
  %v60 = vpack.c.b16 %v58, %v56
  %v61 = vpack.c.b16 %v59, %v57
  %v88 = vunpack.c.l.b16 %v17
  %v89 = vunpack.c.l.b16 %v18
  %v90 = vunpack.c.l.b16 %v19
  %v91 = vunpack.c.l.b16 %v20
  %v92 = vunpack.c.l.b16 %v21
  %v93 = vunpack.c.l.b16 %v22
  %v94 = vunpack.c.l.b16 %v23
  %v95 = vunpack.c.l.b16 %v24
  %v96 = vunpack.c.l.b16 %v25
  %v97 = vunpack.c.l.b16 %v26
  %v98 = vunpack.c.l.b16 %v27
  %v99 = vunpack.c.l.b16 %v28
  %v100 = vunpack.c.l.b16 %v29
  %v101 = vunpack.c.l.b16 %v30
  %v102 = vunpack.c.l.b16 %v31
  %v103 = vunpack.c.l.b16 %v32
  %v104 = vunpack.c.l.b16 %v33
  %v105 = vunpack.c.l.b16 %v34
  %v106 = vunpack.c.l.b16 %v35
  %v107 = vunpack.c.l.b16 %v36
  %v108 = vunpack.c.l.b16 %v37
  %v109 = vunpack.c.l.b16 %v38
  %v110 = vunpack.c.l.b16 %v39
  %v111 = vunpack.c.l.b16 %v40
  %v112 = vunpack.c.l.b16 %v41
  %v113 = vpack.c.b16 %v89, %v88
  %v114 = vpack.c.b16 %v91, %v90
  %v115 = vpack.c.b16 %v93, %v92
  %v116 = vpack.c.b16 %v95, %v94
  %v117 = vpack.c.b16 %v97, %v96
  %v118 = vpack.c.b16 %v99, %v98
  %v119 = vpack.c.b16 %v101, %v100
  %v120 = vpack.c.b16 %v103, %v102
  %v121 = vpack.c.b16 %v105, %v104
  %v122 = vpack.c.b16 %v107, %v106
  %v123 = vpack.c.b16 %v109, %v108
  %v124 = vpack.c.b16 %v111, %v110
  %v125 = vpack.c.b16 %v112, %v112
  %vm138 = vcmask 588800
  %v140 = vsel %vm138, %v61, 0
  %vm142 = vcmask 1043456
  %v144 = vsel %vm142, %v125, 0
  %146 = vmatprep.subr.bf16.mxu0 0
  %147 = vmatpush1.bf16.msra.mxu0 %v113
  %148 = vmatprep.subr.bf16.mxu0 0
  %149 = vmatpush1.bf16.msra.mxu0 %v114
  %150 = vmatprep.subr.bf16.mxu0 0
  %151 = vmatpush1.bf16.msra.mxu0 %v115
  %152 = vmatprep.subr.bf16.mxu0 0
  %153 = vmatpush1.bf16.msra.mxu0 %v116
  %154 = vmatprep.subr.bf16.mxu0 0
  %155 = vmatpush1.bf16.msra.mxu0 %v117
  %156 = vmatprep.subr.bf16.mxu0 0
  %157 = vmatpush1.bf16.msra.mxu0 %v118
  %158 = vmatprep.subr.bf16.mxu0 0
  %159 = vmatpush1.bf16.msra.mxu0 %v119
  %160 = vmatprep.subr.bf16.mxu0 0
  %161 = vmatpush1.bf16.msra.mxu0 %v120
  %162 = vmatprep.subr.bf16.mxu0 0
  %163 = vmatpush1.bf16.msra.mxu0 %v121
  %164 = vmatprep.subr.bf16.mxu0 0
  %165 = vmatpush1.bf16.msra.mxu0 %v122
  %166 = vmatprep.subr.bf16.mxu0 0
  %167 = vmatpush1.bf16.msra.mxu0 %v123
  %168 = vmatprep.subr.bf16.mxu0 0
  %169 = vmatpush1.bf16.msra.mxu0 %v124
  %170 = vmatprep.subr.bf16.mxu0 0
  %171 = vmatpush1.bf16.msra.mxu0 %v144
  %172 = vmatprep.subr.bf16.mxu0 0
  %173 = vmatpush1.bf16.msra.mxu0 0
  %174 = vmatprep.subr.bf16.mxu0 0
  %175 = vmatpush1.bf16.msra.mxu0 0
  %176 = vmatprep.subr.bf16.mxu0 0
  %177 = vmatpush1.bf16.msra.mxu0 0
  %178 = vmatprep.mubr.bf16.mxu0 %v140
  %179 = vmatmul.mubr.bf16.gmra.mrb[0].mxu0 %v60
  %v180 = vpop.f32.mrb[0].mxu0
  %v181 = vadd.f32 %v47, %v180
  %v182 = vpop.f32.mrb[0].mxu0
  %v183 = vpop.f32.mrb[0].mxu0
  %v184 = vadd.f32 %v52, %v183
  %v185 = vpop.f32.mrb[0].mxu0
  %186 = vdwg.mxu0
  %v187 = vadd.f32 %v181, 0.0
  %v188 = vadd.f32 %v184, 0.0
  %vm189 = vcmp.ge.f32.partialorder %v187, 0.5
  %vm190 = vcmp.ge.f32.partialorder %v188, 0.5
  %v191 = vsel %vm189, 1, 0
  %v192 = vsel %vm190, 1, 0
  %v193 = vcvt.s32.f32 %v191
  %v194 = vcvt.s32.f32 %v192
  %v195 = vpack.c.bf16 %v194, %v193
  %v197 = vunpack.c.l.b16 %v195
  %v198 = vunpack.c.h.b16 %v195
  %v199 = vpack.c.b16 %v197, %v197
  %v200 = vpack.c.b16 %v198, %v198
  %vm203 = vcmask 257024
  %204 = vst.msk [vmem:[%s3] sm:$0xf] %vm203, %v199
  %205 = vst.msk [vmem:[%s3 + $0x4] sm:$0xf] %vm203, %v200
  %v206 = vsel %vm189, 0.0, %v187
  %v207 = vsel %vm190, 0.0, %v188
  %210 = vrot.lane.b32.xlu0 %v181, 96
  %v211 = vpop.permute.xlu0 %210
  %212 = vrot.lane.b32.xlu0 %v184, 96
  %v213 = vpop.permute.xlu0 %212
  %v216 = vadd.f32 %v206, %v211
  %v217 = vadd.f32 %v207, %v213
  %vm218 = vcmp.ge.f32.partialorder %v216, 0.5
  %vm219 = vcmp.ge.f32.partialorder %v217, 0.5
  %v220 = vsel %vm218, 1, 0
  %v221 = vsel %vm219, 1, 0
  %v222 = vcvt.s32.f32 %v220
  %v223 = vcvt.s32.f32 %v221
  %v224 = vpack.c.bf16 %v223, %v222
  %v226 = vunpack.c.l.b16 %v224
  %v227 = vunpack.c.h.b16 %v224
  %v228 = vpack.c.b16 %v226, %v226
  %v229 = vpack.c.b16 %v227, %v227
  %230 = vrot.lane.b32.xlu0 %v228, 32
  %v231 = vpop.permute.xlu0 %230
  %232 = vrot.lane.b32.xlu0 %v229, 32
  %v233 = vpop.permute.xlu0 %232
  %vm236 = vcmask 519424
  %237 = vst.msk [vmem:[%s3] sm:$0xf] %vm236, %v231
  %238 = vst.msk [vmem:[%s3 + $0x4] sm:$0xf] %vm236, %v233
  %v239 = vsel %vm218, 0.0, %v216
  %v240 = vsel %vm219, 0.0, %v217
  %241 = vrot.lane.b32.xlu0 %v181, 64
  %v242 = vpop.permute.xlu0 %241
  %243 = vrot.lane.b32.xlu0 %v184, 64
  %v244 = vpop.permute.xlu0 %243
  %v247 = vadd.f32 %v239, %v242
  %v248 = vadd.f32 %v240, %v244
  %vm249 = vcmp.ge.f32.partialorder %v247, 0.5
  %vm250 = vcmp.ge.f32.partialorder %v248, 0.5
  %v251 = vsel %vm249, 1, 0
  %v252 = vsel %vm250, 1, 0
  %v253 = vcvt.s32.f32 %v251
  %v254 = vcvt.s32.f32 %v252
  %v255 = vpack.c.bf16 %v254, %v253
  %v257 = vunpack.c.l.b16 %v255
  %v258 = vunpack.c.h.b16 %v255
  %v259 = vpack.c.b16 %v257, %v257
  %v260 = vpack.c.b16 %v258, %v258
  %261 = vrot.lane.b32.xlu0 %v259, 64
  %v262 = vpop.permute.xlu0 %261
  %263 = vrot.lane.b32.xlu0 %v260, 64
  %v264 = vpop.permute.xlu0 %263
  %vm267 = vcmask 781824
  %268 = vst.msk [vmem:[%s3] sm:$0xf] %vm267, %v262
  %269 = vst.msk [vmem:[%s3 + $0x4] sm:$0xf] %vm267, %v264
  %v270 = vsel %vm249, 0.0, %v247
  %v271 = vsel %vm250, 0.0, %v248
  %272 = vrot.lane.b32.xlu0 %v181, 32
  %v273 = vpop.permute.xlu0 %272
  %274 = vrot.lane.b32.xlu0 %v184, 32
  %v275 = vpop.permute.xlu0 %274
  %v278 = vadd.f32 %v270, %v273
  %v279 = vadd.f32 %v271, %v275
  %vm280 = vcmp.ge.f32.partialorder %v278, 0.5
  %vm281 = vcmp.ge.f32.partialorder %v279, 0.5
  %v282 = vsel %vm280, 1, 0
  %v283 = vsel %vm281, 1, 0
  %v284 = vcvt.s32.f32 %v282
  %v285 = vcvt.s32.f32 %v283
  %v286 = vpack.c.bf16 %v285, %v284
  %v288 = vunpack.c.l.b16 %v286
  %v289 = vunpack.c.h.b16 %v286
  %v290 = vpack.c.b16 %v288, %v288
  %v291 = vpack.c.b16 %v289, %v289
  %292 = vrot.lane.b32.xlu0 %v290, 96
  %v293 = vpop.permute.xlu0 %292
  %294 = vrot.lane.b32.xlu0 %v291, 96
  %v295 = vpop.permute.xlu0 %294
  %vm298 = vcmask 1044224
  %299 = vst.msk [vmem:[%s3] sm:$0xf] %vm298, %v293
  %300 = vst.msk [vmem:[%s3 + $0x4] sm:$0xf] %vm298, %v295
  // Predicated region
  $region14: #{python_net_forward.7} parent=0 // pred_check
    _
  $region15: #{python_net_forward.7} parent=0 // pred_check_branch
    %302 = sbr.rel (0) target = $region17
  $region16: #{python_net_forward.7} parent=0 // pred_region
    _
  $region17: #{python_net_forward.7} parent=0 // pred_fallthru
    _
  // Predicated region
  $region18: #{python_net_forward.7} parent=0 // pred_check
    _
  $region19: #{python_net_forward.7} parent=0 // pred_check_branch
    %304 = sbr.rel (0) target = $region21
  $region20: #{python_net_forward.7} parent=0 // pred_region
    _
  $region21: #{python_net_forward.7} parent=0 // pred_fallthru
    _

// kernel: python_net_forward.8
$region0: #{python_net_forward.8}
  #allocation0 [shape = 'u32[]', space=smem, size = 0x4, offset = 0x4, fixed_abs, tag = 'smem constant byte address 0x4 - core index']
  #allocation1 [shape = 'u32[144,128]{1,0:T(1,128)}', space=vmem, size = 0x12000, scoped, tag = 'internal scratch']
  %s0 = inlined_call_operand.vmem [shape: bf16[400,128], index: 0, kind: input, shape index: {}]
  %s1 = inlined_call_operand.vmem [shape: bf16[16,400], index: 1, kind: input, shape index: {}]
  %s2 = inlined_call_operand.vmem [shape: f32[16,1], index: 2, kind: input, shape index: {}]
  %s3 = inlined_call_operand.vmem [shape: bf16[16,128], index: 3, kind: output, shape index: {}]
  %s4 = sld [smem:[#allocation0]]
  $region22: #{python_net_forward.8} parent=0
    _
  %s6 = ssub.s32 1, %s4
  %s7 = scalar_select 0, %s6, %s4
  // Predicated region
  $region2: #{python_net_forward.8} parent=0 // pred_check
    _
  $region3: #{python_net_forward.8} parent=0 // pred_check_branch
    %9 = sbr.rel (0) target = $region5
  $region4: #{python_net_forward.8} parent=0 // pred_region
    _
  $region5: #{python_net_forward.8} parent=0 // pred_fallthru
    _
  // Predicated region
  $region6: #{python_net_forward.8} parent=0 // pred_check
    _
  $region7: #{python_net_forward.8} parent=0 // pred_check_branch
    %11 = sbr.rel (0) target = $region9
  $region8: #{python_net_forward.8} parent=0 // pred_region
    _
  $region9: #{python_net_forward.8} parent=0 // pred_fallthru
    _
  // Predicated region
  $region10: #{python_net_forward.8} parent=0 // pred_check
    _
  $region11: #{python_net_forward.8} parent=0 // pred_check_branch
    %13 = sbr.rel (0) target = $region13
  $region12: #{python_net_forward.8} parent=0 // pred_region
    _
  $region13: #{python_net_forward.8} parent=0 // pred_fallthru
    _
  %v15 = vld [vmem:[%s1] sm:$0xff]
  %v16 = vld [vmem:[%s1 + $0x8] sm:$0xff]
  %v17 = vld [vmem:[%s1 + $0x10] sm:$0xff]
  %v18 = vld [vmem:[%s1 + $0x18] sm:$0xff]
  %v19 = vld [vmem:[%s0] sm:$0xf]
  %v20 = vld [vmem:[%s0 + $0x4] sm:$0xf]
  %v21 = vld [vmem:[%s0 + $0x8] sm:$0xf]
  %v22 = vld [vmem:[%s0 + $0xc] sm:$0xf]
  %v23 = vld [vmem:[%s0 + $0x10] sm:$0xf]
  %v24 = vld [vmem:[%s0 + $0x14] sm:$0xf]
  %v25 = vld [vmem:[%s0 + $0x18] sm:$0xf]
  %v26 = vld [vmem:[%s0 + $0x1c] sm:$0xf]
  %v27 = vld [vmem:[%s0 + $0x20] sm:$0xf]
  %v28 = vld [vmem:[%s0 + $0x24] sm:$0xf]
  %v29 = vld [vmem:[%s0 + $0x28] sm:$0xf]
  %v30 = vld [vmem:[%s0 + $0x2c] sm:$0xf]
  %v31 = vld [vmem:[%s0 + $0x30] sm:$0xf]
  %v32 = vld [vmem:[%s0 + $0x34] sm:$0xf]
  %v33 = vld [vmem:[%s0 + $0x38] sm:$0xf]
  %v34 = vld [vmem:[%s0 + $0x3c] sm:$0xf]
  %v35 = vld [vmem:[%s0 + $0x40] sm:$0xf]
  %v36 = vld [vmem:[%s0 + $0x44] sm:$0xf]
  %v37 = vld [vmem:[%s0 + $0x48] sm:$0xf]
  %v38 = vld [vmem:[%s0 + $0x4c] sm:$0xf]
  %v39 = vld [vmem:[%s0 + $0x50] sm:$0xf]
  %v40 = vld [vmem:[%s0 + $0x54] sm:$0xf]
  %v41 = vld [vmem:[%s0 + $0x58] sm:$0xf]
  %v42 = vld [vmem:[%s0 + $0x5c] sm:$0xf]
  %v43 = vld [vmem:[%s0 + $0x60] sm:$0xf]
  %v44 = vld [vmem:[%s0 + $0x64] sm:$0xf]
  %v45 = vld [vmem:[%s0 + $0x68] sm:$0xf]
  %v46 = vld [vmem:[%s0 + $0x6c] sm:$0xf]
  %v47 = vld [vmem:[%s0 + $0x70] sm:$0xf]
  %v48 = vld [vmem:[%s0 + $0x74] sm:$0xf]
  %v49 = vld [vmem:[%s0 + $0x78] sm:$0xf]
  %v50 = vld [vmem:[%s0 + $0x7c] sm:$0xf]
  %v51 = vld [vmem:[%s0 + $0x80] sm:$0xf]
  %v52 = vld [vmem:[%s0 + $0x84] sm:$0xf]
  %v53 = vld [vmem:[%s0 + $0x88] sm:$0xf]
  %v54 = vld [vmem:[%s0 + $0x8c] sm:$0xf]
  %v55 = vld [vmem:[%s0 + $0x90] sm:$0xf]
  %v56 = vld [vmem:[%s0 + $0x94] sm:$0xf]
  %v57 = vld [vmem:[%s0 + $0x98] sm:$0xf]
  %v58 = vld [vmem:[%s0 + $0x9c] sm:$0xf]
  %v59 = vld [vmem:[%s0 + $0xa0] sm:$0xf]
  %v60 = vld [vmem:[%s0 + $0xa4] sm:$0xf]
  %v61 = vld [vmem:[%s0 + $0xa8] sm:$0xf]
  %v62 = vld [vmem:[%s0 + $0xac] sm:$0xf]
  %v63 = vld [vmem:[%s0 + $0xb0] sm:$0xf]
  %v64 = vld [vmem:[%s0 + $0xb4] sm:$0xf]
  %v65 = vld [vmem:[%s0 + $0xb8] sm:$0xf]
  %v66 = vld [vmem:[%s0 + $0xbc] sm:$0xf]
  %v67 = vld [vmem:[%s0 + $0xc0] sm:$0xf]
  %v68 = vld [vmem:[%s0 + $0xc4] sm:$0xf]
  %v69 = vld [vmem:[%s2] sm:$0xff]
  %v70 = vld [vmem:[%s2 + $0x8] sm:$0xff]
  %72 = vset.pattern.permute.xlu0 0
  %73 = vperm.xlu0 %72, %v69
  %v74 = vpop.permute.xlu0 %73
  %77 = vset.pattern.permute.xlu0 0
  %78 = vperm.xlu0 %77, %v70
  %v79 = vpop.permute.xlu0 %78
  %v85 = vunpack.c.l.b16 %v15
  %v86 = vunpack.c.h.b16 %v15
  %v87 = vunpack.c.l.b16 %v16
  %v88 = vunpack.c.h.b16 %v16
  %v89 = vunpack.c.l.b16 %v17
  %v90 = vunpack.c.h.b16 %v17
  %v91 = vunpack.c.l.b16 %v18
  %v92 = vunpack.c.h.b16 %v18
  %v93 = vpack.c.b16 %v89, %v85
  %v94 = vpack.c.b16 %v90, %v86
  %v95 = vpack.c.b16 %v91, %v87
  %v96 = vpack.c.b16 %v92, %v88
  %v150 = vunpack.c.l.b16 %v19
  %v151 = vunpack.c.l.b16 %v20
  %v152 = vunpack.c.l.b16 %v21
  %v153 = vunpack.c.l.b16 %v22
  %v154 = vunpack.c.l.b16 %v23
  %v155 = vunpack.c.l.b16 %v24
  %v156 = vunpack.c.l.b16 %v25
  %v157 = vunpack.c.l.b16 %v26
  %v158 = vunpack.c.l.b16 %v27
  %v159 = vunpack.c.l.b16 %v28
  %v160 = vunpack.c.l.b16 %v29
  %v161 = vunpack.c.l.b16 %v30
  %v162 = vunpack.c.l.b16 %v31
  %v163 = vunpack.c.l.b16 %v32
  %v164 = vunpack.c.l.b16 %v33
  %v165 = vunpack.c.l.b16 %v34
  %v166 = vunpack.c.l.b16 %v35
  %v167 = vunpack.c.l.b16 %v36
  %v168 = vunpack.c.l.b16 %v37
  %v169 = vunpack.c.l.b16 %v38
  %v170 = vunpack.c.l.b16 %v39
  %v171 = vunpack.c.l.b16 %v40
  %v172 = vunpack.c.l.b16 %v41
  %v173 = vunpack.c.l.b16 %v42
  %v174 = vunpack.c.l.b16 %v43
  %v175 = vunpack.c.l.b16 %v44
  %v176 = vunpack.c.l.b16 %v45
  %v177 = vunpack.c.l.b16 %v46
  %v178 = vunpack.c.l.b16 %v47
  %v179 = vunpack.c.l.b16 %v48
  %v180 = vunpack.c.l.b16 %v49
  %v181 = vunpack.c.l.b16 %v50
  %v182 = vunpack.c.l.b16 %v51
  %v183 = vunpack.c.l.b16 %v52
  %v184 = vunpack.c.l.b16 %v53
  %v185 = vunpack.c.l.b16 %v54
  %v186 = vunpack.c.l.b16 %v55
  %v187 = vunpack.c.l.b16 %v56
  %v188 = vunpack.c.l.b16 %v57
  %v189 = vunpack.c.l.b16 %v58
  %v190 = vunpack.c.l.b16 %v59
  %v191 = vunpack.c.l.b16 %v60
  %v192 = vunpack.c.l.b16 %v61
  %v193 = vunpack.c.l.b16 %v62
  %v194 = vunpack.c.l.b16 %v63
  %v195 = vunpack.c.l.b16 %v64
  %v196 = vunpack.c.l.b16 %v65
  %v197 = vunpack.c.l.b16 %v66
  %v198 = vunpack.c.l.b16 %v67
  %v199 = vunpack.c.l.b16 %v68
  %v200 = vpack.c.b16 %v151, %v150
  %v201 = vpack.c.b16 %v153, %v152
  %v202 = vpack.c.b16 %v155, %v154
  %v203 = vpack.c.b16 %v157, %v156
  %v204 = vpack.c.b16 %v159, %v158
  %v205 = vpack.c.b16 %v161, %v160
  %v206 = vpack.c.b16 %v163, %v162
  %v207 = vpack.c.b16 %v165, %v164
  %v208 = vpack.c.b16 %v167, %v166
  %v209 = vpack.c.b16 %v169, %v168
  %v210 = vpack.c.b16 %v171, %v170
  %v211 = vpack.c.b16 %v173, %v172
  %v212 = vpack.c.b16 %v175, %v174
  %v213 = vpack.c.b16 %v177, %v176
  %v214 = vpack.c.b16 %v179, %v178
  %v215 = vpack.c.b16 %v181, %v180
  %v216 = vpack.c.b16 %v183, %v182
  %v217 = vpack.c.b16 %v185, %v184
  %v218 = vpack.c.b16 %v187, %v186
  %v219 = vpack.c.b16 %v189, %v188
  %v220 = vpack.c.b16 %v191, %v190
  %v221 = vpack.c.b16 %v193, %v192
  %v222 = vpack.c.b16 %v195, %v194
  %v223 = vpack.c.b16 %v197, %v196
  %v224 = vpack.c.b16 %v199, %v198
  %vm250 = vcmask 130048
  %v252 = vsel %vm250, %v96, 0
  %254 = vmatprep.subr.bf16.mxu0 0
  %255 = vmatpush1.bf16.msra.mxu0 %v200
  %256 = vmatprep.subr.bf16.mxu0 0
  %257 = vmatpush1.bf16.msra.mxu0 %v201
  %258 = vmatprep.subr.bf16.mxu0 0
  %259 = vmatpush1.bf16.msra.mxu0 %v202
  %260 = vmatprep.subr.bf16.mxu0 0
  %261 = vmatpush1.bf16.msra.mxu0 %v203
  %262 = vmatprep.subr.bf16.mxu0 0
  %263 = vmatpush1.bf16.msra.mxu0 %v204
  %264 = vmatprep.subr.bf16.mxu0 0
  %265 = vmatpush1.bf16.msra.mxu0 %v205
  %266 = vmatprep.subr.bf16.mxu0 0
  %267 = vmatpush1.bf16.msra.mxu0 %v206
  %268 = vmatprep.subr.bf16.mxu0 0
  %269 = vmatpush1.bf16.msra.mxu0 %v207
  %270 = vmatprep.subr.bf16.mxu0 0
  %271 = vmatpush1.bf16.msra.mxu0 %v208
  %272 = vmatprep.subr.bf16.mxu0 0
  %273 = vmatpush1.bf16.msra.mxu0 %v209
  %274 = vmatprep.subr.bf16.mxu0 0
  %275 = vmatpush1.bf16.msra.mxu0 %v210
  %276 = vmatprep.subr.bf16.mxu0 0
  %277 = vmatpush1.bf16.msra.mxu0 %v211
  %278 = vmatprep.subr.bf16.mxu0 0
  %279 = vmatpush1.bf16.msra.mxu0 %v212
  %280 = vmatprep.subr.bf16.mxu0 0
  %281 = vmatpush1.bf16.msra.mxu0 %v213
  %282 = vmatprep.subr.bf16.mxu0 0
  %283 = vmatpush1.bf16.msra.mxu0 %v214
  %284 = vmatprep.subr.bf16.mxu0 0
  %285 = vmatpush1.bf16.msra.mxu0 %v215
  %286 = vmatprep.mubr.bf16.mxu0 %v94
  %287 = vmatmul.mubr.bf16.gmra.mrb[0].mxu0 %v93
  %v288 = vpop.f32.mrb[0].mxu0
  %v289 = vadd.f32 %v74, %v288
  %v290 = vpop.f32.mrb[0].mxu0
  %v291 = vpop.f32.mrb[0].mxu0
  %v292 = vadd.f32 %v79, %v291
  %v293 = vpop.f32.mrb[0].mxu0
  %294 = vdwg.mxu0
  %295 = vmatprep.subr.bf16.mxu0 0
  %296 = vmatpush1.bf16.msra.mxu0 %v216
  %297 = vmatprep.subr.bf16.mxu0 0
  %298 = vmatpush1.bf16.msra.mxu0 %v217
  %299 = vmatprep.subr.bf16.mxu0 0
  %300 = vmatpush1.bf16.msra.mxu0 %v218
  %301 = vmatprep.subr.bf16.mxu0 0
  %302 = vmatpush1.bf16.msra.mxu0 %v219
  %303 = vmatprep.subr.bf16.mxu0 0
  %304 = vmatpush1.bf16.msra.mxu0 %v220
  %305 = vmatprep.subr.bf16.mxu0 0
  %306 = vmatpush1.bf16.msra.mxu0 %v221
  %307 = vmatprep.subr.bf16.mxu0 0
  %308 = vmatpush1.bf16.msra.mxu0 %v222
  %309 = vmatprep.subr.bf16.mxu0 0
  %310 = vmatpush1.bf16.msra.mxu0 %v223
  %311 = vmatprep.subr.bf16.mxu0 0
  %312 = vmatpush1.bf16.msra.mxu0 %v224
  %313 = vmatprep.subr.bf16.mxu0 0
  %314 = vmatpush1.bf16.msra.mxu0 0
  %315 = vmatprep.subr.bf16.mxu0 0
  %316 = vmatpush1.bf16.msra.mxu0 0
  %317 = vmatprep.subr.bf16.mxu0 0
  %318 = vmatpush1.bf16.msra.mxu0 0
  %319 = vmatprep.subr.bf16.mxu0 0
  %320 = vmatpush1.bf16.msra.mxu0 0
  %321 = vmatprep.subr.bf16.mxu0 0
  %322 = vmatpush1.bf16.msra.mxu0 0
  %323 = vmatprep.subr.bf16.mxu0 0
  %324 = vmatpush1.bf16.msra.mxu0 0
  %325 = vmatprep.subr.bf16.mxu0 0
  %326 = vmatpush1.bf16.msra.mxu0 0
  %327 = vmatprep.mubr.bf16.mxu0 %v252
  %328 = vmatmul.mubr.bf16.gmra.mrb[0].mxu0 %v95
  %v329 = vpop.f32.mrb[0].mxu0
  %v330 = vadd.f32 %v289, %v329
  %v331 = vpop.f32.mrb[0].mxu0
  %v332 = vpop.f32.mrb[0].mxu0
  %v333 = vadd.f32 %v292, %v332
  %v334 = vpop.f32.mrb[0].mxu0
  %335 = vdwg.mxu0
  %v336 = vadd.f32 %v330, 0.0
  %v337 = vadd.f32 %v333, 0.0
  %vm338 = vcmp.ge.f32.partialorder %v336, 0.5
  %vm339 = vcmp.ge.f32.partialorder %v337, 0.5
  %v340 = vsel %vm338, 1, 0
  %v341 = vsel %vm339, 1, 0
  %v342 = vcvt.s32.f32 %v340
  %v343 = vcvt.s32.f32 %v341
  %v344 = vpack.c.bf16 %v343, %v342
  %v346 = vunpack.c.l.b16 %v344
  %v347 = vunpack.c.h.b16 %v344
  %v348 = vpack.c.b16 %v346, %v346
  %v349 = vpack.c.b16 %v347, %v347
  %vm352 = vcmask 257024
  %353 = vst.msk [vmem:[%s3] sm:$0xf] %vm352, %v348
  %354 = vst.msk [vmem:[%s3 + $0x4] sm:$0xf] %vm352, %v349
  %v355 = vsel %vm338, 0.0, %v336
  %v356 = vsel %vm339, 0.0, %v337
  %359 = vrot.lane.b32.xlu0 %v330, 96
  %v360 = vpop.permute.xlu0 %359
  %361 = vrot.lane.b32.xlu0 %v333, 96
  %v362 = vpop.permute.xlu0 %361
  %v365 = vadd.f32 %v355, %v360
  %v366 = vadd.f32 %v356, %v362
  %vm367 = vcmp.ge.f32.partialorder %v365, 0.5
  %vm368 = vcmp.ge.f32.partialorder %v366, 0.5
  %v369 = vsel %vm367, 1, 0
  %v370 = vsel %vm368, 1, 0
  %v371 = vcvt.s32.f32 %v369
  %v372 = vcvt.s32.f32 %v370
  %v373 = vpack.c.bf16 %v372, %v371
  %v375 = vunpack.c.l.b16 %v373
  %v376 = vunpack.c.h.b16 %v373
  %v377 = vpack.c.b16 %v375, %v375
  %v378 = vpack.c.b16 %v376, %v376
  %379 = vrot.lane.b32.xlu0 %v377, 32
  %v380 = vpop.permute.xlu0 %379
  %381 = vrot.lane.b32.xlu0 %v378, 32
  %v382 = vpop.permute.xlu0 %381
  %vm385 = vcmask 519424
  %386 = vst.msk [vmem:[%s3] sm:$0xf] %vm385, %v380
  %387 = vst.msk [vmem:[%s3 + $0x4] sm:$0xf] %vm385, %v382
  %v388 = vsel %vm367, 0.0, %v365
  %v389 = vsel %vm368, 0.0, %v366
  %390 = vrot.lane.b32.xlu0 %v330, 64
  %v391 = vpop.permute.xlu0 %390
  %392 = vrot.lane.b32.xlu0 %v333, 64
  %v393 = vpop.permute.xlu0 %392
  %v396 = vadd.f32 %v388, %v391
  %v397 = vadd.f32 %v389, %v393
  %vm398 = vcmp.ge.f32.partialorder %v396, 0.5
  %vm399 = vcmp.ge.f32.partialorder %v397, 0.5
  %v400 = vsel %vm398, 1, 0
  %v401 = vsel %vm399, 1, 0
  %v402 = vcvt.s32.f32 %v400
  %v403 = vcvt.s32.f32 %v401
  %v404 = vpack.c.bf16 %v403, %v402
  %v406 = vunpack.c.l.b16 %v404
  %v407 = vunpack.c.h.b16 %v404
  %v408 = vpack.c.b16 %v406, %v406
  %v409 = vpack.c.b16 %v407, %v407
  %410 = vrot.lane.b32.xlu0 %v408, 64
  %v411 = vpop.permute.xlu0 %410
  %412 = vrot.lane.b32.xlu0 %v409, 64
  %v413 = vpop.permute.xlu0 %412
  %vm416 = vcmask 781824
  %417 = vst.msk [vmem:[%s3] sm:$0xf] %vm416, %v411
  %418 = vst.msk [vmem:[%s3 + $0x4] sm:$0xf] %vm416, %v413
  %v419 = vsel %vm398, 0.0, %v396
  %v420 = vsel %vm399, 0.0, %v397
  %421 = vrot.lane.b32.xlu0 %v330, 32
  %v422 = vpop.permute.xlu0 %421
  %423 = vrot.lane.b32.xlu0 %v333, 32
  %v424 = vpop.permute.xlu0 %423
  %v427 = vadd.f32 %v419, %v422
  %v428 = vadd.f32 %v420, %v424
  %vm429 = vcmp.ge.f32.partialorder %v427, 0.5
  %vm430 = vcmp.ge.f32.partialorder %v428, 0.5
  %v431 = vsel %vm429, 1, 0
  %v432 = vsel %vm430, 1, 0
  %v433 = vcvt.s32.f32 %v431
  %v434 = vcvt.s32.f32 %v432
  %v435 = vpack.c.bf16 %v434, %v433
  %v437 = vunpack.c.l.b16 %v435
  %v438 = vunpack.c.h.b16 %v435
  %v439 = vpack.c.b16 %v437, %v437
  %v440 = vpack.c.b16 %v438, %v438
  %441 = vrot.lane.b32.xlu0 %v439, 96
  %v442 = vpop.permute.xlu0 %441
  %443 = vrot.lane.b32.xlu0 %v440, 96
  %v444 = vpop.permute.xlu0 %443
  %vm447 = vcmask 1044224
  %448 = vst.msk [vmem:[%s3] sm:$0xf] %vm447, %v442
  %449 = vst.msk [vmem:[%s3 + $0x4] sm:$0xf] %vm447, %v444
  // Predicated region
  $region14: #{python_net_forward.8} parent=0 // pred_check
    _
  $region15: #{python_net_forward.8} parent=0 // pred_check_branch
    %451 = sbr.rel (0) target = $region17
  $region16: #{python_net_forward.8} parent=0 // pred_region
    _
  $region17: #{python_net_forward.8} parent=0 // pred_fallthru
    _
  // Predicated region
  $region18: #{python_net_forward.8} parent=0 // pred_check
    _
  $region19: #{python_net_forward.8} parent=0 // pred_check_branch
    %453 = sbr.rel (0) target = $region21
  $region20: #{python_net_forward.8} parent=0 // pred_region
    _
  $region21: #{python_net_forward.8} parent=0 // pred_fallthru
    _

// kernel: python_net_forward.9
$region0: #{python_net_forward.9}
  #allocation0 [shape = 'u32[]', space=smem, size = 0x4, offset = 0x4, fixed_abs, tag = 'smem constant byte address 0x4 - core index']
  #allocation1 [shape = 'u32[144,128]{1,0:T(1,128)}', space=vmem, size = 0x12000, scoped, tag = 'internal scratch']
  %s0 = inlined_call_operand.vmem [shape: bf16[8,256], index: 0, kind: input, shape index: {}]
  %s1 = inlined_call_operand.vmem [shape: bf16[256,2048], index: 1, kind: input, shape index: {}]
  %s2 = inlined_call_operand.vmem [shape: bf16[2048,512], index: 2, kind: input, shape index: {}]
  %s3 = inlined_call_operand.vmem [shape: bf16[512,90], index: 3, kind: input, shape index: {}]
  %s4 = inlined_call_operand.vmem [shape: bf16[90,9], index: 4, kind: input, shape index: {}]
  %s5 = inlined_call_operand.hbm [shape: f32[2,9], index: 5, kind: output, shape index: {}]
  %s6 = sld [smem:[#allocation0]]
  $region30: #{python_net_forward.9} parent=0
    _
  %s8 = ssub.s32 1, %s6
  %s9 = scalar_select 0, %s8, %s6
  $region1: #{python_net_forward.9} parent=0
    #allocation2 [shape = 'u8[1024]{0}', space=vmem, size = 0x400, scoped, tag = 'output window, operand 0, single buffered']
    #allocation3 [shape = 's32[1]{0}', space=sflag, size = 0x4, scoped, tag = 'scoped memory for python_net_forward.9']
    %10 = vsyncpa [#allocation3], 0
    // Predicated region
    $region2: #{python_net_forward.9} parent=1 // pred_check
      _
    $region3: #{python_net_forward.9} parent=1 // pred_check_branch
      %12 = sbr.rel (0) target = $region5
    $region4: #{python_net_forward.9} parent=1 // pred_region
      _
    $region5: #{python_net_forward.9} parent=1 // pred_fallthru
      _
    // Predicated region
    $region6: #{python_net_forward.9} parent=1 // pred_check
      _
    $region7: #{python_net_forward.9} parent=1 // pred_check_branch
      %14 = sbr.rel (0) target = $region9
    $region8: #{python_net_forward.9} parent=1 // pred_region
      _
    $region9: #{python_net_forward.9} parent=1 // pred_fallthru
      _
    // Predicated region
    $region10: #{python_net_forward.9} parent=1 // pred_check
      _
    $region11: #{python_net_forward.9} parent=1 // pred_check_branch
      %16 = sbr.rel (0) target = $region13
    $region12: #{python_net_forward.9} parent=1 // pred_region
      _
    $region13: #{python_net_forward.9} parent=1 // pred_fallthru
      _
    // Predicated region
    $region14: #{python_net_forward.9} parent=1 // pred_check
      _
    $region15: #{python_net_forward.9} parent=1 // pred_check_branch
      %18 = sbr.rel (0) target = $region17
    $region16: #{python_net_forward.9} parent=1 // pred_region
      _
    $region17: #{python_net_forward.9} parent=1 // pred_fallthru
      _
    // Predicated region
    $region18: #{python_net_forward.9} parent=1 // pred_check
      _
    $region19: #{python_net_forward.9} parent=1 // pred_check_branch
      %20 = sbr.rel (0) target = $region21
    $region20: #{python_net_forward.9} parent=1 // pred_region
      _
    $region21: #{python_net_forward.9} parent=1 // pred_fallthru
      _
    %v22 = vld [vmem:[%s0] sm:$0xff]
    %v23 = vld [vmem:[%s1] sm:$0xff]
    %v24 = vld [vmem:[%s1 + $0x8] sm:$0xff]
    %v25 = vld [vmem:[%s1 + $0x10] sm:$0xff]
    %v26 = vld [vmem:[%s1 + $0x18] sm:$0xff]
    %v27 = vld [vmem:[%s1 + $0x20] sm:$0xff]
    %v28 = vld [vmem:[%s1 + $0x28] sm:$0xff]
    %v29 = vld [vmem:[%s1 + $0x30] sm:$0xff]
    %v30 = vld [vmem:[%s1 + $0x38] sm:$0xff]
    %v31 = vld [vmem:[%s1 + $0x40] sm:$0xff]
    %v32 = vld [vmem:[%s1 + $0x48] sm:$0xff]
    %v33 = vld [vmem:[%s1 + $0x50] sm:$0xff]
    %v34 = vld [vmem:[%s1 + $0x58] sm:$0xff]
    %v35 = vld [vmem:[%s1 + $0x60] sm:$0xff]
    %v36 = vld [vmem:[%s1 + $0x68] sm:$0xff]
    %v37 = vld [vmem:[%s1 + $0x70] sm:$0xff]
    %v38 = vld [vmem:[%s1 + $0x78] sm:$0xff]
    %v39 = vld [vmem:[%s1 + $0x80] sm:$0xff]
    %v40 = vld [vmem:[%s1 + $0x88] sm:$0xff]
    %v41 = vld [vmem:[%s1 + $0x90] sm:$0xff]
    %v42 = vld [vmem:[%s1 + $0x98] sm:$0xff]
    %v43 = vld [vmem:[%s1 + $0xa0] sm:$0xff]
    %v44 = vld [vmem:[%s1 + $0xa8] sm:$0xff]
    %v45 = vld [vmem:[%s1 + $0xb0] sm:$0xff]
    %v46 = vld [vmem:[%s1 + $0xb8] sm:$0xff]
    %v47 = vld [vmem:[%s1 + $0xc0] sm:$0xff]
    %v48 = vld [vmem:[%s1 + $0xc8] sm:$0xff]
    %v49 = vld [vmem:[%s1 + $0xd0] sm:$0xff]
    %v50 = vld [vmem:[%s1 + $0xd8] sm:$0xff]
    %v51 = vld [vmem:[%s1 + $0xe0] sm:$0xff]
    %v52 = vld [vmem:[%s1 + $0xe8] sm:$0xff]
    %v53 = vld [vmem:[%s1 + $0xf0] sm:$0xff]
    %v54 = vld [vmem:[%s1 + $0xf8] sm:$0xff]
    %v55 = vld [vmem:[%s1 + $0x100] sm:$0xff]
    %v56 = vld [vmem:[%s1 + $0x108] sm:$0xff]
    %v57 = vld [vmem:[%s1 + $0x110] sm:$0xff]
    %v58 = vld [vmem:[%s1 + $0x118] sm:$0xff]
    %v59 = vld [vmem:[%s1 + $0x120] sm:$0xff]
    %v60 = vld [vmem:[%s1 + $0x128] sm:$0xff]
    %v61 = vld [vmem:[%s1 + $0x130] sm:$0xff]
    %v62 = vld [vmem:[%s1 + $0x138] sm:$0xff]
    %v63 = vld [vmem:[%s1 + $0x140] sm:$0xff]
    %v64 = vld [vmem:[%s1 + $0x148] sm:$0xff]
    %v65 = vld [vmem:[%s1 + $0x150] sm:$0xff]
    %v66 = vld [vmem:[%s1 + $0x158] sm:$0xff]
    %v67 = vld [vmem:[%s1 + $0x160] sm:$0xff]
    %v68 = vld [vmem:[%s1 + $0x168] sm:$0xff]
    %v69 = vld [vmem:[%s1 + $0x170] sm:$0xff]
    %v70 = vld [vmem:[%s1 + $0x178] sm:$0xff]
    %v71 = vld [vmem:[%s1 + $0x180] sm:$0xff]
    %v72 = vld [vmem:[%s1 + $0x188] sm:$0xff]
    %v73 = vld [vmem:[%s1 + $0x190] sm:$0xff]
    %v74 = vld [vmem:[%s1 + $0x198] sm:$0xff]
    %v75 = vld [vmem:[%s1 + $0x1a0] sm:$0xff]
    %v76 = vld [vmem:[%s1 + $0x1a8] sm:$0xff]
    %v77 = vld [vmem:[%s1 + $0x1b0] sm:$0xff]
    %v78 = vld [vmem:[%s1 + $0x1b8] sm:$0xff]
    %v79 = vld [vmem:[%s1 + $0x1c0] sm:$0xff]
    %v80 = vld [vmem:[%s1 + $0x1c8] sm:$0xff]
    %v81 = vld [vmem:[%s1 + $0x1d0] sm:$0xff]
    %v82 = vld [vmem:[%s1 + $0x1d8] sm:$0xff]
    %v83 = vld [vmem:[%s1 + $0x1e0] sm:$0xff]
    %v84 = vld [vmem:[%s1 + $0x1e8] sm:$0xff]
    %v85 = vld [vmem:[%s1 + $0x1f0] sm:$0xff]
    %v86 = vld [vmem:[%s1 + $0x1f8] sm:$0xff]
    %v87 = vld [vmem:[%s1 + $0x200] sm:$0xff]
    %v88 = vld [vmem:[%s1 + $0x208] sm:$0xff]
    %v89 = vld [vmem:[%s1 + $0x210] sm:$0xff]
    %v90 = vld [vmem:[%s1 + $0x218] sm:$0xff]
    %v91 = vld [vmem:[%s1 + $0x220] sm:$0xff]
    %v92 = vld [vmem:[%s1 + $0x228] sm:$0xff]
    %v93 = vld [vmem:[%s1 + $0x230] sm:$0xff]
    %v94 = vld [vmem:[%s1 + $0x238] sm:$0xff]
    %v95 = vld [vmem:[%s1 + $0x240] sm:$0xff]
    %v96 = vld [vmem:[%s1 + $0x248] sm:$0xff]
    %v97 = vld [vmem:[%s1 + $0x250] sm:$0xff]
    %v98 = vld [vmem:[%s1 + $0x258] sm:$0xff]
    %v99 = vld [vmem:[%s1 + $0x260] sm:$0xff]
    %v100 = vld [vmem:[%s1 + $0x268] sm:$0xff]
    %v101 = vld [vmem:[%s1 + $0x270] sm:$0xff]
    %v102 = vld [vmem:[%s1 + $0x278] sm:$0xff]
    %v103 = vld [vmem:[%s1 + $0x280] sm:$0xff]
    %v104 = vld [vmem:[%s1 + $0x288] sm:$0xff]
    %v105 = vld [vmem:[%s1 + $0x290] sm:$0xff]
    %v106 = vld [vmem:[%s1 + $0x298] sm:$0xff]
    %v107 = vld [vmem:[%s1 + $0x2a0] sm:$0xff]
    %v108 = vld [vmem:[%s1 + $0x2a8] sm:$0xff]
    %v109 = vld [vmem:[%s1 + $0x2b0] sm:$0xff]
    %v110 = vld [vmem:[%s1 + $0x2b8] sm:$0xff]
    %v111 = vld [vmem:[%s1 + $0x2c0] sm:$0xff]
    %v112 = vld [vmem:[%s1 + $0x2c8] sm:$0xff]
    %v113 = vld [vmem:[%s1 + $0x2d0] sm:$0xff]
    %v114 = vld [vmem:[%s1 + $0x2d8] sm:$0xff]
    %v115 = vld [vmem:[%s1 + $0x2e0] sm:$0xff]
    %v116 = vld [vmem:[%s1 + $0x2e8] sm:$0xff]
    %v117 = vld [vmem:[%s1 + $0x2f0] sm:$0xff]
    %v118 = vld [vmem:[%s1 + $0x2f8] sm:$0xff]
    %v119 = vld [vmem:[%s1 + $0x300] sm:$0xff]
    %v120 = vld [vmem:[%s1 + $0x308] sm:$0xff]
    %v121 = vld [vmem:[%s1 + $0x310] sm:$0xff]
    %v122 = vld [vmem:[%s1 + $0x318] sm:$0xff]
    %v123 = vld [vmem:[%s1 + $0x320] sm:$0xff]
    %v124 = vld [vmem:[%s1 + $0x328] sm:$0xff]
    %v125 = vld [vmem:[%s1 + $0x330] sm:$0xff]
    %v126 = vld [vmem:[%s1 + $0x338] sm:$0xff]
    %v127 = vld [vmem:[%s1 + $0x340] sm:$0xff]
    %v128 = vld [vmem:[%s1 + $0x348] sm:$0xff]
    %v129 = vld [vmem:[%s1 + $0x350] sm:$0xff]
    %v130 = vld [vmem:[%s1 + $0x358] sm:$0xff]
    %v131 = vld [vmem:[%s1 + $0x360] sm:$0xff]
    %v132 = vld [vmem:[%s1 + $0x368] sm:$0xff]
    %v133 = vld [vmem:[%s1 + $0x370] sm:$0xff]
    %v134 = vld [vmem:[%s1 + $0x378] sm:$0xff]
    %v135 = vld [vmem:[%s1 + $0x380] sm:$0xff]
    %v136 = vld [vmem:[%s1 + $0x388] sm:$0xff]
    %v137 = vld [vmem:[%s1 + $0x390] sm:$0xff]
    %v138 = vld [vmem:[%s1 + $0x398] sm:$0xff]
    %v139 = vld [vmem:[%s1 + $0x3a0] sm:$0xff]
    %v140 = vld [vmem:[%s1 + $0x3a8] sm:$0xff]
    %v141 = vld [vmem:[%s1 + $0x3b0] sm:$0xff]
    %v142 = vld [vmem:[%s1 + $0x3b8] sm:$0xff]
    %v143 = vld [vmem:[%s1 + $0x3c0] sm:$0xff]
    %v144 = vld [vmem:[%s1 + $0x3c8] sm:$0xff]
    %v145 = vld [vmem:[%s1 + $0x3d0] sm:$0xff]
    %v146 = vld [vmem:[%s1 + $0x3d8] sm:$0xff]
    %v147 = vld [vmem:[%s1 + $0x3e0] sm:$0xff]
    %v148 = vld [vmem:[%s1 + $0x3e8] sm:$0xff]
    %v149 = vld [vmem:[%s1 + $0x3f0] sm:$0xff]
    %v150 = vld [vmem:[%s1 + $0x3f8] sm:$0xff]
    %v151 = vld [vmem:[%s1 + $0x400] sm:$0xff]
    %v152 = vld [vmem:[%s1 + $0x408] sm:$0xff]
    %v153 = vld [vmem:[%s1 + $0x410] sm:$0xff]
    %v154 = vld [vmem:[%s1 + $0x418] sm:$0xff]
    %v155 = vld [vmem:[%s1 + $0x420] sm:$0xff]
    %v156 = vld [vmem:[%s1 + $0x428] sm:$0xff]
    %v157 = vld [vmem:[%s1 + $0x430] sm:$0xff]
    %v158 = vld [vmem:[%s1 + $0x438] sm:$0xff]
    %v159 = vld [vmem:[%s1 + $0x440] sm:$0xff]
    %v160 = vld [vmem:[%s1 + $0x448] sm:$0xff]
    %v161 = vld [vmem:[%s1 + $0x450] sm:$0xff]
    %v162 = vld [vmem:[%s1 + $0x458] sm:$0xff]
    %v163 = vld [vmem:[%s1 + $0x460] sm:$0xff]
    %v164 = vld [vmem:[%s1 + $0x468] sm:$0xff]
    %v165 = vld [vmem:[%s1 + $0x470] sm:$0xff]
    %v166 = vld [vmem:[%s1 + $0x478] sm:$0xff]
    %v167 = vld [vmem:[%s1 + $0x480] sm:$0xff]
    %v168 = vld [vmem:[%s1 + $0x488] sm:$0xff]
    %v169 = vld [vmem:[%s1 + $0x490] sm:$0xff]
    %v170 = vld [vmem:[%s1 + $0x498] sm:$0xff]
    %v171 = vld [vmem:[%s1 + $0x4a0] sm:$0xff]
    %v172 = vld [vmem:[%s1 + $0x4a8] sm:$0xff]
    %v173 = vld [vmem:[%s1 + $0x4b0] sm:$0xff]
    %v174 = vld [vmem:[%s1 + $0x4b8] sm:$0xff]
    %v175 = vld [vmem:[%s1 + $0x4c0] sm:$0xff]
    %v176 = vld [vmem:[%s1 + $0x4c8] sm:$0xff]
    %v177 = vld [vmem:[%s1 + $0x4d0] sm:$0xff]
    %v178 = vld [vmem:[%s1 + $0x4d8] sm:$0xff]
    %v179 = vld [vmem:[%s1 + $0x4e0] sm:$0xff]
    %v180 = vld [vmem:[%s1 + $0x4e8] sm:$0xff]
    %v181 = vld [vmem:[%s1 + $0x4f0] sm:$0xff]
    %v182 = vld [vmem:[%s1 + $0x4f8] sm:$0xff]
    %v183 = vld [vmem:[%s1 + $0x500] sm:$0xff]
    %v184 = vld [vmem:[%s1 + $0x508] sm:$0xff]
    %v185 = vld [vmem:[%s1 + $0x510] sm:$0xff]
    %v186 = vld [vmem:[%s1 + $0x518] sm:$0xff]
    %v187 = vld [vmem:[%s1 + $0x520] sm:$0xff]
    %v188 = vld [vmem:[%s1 + $0x528] sm:$0xff]
    %v189 = vld [vmem:[%s1 + $0x530] sm:$0xff]
    %v190 = vld [vmem:[%s1 + $0x538] sm:$0xff]
    %v191 = vld [vmem:[%s1 + $0x540] sm:$0xff]
    %v192 = vld [vmem:[%s1 + $0x548] sm:$0xff]
    %v193 = vld [vmem:[%s1 + $0x550] sm:$0xff]
    %v194 = vld [vmem:[%s1 + $0x558] sm:$0xff]
    %v195 = vld [vmem:[%s1 + $0x560] sm:$0xff]
    %v196 = vld [vmem:[%s1 + $0x568] sm:$0xff]
    %v197 = vld [vmem:[%s1 + $0x570] sm:$0xff]
    %v198 = vld [vmem:[%s1 + $0x578] sm:$0xff]
    %v199 = vld [vmem:[%s1 + $0x580] sm:$0xff]
    %v200 = vld [vmem:[%s1 + $0x588] sm:$0xff]
    %v201 = vld [vmem:[%s1 + $0x590] sm:$0xff]
    %v202 = vld [vmem:[%s1 + $0x598] sm:$0xff]
    %v203 = vld [vmem:[%s1 + $0x5a0] sm:$0xff]
    %v204 = vld [vmem:[%s1 + $0x5a8] sm:$0xff]
    %v205 = vld [vmem:[%s1 + $0x5b0] sm:$0xff]
    %v206 = vld [vmem:[%s1 + $0x5b8] sm:$0xff]
    %v207 = vld [vmem:[%s1 + $0x5c0] sm:$0xff]
    %v208 = vld [vmem:[%s1 + $0x5c8] sm:$0xff]
    %v209 = vld [vmem:[%s1 + $0x5d0] sm:$0xff]
    %v210 = vld [vmem:[%s1 + $0x5d8] sm:$0xff]
    %v211 = vld [vmem:[%s1 + $0x5e0] sm:$0xff]
    %v212 = vld [vmem:[%s1 + $0x5e8] sm:$0xff]
    %v213 = vld [vmem:[%s1 + $0x5f0] sm:$0xff]
    %v214 = vld [vmem:[%s1 + $0x5f8] sm:$0xff]
    %v215 = vld [vmem:[%s1 + $0x600] sm:$0xff]
    %v216 = vld [vmem:[%s1 + $0x608] sm:$0xff]
    %v217 = vld [vmem:[%s1 + $0x610] sm:$0xff]
    %v218 = vld [vmem:[%s1 + $0x618] sm:$0xff]
    %v219 = vld [vmem:[%s1 + $0x620] sm:$0xff]
    %v220 = vld [vmem:[%s1 + $0x628] sm:$0xff]
    %v221 = vld [vmem:[%s1 + $0x630] sm:$0xff]
    %v222 = vld [vmem:[%s1 + $0x638] sm:$0xff]
    %v223 = vld [vmem:[%s1 + $0x640] sm:$0xff]
    %v224 = vld [vmem:[%s1 + $0x648] sm:$0xff]
    %v225 = vld [vmem:[%s1 + $0x650] sm:$0xff]
    %v226 = vld [vmem:[%s1 + $0x658] sm:$0xff]
    %v227 = vld [vmem:[%s1 + $0x660] sm:$0xff]
    %v228 = vld [vmem:[%s1 + $0x668] sm:$0xff]
    %v229 = vld [vmem:[%s1 + $0x670] sm:$0xff]
    %v230 = vld [vmem:[%s1 + $0x678] sm:$0xff]
    %v231 = vld [vmem:[%s1 + $0x680] sm:$0xff]
    %v232 = vld [vmem:[%s1 + $0x688] sm:$0xff]
    %v233 = vld [vmem:[%s1 + $0x690] sm:$0xff]
    %v234 = vld [vmem:[%s1 + $0x698] sm:$0xff]
    %v235 = vld [vmem:[%s1 + $0x6a0] sm:$0xff]
    %v236 = vld [vmem:[%s1 + $0x6a8] sm:$0xff]
    %v237 = vld [vmem:[%s1 + $0x6b0] sm:$0xff]
    %v238 = vld [vmem:[%s1 + $0x6b8] sm:$0xff]
    %v239 = vld [vmem:[%s1 + $0x6c0] sm:$0xff]
    %v240 = vld [vmem:[%s1 + $0x6c8] sm:$0xff]
    %v241 = vld [vmem:[%s1 + $0x6d0] sm:$0xff]
    %v242 = vld [vmem:[%s1 + $0x6d8] sm:$0xff]
    %v243 = vld [vmem:[%s1 + $0x6e0] sm:$0xff]
    %v244 = vld [vmem:[%s1 + $0x6e8] sm:$0xff]
    %v245 = vld [vmem:[%s1 + $0x6f0] sm:$0xff]
    %v246 = vld [vmem:[%s1 + $0x6f8] sm:$0xff]
    %v247 = vld [vmem:[%s1 + $0x700] sm:$0xff]
    %v248 = vld [vmem:[%s1 + $0x708] sm:$0xff]
    %v249 = vld [vmem:[%s1 + $0x710] sm:$0xff]
    %v250 = vld [vmem:[%s1 + $0x718] sm:$0xff]
    %v251 = vld [vmem:[%s1 + $0x720] sm:$0xff]
    %v252 = vld [vmem:[%s1 + $0x728] sm:$0xff]
    %v253 = vld [vmem:[%s1 + $0x730] sm:$0xff]
    %v254 = vld [vmem:[%s1 + $0x738] sm:$0xff]
    %v255 = vld [vmem:[%s1 + $0x740] sm:$0xff]
    %v256 = vld [vmem:[%s1 + $0x748] sm:$0xff]
    %v257 = vld [vmem:[%s1 + $0x750] sm:$0xff]
    %v258 = vld [vmem:[%s1 + $0x758] sm:$0xff]
    %v259 = vld [vmem:[%s1 + $0x760] sm:$0xff]
    %v260 = vld [vmem:[%s1 + $0x768] sm:$0xff]
    %v261 = vld [vmem:[%s1 + $0x770] sm:$0xff]
    %v262 = vld [vmem:[%s1 + $0x778] sm:$0xff]
    %v263 = vld [vmem:[%s1 + $0x780] sm:$0xff]
    %v264 = vld [vmem:[%s1 + $0x788] sm:$0xff]
    %v265 = vld [vmem:[%s1 + $0x790] sm:$0xff]
    %v266 = vld [vmem:[%s1 + $0x798] sm:$0xff]
    %v267 = vld [vmem:[%s1 + $0x7a0] sm:$0xff]
    %v268 = vld [vmem:[%s1 + $0x7a8] sm:$0xff]
    %v269 = vld [vmem:[%s1 + $0x7b0] sm:$0xff]
    %v270 = vld [vmem:[%s1 + $0x7b8] sm:$0xff]
    %v271 = vld [vmem:[%s1 + $0x7c0] sm:$0xff]
    %v272 = vld [vmem:[%s1 + $0x7c8] sm:$0xff]
    %v273 = vld [vmem:[%s1 + $0x7d0] sm:$0xff]
    %v274 = vld [vmem:[%s1 + $0x7d8] sm:$0xff]
    %v275 = vld [vmem:[%s1 + $0x7e0] sm:$0xff]
    %v276 = vld [vmem:[%s1 + $0x7e8] sm:$0xff]
    %v277 = vld [vmem:[%s1 + $0x7f0] sm:$0xff]
    %v278 = vld [vmem:[%s1 + $0x7f8] sm:$0xff]
    %v280 = vunpack.c.l.b16 %v22
    %v281 = vunpack.c.h.b16 %v22
    %v282 = vpack.c.b16 %v280, %v280
    %v283 = vpack.c.b16 %v281, %v281
    %v542 = vunpack.c.l.b16 %v23
    %v543 = vunpack.c.h.b16 %v23
    %v544 = vunpack.c.l.b16 %v24
    %v545 = vunpack.c.h.b16 %v24
    %v546 = vunpack.c.l.b16 %v25
    %v547 = vunpack.c.h.b16 %v25
    %v548 = vunpack.c.l.b16 %v26
    %v549 = vunpack.c.h.b16 %v26
    %v550 = vunpack.c.l.b16 %v27
    %v551 = vunpack.c.h.b16 %v27
    %v552 = vunpack.c.l.b16 %v28
    %v553 = vunpack.c.h.b16 %v28
    %v554 = vunpack.c.l.b16 %v29
    %v555 = vunpack.c.h.b16 %v29
    %v556 = vunpack.c.l.b16 %v30
    %v557 = vunpack.c.h.b16 %v30
    %v558 = vunpack.c.l.b16 %v31
    %v559 = vunpack.c.h.b16 %v31
    %v560 = vunpack.c.l.b16 %v32
    %v561 = vunpack.c.h.b16 %v32
    %v562 = vunpack.c.l.b16 %v33
    %v563 = vunpack.c.h.b16 %v33
    %v564 = vunpack.c.l.b16 %v34
    %v565 = vunpack.c.h.b16 %v34
    %v566 = vunpack.c.l.b16 %v35
    %v567 = vunpack.c.h.b16 %v35
    %v568 = vunpack.c.l.b16 %v36
    %v569 = vunpack.c.h.b16 %v36
    %v570 = vunpack.c.l.b16 %v37
    %v571 = vunpack.c.h.b16 %v37
    %v572 = vunpack.c.l.b16 %v38
    %v573 = vunpack.c.h.b16 %v38
    %v574 = vunpack.c.l.b16 %v39
    %v575 = vunpack.c.h.b16 %v39
    %v576 = vunpack.c.l.b16 %v40
    %v577 = vunpack.c.h.b16 %v40
    %v578 = vunpack.c.l.b16 %v41
    %v579 = vunpack.c.h.b16 %v41
    %v580 = vunpack.c.l.b16 %v42
    %v581 = vunpack.c.h.b16 %v42
    %v582 = vunpack.c.l.b16 %v43
    %v583 = vunpack.c.h.b16 %v43
    %v584 = vunpack.c.l.b16 %v44
    %v585 = vunpack.c.h.b16 %v44
    %v586 = vunpack.c.l.b16 %v45
    %v587 = vunpack.c.h.b16 %v45
    %v588 = vunpack.c.l.b16 %v46
    %v589 = vunpack.c.h.b16 %v46
    %v590 = vunpack.c.l.b16 %v47
    %v591 = vunpack.c.h.b16 %v47
    %v592 = vunpack.c.l.b16 %v48
    %v593 = vunpack.c.h.b16 %v48
    %v594 = vunpack.c.l.b16 %v49
    %v595 = vunpack.c.h.b16 %v49
    %v596 = vunpack.c.l.b16 %v50
    %v597 = vunpack.c.h.b16 %v50
    %v598 = vunpack.c.l.b16 %v51
    %v599 = vunpack.c.h.b16 %v51
    %v600 = vunpack.c.l.b16 %v52
    %v601 = vunpack.c.h.b16 %v52
    %v602 = vunpack.c.l.b16 %v53
    %v603 = vunpack.c.h.b16 %v53
    %v604 = vunpack.c.l.b16 %v54
    %v605 = vunpack.c.h.b16 %v54
    %v606 = vunpack.c.l.b16 %v55
    %v607 = vunpack.c.h.b16 %v55
    %v608 = vunpack.c.l.b16 %v56
    %v609 = vunpack.c.h.b16 %v56
    %v610 = vunpack.c.l.b16 %v57
    %v611 = vunpack.c.h.b16 %v57
    %v612 = vunpack.c.l.b16 %v58
    %v613 = vunpack.c.h.b16 %v58
    %v614 = vunpack.c.l.b16 %v59
    %v615 = vunpack.c.h.b16 %v59
    %v616 = vunpack.c.l.b16 %v60
    %v617 = vunpack.c.h.b16 %v60
    %v618 = vunpack.c.l.b16 %v61
    %v619 = vunpack.c.h.b16 %v61
    %v620 = vunpack.c.l.b16 %v62
    %v621 = vunpack.c.h.b16 %v62
    %v622 = vunpack.c.l.b16 %v63
    %v623 = vunpack.c.h.b16 %v63
    %v624 = vunpack.c.l.b16 %v64
    %v625 = vunpack.c.h.b16 %v64
    %v626 = vunpack.c.l.b16 %v65
    %v627 = vunpack.c.h.b16 %v65
    %v628 = vunpack.c.l.b16 %v66
    %v629 = vunpack.c.h.b16 %v66
    %v630 = vunpack.c.l.b16 %v67
    %v631 = vunpack.c.h.b16 %v67
    %v632 = vunpack.c.l.b16 %v68
    %v633 = vunpack.c.h.b16 %v68
    %v634 = vunpack.c.l.b16 %v69
    %v635 = vunpack.c.h.b16 %v69
    %v636 = vunpack.c.l.b16 %v70
    %v637 = vunpack.c.h.b16 %v70
    %v638 = vunpack.c.l.b16 %v71
    %v639 = vunpack.c.h.b16 %v71
    %v640 = vunpack.c.l.b16 %v72
    %v641 = vunpack.c.h.b16 %v72
    %v642 = vunpack.c.l.b16 %v73
    %v643 = vunpack.c.h.b16 %v73
    %v644 = vunpack.c.l.b16 %v74
    %v645 = vunpack.c.h.b16 %v74
    %v646 = vunpack.c.l.b16 %v75
    %v647 = vunpack.c.h.b16 %v75
    %v648 = vunpack.c.l.b16 %v76
    %v649 = vunpack.c.h.b16 %v76
    %v650 = vunpack.c.l.b16 %v77
    %v651 = vunpack.c.h.b16 %v77
    %v652 = vunpack.c.l.b16 %v78
    %v653 = vunpack.c.h.b16 %v78
    %v654 = vunpack.c.l.b16 %v79
    %v655 = vunpack.c.h.b16 %v79
    %v656 = vunpack.c.l.b16 %v80
    %v657 = vunpack.c.h.b16 %v80
    %v658 = vunpack.c.l.b16 %v81
    %v659 = vunpack.c.h.b16 %v81
    %v660 = vunpack.c.l.b16 %v82
    %v661 = vunpack.c.h.b16 %v82
    %v662 = vunpack.c.l.b16 %v83
    %v663 = vunpack.c.h.b16 %v83
    %v664 = vunpack.c.l.b16 %v84
    %v665 = vunpack.c.h.b16 %v84
    %v666 = vunpack.c.l.b16 %v85
    %v667 = vunpack.c.h.b16 %v85
    %v668 = vunpack.c.l.b16 %v86
    %v669 = vunpack.c.h.b16 %v86
    %v670 = vunpack.c.l.b16 %v87
    %v671 = vunpack.c.h.b16 %v87
    %v672 = vunpack.c.l.b16 %v88
    %v673 = vunpack.c.h.b16 %v88
    %v674 = vunpack.c.l.b16 %v89
    %v675 = vunpack.c.h.b16 %v89
    %v676 = vunpack.c.l.b16 %v90
    %v677 = vunpack.c.h.b16 %v90
    %v678 = vunpack.c.l.b16 %v91
    %v679 = vunpack.c.h.b16 %v91
    %v680 = vunpack.c.l.b16 %v92
    %v681 = vunpack.c.h.b16 %v92
    %v682 = vunpack.c.l.b16 %v93
    %v683 = vunpack.c.h.b16 %v93
    %v684 = vunpack.c.l.b16 %v94
    %v685 = vunpack.c.h.b16 %v94
    %v686 = vunpack.c.l.b16 %v95
    %v687 = vunpack.c.h.b16 %v95
    %v688 = vunpack.c.l.b16 %v96
    %v689 = vunpack.c.h.b16 %v96
    %v690 = vunpack.c.l.b16 %v97
    %v691 = vunpack.c.h.b16 %v97
    %v692 = vunpack.c.l.b16 %v98
    %v693 = vunpack.c.h.b16 %v98
    %v694 = vunpack.c.l.b16 %v99
    %v695 = vunpack.c.h.b16 %v99
    %v696 = vunpack.c.l.b16 %v100
    %v697 = vunpack.c.h.b16 %v100
    %v698 = vunpack.c.l.b16 %v101
    %v699 = vunpack.c.h.b16 %v101
    %v700 = vunpack.c.l.b16 %v102
    %v701 = vunpack.c.h.b16 %v102
    %v702 = vunpack.c.l.b16 %v103
    %v703 = vunpack.c.h.b16 %v103
    %v704 = vunpack.c.l.b16 %v104
    %v705 = vunpack.c.h.b16 %v104
    %v706 = vunpack.c.l.b16 %v105
    %v707 = vunpack.c.h.b16 %v105
    %v708 = vunpack.c.l.b16 %v106
    %v709 = vunpack.c.h.b16 %v106
    %v710 = vunpack.c.l.b16 %v107
    %v711 = vunpack.c.h.b16 %v107
    %v712 = vunpack.c.l.b16 %v108
    %v713 = vunpack.c.h.b16 %v108
    %v714 = vunpack.c.l.b16 %v109
    %v715 = vunpack.c.h.b16 %v109
    %v716 = vunpack.c.l.b16 %v110
    %v717 = vunpack.c.h.b16 %v110
    %v718 = vunpack.c.l.b16 %v111
    %v719 = vunpack.c.h.b16 %v111
    %v720 = vunpack.c.l.b16 %v112
    %v721 = vunpack.c.h.b16 %v112
    %v722 = vunpack.c.l.b16 %v113
    %v723 = vunpack.c.h.b16 %v113
    %v724 = vunpack.c.l.b16 %v114
    %v725 = vunpack.c.h.b16 %v114
    %v726 = vunpack.c.l.b16 %v115
    %v727 = vunpack.c.h.b16 %v115
    %v728 = vunpack.c.l.b16 %v116
    %v729 = vunpack.c.h.b16 %v116
    %v730 = vunpack.c.l.b16 %v117
    %v731 = vunpack.c.h.b16 %v117
    %v732 = vunpack.c.l.b16 %v118
    %v733 = vunpack.c.h.b16 %v118
    %v734 = vunpack.c.l.b16 %v119
    %v735 = vunpack.c.h.b16 %v119
    %v736 = vunpack.c.l.b16 %v120
    %v737 = vunpack.c.h.b16 %v120
    %v738 = vunpack.c.l.b16 %v121
    %v739 = vunpack.c.h.b16 %v121
    %v740 = vunpack.c.l.b16 %v122
    %v741 = vunpack.c.h.b16 %v122
    %v742 = vunpack.c.l.b16 %v123
    %v743 = vunpack.c.h.b16 %v123
    %v744 = vunpack.c.l.b16 %v124
    %v745 = vunpack.c.h.b16 %v124
    %v746 = vunpack.c.l.b16 %v125
    %v747 = vunpack.c.h.b16 %v125
    %v748 = vunpack.c.l.b16 %v126
    %v749 = vunpack.c.h.b16 %v126
    %v750 = vunpack.c.l.b16 %v127
    %v751 = vunpack.c.h.b16 %v127
    %v752 = vunpack.c.l.b16 %v128
    %v753 = vunpack.c.h.b16 %v128
    %v754 = vunpack.c.l.b16 %v129
    %v755 = vunpack.c.h.b16 %v129
    %v756 = vunpack.c.l.b16 %v130
    %v757 = vunpack.c.h.b16 %v130
    %v758 = vunpack.c.l.b16 %v131
    %v759 = vunpack.c.h.b16 %v131
    %v760 = vunpack.c.l.b16 %v132
    %v761 = vunpack.c.h.b16 %v132
    %v762 = vunpack.c.l.b16 %v133
    %v763 = vunpack.c.h.b16 %v133
    %v764 = vunpack.c.l.b16 %v134
    %v765 = vunpack.c.h.b16 %v134
    %v766 = vunpack.c.l.b16 %v135
    %v767 = vunpack.c.h.b16 %v135
    %v768 = vunpack.c.l.b16 %v136
    %v769 = vunpack.c.h.b16 %v136
    %v770 = vunpack.c.l.b16 %v137
    %v771 = vunpack.c.h.b16 %v137
    %v772 = vunpack.c.l.b16 %v138
    %v773 = vunpack.c.h.b16 %v138
    %v774 = vunpack.c.l.b16 %v139
    %v775 = vunpack.c.h.b16 %v139
    %v776 = vunpack.c.l.b16 %v140
    %v777 = vunpack.c.h.b16 %v140
    %v778 = vunpack.c.l.b16 %v141
    %v779 = vunpack.c.h.b16 %v141
    %v780 = vunpack.c.l.b16 %v142
    %v781 = vunpack.c.h.b16 %v142
    %v782 = vunpack.c.l.b16 %v143
    %v783 = vunpack.c.h.b16 %v143
    %v784 = vunpack.c.l.b16 %v144
    %v785 = vunpack.c.h.b16 %v144
    %v786 = vunpack.c.l.b16 %v145
    %v787 = vunpack.c.h.b16 %v145
    %v788 = vunpack.c.l.b16 %v146
    %v789 = vunpack.c.h.b16 %v146
    %v790 = vunpack.c.l.b16 %v147
    %v791 = vunpack.c.h.b16 %v147
    %v792 = vunpack.c.l.b16 %v148
    %v793 = vunpack.c.h.b16 %v148
    %v794 = vunpack.c.l.b16 %v149
    %v795 = vunpack.c.h.b16 %v149
    %v796 = vunpack.c.l.b16 %v150
    %v797 = vunpack.c.h.b16 %v150
    %v798 = vunpack.c.l.b16 %v151
    %v799 = vunpack.c.h.b16 %v151
    %v800 = vunpack.c.l.b16 %v152
    %v801 = vunpack.c.h.b16 %v152
    %v802 = vunpack.c.l.b16 %v153
    %v803 = vunpack.c.h.b16 %v153
    %v804 = vunpack.c.l.b16 %v154
    %v805 = vunpack.c.h.b16 %v154
    %v806 = vunpack.c.l.b16 %v155
    %v807 = vunpack.c.h.b16 %v155
    %v808 = vunpack.c.l.b16 %v156
    %v809 = vunpack.c.h.b16 %v156
    %v810 = vunpack.c.l.b16 %v157
    %v811 = vunpack.c.h.b16 %v157
    %v812 = vunpack.c.l.b16 %v158
    %v813 = vunpack.c.h.b16 %v158
    %v814 = vunpack.c.l.b16 %v159
    %v815 = vunpack.c.h.b16 %v159
    %v816 = vunpack.c.l.b16 %v160
    %v817 = vunpack.c.h.b16 %v160
    %v818 = vunpack.c.l.b16 %v161
    %v819 = vunpack.c.h.b16 %v161
    %v820 = vunpack.c.l.b16 %v162
    %v821 = vunpack.c.h.b16 %v162
    %v822 = vunpack.c.l.b16 %v163
    %v823 = vunpack.c.h.b16 %v163
    %v824 = vunpack.c.l.b16 %v164
    %v825 = vunpack.c.h.b16 %v164
    %v826 = vunpack.c.l.b16 %v165
    %v827 = vunpack.c.h.b16 %v165
    %v828 = vunpack.c.l.b16 %v166
    %v829 = vunpack.c.h.b16 %v166
    %v830 = vunpack.c.l.b16 %v167
    %v831 = vunpack.c.h.b16 %v167
    %v832 = vunpack.c.l.b16 %v168
    %v833 = vunpack.c.h.b16 %v168
    %v834 = vunpack.c.l.b16 %v169
    %v835 = vunpack.c.h.b16 %v169
    %v836 = vunpack.c.l.b16 %v170
    %v837 = vunpack.c.h.b16 %v170
    %v838 = vunpack.c.l.b16 %v171
    %v839 = vunpack.c.h.b16 %v171
    %v840 = vunpack.c.l.b16 %v172
    %v841 = vunpack.c.h.b16 %v172
    %v842 = vunpack.c.l.b16 %v173
    %v843 = vunpack.c.h.b16 %v173
    %v844 = vunpack.c.l.b16 %v174
    %v845 = vunpack.c.h.b16 %v174
    %v846 = vunpack.c.l.b16 %v175
    %v847 = vunpack.c.h.b16 %v175
    %v848 = vunpack.c.l.b16 %v176
    %v849 = vunpack.c.h.b16 %v176
    %v850 = vunpack.c.l.b16 %v177
    %v851 = vunpack.c.h.b16 %v177
    %v852 = vunpack.c.l.b16 %v178
    %v853 = vunpack.c.h.b16 %v178
    %v854 = vunpack.c.l.b16 %v179
    %v855 = vunpack.c.h.b16 %v179
    %v856 = vunpack.c.l.b16 %v180
    %v857 = vunpack.c.h.b16 %v180
    %v858 = vunpack.c.l.b16 %v181
    %v859 = vunpack.c.h.b16 %v181
    %v860 = vunpack.c.l.b16 %v182
    %v861 = vunpack.c.h.b16 %v182
    %v862 = vunpack.c.l.b16 %v183
    %v863 = vunpack.c.h.b16 %v183
    %v864 = vunpack.c.l.b16 %v184
    %v865 = vunpack.c.h.b16 %v184
    %v866 = vunpack.c.l.b16 %v185
    %v867 = vunpack.c.h.b16 %v185
    %v868 = vunpack.c.l.b16 %v186
    %v869 = vunpack.c.h.b16 %v186
    %v870 = vunpack.c.l.b16 %v187
    %v871 = vunpack.c.h.b16 %v187
    %v872 = vunpack.c.l.b16 %v188
    %v873 = vunpack.c.h.b16 %v188
    %v874 = vunpack.c.l.b16 %v189
    %v875 = vunpack.c.h.b16 %v189
    %v876 = vunpack.c.l.b16 %v190
    %v877 = vunpack.c.h.b16 %v190
    %v878 = vunpack.c.l.b16 %v191
    %v879 = vunpack.c.h.b16 %v191
    %v880 = vunpack.c.l.b16 %v192
    %v881 = vunpack.c.h.b16 %v192
    %v882 = vunpack.c.l.b16 %v193
    %v883 = vunpack.c.h.b16 %v193
    %v884 = vunpack.c.l.b16 %v194
    %v885 = vunpack.c.h.b16 %v194
    %v886 = vunpack.c.l.b16 %v195
    %v887 = vunpack.c.h.b16 %v195
    %v888 = vunpack.c.l.b16 %v196
    %v889 = vunpack.c.h.b16 %v196
    %v890 = vunpack.c.l.b16 %v197
    %v891 = vunpack.c.h.b16 %v197
    %v892 = vunpack.c.l.b16 %v198
    %v893 = vunpack.c.h.b16 %v198
    %v894 = vunpack.c.l.b16 %v199
    %v895 = vunpack.c.h.b16 %v199
    %v896 = vunpack.c.l.b16 %v200
    %v897 = vunpack.c.h.b16 %v200
    %v898 = vunpack.c.l.b16 %v201
    %v899 = vunpack.c.h.b16 %v201
    %v900 = vunpack.c.l.b16 %v202
    %v901 = vunpack.c.h.b16 %v202
    %v902 = vunpack.c.l.b16 %v203
    %v903 = vunpack.c.h.b16 %v203
    %v904 = vunpack.c.l.b16 %v204
    %v905 = vunpack.c.h.b16 %v204
    %v906 = vunpack.c.l.b16 %v205
    %v907 = vunpack.c.h.b16 %v205
    %v908 = vunpack.c.l.b16 %v206
    %v909 = vunpack.c.h.b16 %v206
    %v910 = vunpack.c.l.b16 %v207
    %v911 = vunpack.c.h.b16 %v207
    %v912 = vunpack.c.l.b16 %v208
    %v913 = vunpack.c.h.b16 %v208
    %v914 = vunpack.c.l.b16 %v209
    %v915 = vunpack.c.h.b16 %v209
    %v916 = vunpack.c.l.b16 %v210
    %v917 = vunpack.c.h.b16 %v210
    %v918 = vunpack.c.l.b16 %v211
    %v919 = vunpack.c.h.b16 %v211
    %v920 = vunpack.c.l.b16 %v212
    %v921 = vunpack.c.h.b16 %v212
    %v922 = vunpack.c.l.b16 %v213
    %v923 = vunpack.c.h.b16 %v213
    %v924 = vunpack.c.l.b16 %v214
    %v925 = vunpack.c.h.b16 %v214
    %v926 = vunpack.c.l.b16 %v215
    %v927 = vunpack.c.h.b16 %v215
    %v928 = vunpack.c.l.b16 %v216
    %v929 = vunpack.c.h.b16 %v216
    %v930 = vunpack.c.l.b16 %v217
    %v931 = vunpack.c.h.b16 %v217
    %v932 = vunpack.c.l.b16 %v218
    %v933 = vunpack.c.h.b16 %v218
    %v934 = vunpack.c.l.b16 %v219
    %v935 = vunpack.c.h.b16 %v219
    %v936 = vunpack.c.l.b16 %v220
    %v937 = vunpack.c.h.b16 %v220
    %v938 = vunpack.c.l.b16 %v221
    %v939 = vunpack.c.h.b16 %v221
    %v940 = vunpack.c.l.b16 %v222
    %v941 = vunpack.c.h.b16 %v222
    %v942 = vunpack.c.l.b16 %v223
    %v943 = vunpack.c.h.b16 %v223
    %v944 = vunpack.c.l.b16 %v224
    %v945 = vunpack.c.h.b16 %v224
    %v946 = vunpack.c.l.b16 %v225
    %v947 = vunpack.c.h.b16 %v225
    %v948 = vunpack.c.l.b16 %v226
    %v949 = vunpack.c.h.b16 %v226
    %v950 = vunpack.c.l.b16 %v227
    %v951 = vunpack.c.h.b16 %v227
    %v952 = vunpack.c.l.b16 %v228
    %v953 = vunpack.c.h.b16 %v228
    %v954 = vunpack.c.l.b16 %v229
    %v955 = vunpack.c.h.b16 %v229
    %v956 = vunpack.c.l.b16 %v230
    %v957 = vunpack.c.h.b16 %v230
    %v958 = vunpack.c.l.b16 %v231
    %v959 = vunpack.c.h.b16 %v231
    %v960 = vunpack.c.l.b16 %v232
    %v961 = vunpack.c.h.b16 %v232
    %v962 = vunpack.c.l.b16 %v233
    %v963 = vunpack.c.h.b16 %v233
    %v964 = vunpack.c.l.b16 %v234
    %v965 = vunpack.c.h.b16 %v234
    %v966 = vunpack.c.l.b16 %v235
    %v967 = vunpack.c.h.b16 %v235
    %v968 = vunpack.c.l.b16 %v236
    %v969 = vunpack.c.h.b16 %v236
    %v970 = vunpack.c.l.b16 %v237
    %v971 = vunpack.c.h.b16 %v237
    %v972 = vunpack.c.l.b16 %v238
    %v973 = vunpack.c.h.b16 %v238
    %v974 = vunpack.c.l.b16 %v239
    %v975 = vunpack.c.h.b16 %v239
    %v976 = vunpack.c.l.b16 %v240
    %v977 = vunpack.c.h.b16 %v240
    %v978 = vunpack.c.l.b16 %v241
    %v979 = vunpack.c.h.b16 %v241
    %v980 = vunpack.c.l.b16 %v242
    %v981 = vunpack.c.h.b16 %v242
    %v982 = vunpack.c.l.b16 %v243
    %v983 = vunpack.c.h.b16 %v243
    %v984 = vunpack.c.l.b16 %v244
    %v985 = vunpack.c.h.b16 %v244
    %v986 = vunpack.c.l.b16 %v245
    %v987 = vunpack.c.h.b16 %v245
    %v988 = vunpack.c.l.b16 %v246
    %v989 = vunpack.c.h.b16 %v246
    %v990 = vunpack.c.l.b16 %v247
    %v991 = vunpack.c.h.b16 %v247
    %v992 = vunpack.c.l.b16 %v248
    %v993 = vunpack.c.h.b16 %v248
    %v994 = vunpack.c.l.b16 %v249
    %v995 = vunpack.c.h.b16 %v249
    %v996 = vunpack.c.l.b16 %v250
    %v997 = vunpack.c.h.b16 %v250
    %v998 = vunpack.c.l.b16 %v251
    %v999 = vunpack.c.h.b16 %v251
    %v1000 = vunpack.c.l.b16 %v252
    %v1001 = vunpack.c.h.b16 %v252
    %v1002 = vunpack.c.l.b16 %v253
    %v1003 = vunpack.c.h.b16 %v253
    %v1004 = vunpack.c.l.b16 %v254
    %v1005 = vunpack.c.h.b16 %v254
    %v1006 = vunpack.c.l.b16 %v255
    %v1007 = vunpack.c.h.b16 %v255
    %v1008 = vunpack.c.l.b16 %v256
    %v1009 = vunpack.c.h.b16 %v256
    %v1010 = vunpack.c.l.b16 %v257
    %v1011 = vunpack.c.h.b16 %v257
    %v1012 = vunpack.c.l.b16 %v258
    %v1013 = vunpack.c.h.b16 %v258
    %v1014 = vunpack.c.l.b16 %v259
    %v1015 = vunpack.c.h.b16 %v259
    %v1016 = vunpack.c.l.b16 %v260
    %v1017 = vunpack.c.h.b16 %v260
    %v1018 = vunpack.c.l.b16 %v261
    %v1019 = vunpack.c.h.b16 %v261
    %v1020 = vunpack.c.l.b16 %v262
    %v1021 = vunpack.c.h.b16 %v262
    %v1022 = vunpack.c.l.b16 %v263
    %v1023 = vunpack.c.h.b16 %v263
    %v1024 = vunpack.c.l.b16 %v264
    %v1025 = vunpack.c.h.b16 %v264
    %v1026 = vunpack.c.l.b16 %v265
    %v1027 = vunpack.c.h.b16 %v265
    %v1028 = vunpack.c.l.b16 %v266
    %v1029 = vunpack.c.h.b16 %v266
    %v1030 = vunpack.c.l.b16 %v267
    %v1031 = vunpack.c.h.b16 %v267
    %v1032 = vunpack.c.l.b16 %v268
    %v1033 = vunpack.c.h.b16 %v268
    %v1034 = vunpack.c.l.b16 %v269
    %v1035 = vunpack.c.h.b16 %v269
    %v1036 = vunpack.c.l.b16 %v270
    %v1037 = vunpack.c.h.b16 %v270
    %v1038 = vunpack.c.l.b16 %v271
    %v1039 = vunpack.c.h.b16 %v271
    %v1040 = vunpack.c.l.b16 %v272
    %v1041 = vunpack.c.h.b16 %v272
    %v1042 = vunpack.c.l.b16 %v273
    %v1043 = vunpack.c.h.b16 %v273
    %v1044 = vunpack.c.l.b16 %v274
    %v1045 = vunpack.c.h.b16 %v274
    %v1046 = vunpack.c.l.b16 %v275
    %v1047 = vunpack.c.h.b16 %v275
    %v1048 = vunpack.c.l.b16 %v276
    %v1049 = vunpack.c.h.b16 %v276
    %v1050 = vunpack.c.l.b16 %v277
    %v1051 = vunpack.c.h.b16 %v277
    %v1052 = vunpack.c.l.b16 %v278
    %v1053 = vunpack.c.h.b16 %v278
    %v1054 = vpack.c.b16 %v558, %v542
    %v1055 = vpack.c.b16 %v559, %v543
    %v1056 = vpack.c.b16 %v560, %v544
    %v1057 = vpack.c.b16 %v561, %v545
    %v1058 = vpack.c.b16 %v562, %v546
    %v1059 = vpack.c.b16 %v563, %v547
    %v1060 = vpack.c.b16 %v564, %v548
    %v1061 = vpack.c.b16 %v565, %v549
    %v1062 = vpack.c.b16 %v566, %v550
    %v1063 = vpack.c.b16 %v567, %v551
    %v1064 = vpack.c.b16 %v568, %v552
    %v1065 = vpack.c.b16 %v569, %v553
    %v1066 = vpack.c.b16 %v570, %v554
    %v1067 = vpack.c.b16 %v571, %v555
    %v1068 = vpack.c.b16 %v572, %v556
    %v1069 = vpack.c.b16 %v573, %v557
    %v1070 = vpack.c.b16 %v590, %v574
    %v1071 = vpack.c.b16 %v591, %v575
    %v1072 = vpack.c.b16 %v592, %v576
    %v1073 = vpack.c.b16 %v593, %v577
    %v1074 = vpack.c.b16 %v594, %v578
    %v1075 = vpack.c.b16 %v595, %v579
    %v1076 = vpack.c.b16 %v596, %v580
    %v1077 = vpack.c.b16 %v597, %v581
    %v1078 = vpack.c.b16 %v598, %v582
    %v1079 = vpack.c.b16 %v599, %v583
    %v1080 = vpack.c.b16 %v600, %v584
    %v1081 = vpack.c.b16 %v601, %v585
    %v1082 = vpack.c.b16 %v602, %v586
    %v1083 = vpack.c.b16 %v603, %v587
    %v1084 = vpack.c.b16 %v604, %v588
    %v1085 = vpack.c.b16 %v605, %v589
    %v1086 = vpack.c.b16 %v622, %v606
    %v1087 = vpack.c.b16 %v623, %v607
    %v1088 = vpack.c.b16 %v624, %v608
    %v1089 = vpack.c.b16 %v625, %v609
    %v1090 = vpack.c.b16 %v626, %v610
    %v1091 = vpack.c.b16 %v627, %v611
    %v1092 = vpack.c.b16 %v628, %v612
    %v1093 = vpack.c.b16 %v629, %v613
    %v1094 = vpack.c.b16 %v630, %v614
    %v1095 = vpack.c.b16 %v631, %v615
    %v1096 = vpack.c.b16 %v632, %v616
    %v1097 = vpack.c.b16 %v633, %v617
    %v1098 = vpack.c.b16 %v634, %v618
    %v1099 = vpack.c.b16 %v635, %v619
    %v1100 = vpack.c.b16 %v636, %v620
    %v1101 = vpack.c.b16 %v637, %v621
    %v1102 = vpack.c.b16 %v654, %v638
    %v1103 = vpack.c.b16 %v655, %v639
    %v1104 = vpack.c.b16 %v656, %v640
    %v1105 = vpack.c.b16 %v657, %v641
    %v1106 = vpack.c.b16 %v658, %v642
    %v1107 = vpack.c.b16 %v659, %v643
    %v1108 = vpack.c.b16 %v660, %v644
    %v1109 = vpack.c.b16 %v661, %v645
    %v1110 = vpack.c.b16 %v662, %v646
    %v1111 = vpack.c.b16 %v663, %v647
    %v1112 = vpack.c.b16 %v664, %v648
    %v1113 = vpack.c.b16 %v665, %v649
    %v1114 = vpack.c.b16 %v666, %v650
    %v1115 = vpack.c.b16 %v667, %v651
    %v1116 = vpack.c.b16 %v668, %v652
    %v1117 = vpack.c.b16 %v669, %v653
    %v1118 = vpack.c.b16 %v686, %v670
    %v1119 = vpack.c.b16 %v687, %v671
    %v1120 = vpack.c.b16 %v688, %v672
    %v1121 = vpack.c.b16 %v689, %v673
    %v1122 = vpack.c.b16 %v690, %v674
    %v1123 = vpack.c.b16 %v691, %v675
    %v1124 = vpack.c.b16 %v692, %v676
    %v1125 = vpack.c.b16 %v693, %v677
    %v1126 = vpack.c.b16 %v694, %v678
    %v1127 = vpack.c.b16 %v695, %v679
    %v1128 = vpack.c.b16 %v696, %v680
    %v1129 = vpack.c.b16 %v697, %v681
    %v1130 = vpack.c.b16 %v698, %v682
    %v1131 = vpack.c.b16 %v699, %v683
    %v1132 = vpack.c.b16 %v700, %v684
    %v1133 = vpack.c.b16 %v701, %v685
    %v1134 = vpack.c.b16 %v718, %v702
    %v1135 = vpack.c.b16 %v719, %v703
    %v1136 = vpack.c.b16 %v720, %v704
    %v1137 = vpack.c.b16 %v721, %v705
    %v1138 = vpack.c.b16 %v722, %v706
    %v1139 = vpack.c.b16 %v723, %v707
    %v1140 = vpack.c.b16 %v724, %v708
    %v1141 = vpack.c.b16 %v725, %v709
    %v1142 = vpack.c.b16 %v726, %v710
    %v1143 = vpack.c.b16 %v727, %v711
    %v1144 = vpack.c.b16 %v728, %v712
    %v1145 = vpack.c.b16 %v729, %v713
    %v1146 = vpack.c.b16 %v730, %v714
    %v1147 = vpack.c.b16 %v731, %v715
    %v1148 = vpack.c.b16 %v732, %v716
    %v1149 = vpack.c.b16 %v733, %v717
    %v1150 = vpack.c.b16 %v750, %v734
    %v1151 = vpack.c.b16 %v751, %v735
    %v1152 = vpack.c.b16 %v752, %v736
    %v1153 = vpack.c.b16 %v753, %v737
    %v1154 = vpack.c.b16 %v754, %v738
    %v1155 = vpack.c.b16 %v755, %v739
    %v1156 = vpack.c.b16 %v756, %v740
    %v1157 = vpack.c.b16 %v757, %v741
    %v1158 = vpack.c.b16 %v758, %v742
    %v1159 = vpack.c.b16 %v759, %v743
    %v1160 = vpack.c.b16 %v760, %v744
    %v1161 = vpack.c.b16 %v761, %v745
    %v1162 = vpack.c.b16 %v762, %v746
    %v1163 = vpack.c.b16 %v763, %v747
    %v1164 = vpack.c.b16 %v764, %v748
    %v1165 = vpack.c.b16 %v765, %v749
    %v1166 = vpack.c.b16 %v782, %v766
    %v1167 = vpack.c.b16 %v783, %v767
    %v1168 = vpack.c.b16 %v784, %v768
    %v1169 = vpack.c.b16 %v785, %v769
    %v1170 = vpack.c.b16 %v786, %v770
    %v1171 = vpack.c.b16 %v787, %v771
    %v1172 = vpack.c.b16 %v788, %v772
    %v1173 = vpack.c.b16 %v789, %v773
    %v1174 = vpack.c.b16 %v790, %v774
    %v1175 = vpack.c.b16 %v791, %v775
    %v1176 = vpack.c.b16 %v792, %v776
    %v1177 = vpack.c.b16 %v793, %v777
    %v1178 = vpack.c.b16 %v794, %v778
    %v1179 = vpack.c.b16 %v795, %v779
    %v1180 = vpack.c.b16 %v796, %v780
    %v1181 = vpack.c.b16 %v797, %v781
    %v1182 = vpack.c.b16 %v814, %v798
    %v1183 = vpack.c.b16 %v815, %v799
    %v1184 = vpack.c.b16 %v816, %v800
    %v1185 = vpack.c.b16 %v817, %v801
    %v1186 = vpack.c.b16 %v818, %v802
    %v1187 = vpack.c.b16 %v819, %v803
    %v1188 = vpack.c.b16 %v820, %v804
    %v1189 = vpack.c.b16 %v821, %v805
    %v1190 = vpack.c.b16 %v822, %v806
    %v1191 = vpack.c.b16 %v823, %v807
    %v1192 = vpack.c.b16 %v824, %v808
    %v1193 = vpack.c.b16 %v825, %v809
    %v1194 = vpack.c.b16 %v826, %v810
    %v1195 = vpack.c.b16 %v827, %v811
    %v1196 = vpack.c.b16 %v828, %v812
    %v1197 = vpack.c.b16 %v829, %v813
    %v1198 = vpack.c.b16 %v846, %v830
    %v1199 = vpack.c.b16 %v847, %v831
    %v1200 = vpack.c.b16 %v848, %v832
    %v1201 = vpack.c.b16 %v849, %v833
    %v1202 = vpack.c.b16 %v850, %v834
    %v1203 = vpack.c.b16 %v851, %v835
    %v1204 = vpack.c.b16 %v852, %v836
    %v1205 = vpack.c.b16 %v853, %v837
    %v1206 = vpack.c.b16 %v854, %v838
    %v1207 = vpack.c.b16 %v855, %v839
    %v1208 = vpack.c.b16 %v856, %v840
    %v1209 = vpack.c.b16 %v857, %v841
    %v1210 = vpack.c.b16 %v858, %v842
    %v1211 = vpack.c.b16 %v859, %v843
    %v1212 = vpack.c.b16 %v860, %v844
    %v1213 = vpack.c.b16 %v861, %v845
    %v1214 = vpack.c.b16 %v878, %v862
    %v1215 = vpack.c.b16 %v879, %v863
    %v1216 = vpack.c.b16 %v880, %v864
    %v1217 = vpack.c.b16 %v881, %v865
    %v1218 = vpack.c.b16 %v882, %v866
    %v1219 = vpack.c.b16 %v883, %v867
    %v1220 = vpack.c.b16 %v884, %v868
    %v1221 = vpack.c.b16 %v885, %v869
    %v1222 = vpack.c.b16 %v886, %v870
    %v1223 = vpack.c.b16 %v887, %v871
    %v1224 = vpack.c.b16 %v888, %v872
    %v1225 = vpack.c.b16 %v889, %v873
    %v1226 = vpack.c.b16 %v890, %v874
    %v1227 = vpack.c.b16 %v891, %v875
    %v1228 = vpack.c.b16 %v892, %v876
    %v1229 = vpack.c.b16 %v893, %v877
    %v1230 = vpack.c.b16 %v910, %v894
    %v1231 = vpack.c.b16 %v911, %v895
    %v1232 = vpack.c.b16 %v912, %v896
    %v1233 = vpack.c.b16 %v913, %v897
    %v1234 = vpack.c.b16 %v914, %v898
    %v1235 = vpack.c.b16 %v915, %v899
    %v1236 = vpack.c.b16 %v916, %v900
    %v1237 = vpack.c.b16 %v917, %v901
    %v1238 = vpack.c.b16 %v918, %v902
    %v1239 = vpack.c.b16 %v919, %v903
    %v1240 = vpack.c.b16 %v920, %v904
    %v1241 = vpack.c.b16 %v921, %v905
    %v1242 = vpack.c.b16 %v922, %v906
    %v1243 = vpack.c.b16 %v923, %v907
    %v1244 = vpack.c.b16 %v924, %v908
    %v1245 = vpack.c.b16 %v925, %v909
    %v1246 = vpack.c.b16 %v942, %v926
    %v1247 = vpack.c.b16 %v943, %v927
    %v1248 = vpack.c.b16 %v944, %v928
    %v1249 = vpack.c.b16 %v945, %v929
    %v1250 = vpack.c.b16 %v946, %v930
    %v1251 = vpack.c.b16 %v947, %v931
    %v1252 = vpack.c.b16 %v948, %v932
    %v1253 = vpack.c.b16 %v949, %v933
    %v1254 = vpack.c.b16 %v950, %v934
    %v1255 = vpack.c.b16 %v951, %v935
    %v1256 = vpack.c.b16 %v952, %v936
    %v1257 = vpack.c.b16 %v953, %v937
    %v1258 = vpack.c.b16 %v954, %v938
    %v1259 = vpack.c.b16 %v955, %v939
    %v1260 = vpack.c.b16 %v956, %v940
    %v1261 = vpack.c.b16 %v957, %v941
    %v1262 = vpack.c.b16 %v974, %v958
    %v1263 = vpack.c.b16 %v975, %v959
    %v1264 = vpack.c.b16 %v976, %v960
    %v1265 = vpack.c.b16 %v977, %v961
    %v1266 = vpack.c.b16 %v978, %v962
    %v1267 = vpack.c.b16 %v979, %v963
    %v1268 = vpack.c.b16 %v980, %v964
    %v1269 = vpack.c.b16 %v981, %v965
    %v1270 = vpack.c.b16 %v982, %v966
    %v1271 = vpack.c.b16 %v983, %v967
    %v1272 = vpack.c.b16 %v984, %v968
    %v1273 = vpack.c.b16 %v985, %v969
    %v1274 = vpack.c.b16 %v986, %v970
    %v1275 = vpack.c.b16 %v987, %v971
    %v1276 = vpack.c.b16 %v988, %v972
    %v1277 = vpack.c.b16 %v989, %v973
    %v1278 = vpack.c.b16 %v1006, %v990
    %v1279 = vpack.c.b16 %v1007, %v991
    %v1280 = vpack.c.b16 %v1008, %v992
    %v1281 = vpack.c.b16 %v1009, %v993
    %v1282 = vpack.c.b16 %v1010, %v994
    %v1283 = vpack.c.b16 %v1011, %v995
    %v1284 = vpack.c.b16 %v1012, %v996
    %v1285 = vpack.c.b16 %v1013, %v997
    %v1286 = vpack.c.b16 %v1014, %v998
    %v1287 = vpack.c.b16 %v1015, %v999
    %v1288 = vpack.c.b16 %v1016, %v1000
    %v1289 = vpack.c.b16 %v1017, %v1001
    %v1290 = vpack.c.b16 %v1018, %v1002
    %v1291 = vpack.c.b16 %v1019, %v1003
    %v1292 = vpack.c.b16 %v1020, %v1004
    %v1293 = vpack.c.b16 %v1021, %v1005
    %v1294 = vpack.c.b16 %v1038, %v1022
    %v1295 = vpack.c.b16 %v1039, %v1023
    %v1296 = vpack.c.b16 %v1040, %v1024
    %v1297 = vpack.c.b16 %v1041, %v1025
    %v1298 = vpack.c.b16 %v1042, %v1026
    %v1299 = vpack.c.b16 %v1043, %v1027
    %v1300 = vpack.c.b16 %v1044, %v1028
    %v1301 = vpack.c.b16 %v1045, %v1029
    %v1302 = vpack.c.b16 %v1046, %v1030
    %v1303 = vpack.c.b16 %v1047, %v1031
    %v1304 = vpack.c.b16 %v1048, %v1032
    %v1305 = vpack.c.b16 %v1049, %v1033
    %v1306 = vpack.c.b16 %v1050, %v1034
    %v1307 = vpack.c.b16 %v1051, %v1035
    %v1308 = vpack.c.b16 %v1052, %v1036
    %v1309 = vpack.c.b16 %v1053, %v1037
    %1566 = vmatprep.subr.bf16.mxu0 %v1055
    %1567 = vmatpush1.bf16.msra.mxu0 %v1054
    %1568 = vmatprep.subr.bf16.mxu0 %v1071
    %1569 = vmatpush1.bf16.msra.mxu0 %v1070
    %1570 = vmatprep.subr.bf16.mxu0 %v1087
    %1571 = vmatpush1.bf16.msra.mxu0 %v1086
    %1572 = vmatprep.subr.bf16.mxu0 %v1103
    %1573 = vmatpush1.bf16.msra.mxu0 %v1102
    %1574 = vmatprep.subr.bf16.mxu0 %v1119
    %1575 = vmatpush1.bf16.msra.mxu0 %v1118
    %1576 = vmatprep.subr.bf16.mxu0 %v1135
    %1577 = vmatpush1.bf16.msra.mxu0 %v1134
    %1578 = vmatprep.subr.bf16.mxu0 %v1151
    %1579 = vmatpush1.bf16.msra.mxu0 %v1150
    %1580 = vmatprep.subr.bf16.mxu0 %v1167
    %1581 = vmatpush1.bf16.msra.mxu0 %v1166
    %1582 = vmatprep.subr.bf16.mxu0 %v1183
    %1583 = vmatpush1.bf16.msra.mxu0 %v1182
    %1584 = vmatprep.subr.bf16.mxu0 %v1199
    %1585 = vmatpush1.bf16.msra.mxu0 %v1198
    %1586 = vmatprep.subr.bf16.mxu0 %v1215
    %1587 = vmatpush1.bf16.msra.mxu0 %v1214
    %1588 = vmatprep.subr.bf16.mxu0 %v1231
    %1589 = vmatpush1.bf16.msra.mxu0 %v1230
    %1590 = vmatprep.subr.bf16.mxu0 %v1247
    %1591 = vmatpush1.bf16.msra.mxu0 %v1246
    %1592 = vmatprep.subr.bf16.mxu0 %v1263
    %1593 = vmatpush1.bf16.msra.mxu0 %v1262
    %1594 = vmatprep.subr.bf16.mxu0 %v1279
    %1595 = vmatpush1.bf16.msra.mxu0 %v1278
    %1596 = vmatprep.subr.bf16.mxu0 %v1295
    %1597 = vmatpush1.bf16.msra.mxu0 %v1294
    %1598 = vmatprep.mubr.bf16.mxu0 %v283
    %1599 = vmatmul.mubr.bf16.gmra.mrb[0].mxu0 %v282
    %v1600 = vpop.f32.mrb[0].mxu0
    %v1601 = vadd.f32 0.0, %v1600
    %v1602 = vpop.f32.mrb[0].mxu0
    %v1603 = vadd.f32 0.0, %v1602
    %v1604 = vpop.f32.mrb[0].mxu0
    %v1605 = vpop.f32.mrb[0].mxu0
    %1606 = vdwg.mxu0
    %1607 = vmatprep.subr.bf16.mxu0 %v1057
    %1608 = vmatpush1.bf16.msra.mxu0 %v1056
    %1609 = vmatprep.subr.bf16.mxu0 %v1073
    %1610 = vmatpush1.bf16.msra.mxu0 %v1072
    %1611 = vmatprep.subr.bf16.mxu0 %v1089
    %1612 = vmatpush1.bf16.msra.mxu0 %v1088
    %1613 = vmatprep.subr.bf16.mxu0 %v1105
    %1614 = vmatpush1.bf16.msra.mxu0 %v1104
    %1615 = vmatprep.subr.bf16.mxu0 %v1121
    %1616 = vmatpush1.bf16.msra.mxu0 %v1120
    %1617 = vmatprep.subr.bf16.mxu0 %v1137
    %1618 = vmatpush1.bf16.msra.mxu0 %v1136
    %1619 = vmatprep.subr.bf16.mxu0 %v1153
    %1620 = vmatpush1.bf16.msra.mxu0 %v1152
    %1621 = vmatprep.subr.bf16.mxu0 %v1169
    %1622 = vmatpush1.bf16.msra.mxu0 %v1168
    %1623 = vmatprep.subr.bf16.mxu0 %v1185
    %1624 = vmatpush1.bf16.msra.mxu0 %v1184
    %1625 = vmatprep.subr.bf16.mxu0 %v1201
    %1626 = vmatpush1.bf16.msra.mxu0 %v1200
    %1627 = vmatprep.subr.bf16.mxu0 %v1217
    %1628 = vmatpush1.bf16.msra.mxu0 %v1216
    %1629 = vmatprep.subr.bf16.mxu0 %v1233
    %1630 = vmatpush1.bf16.msra.mxu0 %v1232
    %1631 = vmatprep.subr.bf16.mxu0 %v1249
    %1632 = vmatpush1.bf16.msra.mxu0 %v1248
    %1633 = vmatprep.subr.bf16.mxu0 %v1265
    %1634 = vmatpush1.bf16.msra.mxu0 %v1264
    %1635 = vmatprep.subr.bf16.mxu0 %v1281
    %1636 = vmatpush1.bf16.msra.mxu0 %v1280
    %1637 = vmatprep.subr.bf16.mxu0 %v1297
    %1638 = vmatpush1.bf16.msra.mxu0 %v1296
    %1639 = vmatprep.mubr.bf16.mxu0 %v283
    %1640 = vmatmul.mubr.bf16.gmra.mrb[0].mxu0 %v282
    %v1641 = vpop.f32.mrb[0].mxu0
    %v1642 = vadd.f32 0.0, %v1641
    %v1643 = vpop.f32.mrb[0].mxu0
    %v1644 = vadd.f32 0.0, %v1643
    %v1645 = vpop.f32.mrb[0].mxu0
    %v1646 = vpop.f32.mrb[0].mxu0
    %1647 = vdwg.mxu0
    %1648 = vmatprep.subr.bf16.mxu0 %v1059
    %1649 = vmatpush1.bf16.msra.mxu0 %v1058
    %1650 = vmatprep.subr.bf16.mxu0 %v1075
    %1651 = vmatpush1.bf16.msra.mxu0 %v1074
    %1652 = vmatprep.subr.bf16.mxu0 %v1091
    %1653 = vmatpush1.bf16.msra.mxu0 %v1090
    %1654 = vmatprep.subr.bf16.mxu0 %v1107
    %1655 = vmatpush1.bf16.msra.mxu0 %v1106
    %1656 = vmatprep.subr.bf16.mxu0 %v1123
    %1657 = vmatpush1.bf16.msra.mxu0 %v1122
    %1658 = vmatprep.subr.bf16.mxu0 %v1139
    %1659 = vmatpush1.bf16.msra.mxu0 %v1138
    %1660 = vmatprep.subr.bf16.mxu0 %v1155
    %1661 = vmatpush1.bf16.msra.mxu0 %v1154
    %1662 = vmatprep.subr.bf16.mxu0 %v1171
    %1663 = vmatpush1.bf16.msra.mxu0 %v1170
    %1664 = vmatprep.subr.bf16.mxu0 %v1187
    %1665 = vmatpush1.bf16.msra.mxu0 %v1186
    %1666 = vmatprep.subr.bf16.mxu0 %v1203
    %1667 = vmatpush1.bf16.msra.mxu0 %v1202
    %1668 = vmatprep.subr.bf16.mxu0 %v1219
    %1669 = vmatpush1.bf16.msra.mxu0 %v1218
    %1670 = vmatprep.subr.bf16.mxu0 %v1235
    %1671 = vmatpush1.bf16.msra.mxu0 %v1234
    %1672 = vmatprep.subr.bf16.mxu0 %v1251
    %1673 = vmatpush1.bf16.msra.mxu0 %v1250
    %1674 = vmatprep.subr.bf16.mxu0 %v1267
    %1675 = vmatpush1.bf16.msra.mxu0 %v1266
    %1676 = vmatprep.subr.bf16.mxu0 %v1283
    %1677 = vmatpush1.bf16.msra.mxu0 %v1282
    %1678 = vmatprep.subr.bf16.mxu0 %v1299
    %1679 = vmatpush1.bf16.msra.mxu0 %v1298
    %1680 = vmatprep.mubr.bf16.mxu0 %v283
    %1681 = vmatmul.mubr.bf16.gmra.mrb[0].mxu0 %v282
    %v1682 = vpop.f32.mrb[0].mxu0
    %v1683 = vadd.f32 0.0, %v1682
    %v1684 = vpop.f32.mrb[0].mxu0
    %v1685 = vadd.f32 0.0, %v1684
    %v1686 = vpop.f32.mrb[0].mxu0
    %v1687 = vpop.f32.mrb[0].mxu0
    %1688 = vdwg.mxu0
    %1689 = vmatprep.subr.bf16.mxu0 %v1061
    %1690 = vmatpush1.bf16.msra.mxu0 %v1060
    %1691 = vmatprep.subr.bf16.mxu0 %v1077
    %1692 = vmatpush1.bf16.msra.mxu0 %v1076
    %1693 = vmatprep.subr.bf16.mxu0 %v1093
    %1694 = vmatpush1.bf16.msra.mxu0 %v1092
    %1695 = vmatprep.subr.bf16.mxu0 %v1109
    %1696 = vmatpush1.bf16.msra.mxu0 %v1108
    %1697 = vmatprep.subr.bf16.mxu0 %v1125
    %1698 = vmatpush1.bf16.msra.mxu0 %v1124
    %1699 = vmatprep.subr.bf16.mxu0 %v1141
    %1700 = vmatpush1.bf16.msra.mxu0 %v1140
    %1701 = vmatprep.subr.bf16.mxu0 %v1157
    %1702 = vmatpush1.bf16.msra.mxu0 %v1156
    %1703 = vmatprep.subr.bf16.mxu0 %v1173
    %1704 = vmatpush1.bf16.msra.mxu0 %v1172
    %1705 = vmatprep.subr.bf16.mxu0 %v1189
    %1706 = vmatpush1.bf16.msra.mxu0 %v1188
    %1707 = vmatprep.subr.bf16.mxu0 %v1205
    %1708 = vmatpush1.bf16.msra.mxu0 %v1204
    %1709 = vmatprep.subr.bf16.mxu0 %v1221
    %1710 = vmatpush1.bf16.msra.mxu0 %v1220
    %1711 = vmatprep.subr.bf16.mxu0 %v1237
    %1712 = vmatpush1.bf16.msra.mxu0 %v1236
    %1713 = vmatprep.subr.bf16.mxu0 %v1253
    %1714 = vmatpush1.bf16.msra.mxu0 %v1252
    %1715 = vmatprep.subr.bf16.mxu0 %v1269
    %1716 = vmatpush1.bf16.msra.mxu0 %v1268
    %1717 = vmatprep.subr.bf16.mxu0 %v1285
    %1718 = vmatpush1.bf16.msra.mxu0 %v1284
    %1719 = vmatprep.subr.bf16.mxu0 %v1301
    %1720 = vmatpush1.bf16.msra.mxu0 %v1300
    %1721 = vmatprep.mubr.bf16.mxu0 %v283
    %1722 = vmatmul.mubr.bf16.gmra.mrb[0].mxu0 %v282
    %v1723 = vpop.f32.mrb[0].mxu0
    %v1724 = vadd.f32 0.0, %v1723
    %v1725 = vpop.f32.mrb[0].mxu0
    %v1726 = vadd.f32 0.0, %v1725
    %v1727 = vpop.f32.mrb[0].mxu0
    %v1728 = vpop.f32.mrb[0].mxu0
    %1729 = vdwg.mxu0
    %1730 = vmatprep.subr.bf16.mxu0 %v1063
    %1731 = vmatpush1.bf16.msra.mxu0 %v1062
    %1732 = vmatprep.subr.bf16.mxu0 %v1079
    %1733 = vmatpush1.bf16.msra.mxu0 %v1078
    %1734 = vmatprep.subr.bf16.mxu0 %v1095
    %1735 = vmatpush1.bf16.msra.mxu0 %v1094
    %1736 = vmatprep.subr.bf16.mxu0 %v1111
    %1737 = vmatpush1.bf16.msra.mxu0 %v1110
    %1738 = vmatprep.subr.bf16.mxu0 %v1127
    %1739 = vmatpush1.bf16.msra.mxu0 %v1126
    %1740 = vmatprep.subr.bf16.mxu0 %v1143
    %1741 = vmatpush1.bf16.msra.mxu0 %v1142
    %1742 = vmatprep.subr.bf16.mxu0 %v1159
    %1743 = vmatpush1.bf16.msra.mxu0 %v1158
    %1744 = vmatprep.subr.bf16.mxu0 %v1175
    %1745 = vmatpush1.bf16.msra.mxu0 %v1174
    %1746 = vmatprep.subr.bf16.mxu0 %v1191
    %1747 = vmatpush1.bf16.msra.mxu0 %v1190
    %1748 = vmatprep.subr.bf16.mxu0 %v1207
    %1749 = vmatpush1.bf16.msra.mxu0 %v1206
    %1750 = vmatprep.subr.bf16.mxu0 %v1223
    %1751 = vmatpush1.bf16.msra.mxu0 %v1222
    %1752 = vmatprep.subr.bf16.mxu0 %v1239
    %1753 = vmatpush1.bf16.msra.mxu0 %v1238
    %1754 = vmatprep.subr.bf16.mxu0 %v1255
    %1755 = vmatpush1.bf16.msra.mxu0 %v1254
    %1756 = vmatprep.subr.bf16.mxu0 %v1271
    %1757 = vmatpush1.bf16.msra.mxu0 %v1270
    %1758 = vmatprep.subr.bf16.mxu0 %v1287
    %1759 = vmatpush1.bf16.msra.mxu0 %v1286
    %1760 = vmatprep.subr.bf16.mxu0 %v1303
    %1761 = vmatpush1.bf16.msra.mxu0 %v1302
    %1762 = vmatprep.mubr.bf16.mxu0 %v283
    %1763 = vmatmul.mubr.bf16.gmra.mrb[0].mxu0 %v282
    %v1764 = vpop.f32.mrb[0].mxu0
    %v1765 = vadd.f32 0.0, %v1764
    %v1766 = vpop.f32.mrb[0].mxu0
    %v1767 = vadd.f32 0.0, %v1766
    %v1768 = vpop.f32.mrb[0].mxu0
    %v1769 = vpop.f32.mrb[0].mxu0
    %1770 = vdwg.mxu0
    %1771 = vmatprep.subr.bf16.mxu0 %v1065
    %1772 = vmatpush1.bf16.msra.mxu0 %v1064
    %1773 = vmatprep.subr.bf16.mxu0 %v1081
    %1774 = vmatpush1.bf16.msra.mxu0 %v1080
    %1775 = vmatprep.subr.bf16.mxu0 %v1097
    %1776 = vmatpush1.bf16.msra.mxu0 %v1096
    %1777 = vmatprep.subr.bf16.mxu0 %v1113
    %1778 = vmatpush1.bf16.msra.mxu0 %v1112
    %1779 = vmatprep.subr.bf16.mxu0 %v1129
    %1780 = vmatpush1.bf16.msra.mxu0 %v1128
    %1781 = vmatprep.subr.bf16.mxu0 %v1145
    %1782 = vmatpush1.bf16.msra.mxu0 %v1144
    %1783 = vmatprep.subr.bf16.mxu0 %v1161
    %1784 = vmatpush1.bf16.msra.mxu0 %v1160
    %1785 = vmatprep.subr.bf16.mxu0 %v1177
    %1786 = vmatpush1.bf16.msra.mxu0 %v1176
    %1787 = vmatprep.subr.bf16.mxu0 %v1193
    %1788 = vmatpush1.bf16.msra.mxu0 %v1192
    %1789 = vmatprep.subr.bf16.mxu0 %v1209
    %1790 = vmatpush1.bf16.msra.mxu0 %v1208
    %1791 = vmatprep.subr.bf16.mxu0 %v1225
    %1792 = vmatpush1.bf16.msra.mxu0 %v1224
    %1793 = vmatprep.subr.bf16.mxu0 %v1241
    %1794 = vmatpush1.bf16.msra.mxu0 %v1240
    %1795 = vmatprep.subr.bf16.mxu0 %v1257
    %1796 = vmatpush1.bf16.msra.mxu0 %v1256
    %1797 = vmatprep.subr.bf16.mxu0 %v1273
    %1798 = vmatpush1.bf16.msra.mxu0 %v1272
    %1799 = vmatprep.subr.bf16.mxu0 %v1289
    %1800 = vmatpush1.bf16.msra.mxu0 %v1288
    %1801 = vmatprep.subr.bf16.mxu0 %v1305
    %1802 = vmatpush1.bf16.msra.mxu0 %v1304
    %1803 = vmatprep.mubr.bf16.mxu0 %v283
    %1804 = vmatmul.mubr.bf16.gmra.mrb[0].mxu0 %v282
    %v1805 = vpop.f32.mrb[0].mxu0
    %v1806 = vadd.f32 0.0, %v1805
    %v1807 = vpop.f32.mrb[0].mxu0
    %v1808 = vadd.f32 0.0, %v1807
    %v1809 = vpop.f32.mrb[0].mxu0
    %v1810 = vpop.f32.mrb[0].mxu0
    %1811 = vdwg.mxu0
    %1812 = vmatprep.subr.bf16.mxu0 %v1067
    %1813 = vmatpush1.bf16.msra.mxu0 %v1066
    %1814 = vmatprep.subr.bf16.mxu0 %v1083
    %1815 = vmatpush1.bf16.msra.mxu0 %v1082
    %1816 = vmatprep.subr.bf16.mxu0 %v1099
    %1817 = vmatpush1.bf16.msra.mxu0 %v1098
    %1818 = vmatprep.subr.bf16.mxu0 %v1115
    %1819 = vmatpush1.bf16.msra.mxu0 %v1114
    %1820 = vmatprep.subr.bf16.mxu0 %v1131
    %1821 = vmatpush1.bf16.msra.mxu0 %v1130
    %1822 = vmatprep.subr.bf16.mxu0 %v1147
    %1823 = vmatpush1.bf16.msra.mxu0 %v1146
    %1824 = vmatprep.subr.bf16.mxu0 %v1163
    %1825 = vmatpush1.bf16.msra.mxu0 %v1162
    %1826 = vmatprep.subr.bf16.mxu0 %v1179
    %1827 = vmatpush1.bf16.msra.mxu0 %v1178
    %1828 = vmatprep.subr.bf16.mxu0 %v1195
    %1829 = vmatpush1.bf16.msra.mxu0 %v1194
    %1830 = vmatprep.subr.bf16.mxu0 %v1211
    %1831 = vmatpush1.bf16.msra.mxu0 %v1210
    %1832 = vmatprep.subr.bf16.mxu0 %v1227
    %1833 = vmatpush1.bf16.msra.mxu0 %v1226
    %1834 = vmatprep.subr.bf16.mxu0 %v1243
    %1835 = vmatpush1.bf16.msra.mxu0 %v1242
    %1836 = vmatprep.subr.bf16.mxu0 %v1259
    %1837 = vmatpush1.bf16.msra.mxu0 %v1258
    %1838 = vmatprep.subr.bf16.mxu0 %v1275
    %1839 = vmatpush1.bf16.msra.mxu0 %v1274
    %1840 = vmatprep.subr.bf16.mxu0 %v1291
    %1841 = vmatpush1.bf16.msra.mxu0 %v1290
    %1842 = vmatprep.subr.bf16.mxu0 %v1307
    %1843 = vmatpush1.bf16.msra.mxu0 %v1306
    %1844 = vmatprep.mubr.bf16.mxu0 %v283
    %1845 = vmatmul.mubr.bf16.gmra.mrb[0].mxu0 %v282
    %v1846 = vpop.f32.mrb[0].mxu0
    %v1847 = vadd.f32 0.0, %v1846
    %v1848 = vpop.f32.mrb[0].mxu0
    %v1849 = vadd.f32 0.0, %v1848
    %v1850 = vpop.f32.mrb[0].mxu0
    %v1851 = vpop.f32.mrb[0].mxu0
    %1852 = vdwg.mxu0
    %1853 = vmatprep.subr.bf16.mxu0 %v1069
    %1854 = vmatpush1.bf16.msra.mxu0 %v1068
    %1855 = vmatprep.subr.bf16.mxu0 %v1085
    %1856 = vmatpush1.bf16.msra.mxu0 %v1084
    %1857 = vmatprep.subr.bf16.mxu0 %v1101
    %1858 = vmatpush1.bf16.msra.mxu0 %v1100
    %1859 = vmatprep.subr.bf16.mxu0 %v1117
    %1860 = vmatpush1.bf16.msra.mxu0 %v1116
    %1861 = vmatprep.subr.bf16.mxu0 %v1133
    %1862 = vmatpush1.bf16.msra.mxu0 %v1132
    %1863 = vmatprep.subr.bf16.mxu0 %v1149
    %1864 = vmatpush1.bf16.msra.mxu0 %v1148
    %1865 = vmatprep.subr.bf16.mxu0 %v1165
    %1866 = vmatpush1.bf16.msra.mxu0 %v1164
    %1867 = vmatprep.subr.bf16.mxu0 %v1181
    %1868 = vmatpush1.bf16.msra.mxu0 %v1180
    %1869 = vmatprep.subr.bf16.mxu0 %v1197
    %1870 = vmatpush1.bf16.msra.mxu0 %v1196
    %1871 = vmatprep.subr.bf16.mxu0 %v1213
    %1872 = vmatpush1.bf16.msra.mxu0 %v1212
    %1873 = vmatprep.subr.bf16.mxu0 %v1229
    %1874 = vmatpush1.bf16.msra.mxu0 %v1228
    %1875 = vmatprep.subr.bf16.mxu0 %v1245
    %1876 = vmatpush1.bf16.msra.mxu0 %v1244
    %1877 = vmatprep.subr.bf16.mxu0 %v1261
    %1878 = vmatpush1.bf16.msra.mxu0 %v1260
    %1879 = vmatprep.subr.bf16.mxu0 %v1277
    %1880 = vmatpush1.bf16.msra.mxu0 %v1276
    %1881 = vmatprep.subr.bf16.mxu0 %v1293
    %1882 = vmatpush1.bf16.msra.mxu0 %v1292
    %1883 = vmatprep.subr.bf16.mxu0 %v1309
    %1884 = vmatpush1.bf16.msra.mxu0 %v1308
    %1885 = vmatprep.mubr.bf16.mxu0 %v283
    %1886 = vmatmul.mubr.bf16.gmra.mrb[0].mxu0 %v282
    %v1887 = vpop.f32.mrb[0].mxu0
    %v1888 = vadd.f32 0.0, %v1887
    %v1889 = vpop.f32.mrb[0].mxu0
    %v1890 = vadd.f32 0.0, %v1889
    %v1891 = vpop.f32.mrb[0].mxu0
    %v1892 = vpop.f32.mrb[0].mxu0
    %1893 = vdwg.mxu0
    %v1894 = vadd.f32 %v1601, 0.0
    %v1895 = vadd.f32 %v1603, 0.0
    %v1896 = vadd.f32 %v1642, 0.0
    %v1897 = vadd.f32 %v1644, 0.0
    %v1898 = vadd.f32 %v1683, 0.0
    %v1899 = vadd.f32 %v1685, 0.0
    %v1900 = vadd.f32 %v1724, 0.0
    %v1901 = vadd.f32 %v1726, 0.0
    %v1902 = vadd.f32 %v1765, 0.0
    %v1903 = vadd.f32 %v1767, 0.0
    %v1904 = vadd.f32 %v1806, 0.0
    %v1905 = vadd.f32 %v1808, 0.0
    %v1906 = vadd.f32 %v1847, 0.0
    %v1907 = vadd.f32 %v1849, 0.0
    %v1908 = vadd.f32 %v1888, 0.0
    %v1909 = vadd.f32 %v1890, 0.0
    %vm1910 = vcmp.ge.f32.partialorder %v1894, 0.5
    %vm1911 = vcmp.ge.f32.partialorder %v1895, 0.5
    %vm1912 = vcmp.ge.f32.partialorder %v1896, 0.5
    %vm1913 = vcmp.ge.f32.partialorder %v1897, 0.5
    %vm1914 = vcmp.ge.f32.partialorder %v1898, 0.5
    %vm1915 = vcmp.ge.f32.partialorder %v1899, 0.5
    %vm1916 = vcmp.ge.f32.partialorder %v1900, 0.5
    %vm1917 = vcmp.ge.f32.partialorder %v1901, 0.5
    %vm1918 = vcmp.ge.f32.partialorder %v1902, 0.5
    %vm1919 = vcmp.ge.f32.partialorder %v1903, 0.5
    %vm1920 = vcmp.ge.f32.partialorder %v1904, 0.5
    %vm1921 = vcmp.ge.f32.partialorder %v1905, 0.5
    %vm1922 = vcmp.ge.f32.partialorder %v1906, 0.5
    %vm1923 = vcmp.ge.f32.partialorder %v1907, 0.5
    %vm1924 = vcmp.ge.f32.partialorder %v1908, 0.5
    %vm1925 = vcmp.ge.f32.partialorder %v1909, 0.5
    %v1926 = vsel %vm1910, 0.0, %v1894
    %v1927 = vsel %vm1911, 0.0, %v1895
    %v1928 = vsel %vm1912, 0.0, %v1896
    %v1929 = vsel %vm1913, 0.0, %v1897
    %v1930 = vsel %vm1914, 0.0, %v1898
    %v1931 = vsel %vm1915, 0.0, %v1899
    %v1932 = vsel %vm1916, 0.0, %v1900
    %v1933 = vsel %vm1917, 0.0, %v1901
    %v1934 = vsel %vm1918, 0.0, %v1902
    %v1935 = vsel %vm1919, 0.0, %v1903
    %v1936 = vsel %vm1920, 0.0, %v1904
    %v1937 = vsel %vm1921, 0.0, %v1905
    %v1938 = vsel %vm1922, 0.0, %v1906
    %v1939 = vsel %vm1923, 0.0, %v1907
    %v1940 = vsel %vm1924, 0.0, %v1908
    %v1941 = vsel %vm1925, 0.0, %v1909
    %v1942 = vsel %vm1910, 1, 0
    %v1943 = vsel %vm1911, 1, 0
    %v1944 = vsel %vm1912, 1, 0
    %v1945 = vsel %vm1913, 1, 0
    %v1946 = vsel %vm1914, 1, 0
    %v1947 = vsel %vm1915, 1, 0
    %v1948 = vsel %vm1916, 1, 0
    %v1949 = vsel %vm1917, 1, 0
    %v1950 = vsel %vm1918, 1, 0
    %v1951 = vsel %vm1919, 1, 0
    %v1952 = vsel %vm1920, 1, 0
    %v1953 = vsel %vm1921, 1, 0
    %v1954 = vsel %vm1922, 1, 0
    %v1955 = vsel %vm1923, 1, 0
    %v1956 = vsel %vm1924, 1, 0
    %v1957 = vsel %vm1925, 1, 0
    %v1958 = vcvt.s32.f32 %v1942
    %v1959 = vcvt.s32.f32 %v1943
    %v1960 = vcvt.s32.f32 %v1944
    %v1961 = vcvt.s32.f32 %v1945
    %v1962 = vcvt.s32.f32 %v1946
    %v1963 = vcvt.s32.f32 %v1947
    %v1964 = vcvt.s32.f32 %v1948
    %v1965 = vcvt.s32.f32 %v1949
    %v1966 = vcvt.s32.f32 %v1950
    %v1967 = vcvt.s32.f32 %v1951
    %v1968 = vcvt.s32.f32 %v1952
    %v1969 = vcvt.s32.f32 %v1953
    %v1970 = vcvt.s32.f32 %v1954
    %v1971 = vcvt.s32.f32 %v1955
    %v1972 = vcvt.s32.f32 %v1956
    %v1973 = vcvt.s32.f32 %v1957
    %v1974 = vpack.c.bf16 %v1958, %v1958
    %v1975 = vpack.c.bf16 %v1959, %v1959
    %v1976 = vpack.c.bf16 %v1960, %v1960
    %v1977 = vpack.c.bf16 %v1961, %v1961
    %v1978 = vpack.c.bf16 %v1962, %v1962
    %v1979 = vpack.c.bf16 %v1963, %v1963
    %v1980 = vpack.c.bf16 %v1964, %v1964
    %v1981 = vpack.c.bf16 %v1965, %v1965
    %v1982 = vpack.c.bf16 %v1966, %v1966
    %v1983 = vpack.c.bf16 %v1967, %v1967
    %v1984 = vpack.c.bf16 %v1968, %v1968
    %v1985 = vpack.c.bf16 %v1969, %v1969
    %v1986 = vpack.c.bf16 %v1970, %v1970
    %v1987 = vpack.c.bf16 %v1971, %v1971
    %v1988 = vpack.c.bf16 %v1972, %v1972
    %v1989 = vpack.c.bf16 %v1973, %v1973
    %v1990 = vld [vmem:[%s2] sm:$0xff]
    %v1991 = vld [vmem:[%s2 + $0x8] sm:$0xff]
    %v1992 = vld [vmem:[%s2 + $0x10] sm:$0xff]
    %v1993 = vld [vmem:[%s2 + $0x18] sm:$0xff]
    %v1994 = vld [vmem:[%s2 + $0x20] sm:$0xff]
    %v1995 = vld [vmem:[%s2 + $0x28] sm:$0xff]
    %v1996 = vld [vmem:[%s2 + $0x30] sm:$0xff]
    %v1997 = vld [vmem:[%s2 + $0x38] sm:$0xff]
    %v1998 = vld [vmem:[%s2 + $0x40] sm:$0xff]
    %v1999 = vld [vmem:[%s2 + $0x48] sm:$0xff]
    %v2000 = vld [vmem:[%s2 + $0x50] sm:$0xff]
    %v2001 = vld [vmem:[%s2 + $0x58] sm:$0xff]
    %v2002 = vld [vmem:[%s2 + $0x60] sm:$0xff]
    %v2003 = vld [vmem:[%s2 + $0x68] sm:$0xff]
    %v2004 = vld [vmem:[%s2 + $0x70] sm:$0xff]
    %v2005 = vld [vmem:[%s2 + $0x78] sm:$0xff]
    %v2006 = vld [vmem:[%s2 + $0x80] sm:$0xff]
    %v2007 = vld [vmem:[%s2 + $0x88] sm:$0xff]
    %v2008 = vld [vmem:[%s2 + $0x90] sm:$0xff]
    %v2009 = vld [vmem:[%s2 + $0x98] sm:$0xff]
    %v2010 = vld [vmem:[%s2 + $0xa0] sm:$0xff]
    %v2011 = vld [vmem:[%s2 + $0xa8] sm:$0xff]
    %v2012 = vld [vmem:[%s2 + $0xb0] sm:$0xff]
    %v2013 = vld [vmem:[%s2 + $0xb8] sm:$0xff]
    %v2014 = vld [vmem:[%s2 + $0xc0] sm:$0xff]
    %v2015 = vld [vmem:[%s2 + $0xc8] sm:$0xff]
    %v2016 = vld [vmem:[%s2 + $0xd0] sm:$0xff]
    %v2017 = vld [vmem:[%s2 + $0xd8] sm:$0xff]
    %v2018 = vld [vmem:[%s2 + $0xe0] sm:$0xff]
    %v2019 = vld [vmem:[%s2 + $0xe8] sm:$0xff]
    %v2020 = vld [vmem:[%s2 + $0xf0] sm:$0xff]
    %v2021 = vld [vmem:[%s2 + $0xf8] sm:$0xff]
    %v2022 = vld [vmem:[%s2 + $0x100] sm:$0xff]
    %v2023 = vld [vmem:[%s2 + $0x108] sm:$0xff]
    %v2024 = vld [vmem:[%s2 + $0x110] sm:$0xff]
    %v2025 = vld [vmem:[%s2 + $0x118] sm:$0xff]
    %v2026 = vld [vmem:[%s2 + $0x120] sm:$0xff]
    %v2027 = vld [vmem:[%s2 + $0x128] sm:$0xff]
    %v2028 = vld [vmem:[%s2 + $0x130] sm:$0xff]
    %v2029 = vld [vmem:[%s2 + $0x138] sm:$0xff]
    %v2030 = vld [vmem:[%s2 + $0x140] sm:$0xff]
    %v2031 = vld [vmem:[%s2 + $0x148] sm:$0xff]
    %v2032 = vld [vmem:[%s2 + $0x150] sm:$0xff]
    %v2033 = vld [vmem:[%s2 + $0x158] sm:$0xff]
    %v2034 = vld [vmem:[%s2 + $0x160] sm:$0xff]
    %v2035 = vld [vmem:[%s2 + $0x168] sm:$0xff]
    %v2036 = vld [vmem:[%s2 + $0x170] sm:$0xff]
    %v2037 = vld [vmem:[%s2 + $0x178] sm:$0xff]
    %v2038 = vld [vmem:[%s2 + $0x180] sm:$0xff]
    %v2039 = vld [vmem:[%s2 + $0x188] sm:$0xff]
    %v2040 = vld [vmem:[%s2 + $0x190] sm:$0xff]
    %v2041 = vld [vmem:[%s2 + $0x198] sm:$0xff]
    %v2042 = vld [vmem:[%s2 + $0x1a0] sm:$0xff]
    %v2043 = vld [vmem:[%s2 + $0x1a8] sm:$0xff]
    %v2044 = vld [vmem:[%s2 + $0x1b0] sm:$0xff]
    %v2045 = vld [vmem:[%s2 + $0x1b8] sm:$0xff]
    %v2046 = vld [vmem:[%s2 + $0x1c0] sm:$0xff]
    %v2047 = vld [vmem:[%s2 + $0x1c8] sm:$0xff]
    %v2048 = vld [vmem:[%s2 + $0x1d0] sm:$0xff]
    %v2049 = vld [vmem:[%s2 + $0x1d8] sm:$0xff]
    %v2050 = vld [vmem:[%s2 + $0x1e0] sm:$0xff]
    %v2051 = vld [vmem:[%s2 + $0x1e8] sm:$0xff]
    %v2052 = vld [vmem:[%s2 + $0x1f0] sm:$0xff]
    %v2053 = vld [vmem:[%s2 + $0x1f8] sm:$0xff]
    %v2054 = vld [vmem:[%s2 + $0x200] sm:$0xff]
    %v2055 = vld [vmem:[%s2 + $0x208] sm:$0xff]
    %v2056 = vld [vmem:[%s2 + $0x210] sm:$0xff]
    %v2057 = vld [vmem:[%s2 + $0x218] sm:$0xff]
    %v2058 = vld [vmem:[%s2 + $0x220] sm:$0xff]
    %v2059 = vld [vmem:[%s2 + $0x228] sm:$0xff]
    %v2060 = vld [vmem:[%s2 + $0x230] sm:$0xff]
    %v2061 = vld [vmem:[%s2 + $0x238] sm:$0xff]
    %v2062 = vld [vmem:[%s2 + $0x240] sm:$0xff]
    %v2063 = vld [vmem:[%s2 + $0x248] sm:$0xff]
    %v2064 = vld [vmem:[%s2 + $0x250] sm:$0xff]
    %v2065 = vld [vmem:[%s2 + $0x258] sm:$0xff]
    %v2066 = vld [vmem:[%s2 + $0x260] sm:$0xff]
    %v2067 = vld [vmem:[%s2 + $0x268] sm:$0xff]
    %v2068 = vld [vmem:[%s2 + $0x270] sm:$0xff]
    %v2069 = vld [vmem:[%s2 + $0x278] sm:$0xff]
    %v2070 = vld [vmem:[%s2 + $0x280] sm:$0xff]
    %v2071 = vld [vmem:[%s2 + $0x288] sm:$0xff]
    %v2072 = vld [vmem:[%s2 + $0x290] sm:$0xff]
    %v2073 = vld [vmem:[%s2 + $0x298] sm:$0xff]
    %v2074 = vld [vmem:[%s2 + $0x2a0] sm:$0xff]
    %v2075 = vld [vmem:[%s2 + $0x2a8] sm:$0xff]
    %v2076 = vld [vmem:[%s2 + $0x2b0] sm:$0xff]
    %v2077 = vld [vmem:[%s2 + $0x2b8] sm:$0xff]
    %v2078 = vld [vmem:[%s2 + $0x2c0] sm:$0xff]
    %v2079 = vld [vmem:[%s2 + $0x2c8] sm:$0xff]
    %v2080 = vld [vmem:[%s2 + $0x2d0] sm:$0xff]
    %v2081 = vld [vmem:[%s2 + $0x2d8] sm:$0xff]
    %v2082 = vld [vmem:[%s2 + $0x2e0] sm:$0xff]
    %v2083 = vld [vmem:[%s2 + $0x2e8] sm:$0xff]
    %v2084 = vld [vmem:[%s2 + $0x2f0] sm:$0xff]
    %v2085 = vld [vmem:[%s2 + $0x2f8] sm:$0xff]
    %v2086 = vld [vmem:[%s2 + $0x300] sm:$0xff]
    %v2087 = vld [vmem:[%s2 + $0x308] sm:$0xff]
    %v2088 = vld [vmem:[%s2 + $0x310] sm:$0xff]
    %v2089 = vld [vmem:[%s2 + $0x318] sm:$0xff]
    %v2090 = vld [vmem:[%s2 + $0x320] sm:$0xff]
    %v2091 = vld [vmem:[%s2 + $0x328] sm:$0xff]
    %v2092 = vld [vmem:[%s2 + $0x330] sm:$0xff]
    %v2093 = vld [vmem:[%s2 + $0x338] sm:$0xff]
    %v2094 = vld [vmem:[%s2 + $0x340] sm:$0xff]
    %v2095 = vld [vmem:[%s2 + $0x348] sm:$0xff]
    %v2096 = vld [vmem:[%s2 + $0x350] sm:$0xff]
    %v2097 = vld [vmem:[%s2 + $0x358] sm:$0xff]
    %v2098 = vld [vmem:[%s2 + $0x360] sm:$0xff]
    %v2099 = vld [vmem:[%s2 + $0x368] sm:$0xff]
    %v2100 = vld [vmem:[%s2 + $0x370] sm:$0xff]
    %v2101 = vld [vmem:[%s2 + $0x378] sm:$0xff]
    %v2102 = vld [vmem:[%s2 + $0x380] sm:$0xff]
    %v2103 = vld [vmem:[%s2 + $0x388] sm:$0xff]
    %v2104 = vld [vmem:[%s2 + $0x390] sm:$0xff]
    %v2105 = vld [vmem:[%s2 + $0x398] sm:$0xff]
    %v2106 = vld [vmem:[%s2 + $0x3a0] sm:$0xff]
    %v2107 = vld [vmem:[%s2 + $0x3a8] sm:$0xff]
    %v2108 = vld [vmem:[%s2 + $0x3b0] sm:$0xff]
    %v2109 = vld [vmem:[%s2 + $0x3b8] sm:$0xff]
    %v2110 = vld [vmem:[%s2 + $0x3c0] sm:$0xff]
    %v2111 = vld [vmem:[%s2 + $0x3c8] sm:$0xff]
    %v2112 = vld [vmem:[%s2 + $0x3d0] sm:$0xff]
    %v2113 = vld [vmem:[%s2 + $0x3d8] sm:$0xff]
    %v2114 = vld [vmem:[%s2 + $0x3e0] sm:$0xff]
    %v2115 = vld [vmem:[%s2 + $0x3e8] sm:$0xff]
    %v2116 = vld [vmem:[%s2 + $0x3f0] sm:$0xff]
    %v2117 = vld [vmem:[%s2 + $0x3f8] sm:$0xff]
    %v2118 = vld [vmem:[%s2 + $0x400] sm:$0xff]
    %v2119 = vld [vmem:[%s2 + $0x408] sm:$0xff]
    %v2120 = vld [vmem:[%s2 + $0x410] sm:$0xff]
    %v2121 = vld [vmem:[%s2 + $0x418] sm:$0xff]
    %v2122 = vld [vmem:[%s2 + $0x420] sm:$0xff]
    %v2123 = vld [vmem:[%s2 + $0x428] sm:$0xff]
    %v2124 = vld [vmem:[%s2 + $0x430] sm:$0xff]
    %v2125 = vld [vmem:[%s2 + $0x438] sm:$0xff]
    %v2126 = vld [vmem:[%s2 + $0x440] sm:$0xff]
    %v2127 = vld [vmem:[%s2 + $0x448] sm:$0xff]
    %v2128 = vld [vmem:[%s2 + $0x450] sm:$0xff]
    %v2129 = vld [vmem:[%s2 + $0x458] sm:$0xff]
    %v2130 = vld [vmem:[%s2 + $0x460] sm:$0xff]
    %v2131 = vld [vmem:[%s2 + $0x468] sm:$0xff]
    %v2132 = vld [vmem:[%s2 + $0x470] sm:$0xff]
    %v2133 = vld [vmem:[%s2 + $0x478] sm:$0xff]
    %v2134 = vld [vmem:[%s2 + $0x480] sm:$0xff]
    %v2135 = vld [vmem:[%s2 + $0x488] sm:$0xff]
    %v2136 = vld [vmem:[%s2 + $0x490] sm:$0xff]
    %v2137 = vld [vmem:[%s2 + $0x498] sm:$0xff]
    %v2138 = vld [vmem:[%s2 + $0x4a0] sm:$0xff]
    %v2139 = vld [vmem:[%s2 + $0x4a8] sm:$0xff]
    %v2140 = vld [vmem:[%s2 + $0x4b0] sm:$0xff]
    %v2141 = vld [vmem:[%s2 + $0x4b8] sm:$0xff]
    %v2142 = vld [vmem:[%s2 + $0x4c0] sm:$0xff]
    %v2143 = vld [vmem:[%s2 + $0x4c8] sm:$0xff]
    %v2144 = vld [vmem:[%s2 + $0x4d0] sm:$0xff]
    %v2145 = vld [vmem:[%s2 + $0x4d8] sm:$0xff]
    %v2146 = vld [vmem:[%s2 + $0x4e0] sm:$0xff]
    %v2147 = vld [vmem:[%s2 + $0x4e8] sm:$0xff]
    %v2148 = vld [vmem:[%s2 + $0x4f0] sm:$0xff]
    %v2149 = vld [vmem:[%s2 + $0x4f8] sm:$0xff]
    %v2150 = vld [vmem:[%s2 + $0x500] sm:$0xff]
    %v2151 = vld [vmem:[%s2 + $0x508] sm:$0xff]
    %v2152 = vld [vmem:[%s2 + $0x510] sm:$0xff]
    %v2153 = vld [vmem:[%s2 + $0x518] sm:$0xff]
    %v2154 = vld [vmem:[%s2 + $0x520] sm:$0xff]
    %v2155 = vld [vmem:[%s2 + $0x528] sm:$0xff]
    %v2156 = vld [vmem:[%s2 + $0x530] sm:$0xff]
    %v2157 = vld [vmem:[%s2 + $0x538] sm:$0xff]
    %v2158 = vld [vmem:[%s2 + $0x540] sm:$0xff]
    %v2159 = vld [vmem:[%s2 + $0x548] sm:$0xff]
    %v2160 = vld [vmem:[%s2 + $0x550] sm:$0xff]
    %v2161 = vld [vmem:[%s2 + $0x558] sm:$0xff]
    %v2162 = vld [vmem:[%s2 + $0x560] sm:$0xff]
    %v2163 = vld [vmem:[%s2 + $0x568] sm:$0xff]
    %v2164 = vld [vmem:[%s2 + $0x570] sm:$0xff]
    %v2165 = vld [vmem:[%s2 + $0x578] sm:$0xff]
    %v2166 = vld [vmem:[%s2 + $0x580] sm:$0xff]
    %v2167 = vld [vmem:[%s2 + $0x588] sm:$0xff]
    %v2168 = vld [vmem:[%s2 + $0x590] sm:$0xff]
    %v2169 = vld [vmem:[%s2 + $0x598] sm:$0xff]
    %v2170 = vld [vmem:[%s2 + $0x5a0] sm:$0xff]
    %v2171 = vld [vmem:[%s2 + $0x5a8] sm:$0xff]
    %v2172 = vld [vmem:[%s2 + $0x5b0] sm:$0xff]
    %v2173 = vld [vmem:[%s2 + $0x5b8] sm:$0xff]
    %v2174 = vld [vmem:[%s2 + $0x5c0] sm:$0xff]
    %v2175 = vld [vmem:[%s2 + $0x5c8] sm:$0xff]
    %v2176 = vld [vmem:[%s2 + $0x5d0] sm:$0xff]
    %v2177 = vld [vmem:[%s2 + $0x5d8] sm:$0xff]
    %v2178 = vld [vmem:[%s2 + $0x5e0] sm:$0xff]
    %v2179 = vld [vmem:[%s2 + $0x5e8] sm:$0xff]
    %v2180 = vld [vmem:[%s2 + $0x5f0] sm:$0xff]
    %v2181 = vld [vmem:[%s2 + $0x5f8] sm:$0xff]
    %v2182 = vld [vmem:[%s2 + $0x600] sm:$0xff]
    %v2183 = vld [vmem:[%s2 + $0x608] sm:$0xff]
    %v2184 = vld [vmem:[%s2 + $0x610] sm:$0xff]
    %v2185 = vld [vmem:[%s2 + $0x618] sm:$0xff]
    %v2186 = vld [vmem:[%s2 + $0x620] sm:$0xff]
    %v2187 = vld [vmem:[%s2 + $0x628] sm:$0xff]
    %v2188 = vld [vmem:[%s2 + $0x630] sm:$0xff]
    %v2189 = vld [vmem:[%s2 + $0x638] sm:$0xff]
    %v2190 = vld [vmem:[%s2 + $0x640] sm:$0xff]
    %v2191 = vld [vmem:[%s2 + $0x648] sm:$0xff]
    %v2192 = vld [vmem:[%s2 + $0x650] sm:$0xff]
    %v2193 = vld [vmem:[%s2 + $0x658] sm:$0xff]
    %v2194 = vld [vmem:[%s2 + $0x660] sm:$0xff]
    %v2195 = vld [vmem:[%s2 + $0x668] sm:$0xff]
    %v2196 = vld [vmem:[%s2 + $0x670] sm:$0xff]
    %v2197 = vld [vmem:[%s2 + $0x678] sm:$0xff]
    %v2198 = vld [vmem:[%s2 + $0x680] sm:$0xff]
    %v2199 = vld [vmem:[%s2 + $0x688] sm:$0xff]
    %v2200 = vld [vmem:[%s2 + $0x690] sm:$0xff]
    %v2201 = vld [vmem:[%s2 + $0x698] sm:$0xff]
    %v2202 = vld [vmem:[%s2 + $0x6a0] sm:$0xff]
    %v2203 = vld [vmem:[%s2 + $0x6a8] sm:$0xff]
    %v2204 = vld [vmem:[%s2 + $0x6b0] sm:$0xff]
    %v2205 = vld [vmem:[%s2 + $0x6b8] sm:$0xff]
    %v2206 = vld [vmem:[%s2 + $0x6c0] sm:$0xff]
    %v2207 = vld [vmem:[%s2 + $0x6c8] sm:$0xff]
    %v2208 = vld [vmem:[%s2 + $0x6d0] sm:$0xff]
    %v2209 = vld [vmem:[%s2 + $0x6d8] sm:$0xff]
    %v2210 = vld [vmem:[%s2 + $0x6e0] sm:$0xff]
    %v2211 = vld [vmem:[%s2 + $0x6e8] sm:$0xff]
    %v2212 = vld [vmem:[%s2 + $0x6f0] sm:$0xff]
    %v2213 = vld [vmem:[%s2 + $0x6f8] sm:$0xff]
    %v2214 = vld [vmem:[%s2 + $0x700] sm:$0xff]
    %v2215 = vld [vmem:[%s2 + $0x708] sm:$0xff]
    %v2216 = vld [vmem:[%s2 + $0x710] sm:$0xff]
    %v2217 = vld [vmem:[%s2 + $0x718] sm:$0xff]
    %v2218 = vld [vmem:[%s2 + $0x720] sm:$0xff]
    %v2219 = vld [vmem:[%s2 + $0x728] sm:$0xff]
    %v2220 = vld [vmem:[%s2 + $0x730] sm:$0xff]
    %v2221 = vld [vmem:[%s2 + $0x738] sm:$0xff]
    %v2222 = vld [vmem:[%s2 + $0x740] sm:$0xff]
    %v2223 = vld [vmem:[%s2 + $0x748] sm:$0xff]
    %v2224 = vld [vmem:[%s2 + $0x750] sm:$0xff]
    %v2225 = vld [vmem:[%s2 + $0x758] sm:$0xff]
    %v2226 = vld [vmem:[%s2 + $0x760] sm:$0xff]
    %v2227 = vld [vmem:[%s2 + $0x768] sm:$0xff]
    %v2228 = vld [vmem:[%s2 + $0x770] sm:$0xff]
    %v2229 = vld [vmem:[%s2 + $0x778] sm:$0xff]
    %v2230 = vld [vmem:[%s2 + $0x780] sm:$0xff]
    %v2231 = vld [vmem:[%s2 + $0x788] sm:$0xff]
    %v2232 = vld [vmem:[%s2 + $0x790] sm:$0xff]
    %v2233 = vld [vmem:[%s2 + $0x798] sm:$0xff]
    %v2234 = vld [vmem:[%s2 + $0x7a0] sm:$0xff]
    %v2235 = vld [vmem:[%s2 + $0x7a8] sm:$0xff]
    %v2236 = vld [vmem:[%s2 + $0x7b0] sm:$0xff]
    %v2237 = vld [vmem:[%s2 + $0x7b8] sm:$0xff]
    %v2238 = vld [vmem:[%s2 + $0x7c0] sm:$0xff]
    %v2239 = vld [vmem:[%s2 + $0x7c8] sm:$0xff]
    %v2240 = vld [vmem:[%s2 + $0x7d0] sm:$0xff]
    %v2241 = vld [vmem:[%s2 + $0x7d8] sm:$0xff]
    %v2242 = vld [vmem:[%s2 + $0x7e0] sm:$0xff]
    %v2243 = vld [vmem:[%s2 + $0x7e8] sm:$0xff]
    %v2244 = vld [vmem:[%s2 + $0x7f0] sm:$0xff]
    %v2245 = vld [vmem:[%s2 + $0x7f8] sm:$0xff]
    %v2246 = vld [vmem:[%s2 + $0x800] sm:$0xff]
    %v2247 = vld [vmem:[%s2 + $0x808] sm:$0xff]
    %v2248 = vld [vmem:[%s2 + $0x810] sm:$0xff]
    %v2249 = vld [vmem:[%s2 + $0x818] sm:$0xff]
    %v2250 = vld [vmem:[%s2 + $0x820] sm:$0xff]
    %v2251 = vld [vmem:[%s2 + $0x828] sm:$0xff]
    %v2252 = vld [vmem:[%s2 + $0x830] sm:$0xff]
    %v2253 = vld [vmem:[%s2 + $0x838] sm:$0xff]
    %v2254 = vld [vmem:[%s2 + $0x840] sm:$0xff]
    %v2255 = vld [vmem:[%s2 + $0x848] sm:$0xff]
    %v2256 = vld [vmem:[%s2 + $0x850] sm:$0xff]
    %v2257 = vld [vmem:[%s2 + $0x858] sm:$0xff]
    %v2258 = vld [vmem:[%s2 + $0x860] sm:$0xff]
    %v2259 = vld [vmem:[%s2 + $0x868] sm:$0xff]
    %v2260 = vld [vmem:[%s2 + $0x870] sm:$0xff]
    %v2261 = vld [vmem:[%s2 + $0x878] sm:$0xff]
    %v2262 = vld [vmem:[%s2 + $0x880] sm:$0xff]
    %v2263 = vld [vmem:[%s2 + $0x888] sm:$0xff]
    %v2264 = vld [vmem:[%s2 + $0x890] sm:$0xff]
    %v2265 = vld [vmem:[%s2 + $0x898] sm:$0xff]
    %v2266 = vld [vmem:[%s2 + $0x8a0] sm:$0xff]
    %v2267 = vld [vmem:[%s2 + $0x8a8] sm:$0xff]
    %v2268 = vld [vmem:[%s2 + $0x8b0] sm:$0xff]
    %v2269 = vld [vmem:[%s2 + $0x8b8] sm:$0xff]
    %v2270 = vld [vmem:[%s2 + $0x8c0] sm:$0xff]
    %v2271 = vld [vmem:[%s2 + $0x8c8] sm:$0xff]
    %v2272 = vld [vmem:[%s2 + $0x8d0] sm:$0xff]
    %v2273 = vld [vmem:[%s2 + $0x8d8] sm:$0xff]
    %v2274 = vld [vmem:[%s2 + $0x8e0] sm:$0xff]
    %v2275 = vld [vmem:[%s2 + $0x8e8] sm:$0xff]
    %v2276 = vld [vmem:[%s2 + $0x8f0] sm:$0xff]
    %v2277 = vld [vmem:[%s2 + $0x8f8] sm:$0xff]
    %v2278 = vld [vmem:[%s2 + $0x900] sm:$0xff]
    %v2279 = vld [vmem:[%s2 + $0x908] sm:$0xff]
    %v2280 = vld [vmem:[%s2 + $0x910] sm:$0xff]
    %v2281 = vld [vmem:[%s2 + $0x918] sm:$0xff]
    %v2282 = vld [vmem:[%s2 + $0x920] sm:$0xff]
    %v2283 = vld [vmem:[%s2 + $0x928] sm:$0xff]
    %v2284 = vld [vmem:[%s2 + $0x930] sm:$0xff]
    %v2285 = vld [vmem:[%s2 + $0x938] sm:$0xff]
    %v2286 = vld [vmem:[%s2 + $0x940] sm:$0xff]
    %v2287 = vld [vmem:[%s2 + $0x948] sm:$0xff]
    %v2288 = vld [vmem:[%s2 + $0x950] sm:$0xff]
    %v2289 = vld [vmem:[%s2 + $0x958] sm:$0xff]
    %v2290 = vld [vmem:[%s2 + $0x960] sm:$0xff]
    %v2291 = vld [vmem:[%s2 + $0x968] sm:$0xff]
    %v2292 = vld [vmem:[%s2 + $0x970] sm:$0xff]
    %v2293 = vld [vmem:[%s2 + $0x978] sm:$0xff]
    %v2294 = vld [vmem:[%s2 + $0x980] sm:$0xff]
    %v2295 = vld [vmem:[%s2 + $0x988] sm:$0xff]
    %v2296 = vld [vmem:[%s2 + $0x990] sm:$0xff]
    %v2297 = vld [vmem:[%s2 + $0x998] sm:$0xff]
    %v2298 = vld [vmem:[%s2 + $0x9a0] sm:$0xff]
    %v2299 = vld [vmem:[%s2 + $0x9a8] sm:$0xff]
    %v2300 = vld [vmem:[%s2 + $0x9b0] sm:$0xff]
    %v2301 = vld [vmem:[%s2 + $0x9b8] sm:$0xff]
    %v2302 = vld [vmem:[%s2 + $0x9c0] sm:$0xff]
    %v2303 = vld [vmem:[%s2 + $0x9c8] sm:$0xff]
    %v2304 = vld [vmem:[%s2 + $0x9d0] sm:$0xff]
    %v2305 = vld [vmem:[%s2 + $0x9d8] sm:$0xff]
    %v2306 = vld [vmem:[%s2 + $0x9e0] sm:$0xff]
    %v2307 = vld [vmem:[%s2 + $0x9e8] sm:$0xff]
    %v2308 = vld [vmem:[%s2 + $0x9f0] sm:$0xff]
    %v2309 = vld [vmem:[%s2 + $0x9f8] sm:$0xff]
    %v2310 = vld [vmem:[%s2 + $0xa00] sm:$0xff]
    %v2311 = vld [vmem:[%s2 + $0xa08] sm:$0xff]
    %v2312 = vld [vmem:[%s2 + $0xa10] sm:$0xff]
    %v2313 = vld [vmem:[%s2 + $0xa18] sm:$0xff]
    %v2314 = vld [vmem:[%s2 + $0xa20] sm:$0xff]
    %v2315 = vld [vmem:[%s2 + $0xa28] sm:$0xff]
    %v2316 = vld [vmem:[%s2 + $0xa30] sm:$0xff]
    %v2317 = vld [vmem:[%s2 + $0xa38] sm:$0xff]
    %v2318 = vld [vmem:[%s2 + $0xa40] sm:$0xff]
    %v2319 = vld [vmem:[%s2 + $0xa48] sm:$0xff]
    %v2320 = vld [vmem:[%s2 + $0xa50] sm:$0xff]
    %v2321 = vld [vmem:[%s2 + $0xa58] sm:$0xff]
    %v2322 = vld [vmem:[%s2 + $0xa60] sm:$0xff]
    %v2323 = vld [vmem:[%s2 + $0xa68] sm:$0xff]
    %v2324 = vld [vmem:[%s2 + $0xa70] sm:$0xff]
    %v2325 = vld [vmem:[%s2 + $0xa78] sm:$0xff]
    %v2326 = vld [vmem:[%s2 + $0xa80] sm:$0xff]
    %v2327 = vld [vmem:[%s2 + $0xa88] sm:$0xff]
    %v2328 = vld [vmem:[%s2 + $0xa90] sm:$0xff]
    %v2329 = vld [vmem:[%s2 + $0xa98] sm:$0xff]
    %v2330 = vld [vmem:[%s2 + $0xaa0] sm:$0xff]
    %v2331 = vld [vmem:[%s2 + $0xaa8] sm:$0xff]
    %v2332 = vld [vmem:[%s2 + $0xab0] sm:$0xff]
    %v2333 = vld [vmem:[%s2 + $0xab8] sm:$0xff]
    %v2334 = vld [vmem:[%s2 + $0xac0] sm:$0xff]
    %v2335 = vld [vmem:[%s2 + $0xac8] sm:$0xff]
    %v2336 = vld [vmem:[%s2 + $0xad0] sm:$0xff]
    %v2337 = vld [vmem:[%s2 + $0xad8] sm:$0xff]
    %v2338 = vld [vmem:[%s2 + $0xae0] sm:$0xff]
    %v2339 = vld [vmem:[%s2 + $0xae8] sm:$0xff]
    %v2340 = vld [vmem:[%s2 + $0xaf0] sm:$0xff]
    %v2341 = vld [vmem:[%s2 + $0xaf8] sm:$0xff]
    %v2342 = vld [vmem:[%s2 + $0xb00] sm:$0xff]
    %v2343 = vld [vmem:[%s2 + $0xb08] sm:$0xff]
    %v2344 = vld [vmem:[%s2 + $0xb10] sm:$0xff]
    %v2345 = vld [vmem:[%s2 + $0xb18] sm:$0xff]
    %v2346 = vld [vmem:[%s2 + $0xb20] sm:$0xff]
    %v2347 = vld [vmem:[%s2 + $0xb28] sm:$0xff]
    %v2348 = vld [vmem:[%s2 + $0xb30] sm:$0xff]
    %v2349 = vld [vmem:[%s2 + $0xb38] sm:$0xff]
    %v2350 = vld [vmem:[%s2 + $0xb40] sm:$0xff]
    %v2351 = vld [vmem:[%s2 + $0xb48] sm:$0xff]
    %v2352 = vld [vmem:[%s2 + $0xb50] sm:$0xff]
    %v2353 = vld [vmem:[%s2 + $0xb58] sm:$0xff]
    %v2354 = vld [vmem:[%s2 + $0xb60] sm:$0xff]
    %v2355 = vld [vmem:[%s2 + $0xb68] sm:$0xff]
    %v2356 = vld [vmem:[%s2 + $0xb70] sm:$0xff]
    %v2357 = vld [vmem:[%s2 + $0xb78] sm:$0xff]
    %v2358 = vld [vmem:[%s2 + $0xb80] sm:$0xff]
    %v2359 = vld [vmem:[%s2 + $0xb88] sm:$0xff]
    %v2360 = vld [vmem:[%s2 + $0xb90] sm:$0xff]
    %v2361 = vld [vmem:[%s2 + $0xb98] sm:$0xff]
    %v2362 = vld [vmem:[%s2 + $0xba0] sm:$0xff]
    %v2363 = vld [vmem:[%s2 + $0xba8] sm:$0xff]
    %v2364 = vld [vmem:[%s2 + $0xbb0] sm:$0xff]
    %v2365 = vld [vmem:[%s2 + $0xbb8] sm:$0xff]
    %v2366 = vld [vmem:[%s2 + $0xbc0] sm:$0xff]
    %v2367 = vld [vmem:[%s2 + $0xbc8] sm:$0xff]
    %v2368 = vld [vmem:[%s2 + $0xbd0] sm:$0xff]
    %v2369 = vld [vmem:[%s2 + $0xbd8] sm:$0xff]
    %v2370 = vld [vmem:[%s2 + $0xbe0] sm:$0xff]
    %v2371 = vld [vmem:[%s2 + $0xbe8] sm:$0xff]
    %v2372 = vld [vmem:[%s2 + $0xbf0] sm:$0xff]
    %v2373 = vld [vmem:[%s2 + $0xbf8] sm:$0xff]
    %v2374 = vld [vmem:[%s2 + $0xc00] sm:$0xff]
    %v2375 = vld [vmem:[%s2 + $0xc08] sm:$0xff]
    %v2376 = vld [vmem:[%s2 + $0xc10] sm:$0xff]
    %v2377 = vld [vmem:[%s2 + $0xc18] sm:$0xff]
    %v2378 = vld [vmem:[%s2 + $0xc20] sm:$0xff]
    %v2379 = vld [vmem:[%s2 + $0xc28] sm:$0xff]
    %v2380 = vld [vmem:[%s2 + $0xc30] sm:$0xff]
    %v2381 = vld [vmem:[%s2 + $0xc38] sm:$0xff]
    %v2382 = vld [vmem:[%s2 + $0xc40] sm:$0xff]
    %v2383 = vld [vmem:[%s2 + $0xc48] sm:$0xff]
    %v2384 = vld [vmem:[%s2 + $0xc50] sm:$0xff]
    %v2385 = vld [vmem:[%s2 + $0xc58] sm:$0xff]
    %v2386 = vld [vmem:[%s2 + $0xc60] sm:$0xff]
    %v2387 = vld [vmem:[%s2 + $0xc68] sm:$0xff]
    %v2388 = vld [vmem:[%s2 + $0xc70] sm:$0xff]
    %v2389 = vld [vmem:[%s2 + $0xc78] sm:$0xff]
    %v2390 = vld [vmem:[%s2 + $0xc80] sm:$0xff]
    %v2391 = vld [vmem:[%s2 + $0xc88] sm:$0xff]
    %v2392 = vld [vmem:[%s2 + $0xc90] sm:$0xff]
    %v2393 = vld [vmem:[%s2 + $0xc98] sm:$0xff]
    %v2394 = vld [vmem:[%s2 + $0xca0] sm:$0xff]
    %v2395 = vld [vmem:[%s2 + $0xca8] sm:$0xff]
    %v2396 = vld [vmem:[%s2 + $0xcb0] sm:$0xff]
    %v2397 = vld [vmem:[%s2 + $0xcb8] sm:$0xff]
    %v2398 = vld [vmem:[%s2 + $0xcc0] sm:$0xff]
    %v2399 = vld [vmem:[%s2 + $0xcc8] sm:$0xff]
    %v2400 = vld [vmem:[%s2 + $0xcd0] sm:$0xff]
    %v2401 = vld [vmem:[%s2 + $0xcd8] sm:$0xff]
    %v2402 = vld [vmem:[%s2 + $0xce0] sm:$0xff]
    %v2403 = vld [vmem:[%s2 + $0xce8] sm:$0xff]
    %v2404 = vld [vmem:[%s2 + $0xcf0] sm:$0xff]
    %v2405 = vld [vmem:[%s2 + $0xcf8] sm:$0xff]
    %v2406 = vld [vmem:[%s2 + $0xd00] sm:$0xff]
    %v2407 = vld [vmem:[%s2 + $0xd08] sm:$0xff]
    %v2408 = vld [vmem:[%s2 + $0xd10] sm:$0xff]
    %v2409 = vld [vmem:[%s2 + $0xd18] sm:$0xff]
    %v2410 = vld [vmem:[%s2 + $0xd20] sm:$0xff]
    %v2411 = vld [vmem:[%s2 + $0xd28] sm:$0xff]
    %v2412 = vld [vmem:[%s2 + $0xd30] sm:$0xff]
    %v2413 = vld [vmem:[%s2 + $0xd38] sm:$0xff]
    %v2414 = vld [vmem:[%s2 + $0xd40] sm:$0xff]
    %v2415 = vld [vmem:[%s2 + $0xd48] sm:$0xff]
    %v2416 = vld [vmem:[%s2 + $0xd50] sm:$0xff]
    %v2417 = vld [vmem:[%s2 + $0xd58] sm:$0xff]
    %v2418 = vld [vmem:[%s2 + $0xd60] sm:$0xff]
    %v2419 = vld [vmem:[%s2 + $0xd68] sm:$0xff]
    %v2420 = vld [vmem:[%s2 + $0xd70] sm:$0xff]
    %v2421 = vld [vmem:[%s2 + $0xd78] sm:$0xff]
    %v2422 = vld [vmem:[%s2 + $0xd80] sm:$0xff]
    %v2423 = vld [vmem:[%s2 + $0xd88] sm:$0xff]
    %v2424 = vld [vmem:[%s2 + $0xd90] sm:$0xff]
    %v2425 = vld [vmem:[%s2 + $0xd98] sm:$0xff]
    %v2426 = vld [vmem:[%s2 + $0xda0] sm:$0xff]
    %v2427 = vld [vmem:[%s2 + $0xda8] sm:$0xff]
    %v2428 = vld [vmem:[%s2 + $0xdb0] sm:$0xff]
    %v2429 = vld [vmem:[%s2 + $0xdb8] sm:$0xff]
    %v2430 = vld [vmem:[%s2 + $0xdc0] sm:$0xff]
    %v2431 = vld [vmem:[%s2 + $0xdc8] sm:$0xff]
    %v2432 = vld [vmem:[%s2 + $0xdd0] sm:$0xff]
    %v2433 = vld [vmem:[%s2 + $0xdd8] sm:$0xff]
    %v2434 = vld [vmem:[%s2 + $0xde0] sm:$0xff]
    %v2435 = vld [vmem:[%s2 + $0xde8] sm:$0xff]
    %v2436 = vld [vmem:[%s2 + $0xdf0] sm:$0xff]
    %v2437 = vld [vmem:[%s2 + $0xdf8] sm:$0xff]
    %v2438 = vld [vmem:[%s2 + $0xe00] sm:$0xff]
    %v2439 = vld [vmem:[%s2 + $0xe08] sm:$0xff]
    %v2440 = vld [vmem:[%s2 + $0xe10] sm:$0xff]
    %v2441 = vld [vmem:[%s2 + $0xe18] sm:$0xff]
    %v2442 = vld [vmem:[%s2 + $0xe20] sm:$0xff]
    %v2443 = vld [vmem:[%s2 + $0xe28] sm:$0xff]
    %v2444 = vld [vmem:[%s2 + $0xe30] sm:$0xff]
    %v2445 = vld [vmem:[%s2 + $0xe38] sm:$0xff]
    %v2446 = vld [vmem:[%s2 + $0xe40] sm:$0xff]
    %v2447 = vld [vmem:[%s2 + $0xe48] sm:$0xff]
    %v2448 = vld [vmem:[%s2 + $0xe50] sm:$0xff]
    %v2449 = vld [vmem:[%s2 + $0xe58] sm:$0xff]
    %v2450 = vld [vmem:[%s2 + $0xe60] sm:$0xff]
    %v2451 = vld [vmem:[%s2 + $0xe68] sm:$0xff]
    %v2452 = vld [vmem:[%s2 + $0xe70] sm:$0xff]
    %v2453 = vld [vmem:[%s2 + $0xe78] sm:$0xff]
    %v2454 = vld [vmem:[%s2 + $0xe80] sm:$0xff]
    %v2455 = vld [vmem:[%s2 + $0xe88] sm:$0xff]
    %v2456 = vld [vmem:[%s2 + $0xe90] sm:$0xff]
    %v2457 = vld [vmem:[%s2 + $0xe98] sm:$0xff]
    %v2458 = vld [vmem:[%s2 + $0xea0] sm:$0xff]
    %v2459 = vld [vmem:[%s2 + $0xea8] sm:$0xff]
    %v2460 = vld [vmem:[%s2 + $0xeb0] sm:$0xff]
    %v2461 = vld [vmem:[%s2 + $0xeb8] sm:$0xff]
    %v2462 = vld [vmem:[%s2 + $0xec0] sm:$0xff]
    %v2463 = vld [vmem:[%s2 + $0xec8] sm:$0xff]
    %v2464 = vld [vmem:[%s2 + $0xed0] sm:$0xff]
    %v2465 = vld [vmem:[%s2 + $0xed8] sm:$0xff]
    %v2466 = vld [vmem:[%s2 + $0xee0] sm:$0xff]
    %v2467 = vld [vmem:[%s2 + $0xee8] sm:$0xff]
    %v2468 = vld [vmem:[%s2 + $0xef0] sm:$0xff]
    %v2469 = vld [vmem:[%s2 + $0xef8] sm:$0xff]
    %v2470 = vld [vmem:[%s2 + $0xf00] sm:$0xff]
    %v2471 = vld [vmem:[%s2 + $0xf08] sm:$0xff]
    %v2472 = vld [vmem:[%s2 + $0xf10] sm:$0xff]
    %v2473 = vld [vmem:[%s2 + $0xf18] sm:$0xff]
    %v2474 = vld [vmem:[%s2 + $0xf20] sm:$0xff]
    %v2475 = vld [vmem:[%s2 + $0xf28] sm:$0xff]
    %v2476 = vld [vmem:[%s2 + $0xf30] sm:$0xff]
    %v2477 = vld [vmem:[%s2 + $0xf38] sm:$0xff]
    %v2478 = vld [vmem:[%s2 + $0xf40] sm:$0xff]
    %v2479 = vld [vmem:[%s2 + $0xf48] sm:$0xff]
    %v2480 = vld [vmem:[%s2 + $0xf50] sm:$0xff]
    %v2481 = vld [vmem:[%s2 + $0xf58] sm:$0xff]
    %v2482 = vld [vmem:[%s2 + $0xf60] sm:$0xff]
    %v2483 = vld [vmem:[%s2 + $0xf68] sm:$0xff]
    %v2484 = vld [vmem:[%s2 + $0xf70] sm:$0xff]
    %v2485 = vld [vmem:[%s2 + $0xf78] sm:$0xff]
    %v2486 = vld [vmem:[%s2 + $0xf80] sm:$0xff]
    %v2487 = vld [vmem:[%s2 + $0xf88] sm:$0xff]
    %v2488 = vld [vmem:[%s2 + $0xf90] sm:$0xff]
    %v2489 = vld [vmem:[%s2 + $0xf98] sm:$0xff]
    %v2490 = vld [vmem:[%s2 + $0xfa0] sm:$0xff]
    %v2491 = vld [vmem:[%s2 + $0xfa8] sm:$0xff]
    %v2492 = vld [vmem:[%s2 + $0xfb0] sm:$0xff]
    %v2493 = vld [vmem:[%s2 + $0xfb8] sm:$0xff]
    %v2494 = vld [vmem:[%s2 + $0xfc0] sm:$0xff]
    %v2495 = vld [vmem:[%s2 + $0xfc8] sm:$0xff]
    %v2496 = vld [vmem:[%s2 + $0xfd0] sm:$0xff]
    %v2497 = vld [vmem:[%s2 + $0xfd8] sm:$0xff]
    %v2498 = vld [vmem:[%s2 + $0xfe0] sm:$0xff]
    %v2499 = vld [vmem:[%s2 + $0xfe8] sm:$0xff]
    %v2500 = vld [vmem:[%s2 + $0xff0] sm:$0xff]
    %v2501 = vld [vmem:[%s2 + $0xff8] sm:$0xff]
    %v3014 = vunpack.c.l.b16 %v1990
    %v3015 = vunpack.c.h.b16 %v1990
    %v3016 = vunpack.c.l.b16 %v1991
    %v3017 = vunpack.c.h.b16 %v1991
    %v3018 = vunpack.c.l.b16 %v1992
    %v3019 = vunpack.c.h.b16 %v1992
    %v3020 = vunpack.c.l.b16 %v1993
    %v3021 = vunpack.c.h.b16 %v1993
    %v3022 = vunpack.c.l.b16 %v1994
    %v3023 = vunpack.c.h.b16 %v1994
    %v3024 = vunpack.c.l.b16 %v1995
    %v3025 = vunpack.c.h.b16 %v1995
    %v3026 = vunpack.c.l.b16 %v1996
    %v3027 = vunpack.c.h.b16 %v1996
    %v3028 = vunpack.c.l.b16 %v1997
    %v3029 = vunpack.c.h.b16 %v1997
    %v3030 = vunpack.c.l.b16 %v1998
    %v3031 = vunpack.c.h.b16 %v1998
    %v3032 = vunpack.c.l.b16 %v1999
    %v3033 = vunpack.c.h.b16 %v1999
    %v3034 = vunpack.c.l.b16 %v2000
    %v3035 = vunpack.c.h.b16 %v2000
    %v3036 = vunpack.c.l.b16 %v2001
    %v3037 = vunpack.c.h.b16 %v2001
    %v3038 = vunpack.c.l.b16 %v2002
    %v3039 = vunpack.c.h.b16 %v2002
    %v3040 = vunpack.c.l.b16 %v2003
    %v3041 = vunpack.c.h.b16 %v2003
    %v3042 = vunpack.c.l.b16 %v2004
    %v3043 = vunpack.c.h.b16 %v2004
    %v3044 = vunpack.c.l.b16 %v2005
    %v3045 = vunpack.c.h.b16 %v2005
    %v3046 = vunpack.c.l.b16 %v2006
    %v3047 = vunpack.c.h.b16 %v2006
    %v3048 = vunpack.c.l.b16 %v2007
    %v3049 = vunpack.c.h.b16 %v2007
    %v3050 = vunpack.c.l.b16 %v2008
    %v3051 = vunpack.c.h.b16 %v2008
    %v3052 = vunpack.c.l.b16 %v2009
    %v3053 = vunpack.c.h.b16 %v2009
    %v3054 = vunpack.c.l.b16 %v2010
    %v3055 = vunpack.c.h.b16 %v2010
    %v3056 = vunpack.c.l.b16 %v2011
    %v3057 = vunpack.c.h.b16 %v2011
    %v3058 = vunpack.c.l.b16 %v2012
    %v3059 = vunpack.c.h.b16 %v2012
    %v3060 = vunpack.c.l.b16 %v2013
    %v3061 = vunpack.c.h.b16 %v2013
    %v3062 = vunpack.c.l.b16 %v2014
    %v3063 = vunpack.c.h.b16 %v2014
    %v3064 = vunpack.c.l.b16 %v2015
    %v3065 = vunpack.c.h.b16 %v2015
    %v3066 = vunpack.c.l.b16 %v2016
    %v3067 = vunpack.c.h.b16 %v2016
    %v3068 = vunpack.c.l.b16 %v2017
    %v3069 = vunpack.c.h.b16 %v2017
    %v3070 = vunpack.c.l.b16 %v2018
    %v3071 = vunpack.c.h.b16 %v2018
    %v3072 = vunpack.c.l.b16 %v2019
    %v3073 = vunpack.c.h.b16 %v2019
    %v3074 = vunpack.c.l.b16 %v2020
    %v3075 = vunpack.c.h.b16 %v2020
    %v3076 = vunpack.c.l.b16 %v2021
    %v3077 = vunpack.c.h.b16 %v2021
    %v3078 = vunpack.c.l.b16 %v2022
    %v3079 = vunpack.c.h.b16 %v2022
    %v3080 = vunpack.c.l.b16 %v2023
    %v3081 = vunpack.c.h.b16 %v2023
    %v3082 = vunpack.c.l.b16 %v2024
    %v3083 = vunpack.c.h.b16 %v2024
    %v3084 = vunpack.c.l.b16 %v2025
    %v3085 = vunpack.c.h.b16 %v2025
    %v3086 = vunpack.c.l.b16 %v2026
    %v3087 = vunpack.c.h.b16 %v2026
    %v3088 = vunpack.c.l.b16 %v2027
    %v3089 = vunpack.c.h.b16 %v2027
    %v3090 = vunpack.c.l.b16 %v2028
    %v3091 = vunpack.c.h.b16 %v2028
    %v3092 = vunpack.c.l.b16 %v2029
    %v3093 = vunpack.c.h.b16 %v2029
    %v3094 = vunpack.c.l.b16 %v2030
    %v3095 = vunpack.c.h.b16 %v2030
    %v3096 = vunpack.c.l.b16 %v2031
    %v3097 = vunpack.c.h.b16 %v2031
    %v3098 = vunpack.c.l.b16 %v2032
    %v3099 = vunpack.c.h.b16 %v2032
    %v3100 = vunpack.c.l.b16 %v2033
    %v3101 = vunpack.c.h.b16 %v2033
    %v3102 = vunpack.c.l.b16 %v2034
    %v3103 = vunpack.c.h.b16 %v2034
    %v3104 = vunpack.c.l.b16 %v2035
    %v3105 = vunpack.c.h.b16 %v2035
    %v3106 = vunpack.c.l.b16 %v2036
    %v3107 = vunpack.c.h.b16 %v2036
    %v3108 = vunpack.c.l.b16 %v2037
    %v3109 = vunpack.c.h.b16 %v2037
    %v3110 = vunpack.c.l.b16 %v2038
    %v3111 = vunpack.c.h.b16 %v2038
    %v3112 = vunpack.c.l.b16 %v2039
    %v3113 = vunpack.c.h.b16 %v2039
    %v3114 = vunpack.c.l.b16 %v2040
    %v3115 = vunpack.c.h.b16 %v2040
    %v3116 = vunpack.c.l.b16 %v2041
    %v3117 = vunpack.c.h.b16 %v2041
    %v3118 = vunpack.c.l.b16 %v2042
    %v3119 = vunpack.c.h.b16 %v2042
    %v3120 = vunpack.c.l.b16 %v2043
    %v3121 = vunpack.c.h.b16 %v2043
    %v3122 = vunpack.c.l.b16 %v2044
    %v3123 = vunpack.c.h.b16 %v2044
    %v3124 = vunpack.c.l.b16 %v2045
    %v3125 = vunpack.c.h.b16 %v2045
    %v3126 = vunpack.c.l.b16 %v2046
    %v3127 = vunpack.c.h.b16 %v2046
    %v3128 = vunpack.c.l.b16 %v2047
    %v3129 = vunpack.c.h.b16 %v2047
    %v3130 = vunpack.c.l.b16 %v2048
    %v3131 = vunpack.c.h.b16 %v2048
    %v3132 = vunpack.c.l.b16 %v2049
    %v3133 = vunpack.c.h.b16 %v2049
    %v3134 = vunpack.c.l.b16 %v2050
    %v3135 = vunpack.c.h.b16 %v2050
    %v3136 = vunpack.c.l.b16 %v2051
    %v3137 = vunpack.c.h.b16 %v2051
    %v3138 = vunpack.c.l.b16 %v2052
    %v3139 = vunpack.c.h.b16 %v2052
    %v3140 = vunpack.c.l.b16 %v2053
    %v3141 = vunpack.c.h.b16 %v2053
    %v3142 = vunpack.c.l.b16 %v2054
    %v3143 = vunpack.c.h.b16 %v2054
    %v3144 = vunpack.c.l.b16 %v2055
    %v3145 = vunpack.c.h.b16 %v2055
    %v3146 = vunpack.c.l.b16 %v2056
    %v3147 = vunpack.c.h.b16 %v2056
    %v3148 = vunpack.c.l.b16 %v2057
    %v3149 = vunpack.c.h.b16 %v2057
    %v3150 = vunpack.c.l.b16 %v2058
    %v3151 = vunpack.c.h.b16 %v2058
    %v3152 = vunpack.c.l.b16 %v2059
    %v3153 = vunpack.c.h.b16 %v2059
    %v3154 = vunpack.c.l.b16 %v2060
    %v3155 = vunpack.c.h.b16 %v2060
    %v3156 = vunpack.c.l.b16 %v2061
    %v3157 = vunpack.c.h.b16 %v2061
    %v3158 = vunpack.c.l.b16 %v2062
    %v3159 = vunpack.c.h.b16 %v2062
    %v3160 = vunpack.c.l.b16 %v2063
    %v3161 = vunpack.c.h.b16 %v2063
    %v3162 = vunpack.c.l.b16 %v2064
    %v3163 = vunpack.c.h.b16 %v2064
    %v3164 = vunpack.c.l.b16 %v2065
    %v3165 = vunpack.c.h.b16 %v2065
    %v3166 = vunpack.c.l.b16 %v2066
    %v3167 = vunpack.c.h.b16 %v2066
    %v3168 = vunpack.c.l.b16 %v2067
    %v3169 = vunpack.c.h.b16 %v2067
    %v3170 = vunpack.c.l.b16 %v2068
    %v3171 = vunpack.c.h.b16 %v2068
    %v3172 = vunpack.c.l.b16 %v2069
    %v3173 = vunpack.c.h.b16 %v2069
    %v3174 = vunpack.c.l.b16 %v2070
    %v3175 = vunpack.c.h.b16 %v2070
    %v3176 = vunpack.c.l.b16 %v2071
    %v3177 = vunpack.c.h.b16 %v2071
    %v3178 = vunpack.c.l.b16 %v2072
    %v3179 = vunpack.c.h.b16 %v2072
    %v3180 = vunpack.c.l.b16 %v2073
    %v3181 = vunpack.c.h.b16 %v2073
    %v3182 = vunpack.c.l.b16 %v2074
    %v3183 = vunpack.c.h.b16 %v2074
    %v3184 = vunpack.c.l.b16 %v2075
    %v3185 = vunpack.c.h.b16 %v2075
    %v3186 = vunpack.c.l.b16 %v2076
    %v3187 = vunpack.c.h.b16 %v2076
    %v3188 = vunpack.c.l.b16 %v2077
    %v3189 = vunpack.c.h.b16 %v2077
    %v3190 = vunpack.c.l.b16 %v2078
    %v3191 = vunpack.c.h.b16 %v2078
    %v3192 = vunpack.c.l.b16 %v2079
    %v3193 = vunpack.c.h.b16 %v2079
    %v3194 = vunpack.c.l.b16 %v2080
    %v3195 = vunpack.c.h.b16 %v2080
    %v3196 = vunpack.c.l.b16 %v2081
    %v3197 = vunpack.c.h.b16 %v2081
    %v3198 = vunpack.c.l.b16 %v2082
    %v3199 = vunpack.c.h.b16 %v2082
    %v3200 = vunpack.c.l.b16 %v2083
    %v3201 = vunpack.c.h.b16 %v2083
    %v3202 = vunpack.c.l.b16 %v2084
    %v3203 = vunpack.c.h.b16 %v2084
    %v3204 = vunpack.c.l.b16 %v2085
    %v3205 = vunpack.c.h.b16 %v2085
    %v3206 = vunpack.c.l.b16 %v2086
    %v3207 = vunpack.c.h.b16 %v2086
    %v3208 = vunpack.c.l.b16 %v2087
    %v3209 = vunpack.c.h.b16 %v2087
    %v3210 = vunpack.c.l.b16 %v2088
    %v3211 = vunpack.c.h.b16 %v2088
    %v3212 = vunpack.c.l.b16 %v2089
    %v3213 = vunpack.c.h.b16 %v2089
    %v3214 = vunpack.c.l.b16 %v2090
    %v3215 = vunpack.c.h.b16 %v2090
    %v3216 = vunpack.c.l.b16 %v2091
    %v3217 = vunpack.c.h.b16 %v2091
    %v3218 = vunpack.c.l.b16 %v2092
    %v3219 = vunpack.c.h.b16 %v2092
    %v3220 = vunpack.c.l.b16 %v2093
    %v3221 = vunpack.c.h.b16 %v2093
    %v3222 = vunpack.c.l.b16 %v2094
    %v3223 = vunpack.c.h.b16 %v2094
    %v3224 = vunpack.c.l.b16 %v2095
    %v3225 = vunpack.c.h.b16 %v2095
    %v3226 = vunpack.c.l.b16 %v2096
    %v3227 = vunpack.c.h.b16 %v2096
    %v3228 = vunpack.c.l.b16 %v2097
    %v3229 = vunpack.c.h.b16 %v2097
    %v3230 = vunpack.c.l.b16 %v2098
    %v3231 = vunpack.c.h.b16 %v2098
    %v3232 = vunpack.c.l.b16 %v2099
    %v3233 = vunpack.c.h.b16 %v2099
    %v3234 = vunpack.c.l.b16 %v2100
    %v3235 = vunpack.c.h.b16 %v2100
    %v3236 = vunpack.c.l.b16 %v2101
    %v3237 = vunpack.c.h.b16 %v2101
    %v3238 = vunpack.c.l.b16 %v2102
    %v3239 = vunpack.c.h.b16 %v2102
    %v3240 = vunpack.c.l.b16 %v2103
    %v3241 = vunpack.c.h.b16 %v2103
    %v3242 = vunpack.c.l.b16 %v2104
    %v3243 = vunpack.c.h.b16 %v2104
    %v3244 = vunpack.c.l.b16 %v2105
    %v3245 = vunpack.c.h.b16 %v2105
    %v3246 = vunpack.c.l.b16 %v2106
    %v3247 = vunpack.c.h.b16 %v2106
    %v3248 = vunpack.c.l.b16 %v2107
    %v3249 = vunpack.c.h.b16 %v2107
    %v3250 = vunpack.c.l.b16 %v2108
    %v3251 = vunpack.c.h.b16 %v2108
    %v3252 = vunpack.c.l.b16 %v2109
    %v3253 = vunpack.c.h.b16 %v2109
    %v3254 = vunpack.c.l.b16 %v2110
    %v3255 = vunpack.c.h.b16 %v2110
    %v3256 = vunpack.c.l.b16 %v2111
    %v3257 = vunpack.c.h.b16 %v2111
    %v3258 = vunpack.c.l.b16 %v2112
    %v3259 = vunpack.c.h.b16 %v2112
    %v3260 = vunpack.c.l.b16 %v2113
    %v3261 = vunpack.c.h.b16 %v2113
    %v3262 = vunpack.c.l.b16 %v2114
    %v3263 = vunpack.c.h.b16 %v2114
    %v3264 = vunpack.c.l.b16 %v2115
    %v3265 = vunpack.c.h.b16 %v2115
    %v3266 = vunpack.c.l.b16 %v2116
    %v3267 = vunpack.c.h.b16 %v2116
    %v3268 = vunpack.c.l.b16 %v2117
    %v3269 = vunpack.c.h.b16 %v2117
    %v3270 = vunpack.c.l.b16 %v2118
    %v3271 = vunpack.c.h.b16 %v2118
    %v3272 = vunpack.c.l.b16 %v2119
    %v3273 = vunpack.c.h.b16 %v2119
    %v3274 = vunpack.c.l.b16 %v2120
    %v3275 = vunpack.c.h.b16 %v2120
    %v3276 = vunpack.c.l.b16 %v2121
    %v3277 = vunpack.c.h.b16 %v2121
    %v3278 = vunpack.c.l.b16 %v2122
    %v3279 = vunpack.c.h.b16 %v2122
    %v3280 = vunpack.c.l.b16 %v2123
    %v3281 = vunpack.c.h.b16 %v2123
    %v3282 = vunpack.c.l.b16 %v2124
    %v3283 = vunpack.c.h.b16 %v2124
    %v3284 = vunpack.c.l.b16 %v2125
    %v3285 = vunpack.c.h.b16 %v2125
    %v3286 = vunpack.c.l.b16 %v2126
    %v3287 = vunpack.c.h.b16 %v2126
    %v3288 = vunpack.c.l.b16 %v2127
    %v3289 = vunpack.c.h.b16 %v2127
    %v3290 = vunpack.c.l.b16 %v2128
    %v3291 = vunpack.c.h.b16 %v2128
    %v3292 = vunpack.c.l.b16 %v2129
    %v3293 = vunpack.c.h.b16 %v2129
    %v3294 = vunpack.c.l.b16 %v2130
    %v3295 = vunpack.c.h.b16 %v2130
    %v3296 = vunpack.c.l.b16 %v2131
    %v3297 = vunpack.c.h.b16 %v2131
    %v3298 = vunpack.c.l.b16 %v2132
    %v3299 = vunpack.c.h.b16 %v2132
    %v3300 = vunpack.c.l.b16 %v2133
    %v3301 = vunpack.c.h.b16 %v2133
    %v3302 = vunpack.c.l.b16 %v2134
    %v3303 = vunpack.c.h.b16 %v2134
    %v3304 = vunpack.c.l.b16 %v2135
    %v3305 = vunpack.c.h.b16 %v2135
    %v3306 = vunpack.c.l.b16 %v2136
    %v3307 = vunpack.c.h.b16 %v2136
    %v3308 = vunpack.c.l.b16 %v2137
    %v3309 = vunpack.c.h.b16 %v2137
    %v3310 = vunpack.c.l.b16 %v2138
    %v3311 = vunpack.c.h.b16 %v2138
    %v3312 = vunpack.c.l.b16 %v2139
    %v3313 = vunpack.c.h.b16 %v2139
    %v3314 = vunpack.c.l.b16 %v2140
    %v3315 = vunpack.c.h.b16 %v2140
    %v3316 = vunpack.c.l.b16 %v2141
    %v3317 = vunpack.c.h.b16 %v2141
    %v3318 = vunpack.c.l.b16 %v2142
    %v3319 = vunpack.c.h.b16 %v2142
    %v3320 = vunpack.c.l.b16 %v2143
    %v3321 = vunpack.c.h.b16 %v2143
    %v3322 = vunpack.c.l.b16 %v2144
    %v3323 = vunpack.c.h.b16 %v2144
    %v3324 = vunpack.c.l.b16 %v2145
    %v3325 = vunpack.c.h.b16 %v2145
    %v3326 = vunpack.c.l.b16 %v2146
    %v3327 = vunpack.c.h.b16 %v2146
    %v3328 = vunpack.c.l.b16 %v2147
    %v3329 = vunpack.c.h.b16 %v2147
    %v3330 = vunpack.c.l.b16 %v2148
    %v3331 = vunpack.c.h.b16 %v2148
    %v3332 = vunpack.c.l.b16 %v2149
    %v3333 = vunpack.c.h.b16 %v2149
    %v3334 = vunpack.c.l.b16 %v2150
    %v3335 = vunpack.c.h.b16 %v2150
    %v3336 = vunpack.c.l.b16 %v2151
    %v3337 = vunpack.c.h.b16 %v2151
    %v3338 = vunpack.c.l.b16 %v2152
    %v3339 = vunpack.c.h.b16 %v2152
    %v3340 = vunpack.c.l.b16 %v2153
    %v3341 = vunpack.c.h.b16 %v2153
    %v3342 = vunpack.c.l.b16 %v2154
    %v3343 = vunpack.c.h.b16 %v2154
    %v3344 = vunpack.c.l.b16 %v2155
    %v3345 = vunpack.c.h.b16 %v2155
    %v3346 = vunpack.c.l.b16 %v2156
    %v3347 = vunpack.c.h.b16 %v2156
    %v3348 = vunpack.c.l.b16 %v2157
    %v3349 = vunpack.c.h.b16 %v2157
    %v3350 = vunpack.c.l.b16 %v2158
    %v3351 = vunpack.c.h.b16 %v2158
    %v3352 = vunpack.c.l.b16 %v2159
    %v3353 = vunpack.c.h.b16 %v2159
    %v3354 = vunpack.c.l.b16 %v2160
    %v3355 = vunpack.c.h.b16 %v2160
    %v3356 = vunpack.c.l.b16 %v2161
    %v3357 = vunpack.c.h.b16 %v2161
    %v3358 = vunpack.c.l.b16 %v2162
    %v3359 = vunpack.c.h.b16 %v2162
    %v3360 = vunpack.c.l.b16 %v2163
    %v3361 = vunpack.c.h.b16 %v2163
    %v3362 = vunpack.c.l.b16 %v2164
    %v3363 = vunpack.c.h.b16 %v2164
    %v3364 = vunpack.c.l.b16 %v2165
    %v3365 = vunpack.c.h.b16 %v2165
    %v3366 = vunpack.c.l.b16 %v2166
    %v3367 = vunpack.c.h.b16 %v2166
    %v3368 = vunpack.c.l.b16 %v2167
    %v3369 = vunpack.c.h.b16 %v2167
    %v3370 = vunpack.c.l.b16 %v2168
    %v3371 = vunpack.c.h.b16 %v2168
    %v3372 = vunpack.c.l.b16 %v2169
    %v3373 = vunpack.c.h.b16 %v2169
    %v3374 = vunpack.c.l.b16 %v2170
    %v3375 = vunpack.c.h.b16 %v2170
    %v3376 = vunpack.c.l.b16 %v2171
    %v3377 = vunpack.c.h.b16 %v2171
    %v3378 = vunpack.c.l.b16 %v2172
    %v3379 = vunpack.c.h.b16 %v2172
    %v3380 = vunpack.c.l.b16 %v2173
    %v3381 = vunpack.c.h.b16 %v2173
    %v3382 = vunpack.c.l.b16 %v2174
    %v3383 = vunpack.c.h.b16 %v2174
    %v3384 = vunpack.c.l.b16 %v2175
    %v3385 = vunpack.c.h.b16 %v2175
    %v3386 = vunpack.c.l.b16 %v2176
    %v3387 = vunpack.c.h.b16 %v2176
    %v3388 = vunpack.c.l.b16 %v2177
    %v3389 = vunpack.c.h.b16 %v2177
    %v3390 = vunpack.c.l.b16 %v2178
    %v3391 = vunpack.c.h.b16 %v2178
    %v3392 = vunpack.c.l.b16 %v2179
    %v3393 = vunpack.c.h.b16 %v2179
    %v3394 = vunpack.c.l.b16 %v2180
    %v3395 = vunpack.c.h.b16 %v2180
    %v3396 = vunpack.c.l.b16 %v2181
    %v3397 = vunpack.c.h.b16 %v2181
    %v3398 = vunpack.c.l.b16 %v2182
    %v3399 = vunpack.c.h.b16 %v2182
    %v3400 = vunpack.c.l.b16 %v2183
    %v3401 = vunpack.c.h.b16 %v2183
    %v3402 = vunpack.c.l.b16 %v2184
    %v3403 = vunpack.c.h.b16 %v2184
    %v3404 = vunpack.c.l.b16 %v2185
    %v3405 = vunpack.c.h.b16 %v2185
    %v3406 = vunpack.c.l.b16 %v2186
    %v3407 = vunpack.c.h.b16 %v2186
    %v3408 = vunpack.c.l.b16 %v2187
    %v3409 = vunpack.c.h.b16 %v2187
    %v3410 = vunpack.c.l.b16 %v2188
    %v3411 = vunpack.c.h.b16 %v2188
    %v3412 = vunpack.c.l.b16 %v2189
    %v3413 = vunpack.c.h.b16 %v2189
    %v3414 = vunpack.c.l.b16 %v2190
    %v3415 = vunpack.c.h.b16 %v2190
    %v3416 = vunpack.c.l.b16 %v2191
    %v3417 = vunpack.c.h.b16 %v2191
    %v3418 = vunpack.c.l.b16 %v2192
    %v3419 = vunpack.c.h.b16 %v2192
    %v3420 = vunpack.c.l.b16 %v2193
    %v3421 = vunpack.c.h.b16 %v2193
    %v3422 = vunpack.c.l.b16 %v2194
    %v3423 = vunpack.c.h.b16 %v2194
    %v3424 = vunpack.c.l.b16 %v2195
    %v3425 = vunpack.c.h.b16 %v2195
    %v3426 = vunpack.c.l.b16 %v2196
    %v3427 = vunpack.c.h.b16 %v2196
    %v3428 = vunpack.c.l.b16 %v2197
    %v3429 = vunpack.c.h.b16 %v2197
    %v3430 = vunpack.c.l.b16 %v2198
    %v3431 = vunpack.c.h.b16 %v2198
    %v3432 = vunpack.c.l.b16 %v2199
    %v3433 = vunpack.c.h.b16 %v2199
    %v3434 = vunpack.c.l.b16 %v2200
    %v3435 = vunpack.c.h.b16 %v2200
    %v3436 = vunpack.c.l.b16 %v2201
    %v3437 = vunpack.c.h.b16 %v2201
    %v3438 = vunpack.c.l.b16 %v2202
    %v3439 = vunpack.c.h.b16 %v2202
    %v3440 = vunpack.c.l.b16 %v2203
    %v3441 = vunpack.c.h.b16 %v2203
    %v3442 = vunpack.c.l.b16 %v2204
    %v3443 = vunpack.c.h.b16 %v2204
    %v3444 = vunpack.c.l.b16 %v2205
    %v3445 = vunpack.c.h.b16 %v2205
    %v3446 = vunpack.c.l.b16 %v2206
    %v3447 = vunpack.c.h.b16 %v2206
    %v3448 = vunpack.c.l.b16 %v2207
    %v3449 = vunpack.c.h.b16 %v2207
    %v3450 = vunpack.c.l.b16 %v2208
    %v3451 = vunpack.c.h.b16 %v2208
    %v3452 = vunpack.c.l.b16 %v2209
    %v3453 = vunpack.c.h.b16 %v2209
    %v3454 = vunpack.c.l.b16 %v2210
    %v3455 = vunpack.c.h.b16 %v2210
    %v3456 = vunpack.c.l.b16 %v2211
    %v3457 = vunpack.c.h.b16 %v2211
    %v3458 = vunpack.c.l.b16 %v2212
    %v3459 = vunpack.c.h.b16 %v2212
    %v3460 = vunpack.c.l.b16 %v2213
    %v3461 = vunpack.c.h.b16 %v2213
    %v3462 = vunpack.c.l.b16 %v2214
    %v3463 = vunpack.c.h.b16 %v2214
    %v3464 = vunpack.c.l.b16 %v2215
    %v3465 = vunpack.c.h.b16 %v2215
    %v3466 = vunpack.c.l.b16 %v2216
    %v3467 = vunpack.c.h.b16 %v2216
    %v3468 = vunpack.c.l.b16 %v2217
    %v3469 = vunpack.c.h.b16 %v2217
    %v3470 = vunpack.c.l.b16 %v2218
    %v3471 = vunpack.c.h.b16 %v2218
    %v3472 = vunpack.c.l.b16 %v2219
    %v3473 = vunpack.c.h.b16 %v2219
    %v3474 = vunpack.c.l.b16 %v2220
    %v3475 = vunpack.c.h.b16 %v2220
    %v3476 = vunpack.c.l.b16 %v2221
    %v3477 = vunpack.c.h.b16 %v2221
    %v3478 = vunpack.c.l.b16 %v2222
    %v3479 = vunpack.c.h.b16 %v2222
    %v3480 = vunpack.c.l.b16 %v2223
    %v3481 = vunpack.c.h.b16 %v2223
    %v3482 = vunpack.c.l.b16 %v2224
    %v3483 = vunpack.c.h.b16 %v2224
    %v3484 = vunpack.c.l.b16 %v2225
    %v3485 = vunpack.c.h.b16 %v2225
    %v3486 = vunpack.c.l.b16 %v2226
    %v3487 = vunpack.c.h.b16 %v2226
    %v3488 = vunpack.c.l.b16 %v2227
    %v3489 = vunpack.c.h.b16 %v2227
    %v3490 = vunpack.c.l.b16 %v2228
    %v3491 = vunpack.c.h.b16 %v2228
    %v3492 = vunpack.c.l.b16 %v2229
    %v3493 = vunpack.c.h.b16 %v2229
    %v3494 = vunpack.c.l.b16 %v2230
    %v3495 = vunpack.c.h.b16 %v2230
    %v3496 = vunpack.c.l.b16 %v2231
    %v3497 = vunpack.c.h.b16 %v2231
    %v3498 = vunpack.c.l.b16 %v2232
    %v3499 = vunpack.c.h.b16 %v2232
    %v3500 = vunpack.c.l.b16 %v2233
    %v3501 = vunpack.c.h.b16 %v2233
    %v3502 = vunpack.c.l.b16 %v2234
    %v3503 = vunpack.c.h.b16 %v2234
    %v3504 = vunpack.c.l.b16 %v2235
    %v3505 = vunpack.c.h.b16 %v2235
    %v3506 = vunpack.c.l.b16 %v2236
    %v3507 = vunpack.c.h.b16 %v2236
    %v3508 = vunpack.c.l.b16 %v2237
    %v3509 = vunpack.c.h.b16 %v2237
    %v3510 = vunpack.c.l.b16 %v2238
    %v3511 = vunpack.c.h.b16 %v2238
    %v3512 = vunpack.c.l.b16 %v2239
    %v3513 = vunpack.c.h.b16 %v2239
    %v3514 = vunpack.c.l.b16 %v2240
    %v3515 = vunpack.c.h.b16 %v2240
    %v3516 = vunpack.c.l.b16 %v2241
    %v3517 = vunpack.c.h.b16 %v2241
    %v3518 = vunpack.c.l.b16 %v2242
    %v3519 = vunpack.c.h.b16 %v2242
    %v3520 = vunpack.c.l.b16 %v2243
    %v3521 = vunpack.c.h.b16 %v2243
    %v3522 = vunpack.c.l.b16 %v2244
    %v3523 = vunpack.c.h.b16 %v2244
    %v3524 = vunpack.c.l.b16 %v2245
    %v3525 = vunpack.c.h.b16 %v2245
    %v3526 = vunpack.c.l.b16 %v2246
    %v3527 = vunpack.c.h.b16 %v2246
    %v3528 = vunpack.c.l.b16 %v2247
    %v3529 = vunpack.c.h.b16 %v2247
    %v3530 = vunpack.c.l.b16 %v2248
    %v3531 = vunpack.c.h.b16 %v2248
    %v3532 = vunpack.c.l.b16 %v2249
    %v3533 = vunpack.c.h.b16 %v2249
    %v3534 = vunpack.c.l.b16 %v2250
    %v3535 = vunpack.c.h.b16 %v2250
    %v3536 = vunpack.c.l.b16 %v2251
    %v3537 = vunpack.c.h.b16 %v2251
    %v3538 = vunpack.c.l.b16 %v2252
    %v3539 = vunpack.c.h.b16 %v2252
    %v3540 = vunpack.c.l.b16 %v2253
    %v3541 = vunpack.c.h.b16 %v2253
    %v3542 = vunpack.c.l.b16 %v2254
    %v3543 = vunpack.c.h.b16 %v2254
    %v3544 = vunpack.c.l.b16 %v2255
    %v3545 = vunpack.c.h.b16 %v2255
    %v3546 = vunpack.c.l.b16 %v2256
    %v3547 = vunpack.c.h.b16 %v2256
    %v3548 = vunpack.c.l.b16 %v2257
    %v3549 = vunpack.c.h.b16 %v2257
    %v3550 = vunpack.c.l.b16 %v2258
    %v3551 = vunpack.c.h.b16 %v2258
    %v3552 = vunpack.c.l.b16 %v2259
    %v3553 = vunpack.c.h.b16 %v2259
    %v3554 = vunpack.c.l.b16 %v2260
    %v3555 = vunpack.c.h.b16 %v2260
    %v3556 = vunpack.c.l.b16 %v2261
    %v3557 = vunpack.c.h.b16 %v2261
    %v3558 = vunpack.c.l.b16 %v2262
    %v3559 = vunpack.c.h.b16 %v2262
    %v3560 = vunpack.c.l.b16 %v2263
    %v3561 = vunpack.c.h.b16 %v2263
    %v3562 = vunpack.c.l.b16 %v2264
    %v3563 = vunpack.c.h.b16 %v2264
    %v3564 = vunpack.c.l.b16 %v2265
    %v3565 = vunpack.c.h.b16 %v2265
    %v3566 = vunpack.c.l.b16 %v2266
    %v3567 = vunpack.c.h.b16 %v2266
    %v3568 = vunpack.c.l.b16 %v2267
    %v3569 = vunpack.c.h.b16 %v2267
    %v3570 = vunpack.c.l.b16 %v2268
    %v3571 = vunpack.c.h.b16 %v2268
    %v3572 = vunpack.c.l.b16 %v2269
    %v3573 = vunpack.c.h.b16 %v2269
    %v3574 = vunpack.c.l.b16 %v2270
    %v3575 = vunpack.c.h.b16 %v2270
    %v3576 = vunpack.c.l.b16 %v2271
    %v3577 = vunpack.c.h.b16 %v2271
    %v3578 = vunpack.c.l.b16 %v2272
    %v3579 = vunpack.c.h.b16 %v2272
    %v3580 = vunpack.c.l.b16 %v2273
    %v3581 = vunpack.c.h.b16 %v2273
    %v3582 = vunpack.c.l.b16 %v2274
    %v3583 = vunpack.c.h.b16 %v2274
    %v3584 = vunpack.c.l.b16 %v2275
    %v3585 = vunpack.c.h.b16 %v2275
    %v3586 = vunpack.c.l.b16 %v2276
    %v3587 = vunpack.c.h.b16 %v2276
    %v3588 = vunpack.c.l.b16 %v2277
    %v3589 = vunpack.c.h.b16 %v2277
    %v3590 = vunpack.c.l.b16 %v2278
    %v3591 = vunpack.c.h.b16 %v2278
    %v3592 = vunpack.c.l.b16 %v2279
    %v3593 = vunpack.c.h.b16 %v2279
    %v3594 = vunpack.c.l.b16 %v2280
    %v3595 = vunpack.c.h.b16 %v2280
    %v3596 = vunpack.c.l.b16 %v2281
    %v3597 = vunpack.c.h.b16 %v2281
    %v3598 = vunpack.c.l.b16 %v2282
    %v3599 = vunpack.c.h.b16 %v2282
    %v3600 = vunpack.c.l.b16 %v2283
    %v3601 = vunpack.c.h.b16 %v2283
    %v3602 = vunpack.c.l.b16 %v2284
    %v3603 = vunpack.c.h.b16 %v2284
    %v3604 = vunpack.c.l.b16 %v2285
    %v3605 = vunpack.c.h.b16 %v2285
    %v3606 = vunpack.c.l.b16 %v2286
    %v3607 = vunpack.c.h.b16 %v2286
    %v3608 = vunpack.c.l.b16 %v2287
    %v3609 = vunpack.c.h.b16 %v2287
    %v3610 = vunpack.c.l.b16 %v2288
    %v3611 = vunpack.c.h.b16 %v2288
    %v3612 = vunpack.c.l.b16 %v2289
    %v3613 = vunpack.c.h.b16 %v2289
    %v3614 = vunpack.c.l.b16 %v2290
    %v3615 = vunpack.c.h.b16 %v2290
    %v3616 = vunpack.c.l.b16 %v2291
    %v3617 = vunpack.c.h.b16 %v2291
    %v3618 = vunpack.c.l.b16 %v2292
    %v3619 = vunpack.c.h.b16 %v2292
    %v3620 = vunpack.c.l.b16 %v2293
    %v3621 = vunpack.c.h.b16 %v2293
    %v3622 = vunpack.c.l.b16 %v2294
    %v3623 = vunpack.c.h.b16 %v2294
    %v3624 = vunpack.c.l.b16 %v2295
    %v3625 = vunpack.c.h.b16 %v2295
    %v3626 = vunpack.c.l.b16 %v2296
    %v3627 = vunpack.c.h.b16 %v2296
    %v3628 = vunpack.c.l.b16 %v2297
    %v3629 = vunpack.c.h.b16 %v2297
    %v3630 = vunpack.c.l.b16 %v2298
    %v3631 = vunpack.c.h.b16 %v2298
    %v3632 = vunpack.c.l.b16 %v2299
    %v3633 = vunpack.c.h.b16 %v2299
    %v3634 = vunpack.c.l.b16 %v2300
    %v3635 = vunpack.c.h.b16 %v2300
    %v3636 = vunpack.c.l.b16 %v2301
    %v3637 = vunpack.c.h.b16 %v2301
    %v3638 = vunpack.c.l.b16 %v2302
    %v3639 = vunpack.c.h.b16 %v2302
    %v3640 = vunpack.c.l.b16 %v2303
    %v3641 = vunpack.c.h.b16 %v2303
    %v3642 = vunpack.c.l.b16 %v2304
    %v3643 = vunpack.c.h.b16 %v2304
    %v3644 = vunpack.c.l.b16 %v2305
    %v3645 = vunpack.c.h.b16 %v2305
    %v3646 = vunpack.c.l.b16 %v2306
    %v3647 = vunpack.c.h.b16 %v2306
    %v3648 = vunpack.c.l.b16 %v2307
    %v3649 = vunpack.c.h.b16 %v2307
    %v3650 = vunpack.c.l.b16 %v2308
    %v3651 = vunpack.c.h.b16 %v2308
    %v3652 = vunpack.c.l.b16 %v2309
    %v3653 = vunpack.c.h.b16 %v2309
    %v3654 = vunpack.c.l.b16 %v2310
    %v3655 = vunpack.c.h.b16 %v2310
    %v3656 = vunpack.c.l.b16 %v2311
    %v3657 = vunpack.c.h.b16 %v2311
    %v3658 = vunpack.c.l.b16 %v2312
    %v3659 = vunpack.c.h.b16 %v2312
    %v3660 = vunpack.c.l.b16 %v2313
    %v3661 = vunpack.c.h.b16 %v2313
    %v3662 = vunpack.c.l.b16 %v2314
    %v3663 = vunpack.c.h.b16 %v2314
    %v3664 = vunpack.c.l.b16 %v2315
    %v3665 = vunpack.c.h.b16 %v2315
    %v3666 = vunpack.c.l.b16 %v2316
    %v3667 = vunpack.c.h.b16 %v2316
    %v3668 = vunpack.c.l.b16 %v2317
    %v3669 = vunpack.c.h.b16 %v2317
    %v3670 = vunpack.c.l.b16 %v2318
    %v3671 = vunpack.c.h.b16 %v2318
    %v3672 = vunpack.c.l.b16 %v2319
    %v3673 = vunpack.c.h.b16 %v2319
    %v3674 = vunpack.c.l.b16 %v2320
    %v3675 = vunpack.c.h.b16 %v2320
    %v3676 = vunpack.c.l.b16 %v2321
    %v3677 = vunpack.c.h.b16 %v2321
    %v3678 = vunpack.c.l.b16 %v2322
    %v3679 = vunpack.c.h.b16 %v2322
    %v3680 = vunpack.c.l.b16 %v2323
    %v3681 = vunpack.c.h.b16 %v2323
    %v3682 = vunpack.c.l.b16 %v2324
    %v3683 = vunpack.c.h.b16 %v2324
    %v3684 = vunpack.c.l.b16 %v2325
    %v3685 = vunpack.c.h.b16 %v2325
    %v3686 = vunpack.c.l.b16 %v2326
    %v3687 = vunpack.c.h.b16 %v2326
    %v3688 = vunpack.c.l.b16 %v2327
    %v3689 = vunpack.c.h.b16 %v2327
    %v3690 = vunpack.c.l.b16 %v2328
    %v3691 = vunpack.c.h.b16 %v2328
    %v3692 = vunpack.c.l.b16 %v2329
    %v3693 = vunpack.c.h.b16 %v2329
    %v3694 = vunpack.c.l.b16 %v2330
    %v3695 = vunpack.c.h.b16 %v2330
    %v3696 = vunpack.c.l.b16 %v2331
    %v3697 = vunpack.c.h.b16 %v2331
    %v3698 = vunpack.c.l.b16 %v2332
    %v3699 = vunpack.c.h.b16 %v2332
    %v3700 = vunpack.c.l.b16 %v2333
    %v3701 = vunpack.c.h.b16 %v2333
    %v3702 = vunpack.c.l.b16 %v2334
    %v3703 = vunpack.c.h.b16 %v2334
    %v3704 = vunpack.c.l.b16 %v2335
    %v3705 = vunpack.c.h.b16 %v2335
    %v3706 = vunpack.c.l.b16 %v2336
    %v3707 = vunpack.c.h.b16 %v2336
    %v3708 = vunpack.c.l.b16 %v2337
    %v3709 = vunpack.c.h.b16 %v2337
    %v3710 = vunpack.c.l.b16 %v2338
    %v3711 = vunpack.c.h.b16 %v2338
    %v3712 = vunpack.c.l.b16 %v2339
    %v3713 = vunpack.c.h.b16 %v2339
    %v3714 = vunpack.c.l.b16 %v2340
    %v3715 = vunpack.c.h.b16 %v2340
    %v3716 = vunpack.c.l.b16 %v2341
    %v3717 = vunpack.c.h.b16 %v2341
    %v3718 = vunpack.c.l.b16 %v2342
    %v3719 = vunpack.c.h.b16 %v2342
    %v3720 = vunpack.c.l.b16 %v2343
    %v3721 = vunpack.c.h.b16 %v2343
    %v3722 = vunpack.c.l.b16 %v2344
    %v3723 = vunpack.c.h.b16 %v2344
    %v3724 = vunpack.c.l.b16 %v2345
    %v3725 = vunpack.c.h.b16 %v2345
    %v3726 = vunpack.c.l.b16 %v2346
    %v3727 = vunpack.c.h.b16 %v2346
    %v3728 = vunpack.c.l.b16 %v2347
    %v3729 = vunpack.c.h.b16 %v2347
    %v3730 = vunpack.c.l.b16 %v2348
    %v3731 = vunpack.c.h.b16 %v2348
    %v3732 = vunpack.c.l.b16 %v2349
    %v3733 = vunpack.c.h.b16 %v2349
    %v3734 = vunpack.c.l.b16 %v2350
    %v3735 = vunpack.c.h.b16 %v2350
    %v3736 = vunpack.c.l.b16 %v2351
    %v3737 = vunpack.c.h.b16 %v2351
    %v3738 = vunpack.c.l.b16 %v2352
    %v3739 = vunpack.c.h.b16 %v2352
    %v3740 = vunpack.c.l.b16 %v2353
    %v3741 = vunpack.c.h.b16 %v2353
    %v3742 = vunpack.c.l.b16 %v2354
    %v3743 = vunpack.c.h.b16 %v2354
    %v3744 = vunpack.c.l.b16 %v2355
    %v3745 = vunpack.c.h.b16 %v2355
    %v3746 = vunpack.c.l.b16 %v2356
    %v3747 = vunpack.c.h.b16 %v2356
    %v3748 = vunpack.c.l.b16 %v2357
    %v3749 = vunpack.c.h.b16 %v2357
    %v3750 = vunpack.c.l.b16 %v2358
    %v3751 = vunpack.c.h.b16 %v2358
    %v3752 = vunpack.c.l.b16 %v2359
    %v3753 = vunpack.c.h.b16 %v2359
    %v3754 = vunpack.c.l.b16 %v2360
    %v3755 = vunpack.c.h.b16 %v2360
    %v3756 = vunpack.c.l.b16 %v2361
    %v3757 = vunpack.c.h.b16 %v2361
    %v3758 = vunpack.c.l.b16 %v2362
    %v3759 = vunpack.c.h.b16 %v2362
    %v3760 = vunpack.c.l.b16 %v2363
    %v3761 = vunpack.c.h.b16 %v2363
    %v3762 = vunpack.c.l.b16 %v2364
    %v3763 = vunpack.c.h.b16 %v2364
    %v3764 = vunpack.c.l.b16 %v2365
    %v3765 = vunpack.c.h.b16 %v2365
    %v3766 = vunpack.c.l.b16 %v2366
    %v3767 = vunpack.c.h.b16 %v2366
    %v3768 = vunpack.c.l.b16 %v2367
    %v3769 = vunpack.c.h.b16 %v2367
    %v3770 = vunpack.c.l.b16 %v2368
    %v3771 = vunpack.c.h.b16 %v2368
    %v3772 = vunpack.c.l.b16 %v2369
    %v3773 = vunpack.c.h.b16 %v2369
    %v3774 = vunpack.c.l.b16 %v2370
    %v3775 = vunpack.c.h.b16 %v2370
    %v3776 = vunpack.c.l.b16 %v2371
    %v3777 = vunpack.c.h.b16 %v2371
    %v3778 = vunpack.c.l.b16 %v2372
    %v3779 = vunpack.c.h.b16 %v2372
    %v3780 = vunpack.c.l.b16 %v2373
    %v3781 = vunpack.c.h.b16 %v2373
    %v3782 = vunpack.c.l.b16 %v2374
    %v3783 = vunpack.c.h.b16 %v2374
    %v3784 = vunpack.c.l.b16 %v2375
    %v3785 = vunpack.c.h.b16 %v2375
    %v3786 = vunpack.c.l.b16 %v2376
    %v3787 = vunpack.c.h.b16 %v2376
    %v3788 = vunpack.c.l.b16 %v2377
    %v3789 = vunpack.c.h.b16 %v2377
    %v3790 = vunpack.c.l.b16 %v2378
    %v3791 = vunpack.c.h.b16 %v2378
    %v3792 = vunpack.c.l.b16 %v2379
    %v3793 = vunpack.c.h.b16 %v2379
    %v3794 = vunpack.c.l.b16 %v2380
    %v3795 = vunpack.c.h.b16 %v2380
    %v3796 = vunpack.c.l.b16 %v2381
    %v3797 = vunpack.c.h.b16 %v2381
    %v3798 = vunpack.c.l.b16 %v2382
    %v3799 = vunpack.c.h.b16 %v2382
    %v3800 = vunpack.c.l.b16 %v2383
    %v3801 = vunpack.c.h.b16 %v2383
    %v3802 = vunpack.c.l.b16 %v2384
    %v3803 = vunpack.c.h.b16 %v2384
    %v3804 = vunpack.c.l.b16 %v2385
    %v3805 = vunpack.c.h.b16 %v2385
    %v3806 = vunpack.c.l.b16 %v2386
    %v3807 = vunpack.c.h.b16 %v2386
    %v3808 = vunpack.c.l.b16 %v2387
    %v3809 = vunpack.c.h.b16 %v2387
    %v3810 = vunpack.c.l.b16 %v2388
    %v3811 = vunpack.c.h.b16 %v2388
    %v3812 = vunpack.c.l.b16 %v2389
    %v3813 = vunpack.c.h.b16 %v2389
    %v3814 = vunpack.c.l.b16 %v2390
    %v3815 = vunpack.c.h.b16 %v2390
    %v3816 = vunpack.c.l.b16 %v2391
    %v3817 = vunpack.c.h.b16 %v2391
    %v3818 = vunpack.c.l.b16 %v2392
    %v3819 = vunpack.c.h.b16 %v2392
    %v3820 = vunpack.c.l.b16 %v2393
    %v3821 = vunpack.c.h.b16 %v2393
    %v3822 = vunpack.c.l.b16 %v2394
    %v3823 = vunpack.c.h.b16 %v2394
    %v3824 = vunpack.c.l.b16 %v2395
    %v3825 = vunpack.c.h.b16 %v2395
    %v3826 = vunpack.c.l.b16 %v2396
    %v3827 = vunpack.c.h.b16 %v2396
    %v3828 = vunpack.c.l.b16 %v2397
    %v3829 = vunpack.c.h.b16 %v2397
    %v3830 = vunpack.c.l.b16 %v2398
    %v3831 = vunpack.c.h.b16 %v2398
    %v3832 = vunpack.c.l.b16 %v2399
    %v3833 = vunpack.c.h.b16 %v2399
    %v3834 = vunpack.c.l.b16 %v2400
    %v3835 = vunpack.c.h.b16 %v2400
    %v3836 = vunpack.c.l.b16 %v2401
    %v3837 = vunpack.c.h.b16 %v2401
    %v3838 = vunpack.c.l.b16 %v2402
    %v3839 = vunpack.c.h.b16 %v2402
    %v3840 = vunpack.c.l.b16 %v2403
    %v3841 = vunpack.c.h.b16 %v2403
    %v3842 = vunpack.c.l.b16 %v2404
    %v3843 = vunpack.c.h.b16 %v2404
    %v3844 = vunpack.c.l.b16 %v2405
    %v3845 = vunpack.c.h.b16 %v2405
    %v3846 = vunpack.c.l.b16 %v2406
    %v3847 = vunpack.c.h.b16 %v2406
    %v3848 = vunpack.c.l.b16 %v2407
    %v3849 = vunpack.c.h.b16 %v2407
    %v3850 = vunpack.c.l.b16 %v2408
    %v3851 = vunpack.c.h.b16 %v2408
    %v3852 = vunpack.c.l.b16 %v2409
    %v3853 = vunpack.c.h.b16 %v2409
    %v3854 = vunpack.c.l.b16 %v2410
    %v3855 = vunpack.c.h.b16 %v2410
    %v3856 = vunpack.c.l.b16 %v2411
    %v3857 = vunpack.c.h.b16 %v2411
    %v3858 = vunpack.c.l.b16 %v2412
    %v3859 = vunpack.c.h.b16 %v2412
    %v3860 = vunpack.c.l.b16 %v2413
    %v3861 = vunpack.c.h.b16 %v2413
    %v3862 = vunpack.c.l.b16 %v2414
    %v3863 = vunpack.c.h.b16 %v2414
    %v3864 = vunpack.c.l.b16 %v2415
    %v3865 = vunpack.c.h.b16 %v2415
    %v3866 = vunpack.c.l.b16 %v2416
    %v3867 = vunpack.c.h.b16 %v2416
    %v3868 = vunpack.c.l.b16 %v2417
    %v3869 = vunpack.c.h.b16 %v2417
    %v3870 = vunpack.c.l.b16 %v2418
    %v3871 = vunpack.c.h.b16 %v2418
    %v3872 = vunpack.c.l.b16 %v2419
    %v3873 = vunpack.c.h.b16 %v2419
    %v3874 = vunpack.c.l.b16 %v2420
    %v3875 = vunpack.c.h.b16 %v2420
    %v3876 = vunpack.c.l.b16 %v2421
    %v3877 = vunpack.c.h.b16 %v2421
    %v3878 = vunpack.c.l.b16 %v2422
    %v3879 = vunpack.c.h.b16 %v2422
    %v3880 = vunpack.c.l.b16 %v2423
    %v3881 = vunpack.c.h.b16 %v2423
    %v3882 = vunpack.c.l.b16 %v2424
    %v3883 = vunpack.c.h.b16 %v2424
    %v3884 = vunpack.c.l.b16 %v2425
    %v3885 = vunpack.c.h.b16 %v2425
    %v3886 = vunpack.c.l.b16 %v2426
    %v3887 = vunpack.c.h.b16 %v2426
    %v3888 = vunpack.c.l.b16 %v2427
    %v3889 = vunpack.c.h.b16 %v2427
    %v3890 = vunpack.c.l.b16 %v2428
    %v3891 = vunpack.c.h.b16 %v2428
    %v3892 = vunpack.c.l.b16 %v2429
    %v3893 = vunpack.c.h.b16 %v2429
    %v3894 = vunpack.c.l.b16 %v2430
    %v3895 = vunpack.c.h.b16 %v2430
    %v3896 = vunpack.c.l.b16 %v2431
    %v3897 = vunpack.c.h.b16 %v2431
    %v3898 = vunpack.c.l.b16 %v2432
    %v3899 = vunpack.c.h.b16 %v2432
    %v3900 = vunpack.c.l.b16 %v2433
    %v3901 = vunpack.c.h.b16 %v2433
    %v3902 = vunpack.c.l.b16 %v2434
    %v3903 = vunpack.c.h.b16 %v2434
    %v3904 = vunpack.c.l.b16 %v2435
    %v3905 = vunpack.c.h.b16 %v2435
    %v3906 = vunpack.c.l.b16 %v2436
    %v3907 = vunpack.c.h.b16 %v2436
    %v3908 = vunpack.c.l.b16 %v2437
    %v3909 = vunpack.c.h.b16 %v2437
    %v3910 = vunpack.c.l.b16 %v2438
    %v3911 = vunpack.c.h.b16 %v2438
    %v3912 = vunpack.c.l.b16 %v2439
    %v3913 = vunpack.c.h.b16 %v2439
    %v3914 = vunpack.c.l.b16 %v2440
    %v3915 = vunpack.c.h.b16 %v2440
    %v3916 = vunpack.c.l.b16 %v2441
    %v3917 = vunpack.c.h.b16 %v2441
    %v3918 = vunpack.c.l.b16 %v2442
    %v3919 = vunpack.c.h.b16 %v2442
    %v3920 = vunpack.c.l.b16 %v2443
    %v3921 = vunpack.c.h.b16 %v2443
    %v3922 = vunpack.c.l.b16 %v2444
    %v3923 = vunpack.c.h.b16 %v2444
    %v3924 = vunpack.c.l.b16 %v2445
    %v3925 = vunpack.c.h.b16 %v2445
    %v3926 = vunpack.c.l.b16 %v2446
    %v3927 = vunpack.c.h.b16 %v2446
    %v3928 = vunpack.c.l.b16 %v2447
    %v3929 = vunpack.c.h.b16 %v2447
    %v3930 = vunpack.c.l.b16 %v2448
    %v3931 = vunpack.c.h.b16 %v2448
    %v3932 = vunpack.c.l.b16 %v2449
    %v3933 = vunpack.c.h.b16 %v2449
    %v3934 = vunpack.c.l.b16 %v2450
    %v3935 = vunpack.c.h.b16 %v2450
    %v3936 = vunpack.c.l.b16 %v2451
    %v3937 = vunpack.c.h.b16 %v2451
    %v3938 = vunpack.c.l.b16 %v2452
    %v3939 = vunpack.c.h.b16 %v2452
    %v3940 = vunpack.c.l.b16 %v2453
    %v3941 = vunpack.c.h.b16 %v2453
    %v3942 = vunpack.c.l.b16 %v2454
    %v3943 = vunpack.c.h.b16 %v2454
    %v3944 = vunpack.c.l.b16 %v2455
    %v3945 = vunpack.c.h.b16 %v2455
    %v3946 = vunpack.c.l.b16 %v2456
    %v3947 = vunpack.c.h.b16 %v2456
    %v3948 = vunpack.c.l.b16 %v2457
    %v3949 = vunpack.c.h.b16 %v2457
    %v3950 = vunpack.c.l.b16 %v2458
    %v3951 = vunpack.c.h.b16 %v2458
    %v3952 = vunpack.c.l.b16 %v2459
    %v3953 = vunpack.c.h.b16 %v2459
    %v3954 = vunpack.c.l.b16 %v2460
    %v3955 = vunpack.c.h.b16 %v2460
    %v3956 = vunpack.c.l.b16 %v2461
    %v3957 = vunpack.c.h.b16 %v2461
    %v3958 = vunpack.c.l.b16 %v2462
    %v3959 = vunpack.c.h.b16 %v2462
    %v3960 = vunpack.c.l.b16 %v2463
    %v3961 = vunpack.c.h.b16 %v2463
    %v3962 = vunpack.c.l.b16 %v2464
    %v3963 = vunpack.c.h.b16 %v2464
    %v3964 = vunpack.c.l.b16 %v2465
    %v3965 = vunpack.c.h.b16 %v2465
    %v3966 = vunpack.c.l.b16 %v2466
    %v3967 = vunpack.c.h.b16 %v2466
    %v3968 = vunpack.c.l.b16 %v2467
    %v3969 = vunpack.c.h.b16 %v2467
    %v3970 = vunpack.c.l.b16 %v2468
    %v3971 = vunpack.c.h.b16 %v2468
    %v3972 = vunpack.c.l.b16 %v2469
    %v3973 = vunpack.c.h.b16 %v2469
    %v3974 = vunpack.c.l.b16 %v2470
    %v3975 = vunpack.c.h.b16 %v2470
    %v3976 = vunpack.c.l.b16 %v2471
    %v3977 = vunpack.c.h.b16 %v2471
    %v3978 = vunpack.c.l.b16 %v2472
    %v3979 = vunpack.c.h.b16 %v2472
    %v3980 = vunpack.c.l.b16 %v2473
    %v3981 = vunpack.c.h.b16 %v2473
    %v3982 = vunpack.c.l.b16 %v2474
    %v3983 = vunpack.c.h.b16 %v2474
    %v3984 = vunpack.c.l.b16 %v2475
    %v3985 = vunpack.c.h.b16 %v2475
    %v3986 = vunpack.c.l.b16 %v2476
    %v3987 = vunpack.c.h.b16 %v2476
    %v3988 = vunpack.c.l.b16 %v2477
    %v3989 = vunpack.c.h.b16 %v2477
    %v3990 = vunpack.c.l.b16 %v2478
    %v3991 = vunpack.c.h.b16 %v2478
    %v3992 = vunpack.c.l.b16 %v2479
    %v3993 = vunpack.c.h.b16 %v2479
    %v3994 = vunpack.c.l.b16 %v2480
    %v3995 = vunpack.c.h.b16 %v2480
    %v3996 = vunpack.c.l.b16 %v2481
    %v3997 = vunpack.c.h.b16 %v2481
    %v3998 = vunpack.c.l.b16 %v2482
    %v3999 = vunpack.c.h.b16 %v2482
    %v4000 = vunpack.c.l.b16 %v2483
    %v4001 = vunpack.c.h.b16 %v2483
    %v4002 = vunpack.c.l.b16 %v2484
    %v4003 = vunpack.c.h.b16 %v2484
    %v4004 = vunpack.c.l.b16 %v2485
    %v4005 = vunpack.c.h.b16 %v2485
    %v4006 = vunpack.c.l.b16 %v2486
    %v4007 = vunpack.c.h.b16 %v2486
    %v4008 = vunpack.c.l.b16 %v2487
    %v4009 = vunpack.c.h.b16 %v2487
    %v4010 = vunpack.c.l.b16 %v2488
    %v4011 = vunpack.c.h.b16 %v2488
    %v4012 = vunpack.c.l.b16 %v2489
    %v4013 = vunpack.c.h.b16 %v2489
    %v4014 = vunpack.c.l.b16 %v2490
    %v4015 = vunpack.c.h.b16 %v2490
    %v4016 = vunpack.c.l.b16 %v2491
    %v4017 = vunpack.c.h.b16 %v2491
    %v4018 = vunpack.c.l.b16 %v2492
    %v4019 = vunpack.c.h.b16 %v2492
    %v4020 = vunpack.c.l.b16 %v2493
    %v4021 = vunpack.c.h.b16 %v2493
    %v4022 = vunpack.c.l.b16 %v2494
    %v4023 = vunpack.c.h.b16 %v2494
    %v4024 = vunpack.c.l.b16 %v2495
    %v4025 = vunpack.c.h.b16 %v2495
    %v4026 = vunpack.c.l.b16 %v2496
    %v4027 = vunpack.c.h.b16 %v2496
    %v4028 = vunpack.c.l.b16 %v2497
    %v4029 = vunpack.c.h.b16 %v2497
    %v4030 = vunpack.c.l.b16 %v2498
    %v4031 = vunpack.c.h.b16 %v2498
    %v4032 = vunpack.c.l.b16 %v2499
    %v4033 = vunpack.c.h.b16 %v2499
    %v4034 = vunpack.c.l.b16 %v2500
    %v4035 = vunpack.c.h.b16 %v2500
    %v4036 = vunpack.c.l.b16 %v2501
    %v4037 = vunpack.c.h.b16 %v2501
    %v4038 = vpack.c.b16 %v3018, %v3014
    %v4039 = vpack.c.b16 %v3019, %v3015
    %v4040 = vpack.c.b16 %v3020, %v3016
    %v4041 = vpack.c.b16 %v3021, %v3017
    %v4042 = vpack.c.b16 %v3026, %v3022
    %v4043 = vpack.c.b16 %v3027, %v3023
    %v4044 = vpack.c.b16 %v3028, %v3024
    %v4045 = vpack.c.b16 %v3029, %v3025
    %v4046 = vpack.c.b16 %v3034, %v3030
    %v4047 = vpack.c.b16 %v3035, %v3031
    %v4048 = vpack.c.b16 %v3036, %v3032
    %v4049 = vpack.c.b16 %v3037, %v3033
    %v4050 = vpack.c.b16 %v3042, %v3038
    %v4051 = vpack.c.b16 %v3043, %v3039
    %v4052 = vpack.c.b16 %v3044, %v3040
    %v4053 = vpack.c.b16 %v3045, %v3041
    %v4054 = vpack.c.b16 %v3050, %v3046
    %v4055 = vpack.c.b16 %v3051, %v3047
    %v4056 = vpack.c.b16 %v3052, %v3048
    %v4057 = vpack.c.b16 %v3053, %v3049
    %v4058 = vpack.c.b16 %v3058, %v3054
    %v4059 = vpack.c.b16 %v3059, %v3055
    %v4060 = vpack.c.b16 %v3060, %v3056
    %v4061 = vpack.c.b16 %v3061, %v3057
    %v4062 = vpack.c.b16 %v3066, %v3062
    %v4063 = vpack.c.b16 %v3067, %v3063
    %v4064 = vpack.c.b16 %v3068, %v3064
    %v4065 = vpack.c.b16 %v3069, %v3065
    %v4066 = vpack.c.b16 %v3074, %v3070
    %v4067 = vpack.c.b16 %v3075, %v3071
    %v4068 = vpack.c.b16 %v3076, %v3072
    %v4069 = vpack.c.b16 %v3077, %v3073
    %v4070 = vpack.c.b16 %v3082, %v3078
    %v4071 = vpack.c.b16 %v3083, %v3079
    %v4072 = vpack.c.b16 %v3084, %v3080
    %v4073 = vpack.c.b16 %v3085, %v3081
    %v4074 = vpack.c.b16 %v3090, %v3086
    %v4075 = vpack.c.b16 %v3091, %v3087
    %v4076 = vpack.c.b16 %v3092, %v3088
    %v4077 = vpack.c.b16 %v3093, %v3089
    %v4078 = vpack.c.b16 %v3098, %v3094
    %v4079 = vpack.c.b16 %v3099, %v3095
    %v4080 = vpack.c.b16 %v3100, %v3096
    %v4081 = vpack.c.b16 %v3101, %v3097
    %v4082 = vpack.c.b16 %v3106, %v3102
    %v4083 = vpack.c.b16 %v3107, %v3103
    %v4084 = vpack.c.b16 %v3108, %v3104
    %v4085 = vpack.c.b16 %v3109, %v3105
    %v4086 = vpack.c.b16 %v3114, %v3110
    %v4087 = vpack.c.b16 %v3115, %v3111
    %v4088 = vpack.c.b16 %v3116, %v3112
    %v4089 = vpack.c.b16 %v3117, %v3113
    %v4090 = vpack.c.b16 %v3122, %v3118
    %v4091 = vpack.c.b16 %v3123, %v3119
    %v4092 = vpack.c.b16 %v3124, %v3120
    %v4093 = vpack.c.b16 %v3125, %v3121
    %v4094 = vpack.c.b16 %v3130, %v3126
    %v4095 = vpack.c.b16 %v3131, %v3127
    %v4096 = vpack.c.b16 %v3132, %v3128
    %v4097 = vpack.c.b16 %v3133, %v3129
    %v4098 = vpack.c.b16 %v3138, %v3134
    %v4099 = vpack.c.b16 %v3139, %v3135
    %v4100 = vpack.c.b16 %v3140, %v3136
    %v4101 = vpack.c.b16 %v3141, %v3137
    %v4102 = vpack.c.b16 %v3146, %v3142
    %v4103 = vpack.c.b16 %v3147, %v3143
    %v4104 = vpack.c.b16 %v3148, %v3144
    %v4105 = vpack.c.b16 %v3149, %v3145
    %v4106 = vpack.c.b16 %v3154, %v3150
    %v4107 = vpack.c.b16 %v3155, %v3151
    %v4108 = vpack.c.b16 %v3156, %v3152
    %v4109 = vpack.c.b16 %v3157, %v3153
    %v4110 = vpack.c.b16 %v3162, %v3158
    %v4111 = vpack.c.b16 %v3163, %v3159
    %v4112 = vpack.c.b16 %v3164, %v3160
    %v4113 = vpack.c.b16 %v3165, %v3161
    %v4114 = vpack.c.b16 %v3170, %v3166
    %v4115 = vpack.c.b16 %v3171, %v3167
    %v4116 = vpack.c.b16 %v3172, %v3168
    %v4117 = vpack.c.b16 %v3173, %v3169
    %v4118 = vpack.c.b16 %v3178, %v3174
    %v4119 = vpack.c.b16 %v3179, %v3175
    %v4120 = vpack.c.b16 %v3180, %v3176
    %v4121 = vpack.c.b16 %v3181, %v3177
    %v4122 = vpack.c.b16 %v3186, %v3182
    %v4123 = vpack.c.b16 %v3187, %v3183
    %v4124 = vpack.c.b16 %v3188, %v3184
    %v4125 = vpack.c.b16 %v3189, %v3185
    %v4126 = vpack.c.b16 %v3194, %v3190
    %v4127 = vpack.c.b16 %v3195, %v3191
    %v4128 = vpack.c.b16 %v3196, %v3192
    %v4129 = vpack.c.b16 %v3197, %v3193
    %v4130 = vpack.c.b16 %v3202, %v3198
    %v4131 = vpack.c.b16 %v3203, %v3199
    %v4132 = vpack.c.b16 %v3204, %v3200
    %v4133 = vpack.c.b16 %v3205, %v3201
    %v4134 = vpack.c.b16 %v3210, %v3206
    %v4135 = vpack.c.b16 %v3211, %v3207
    %v4136 = vpack.c.b16 %v3212, %v3208
    %v4137 = vpack.c.b16 %v3213, %v3209
    %v4138 = vpack.c.b16 %v3218, %v3214
    %v4139 = vpack.c.b16 %v3219, %v3215
    %v4140 = vpack.c.b16 %v3220, %v3216
    %v4141 = vpack.c.b16 %v3221, %v3217
    %v4142 = vpack.c.b16 %v3226, %v3222
    %v4143 = vpack.c.b16 %v3227, %v3223
    %v4144 = vpack.c.b16 %v3228, %v3224
    %v4145 = vpack.c.b16 %v3229, %v3225
    %v4146 = vpack.c.b16 %v3234, %v3230
    %v4147 = vpack.c.b16 %v3235, %v3231
    %v4148 = vpack.c.b16 %v3236, %v3232
    %v4149 = vpack.c.b16 %v3237, %v3233
    %v4150 = vpack.c.b16 %v3242, %v3238
    %v4151 = vpack.c.b16 %v3243, %v3239
    %v4152 = vpack.c.b16 %v3244, %v3240
    %v4153 = vpack.c.b16 %v3245, %v3241
    %v4154 = vpack.c.b16 %v3250, %v3246
    %v4155 = vpack.c.b16 %v3251, %v3247
    %v4156 = vpack.c.b16 %v3252, %v3248
    %v4157 = vpack.c.b16 %v3253, %v3249
    %v4158 = vpack.c.b16 %v3258, %v3254
    %v4159 = vpack.c.b16 %v3259, %v3255
    %v4160 = vpack.c.b16 %v3260, %v3256
    %v4161 = vpack.c.b16 %v3261, %v3257
    %v4162 = vpack.c.b16 %v3266, %v3262
    %v4163 = vpack.c.b16 %v3267, %v3263
    %v4164 = vpack.c.b16 %v3268, %v3264
    %v4165 = vpack.c.b16 %v3269, %v3265
    %v4166 = vpack.c.b16 %v3274, %v3270
    %v4167 = vpack.c.b16 %v3275, %v3271
    %v4168 = vpack.c.b16 %v3276, %v3272
    %v4169 = vpack.c.b16 %v3277, %v3273
    %v4170 = vpack.c.b16 %v3282, %v3278
    %v4171 = vpack.c.b16 %v3283, %v3279
    %v4172 = vpack.c.b16 %v3284, %v3280
    %v4173 = vpack.c.b16 %v3285, %v3281
    %v4174 = vpack.c.b16 %v3290, %v3286
    %v4175 = vpack.c.b16 %v3291, %v3287
    %v4176 = vpack.c.b16 %v3292, %v3288
    %v4177 = vpack.c.b16 %v3293, %v3289
    %v4178 = vpack.c.b16 %v3298, %v3294
    %v4179 = vpack.c.b16 %v3299, %v3295
    %v4180 = vpack.c.b16 %v3300, %v3296
    %v4181 = vpack.c.b16 %v3301, %v3297
    %v4182 = vpack.c.b16 %v3306, %v3302
    %v4183 = vpack.c.b16 %v3307, %v3303
    %v4184 = vpack.c.b16 %v3308, %v3304
    %v4185 = vpack.c.b16 %v3309, %v3305
    %v4186 = vpack.c.b16 %v3314, %v3310
    %v4187 = vpack.c.b16 %v3315, %v3311
    %v4188 = vpack.c.b16 %v3316, %v3312
    %v4189 = vpack.c.b16 %v3317, %v3313
    %v4190 = vpack.c.b16 %v3322, %v3318
    %v4191 = vpack.c.b16 %v3323, %v3319
    %v4192 = vpack.c.b16 %v3324, %v3320
    %v4193 = vpack.c.b16 %v3325, %v3321
    %v4194 = vpack.c.b16 %v3330, %v3326
    %v4195 = vpack.c.b16 %v3331, %v3327
    %v4196 = vpack.c.b16 %v3332, %v3328
    %v4197 = vpack.c.b16 %v3333, %v3329
    %v4198 = vpack.c.b16 %v3338, %v3334
    %v4199 = vpack.c.b16 %v3339, %v3335
    %v4200 = vpack.c.b16 %v3340, %v3336
    %v4201 = vpack.c.b16 %v3341, %v3337
    %v4202 = vpack.c.b16 %v3346, %v3342
    %v4203 = vpack.c.b16 %v3347, %v3343
    %v4204 = vpack.c.b16 %v3348, %v3344
    %v4205 = vpack.c.b16 %v3349, %v3345
    %v4206 = vpack.c.b16 %v3354, %v3350
    %v4207 = vpack.c.b16 %v3355, %v3351
    %v4208 = vpack.c.b16 %v3356, %v3352
    %v4209 = vpack.c.b16 %v3357, %v3353
    %v4210 = vpack.c.b16 %v3362, %v3358
    %v4211 = vpack.c.b16 %v3363, %v3359
    %v4212 = vpack.c.b16 %v3364, %v3360
    %v4213 = vpack.c.b16 %v3365, %v3361
    %v4214 = vpack.c.b16 %v3370, %v3366
    %v4215 = vpack.c.b16 %v3371, %v3367
    %v4216 = vpack.c.b16 %v3372, %v3368
    %v4217 = vpack.c.b16 %v3373, %v3369
    %v4218 = vpack.c.b16 %v3378, %v3374
    %v4219 = vpack.c.b16 %v3379, %v3375
    %v4220 = vpack.c.b16 %v3380, %v3376
    %v4221 = vpack.c.b16 %v3381, %v3377
    %v4222 = vpack.c.b16 %v3386, %v3382
    %v4223 = vpack.c.b16 %v3387, %v3383
    %v4224 = vpack.c.b16 %v3388, %v3384
    %v4225 = vpack.c.b16 %v3389, %v3385
    %v4226 = vpack.c.b16 %v3394, %v3390
    %v4227 = vpack.c.b16 %v3395, %v3391
    %v4228 = vpack.c.b16 %v3396, %v3392
    %v4229 = vpack.c.b16 %v3397, %v3393
    %v4230 = vpack.c.b16 %v3402, %v3398
    %v4231 = vpack.c.b16 %v3403, %v3399
    %v4232 = vpack.c.b16 %v3404, %v3400
    %v4233 = vpack.c.b16 %v3405, %v3401
    %v4234 = vpack.c.b16 %v3410, %v3406
    %v4235 = vpack.c.b16 %v3411, %v3407
    %v4236 = vpack.c.b16 %v3412, %v3408
    %v4237 = vpack.c.b16 %v3413, %v3409
    %v4238 = vpack.c.b16 %v3418, %v3414
    %v4239 = vpack.c.b16 %v3419, %v3415
    %v4240 = vpack.c.b16 %v3420, %v3416
    %v4241 = vpack.c.b16 %v3421, %v3417
    %v4242 = vpack.c.b16 %v3426, %v3422
    %v4243 = vpack.c.b16 %v3427, %v3423
    %v4244 = vpack.c.b16 %v3428, %v3424
    %v4245 = vpack.c.b16 %v3429, %v3425
    %v4246 = vpack.c.b16 %v3434, %v3430
    %v4247 = vpack.c.b16 %v3435, %v3431
    %v4248 = vpack.c.b16 %v3436, %v3432
    %v4249 = vpack.c.b16 %v3437, %v3433
    %v4250 = vpack.c.b16 %v3442, %v3438
    %v4251 = vpack.c.b16 %v3443, %v3439
    %v4252 = vpack.c.b16 %v3444, %v3440
    %v4253 = vpack.c.b16 %v3445, %v3441
    %v4254 = vpack.c.b16 %v3450, %v3446
    %v4255 = vpack.c.b16 %v3451, %v3447
    %v4256 = vpack.c.b16 %v3452, %v3448
    %v4257 = vpack.c.b16 %v3453, %v3449
    %v4258 = vpack.c.b16 %v3458, %v3454
    %v4259 = vpack.c.b16 %v3459, %v3455
    %v4260 = vpack.c.b16 %v3460, %v3456
    %v4261 = vpack.c.b16 %v3461, %v3457
    %v4262 = vpack.c.b16 %v3466, %v3462
    %v4263 = vpack.c.b16 %v3467, %v3463
    %v4264 = vpack.c.b16 %v3468, %v3464
    %v4265 = vpack.c.b16 %v3469, %v3465
    %v4266 = vpack.c.b16 %v3474, %v3470
    %v4267 = vpack.c.b16 %v3475, %v3471
    %v4268 = vpack.c.b16 %v3476, %v3472
    %v4269 = vpack.c.b16 %v3477, %v3473
    %v4270 = vpack.c.b16 %v3482, %v3478
    %v4271 = vpack.c.b16 %v3483, %v3479
    %v4272 = vpack.c.b16 %v3484, %v3480
    %v4273 = vpack.c.b16 %v3485, %v3481
    %v4274 = vpack.c.b16 %v3490, %v3486
    %v4275 = vpack.c.b16 %v3491, %v3487
    %v4276 = vpack.c.b16 %v3492, %v3488
    %v4277 = vpack.c.b16 %v3493, %v3489
    %v4278 = vpack.c.b16 %v3498, %v3494
    %v4279 = vpack.c.b16 %v3499, %v3495
    %v4280 = vpack.c.b16 %v3500, %v3496
    %v4281 = vpack.c.b16 %v3501, %v3497
    %v4282 = vpack.c.b16 %v3506, %v3502
    %v4283 = vpack.c.b16 %v3507, %v3503
    %v4284 = vpack.c.b16 %v3508, %v3504
    %v4285 = vpack.c.b16 %v3509, %v3505
    %v4286 = vpack.c.b16 %v3514, %v3510
    %v4287 = vpack.c.b16 %v3515, %v3511
    %v4288 = vpack.c.b16 %v3516, %v3512
    %v4289 = vpack.c.b16 %v3517, %v3513
    %v4290 = vpack.c.b16 %v3522, %v3518
    %v4291 = vpack.c.b16 %v3523, %v3519
    %v4292 = vpack.c.b16 %v3524, %v3520
    %v4293 = vpack.c.b16 %v3525, %v3521
    %v4294 = vpack.c.b16 %v3530, %v3526
    %v4295 = vpack.c.b16 %v3531, %v3527
    %v4296 = vpack.c.b16 %v3532, %v3528
    %v4297 = vpack.c.b16 %v3533, %v3529
    %v4298 = vpack.c.b16 %v3538, %v3534
    %v4299 = vpack.c.b16 %v3539, %v3535
    %v4300 = vpack.c.b16 %v3540, %v3536
    %v4301 = vpack.c.b16 %v3541, %v3537
    %v4302 = vpack.c.b16 %v3546, %v3542
    %v4303 = vpack.c.b16 %v3547, %v3543
    %v4304 = vpack.c.b16 %v3548, %v3544
    %v4305 = vpack.c.b16 %v3549, %v3545
    %v4306 = vpack.c.b16 %v3554, %v3550
    %v4307 = vpack.c.b16 %v3555, %v3551
    %v4308 = vpack.c.b16 %v3556, %v3552
    %v4309 = vpack.c.b16 %v3557, %v3553
    %v4310 = vpack.c.b16 %v3562, %v3558
    %v4311 = vpack.c.b16 %v3563, %v3559
    %v4312 = vpack.c.b16 %v3564, %v3560
    %v4313 = vpack.c.b16 %v3565, %v3561
    %v4314 = vpack.c.b16 %v3570, %v3566
    %v4315 = vpack.c.b16 %v3571, %v3567
    %v4316 = vpack.c.b16 %v3572, %v3568
    %v4317 = vpack.c.b16 %v3573, %v3569
    %v4318 = vpack.c.b16 %v3578, %v3574
    %v4319 = vpack.c.b16 %v3579, %v3575
    %v4320 = vpack.c.b16 %v3580, %v3576
    %v4321 = vpack.c.b16 %v3581, %v3577
    %v4322 = vpack.c.b16 %v3586, %v3582
    %v4323 = vpack.c.b16 %v3587, %v3583
    %v4324 = vpack.c.b16 %v3588, %v3584
    %v4325 = vpack.c.b16 %v3589, %v3585
    %v4326 = vpack.c.b16 %v3594, %v3590
    %v4327 = vpack.c.b16 %v3595, %v3591
    %v4328 = vpack.c.b16 %v3596, %v3592
    %v4329 = vpack.c.b16 %v3597, %v3593
    %v4330 = vpack.c.b16 %v3602, %v3598
    %v4331 = vpack.c.b16 %v3603, %v3599
    %v4332 = vpack.c.b16 %v3604, %v3600
    %v4333 = vpack.c.b16 %v3605, %v3601
    %v4334 = vpack.c.b16 %v3610, %v3606
    %v4335 = vpack.c.b16 %v3611, %v3607
    %v4336 = vpack.c.b16 %v3612, %v3608
    %v4337 = vpack.c.b16 %v3613, %v3609
    %v4338 = vpack.c.b16 %v3618, %v3614
    %v4339 = vpack.c.b16 %v3619, %v3615
    %v4340 = vpack.c.b16 %v3620, %v3616
    %v4341 = vpack.c.b16 %v3621, %v3617
    %v4342 = vpack.c.b16 %v3626, %v3622
    %v4343 = vpack.c.b16 %v3627, %v3623
    %v4344 = vpack.c.b16 %v3628, %v3624
    %v4345 = vpack.c.b16 %v3629, %v3625
    %v4346 = vpack.c.b16 %v3634, %v3630
    %v4347 = vpack.c.b16 %v3635, %v3631
    %v4348 = vpack.c.b16 %v3636, %v3632
    %v4349 = vpack.c.b16 %v3637, %v3633
    %v4350 = vpack.c.b16 %v3642, %v3638
    %v4351 = vpack.c.b16 %v3643, %v3639
    %v4352 = vpack.c.b16 %v3644, %v3640
    %v4353 = vpack.c.b16 %v3645, %v3641
    %v4354 = vpack.c.b16 %v3650, %v3646
    %v4355 = vpack.c.b16 %v3651, %v3647
    %v4356 = vpack.c.b16 %v3652, %v3648
    %v4357 = vpack.c.b16 %v3653, %v3649
    %v4358 = vpack.c.b16 %v3658, %v3654
    %v4359 = vpack.c.b16 %v3659, %v3655
    %v4360 = vpack.c.b16 %v3660, %v3656
    %v4361 = vpack.c.b16 %v3661, %v3657
    %v4362 = vpack.c.b16 %v3666, %v3662
    %v4363 = vpack.c.b16 %v3667, %v3663
    %v4364 = vpack.c.b16 %v3668, %v3664
    %v4365 = vpack.c.b16 %v3669, %v3665
    %v4366 = vpack.c.b16 %v3674, %v3670
    %v4367 = vpack.c.b16 %v3675, %v3671
    %v4368 = vpack.c.b16 %v3676, %v3672
    %v4369 = vpack.c.b16 %v3677, %v3673
    %v4370 = vpack.c.b16 %v3682, %v3678
    %v4371 = vpack.c.b16 %v3683, %v3679
    %v4372 = vpack.c.b16 %v3684, %v3680
    %v4373 = vpack.c.b16 %v3685, %v3681
    %v4374 = vpack.c.b16 %v3690, %v3686
    %v4375 = vpack.c.b16 %v3691, %v3687
    %v4376 = vpack.c.b16 %v3692, %v3688
    %v4377 = vpack.c.b16 %v3693, %v3689
    %v4378 = vpack.c.b16 %v3698, %v3694
    %v4379 = vpack.c.b16 %v3699, %v3695
    %v4380 = vpack.c.b16 %v3700, %v3696
    %v4381 = vpack.c.b16 %v3701, %v3697
    %v4382 = vpack.c.b16 %v3706, %v3702
    %v4383 = vpack.c.b16 %v3707, %v3703
    %v4384 = vpack.c.b16 %v3708, %v3704
    %v4385 = vpack.c.b16 %v3709, %v3705
    %v4386 = vpack.c.b16 %v3714, %v3710
    %v4387 = vpack.c.b16 %v3715, %v3711
    %v4388 = vpack.c.b16 %v3716, %v3712
    %v4389 = vpack.c.b16 %v3717, %v3713
    %v4390 = vpack.c.b16 %v3722, %v3718
    %v4391 = vpack.c.b16 %v3723, %v3719
    %v4392 = vpack.c.b16 %v3724, %v3720
    %v4393 = vpack.c.b16 %v3725, %v3721
    %v4394 = vpack.c.b16 %v3730, %v3726
    %v4395 = vpack.c.b16 %v3731, %v3727
    %v4396 = vpack.c.b16 %v3732, %v3728
    %v4397 = vpack.c.b16 %v3733, %v3729
    %v4398 = vpack.c.b16 %v3738, %v3734
    %v4399 = vpack.c.b16 %v3739, %v3735
    %v4400 = vpack.c.b16 %v3740, %v3736
    %v4401 = vpack.c.b16 %v3741, %v3737
    %v4402 = vpack.c.b16 %v3746, %v3742
    %v4403 = vpack.c.b16 %v3747, %v3743
    %v4404 = vpack.c.b16 %v3748, %v3744
    %v4405 = vpack.c.b16 %v3749, %v3745
    %v4406 = vpack.c.b16 %v3754, %v3750
    %v4407 = vpack.c.b16 %v3755, %v3751
    %v4408 = vpack.c.b16 %v3756, %v3752
    %v4409 = vpack.c.b16 %v3757, %v3753
    %v4410 = vpack.c.b16 %v3762, %v3758
    %v4411 = vpack.c.b16 %v3763, %v3759
    %v4412 = vpack.c.b16 %v3764, %v3760
    %v4413 = vpack.c.b16 %v3765, %v3761
    %v4414 = vpack.c.b16 %v3770, %v3766
    %v4415 = vpack.c.b16 %v3771, %v3767
    %v4416 = vpack.c.b16 %v3772, %v3768
    %v4417 = vpack.c.b16 %v3773, %v3769
    %v4418 = vpack.c.b16 %v3778, %v3774
    %v4419 = vpack.c.b16 %v3779, %v3775
    %v4420 = vpack.c.b16 %v3780, %v3776
    %v4421 = vpack.c.b16 %v3781, %v3777
    %v4422 = vpack.c.b16 %v3786, %v3782
    %v4423 = vpack.c.b16 %v3787, %v3783
    %v4424 = vpack.c.b16 %v3788, %v3784
    %v4425 = vpack.c.b16 %v3789, %v3785
    %v4426 = vpack.c.b16 %v3794, %v3790
    %v4427 = vpack.c.b16 %v3795, %v3791
    %v4428 = vpack.c.b16 %v3796, %v3792
    %v4429 = vpack.c.b16 %v3797, %v3793
    %v4430 = vpack.c.b16 %v3802, %v3798
    %v4431 = vpack.c.b16 %v3803, %v3799
    %v4432 = vpack.c.b16 %v3804, %v3800
    %v4433 = vpack.c.b16 %v3805, %v3801
    %v4434 = vpack.c.b16 %v3810, %v3806
    %v4435 = vpack.c.b16 %v3811, %v3807
    %v4436 = vpack.c.b16 %v3812, %v3808
    %v4437 = vpack.c.b16 %v3813, %v3809
    %v4438 = vpack.c.b16 %v3818, %v3814
    %v4439 = vpack.c.b16 %v3819, %v3815
    %v4440 = vpack.c.b16 %v3820, %v3816
    %v4441 = vpack.c.b16 %v3821, %v3817
    %v4442 = vpack.c.b16 %v3826, %v3822
    %v4443 = vpack.c.b16 %v3827, %v3823
    %v4444 = vpack.c.b16 %v3828, %v3824
    %v4445 = vpack.c.b16 %v3829, %v3825
    %v4446 = vpack.c.b16 %v3834, %v3830
    %v4447 = vpack.c.b16 %v3835, %v3831
    %v4448 = vpack.c.b16 %v3836, %v3832
    %v4449 = vpack.c.b16 %v3837, %v3833
    %v4450 = vpack.c.b16 %v3842, %v3838
    %v4451 = vpack.c.b16 %v3843, %v3839
    %v4452 = vpack.c.b16 %v3844, %v3840
    %v4453 = vpack.c.b16 %v3845, %v3841
    %v4454 = vpack.c.b16 %v3850, %v3846
    %v4455 = vpack.c.b16 %v3851, %v3847
    %v4456 = vpack.c.b16 %v3852, %v3848
    %v4457 = vpack.c.b16 %v3853, %v3849
    %v4458 = vpack.c.b16 %v3858, %v3854
    %v4459 = vpack.c.b16 %v3859, %v3855
    %v4460 = vpack.c.b16 %v3860, %v3856
    %v4461 = vpack.c.b16 %v3861, %v3857
    %v4462 = vpack.c.b16 %v3866, %v3862
    %v4463 = vpack.c.b16 %v3867, %v3863
    %v4464 = vpack.c.b16 %v3868, %v3864
    %v4465 = vpack.c.b16 %v3869, %v3865
    %v4466 = vpack.c.b16 %v3874, %v3870
    %v4467 = vpack.c.b16 %v3875, %v3871
    %v4468 = vpack.c.b16 %v3876, %v3872
    %v4469 = vpack.c.b16 %v3877, %v3873
    %v4470 = vpack.c.b16 %v3882, %v3878
    %v4471 = vpack.c.b16 %v3883, %v3879
    %v4472 = vpack.c.b16 %v3884, %v3880
    %v4473 = vpack.c.b16 %v3885, %v3881
    %v4474 = vpack.c.b16 %v3890, %v3886
    %v4475 = vpack.c.b16 %v3891, %v3887
    %v4476 = vpack.c.b16 %v3892, %v3888
    %v4477 = vpack.c.b16 %v3893, %v3889
    %v4478 = vpack.c.b16 %v3898, %v3894
    %v4479 = vpack.c.b16 %v3899, %v3895
    %v4480 = vpack.c.b16 %v3900, %v3896
    %v4481 = vpack.c.b16 %v3901, %v3897
    %v4482 = vpack.c.b16 %v3906, %v3902
    %v4483 = vpack.c.b16 %v3907, %v3903
    %v4484 = vpack.c.b16 %v3908, %v3904
    %v4485 = vpack.c.b16 %v3909, %v3905
    %v4486 = vpack.c.b16 %v3914, %v3910
    %v4487 = vpack.c.b16 %v3915, %v3911
    %v4488 = vpack.c.b16 %v3916, %v3912
    %v4489 = vpack.c.b16 %v3917, %v3913
    %v4490 = vpack.c.b16 %v3922, %v3918
    %v4491 = vpack.c.b16 %v3923, %v3919
    %v4492 = vpack.c.b16 %v3924, %v3920
    %v4493 = vpack.c.b16 %v3925, %v3921
    %v4494 = vpack.c.b16 %v3930, %v3926
    %v4495 = vpack.c.b16 %v3931, %v3927
    %v4496 = vpack.c.b16 %v3932, %v3928
    %v4497 = vpack.c.b16 %v3933, %v3929
    %v4498 = vpack.c.b16 %v3938, %v3934
    %v4499 = vpack.c.b16 %v3939, %v3935
    %v4500 = vpack.c.b16 %v3940, %v3936
    %v4501 = vpack.c.b16 %v3941, %v3937
    %v4502 = vpack.c.b16 %v3946, %v3942
    %v4503 = vpack.c.b16 %v3947, %v3943
    %v4504 = vpack.c.b16 %v3948, %v3944
    %v4505 = vpack.c.b16 %v3949, %v3945
    %v4506 = vpack.c.b16 %v3954, %v3950
    %v4507 = vpack.c.b16 %v3955, %v3951
    %v4508 = vpack.c.b16 %v3956, %v3952
    %v4509 = vpack.c.b16 %v3957, %v3953
    %v4510 = vpack.c.b16 %v3962, %v3958
    %v4511 = vpack.c.b16 %v3963, %v3959
    %v4512 = vpack.c.b16 %v3964, %v3960
    %v4513 = vpack.c.b16 %v3965, %v3961
    %v4514 = vpack.c.b16 %v3970, %v3966
    %v4515 = vpack.c.b16 %v3971, %v3967
    %v4516 = vpack.c.b16 %v3972, %v3968
    %v4517 = vpack.c.b16 %v3973, %v3969
    %v4518 = vpack.c.b16 %v3978, %v3974
    %v4519 = vpack.c.b16 %v3979, %v3975
    %v4520 = vpack.c.b16 %v3980, %v3976
    %v4521 = vpack.c.b16 %v3981, %v3977
    %v4522 = vpack.c.b16 %v3986, %v3982
    %v4523 = vpack.c.b16 %v3987, %v3983
    %v4524 = vpack.c.b16 %v3988, %v3984
    %v4525 = vpack.c.b16 %v3989, %v3985
    %v4526 = vpack.c.b16 %v3994, %v3990
    %v4527 = vpack.c.b16 %v3995, %v3991
    %v4528 = vpack.c.b16 %v3996, %v3992
    %v4529 = vpack.c.b16 %v3997, %v3993
    %v4530 = vpack.c.b16 %v4002, %v3998
    %v4531 = vpack.c.b16 %v4003, %v3999
    %v4532 = vpack.c.b16 %v4004, %v4000
    %v4533 = vpack.c.b16 %v4005, %v4001
    %v4534 = vpack.c.b16 %v4010, %v4006
    %v4535 = vpack.c.b16 %v4011, %v4007
    %v4536 = vpack.c.b16 %v4012, %v4008
    %v4537 = vpack.c.b16 %v4013, %v4009
    %v4538 = vpack.c.b16 %v4018, %v4014
    %v4539 = vpack.c.b16 %v4019, %v4015
    %v4540 = vpack.c.b16 %v4020, %v4016
    %v4541 = vpack.c.b16 %v4021, %v4017
    %v4542 = vpack.c.b16 %v4026, %v4022
    %v4543 = vpack.c.b16 %v4027, %v4023
    %v4544 = vpack.c.b16 %v4028, %v4024
    %v4545 = vpack.c.b16 %v4029, %v4025
    %v4546 = vpack.c.b16 %v4034, %v4030
    %v4547 = vpack.c.b16 %v4035, %v4031
    %v4548 = vpack.c.b16 %v4036, %v4032
    %v4549 = vpack.c.b16 %v4037, %v4033
    %5062 = vmatprep.subr.bf16.mxu0 %v4039
    %5063 = vmatpush1.bf16.msra.mxu0 %v4038
    %5064 = vmatprep.subr.bf16.mxu0 %v4043
    %5065 = vmatpush1.bf16.msra.mxu0 %v4042
    %5066 = vmatprep.subr.bf16.mxu0 %v4047
    %5067 = vmatpush1.bf16.msra.mxu0 %v4046
    %5068 = vmatprep.subr.bf16.mxu0 %v4051
    %5069 = vmatpush1.bf16.msra.mxu0 %v4050
    %5070 = vmatprep.subr.bf16.mxu0 %v4055
    %5071 = vmatpush1.bf16.msra.mxu0 %v4054
    %5072 = vmatprep.subr.bf16.mxu0 %v4059
    %5073 = vmatpush1.bf16.msra.mxu0 %v4058
    %5074 = vmatprep.subr.bf16.mxu0 %v4063
    %5075 = vmatpush1.bf16.msra.mxu0 %v4062
    %5076 = vmatprep.subr.bf16.mxu0 %v4067
    %5077 = vmatpush1.bf16.msra.mxu0 %v4066
    %5078 = vmatprep.subr.bf16.mxu0 %v4071
    %5079 = vmatpush1.bf16.msra.mxu0 %v4070
    %5080 = vmatprep.subr.bf16.mxu0 %v4075
    %5081 = vmatpush1.bf16.msra.mxu0 %v4074
    %5082 = vmatprep.subr.bf16.mxu0 %v4079
    %5083 = vmatpush1.bf16.msra.mxu0 %v4078
    %5084 = vmatprep.subr.bf16.mxu0 %v4083
    %5085 = vmatpush1.bf16.msra.mxu0 %v4082
    %5086 = vmatprep.subr.bf16.mxu0 %v4087
    %5087 = vmatpush1.bf16.msra.mxu0 %v4086
    %5088 = vmatprep.subr.bf16.mxu0 %v4091
    %5089 = vmatpush1.bf16.msra.mxu0 %v4090
    %5090 = vmatprep.subr.bf16.mxu0 %v4095
    %5091 = vmatpush1.bf16.msra.mxu0 %v4094
    %5092 = vmatprep.subr.bf16.mxu0 %v4099
    %5093 = vmatpush1.bf16.msra.mxu0 %v4098
    %5094 = vmatprep.mubr.bf16.mxu0 %v1975
    %5095 = vmatmul.mubr.bf16.gmra.mrb[0].mxu0 %v1974
    %v5096 = vpop.f32.mrb[0].mxu0
    %v5097 = vadd.f32 0.0, %v5096
    %v5098 = vpop.f32.mrb[0].mxu0
    %v5099 = vadd.f32 0.0, %v5098
    %v5100 = vpop.f32.mrb[0].mxu0
    %v5101 = vpop.f32.mrb[0].mxu0
    %5102 = vdwg.mxu0
    %5103 = vmatprep.subr.bf16.mxu0 %v4103
    %5104 = vmatpush1.bf16.msra.mxu0 %v4102
    %5105 = vmatprep.subr.bf16.mxu0 %v4107
    %5106 = vmatpush1.bf16.msra.mxu0 %v4106
    %5107 = vmatprep.subr.bf16.mxu0 %v4111
    %5108 = vmatpush1.bf16.msra.mxu0 %v4110
    %5109 = vmatprep.subr.bf16.mxu0 %v4115
    %5110 = vmatpush1.bf16.msra.mxu0 %v4114
    %5111 = vmatprep.subr.bf16.mxu0 %v4119
    %5112 = vmatpush1.bf16.msra.mxu0 %v4118
    %5113 = vmatprep.subr.bf16.mxu0 %v4123
    %5114 = vmatpush1.bf16.msra.mxu0 %v4122
    %5115 = vmatprep.subr.bf16.mxu0 %v4127
    %5116 = vmatpush1.bf16.msra.mxu0 %v4126
    %5117 = vmatprep.subr.bf16.mxu0 %v4131
    %5118 = vmatpush1.bf16.msra.mxu0 %v4130
    %5119 = vmatprep.subr.bf16.mxu0 %v4135
    %5120 = vmatpush1.bf16.msra.mxu0 %v4134
    %5121 = vmatprep.subr.bf16.mxu0 %v4139
    %5122 = vmatpush1.bf16.msra.mxu0 %v4138
    %5123 = vmatprep.subr.bf16.mxu0 %v4143
    %5124 = vmatpush1.bf16.msra.mxu0 %v4142
    %5125 = vmatprep.subr.bf16.mxu0 %v4147
    %5126 = vmatpush1.bf16.msra.mxu0 %v4146
    %5127 = vmatprep.subr.bf16.mxu0 %v4151
    %5128 = vmatpush1.bf16.msra.mxu0 %v4150
    %5129 = vmatprep.subr.bf16.mxu0 %v4155
    %5130 = vmatpush1.bf16.msra.mxu0 %v4154
    %5131 = vmatprep.subr.bf16.mxu0 %v4159
    %5132 = vmatpush1.bf16.msra.mxu0 %v4158
    %5133 = vmatprep.subr.bf16.mxu0 %v4163
    %5134 = vmatpush1.bf16.msra.mxu0 %v4162
    %5135 = vmatprep.mubr.bf16.mxu0 %v1977
    %5136 = vmatmul.mubr.bf16.gmra.mrb[0].mxu0 %v1976
    %v5137 = vpop.f32.mrb[0].mxu0
    %v5138 = vadd.f32 %v5097, %v5137
    %v5139 = vpop.f32.mrb[0].mxu0
    %v5140 = vadd.f32 %v5099, %v5139
    %v5141 = vpop.f32.mrb[0].mxu0
    %v5142 = vpop.f32.mrb[0].mxu0
    %5143 = vdwg.mxu0
    %5144 = vmatprep.subr.bf16.mxu0 %v4167
    %5145 = vmatpush1.bf16.msra.mxu0 %v4166
    %5146 = vmatprep.subr.bf16.mxu0 %v4171
    %5147 = vmatpush1.bf16.msra.mxu0 %v4170
    %5148 = vmatprep.subr.bf16.mxu0 %v4175
    %5149 = vmatpush1.bf16.msra.mxu0 %v4174
    %5150 = vmatprep.subr.bf16.mxu0 %v4179
    %5151 = vmatpush1.bf16.msra.mxu0 %v4178
    %5152 = vmatprep.subr.bf16.mxu0 %v4183
    %5153 = vmatpush1.bf16.msra.mxu0 %v4182
    %5154 = vmatprep.subr.bf16.mxu0 %v4187
    %5155 = vmatpush1.bf16.msra.mxu0 %v4186
    %5156 = vmatprep.subr.bf16.mxu0 %v4191
    %5157 = vmatpush1.bf16.msra.mxu0 %v4190
    %5158 = vmatprep.subr.bf16.mxu0 %v4195
    %5159 = vmatpush1.bf16.msra.mxu0 %v4194
    %5160 = vmatprep.subr.bf16.mxu0 %v4199
    %5161 = vmatpush1.bf16.msra.mxu0 %v4198
    %5162 = vmatprep.subr.bf16.mxu0 %v4203
    %5163 = vmatpush1.bf16.msra.mxu0 %v4202
    %5164 = vmatprep.subr.bf16.mxu0 %v4207
    %5165 = vmatpush1.bf16.msra.mxu0 %v4206
    %5166 = vmatprep.subr.bf16.mxu0 %v4211
    %5167 = vmatpush1.bf16.msra.mxu0 %v4210
    %5168 = vmatprep.subr.bf16.mxu0 %v4215
    %5169 = vmatpush1.bf16.msra.mxu0 %v4214
    %5170 = vmatprep.subr.bf16.mxu0 %v4219
    %5171 = vmatpush1.bf16.msra.mxu0 %v4218
    %5172 = vmatprep.subr.bf16.mxu0 %v4223
    %5173 = vmatpush1.bf16.msra.mxu0 %v4222
    %5174 = vmatprep.subr.bf16.mxu0 %v4227
    %5175 = vmatpush1.bf16.msra.mxu0 %v4226
    %5176 = vmatprep.mubr.bf16.mxu0 %v1979
    %5177 = vmatmul.mubr.bf16.gmra.mrb[0].mxu0 %v1978
    %v5178 = vpop.f32.mrb[0].mxu0
    %v5179 = vadd.f32 %v5138, %v5178
    %v5180 = vpop.f32.mrb[0].mxu0
    %v5181 = vadd.f32 %v5140, %v5180
    %v5182 = vpop.f32.mrb[0].mxu0
    %v5183 = vpop.f32.mrb[0].mxu0
    %5184 = vdwg.mxu0
    %5185 = vmatprep.subr.bf16.mxu0 %v4231
    %5186 = vmatpush1.bf16.msra.mxu0 %v4230
    %5187 = vmatprep.subr.bf16.mxu0 %v4235
    %5188 = vmatpush1.bf16.msra.mxu0 %v4234
    %5189 = vmatprep.subr.bf16.mxu0 %v4239
    %5190 = vmatpush1.bf16.msra.mxu0 %v4238
    %5191 = vmatprep.subr.bf16.mxu0 %v4243
    %5192 = vmatpush1.bf16.msra.mxu0 %v4242
    %5193 = vmatprep.subr.bf16.mxu0 %v4247
    %5194 = vmatpush1.bf16.msra.mxu0 %v4246
    %5195 = vmatprep.subr.bf16.mxu0 %v4251
    %5196 = vmatpush1.bf16.msra.mxu0 %v4250
    %5197 = vmatprep.subr.bf16.mxu0 %v4255
    %5198 = vmatpush1.bf16.msra.mxu0 %v4254
    %5199 = vmatprep.subr.bf16.mxu0 %v4259
    %5200 = vmatpush1.bf16.msra.mxu0 %v4258
    %5201 = vmatprep.subr.bf16.mxu0 %v4263
    %5202 = vmatpush1.bf16.msra.mxu0 %v4262
    %5203 = vmatprep.subr.bf16.mxu0 %v4267
    %5204 = vmatpush1.bf16.msra.mxu0 %v4266
    %5205 = vmatprep.subr.bf16.mxu0 %v4271
    %5206 = vmatpush1.bf16.msra.mxu0 %v4270
    %5207 = vmatprep.subr.bf16.mxu0 %v4275
    %5208 = vmatpush1.bf16.msra.mxu0 %v4274
    %5209 = vmatprep.subr.bf16.mxu0 %v4279
    %5210 = vmatpush1.bf16.msra.mxu0 %v4278
    %5211 = vmatprep.subr.bf16.mxu0 %v4283
    %5212 = vmatpush1.bf16.msra.mxu0 %v4282
    %5213 = vmatprep.subr.bf16.mxu0 %v4287
    %5214 = vmatpush1.bf16.msra.mxu0 %v4286
    %5215 = vmatprep.subr.bf16.mxu0 %v4291
    %5216 = vmatpush1.bf16.msra.mxu0 %v4290
    %5217 = vmatprep.mubr.bf16.mxu0 %v1981
    %5218 = vmatmul.mubr.bf16.gmra.mrb[0].mxu0 %v1980
    %v5219 = vpop.f32.mrb[0].mxu0
    %v5220 = vadd.f32 %v5179, %v5219
    %v5221 = vpop.f32.mrb[0].mxu0
    %v5222 = vadd.f32 %v5181, %v5221
    %v5223 = vpop.f32.mrb[0].mxu0
    %v5224 = vpop.f32.mrb[0].mxu0
    %5225 = vdwg.mxu0
    %5226 = vmatprep.subr.bf16.mxu0 %v4295
    %5227 = vmatpush1.bf16.msra.mxu0 %v4294
    %5228 = vmatprep.subr.bf16.mxu0 %v4299
    %5229 = vmatpush1.bf16.msra.mxu0 %v4298
    %5230 = vmatprep.subr.bf16.mxu0 %v4303
    %5231 = vmatpush1.bf16.msra.mxu0 %v4302
    %5232 = vmatprep.subr.bf16.mxu0 %v4307
    %5233 = vmatpush1.bf16.msra.mxu0 %v4306
    %5234 = vmatprep.subr.bf16.mxu0 %v4311
    %5235 = vmatpush1.bf16.msra.mxu0 %v4310
    %5236 = vmatprep.subr.bf16.mxu0 %v4315
    %5237 = vmatpush1.bf16.msra.mxu0 %v4314
    %5238 = vmatprep.subr.bf16.mxu0 %v4319
    %5239 = vmatpush1.bf16.msra.mxu0 %v4318
    %5240 = vmatprep.subr.bf16.mxu0 %v4323
    %5241 = vmatpush1.bf16.msra.mxu0 %v4322
    %5242 = vmatprep.subr.bf16.mxu0 %v4327
    %5243 = vmatpush1.bf16.msra.mxu0 %v4326
    %5244 = vmatprep.subr.bf16.mxu0 %v4331
    %5245 = vmatpush1.bf16.msra.mxu0 %v4330
    %5246 = vmatprep.subr.bf16.mxu0 %v4335
    %5247 = vmatpush1.bf16.msra.mxu0 %v4334
    %5248 = vmatprep.subr.bf16.mxu0 %v4339
    %5249 = vmatpush1.bf16.msra.mxu0 %v4338
    %5250 = vmatprep.subr.bf16.mxu0 %v4343
    %5251 = vmatpush1.bf16.msra.mxu0 %v4342
    %5252 = vmatprep.subr.bf16.mxu0 %v4347
    %5253 = vmatpush1.bf16.msra.mxu0 %v4346
    %5254 = vmatprep.subr.bf16.mxu0 %v4351
    %5255 = vmatpush1.bf16.msra.mxu0 %v4350
    %5256 = vmatprep.subr.bf16.mxu0 %v4355
    %5257 = vmatpush1.bf16.msra.mxu0 %v4354
    %5258 = vmatprep.mubr.bf16.mxu0 %v1983
    %5259 = vmatmul.mubr.bf16.gmra.mrb[0].mxu0 %v1982
    %v5260 = vpop.f32.mrb[0].mxu0
    %v5261 = vadd.f32 %v5220, %v5260
    %v5262 = vpop.f32.mrb[0].mxu0
    %v5263 = vadd.f32 %v5222, %v5262
    %v5264 = vpop.f32.mrb[0].mxu0
    %v5265 = vpop.f32.mrb[0].mxu0
    %5266 = vdwg.mxu0
    %5267 = vmatprep.subr.bf16.mxu0 %v4359
    %5268 = vmatpush1.bf16.msra.mxu0 %v4358
    %5269 = vmatprep.subr.bf16.mxu0 %v4363
    %5270 = vmatpush1.bf16.msra.mxu0 %v4362
    %5271 = vmatprep.subr.bf16.mxu0 %v4367
    %5272 = vmatpush1.bf16.msra.mxu0 %v4366
    %5273 = vmatprep.subr.bf16.mxu0 %v4371
    %5274 = vmatpush1.bf16.msra.mxu0 %v4370
    %5275 = vmatprep.subr.bf16.mxu0 %v4375
    %5276 = vmatpush1.bf16.msra.mxu0 %v4374
    %5277 = vmatprep.subr.bf16.mxu0 %v4379
    %5278 = vmatpush1.bf16.msra.mxu0 %v4378
    %5279 = vmatprep.subr.bf16.mxu0 %v4383
    %5280 = vmatpush1.bf16.msra.mxu0 %v4382
    %5281 = vmatprep.subr.bf16.mxu0 %v4387
    %5282 = vmatpush1.bf16.msra.mxu0 %v4386
    %5283 = vmatprep.subr.bf16.mxu0 %v4391
    %5284 = vmatpush1.bf16.msra.mxu0 %v4390
    %5285 = vmatprep.subr.bf16.mxu0 %v4395
    %5286 = vmatpush1.bf16.msra.mxu0 %v4394
    %5287 = vmatprep.subr.bf16.mxu0 %v4399
    %5288 = vmatpush1.bf16.msra.mxu0 %v4398
    %5289 = vmatprep.subr.bf16.mxu0 %v4403
    %5290 = vmatpush1.bf16.msra.mxu0 %v4402
    %5291 = vmatprep.subr.bf16.mxu0 %v4407
    %5292 = vmatpush1.bf16.msra.mxu0 %v4406
    %5293 = vmatprep.subr.bf16.mxu0 %v4411
    %5294 = vmatpush1.bf16.msra.mxu0 %v4410
    %5295 = vmatprep.subr.bf16.mxu0 %v4415
    %5296 = vmatpush1.bf16.msra.mxu0 %v4414
    %5297 = vmatprep.subr.bf16.mxu0 %v4419
    %5298 = vmatpush1.bf16.msra.mxu0 %v4418
    %5299 = vmatprep.mubr.bf16.mxu0 %v1985
    %5300 = vmatmul.mubr.bf16.gmra.mrb[0].mxu0 %v1984
    %v5301 = vpop.f32.mrb[0].mxu0
    %v5302 = vadd.f32 %v5261, %v5301
    %v5303 = vpop.f32.mrb[0].mxu0
    %v5304 = vadd.f32 %v5263, %v5303
    %v5305 = vpop.f32.mrb[0].mxu0
    %v5306 = vpop.f32.mrb[0].mxu0
    %5307 = vdwg.mxu0
    %5308 = vmatprep.subr.bf16.mxu0 %v4423
    %5309 = vmatpush1.bf16.msra.mxu0 %v4422
    %5310 = vmatprep.subr.bf16.mxu0 %v4427
    %5311 = vmatpush1.bf16.msra.mxu0 %v4426
    %5312 = vmatprep.subr.bf16.mxu0 %v4431
    %5313 = vmatpush1.bf16.msra.mxu0 %v4430
    %5314 = vmatprep.subr.bf16.mxu0 %v4435
    %5315 = vmatpush1.bf16.msra.mxu0 %v4434
    %5316 = vmatprep.subr.bf16.mxu0 %v4439
    %5317 = vmatpush1.bf16.msra.mxu0 %v4438
    %5318 = vmatprep.subr.bf16.mxu0 %v4443
    %5319 = vmatpush1.bf16.msra.mxu0 %v4442
    %5320 = vmatprep.subr.bf16.mxu0 %v4447
    %5321 = vmatpush1.bf16.msra.mxu0 %v4446
    %5322 = vmatprep.subr.bf16.mxu0 %v4451
    %5323 = vmatpush1.bf16.msra.mxu0 %v4450
    %5324 = vmatprep.subr.bf16.mxu0 %v4455
    %5325 = vmatpush1.bf16.msra.mxu0 %v4454
    %5326 = vmatprep.subr.bf16.mxu0 %v4459
    %5327 = vmatpush1.bf16.msra.mxu0 %v4458
    %5328 = vmatprep.subr.bf16.mxu0 %v4463
    %5329 = vmatpush1.bf16.msra.mxu0 %v4462
    %5330 = vmatprep.subr.bf16.mxu0 %v4467
    %5331 = vmatpush1.bf16.msra.mxu0 %v4466
    %5332 = vmatprep.subr.bf16.mxu0 %v4471
    %5333 = vmatpush1.bf16.msra.mxu0 %v4470
    %5334 = vmatprep.subr.bf16.mxu0 %v4475
    %5335 = vmatpush1.bf16.msra.mxu0 %v4474
    %5336 = vmatprep.subr.bf16.mxu0 %v4479
    %5337 = vmatpush1.bf16.msra.mxu0 %v4478
    %5338 = vmatprep.subr.bf16.mxu0 %v4483
    %5339 = vmatpush1.bf16.msra.mxu0 %v4482
    %5340 = vmatprep.mubr.bf16.mxu0 %v1987
    %5341 = vmatmul.mubr.bf16.gmra.mrb[0].mxu0 %v1986
    %v5342 = vpop.f32.mrb[0].mxu0
    %v5343 = vadd.f32 %v5302, %v5342
    %v5344 = vpop.f32.mrb[0].mxu0
    %v5345 = vadd.f32 %v5304, %v5344
    %v5346 = vpop.f32.mrb[0].mxu0
    %v5347 = vpop.f32.mrb[0].mxu0
    %5348 = vdwg.mxu0
    %5349 = vmatprep.subr.bf16.mxu0 %v4487
    %5350 = vmatpush1.bf16.msra.mxu0 %v4486
    %5351 = vmatprep.subr.bf16.mxu0 %v4491
    %5352 = vmatpush1.bf16.msra.mxu0 %v4490
    %5353 = vmatprep.subr.bf16.mxu0 %v4495
    %5354 = vmatpush1.bf16.msra.mxu0 %v4494
    %5355 = vmatprep.subr.bf16.mxu0 %v4499
    %5356 = vmatpush1.bf16.msra.mxu0 %v4498
    %5357 = vmatprep.subr.bf16.mxu0 %v4503
    %5358 = vmatpush1.bf16.msra.mxu0 %v4502
    %5359 = vmatprep.subr.bf16.mxu0 %v4507
    %5360 = vmatpush1.bf16.msra.mxu0 %v4506
    %5361 = vmatprep.subr.bf16.mxu0 %v4511
    %5362 = vmatpush1.bf16.msra.mxu0 %v4510
    %5363 = vmatprep.subr.bf16.mxu0 %v4515
    %5364 = vmatpush1.bf16.msra.mxu0 %v4514
    %5365 = vmatprep.subr.bf16.mxu0 %v4519
    %5366 = vmatpush1.bf16.msra.mxu0 %v4518
    %5367 = vmatprep.subr.bf16.mxu0 %v4523
    %5368 = vmatpush1.bf16.msra.mxu0 %v4522
    %5369 = vmatprep.subr.bf16.mxu0 %v4527
    %5370 = vmatpush1.bf16.msra.mxu0 %v4526
    %5371 = vmatprep.subr.bf16.mxu0 %v4531
    %5372 = vmatpush1.bf16.msra.mxu0 %v4530
    %5373 = vmatprep.subr.bf16.mxu0 %v4535
    %5374 = vmatpush1.bf16.msra.mxu0 %v4534
    %5375 = vmatprep.subr.bf16.mxu0 %v4539
    %5376 = vmatpush1.bf16.msra.mxu0 %v4538
    %5377 = vmatprep.subr.bf16.mxu0 %v4543
    %5378 = vmatpush1.bf16.msra.mxu0 %v4542
    %5379 = vmatprep.subr.bf16.mxu0 %v4547
    %5380 = vmatpush1.bf16.msra.mxu0 %v4546
    %5381 = vmatprep.mubr.bf16.mxu0 %v1989
    %5382 = vmatmul.mubr.bf16.gmra.mrb[0].mxu0 %v1988
    %v5383 = vpop.f32.mrb[0].mxu0
    %v5384 = vadd.f32 %v5343, %v5383
    %v5385 = vpop.f32.mrb[0].mxu0
    %v5386 = vadd.f32 %v5345, %v5385
    %v5387 = vpop.f32.mrb[0].mxu0
    %v5388 = vpop.f32.mrb[0].mxu0
    %5389 = vdwg.mxu0
    %5390 = vmatprep.subr.bf16.mxu0 %v4041
    %5391 = vmatpush1.bf16.msra.mxu0 %v4040
    %5392 = vmatprep.subr.bf16.mxu0 %v4045
    %5393 = vmatpush1.bf16.msra.mxu0 %v4044
    %5394 = vmatprep.subr.bf16.mxu0 %v4049
    %5395 = vmatpush1.bf16.msra.mxu0 %v4048
    %5396 = vmatprep.subr.bf16.mxu0 %v4053
    %5397 = vmatpush1.bf16.msra.mxu0 %v4052
    %5398 = vmatprep.subr.bf16.mxu0 %v4057
    %5399 = vmatpush1.bf16.msra.mxu0 %v4056
    %5400 = vmatprep.subr.bf16.mxu0 %v4061
    %5401 = vmatpush1.bf16.msra.mxu0 %v4060
    %5402 = vmatprep.subr.bf16.mxu0 %v4065
    %5403 = vmatpush1.bf16.msra.mxu0 %v4064
    %5404 = vmatprep.subr.bf16.mxu0 %v4069
    %5405 = vmatpush1.bf16.msra.mxu0 %v4068
    %5406 = vmatprep.subr.bf16.mxu0 %v4073
    %5407 = vmatpush1.bf16.msra.mxu0 %v4072
    %5408 = vmatprep.subr.bf16.mxu0 %v4077
    %5409 = vmatpush1.bf16.msra.mxu0 %v4076
    %5410 = vmatprep.subr.bf16.mxu0 %v4081
    %5411 = vmatpush1.bf16.msra.mxu0 %v4080
    %5412 = vmatprep.subr.bf16.mxu0 %v4085
    %5413 = vmatpush1.bf16.msra.mxu0 %v4084
    %5414 = vmatprep.subr.bf16.mxu0 %v4089
    %5415 = vmatpush1.bf16.msra.mxu0 %v4088
    %5416 = vmatprep.subr.bf16.mxu0 %v4093
    %5417 = vmatpush1.bf16.msra.mxu0 %v4092
    %5418 = vmatprep.subr.bf16.mxu0 %v4097
    %5419 = vmatpush1.bf16.msra.mxu0 %v4096
    %5420 = vmatprep.subr.bf16.mxu0 %v4101
    %5421 = vmatpush1.bf16.msra.mxu0 %v4100
    %5422 = vmatprep.mubr.bf16.mxu0 %v1975
    %5423 = vmatmul.mubr.bf16.gmra.mrb[0].mxu0 %v1974
    %v5424 = vpop.f32.mrb[0].mxu0
    %v5425 = vadd.f32 0.0, %v5424
    %v5426 = vpop.f32.mrb[0].mxu0
    %v5427 = vadd.f32 0.0, %v5426
    %v5428 = vpop.f32.mrb[0].mxu0
    %v5429 = vpop.f32.mrb[0].mxu0
    %5430 = vdwg.mxu0
    %5431 = vmatprep.subr.bf16.mxu0 %v4105
    %5432 = vmatpush1.bf16.msra.mxu0 %v4104
    %5433 = vmatprep.subr.bf16.mxu0 %v4109
    %5434 = vmatpush1.bf16.msra.mxu0 %v4108
    %5435 = vmatprep.subr.bf16.mxu0 %v4113
    %5436 = vmatpush1.bf16.msra.mxu0 %v4112
    %5437 = vmatprep.subr.bf16.mxu0 %v4117
    %5438 = vmatpush1.bf16.msra.mxu0 %v4116
    %5439 = vmatprep.subr.bf16.mxu0 %v4121
    %5440 = vmatpush1.bf16.msra.mxu0 %v4120
    %5441 = vmatprep.subr.bf16.mxu0 %v4125
    %5442 = vmatpush1.bf16.msra.mxu0 %v4124
    %5443 = vmatprep.subr.bf16.mxu0 %v4129
    %5444 = vmatpush1.bf16.msra.mxu0 %v4128
    %5445 = vmatprep.subr.bf16.mxu0 %v4133
    %5446 = vmatpush1.bf16.msra.mxu0 %v4132
    %5447 = vmatprep.subr.bf16.mxu0 %v4137
    %5448 = vmatpush1.bf16.msra.mxu0 %v4136
    %5449 = vmatprep.subr.bf16.mxu0 %v4141
    %5450 = vmatpush1.bf16.msra.mxu0 %v4140
    %5451 = vmatprep.subr.bf16.mxu0 %v4145
    %5452 = vmatpush1.bf16.msra.mxu0 %v4144
    %5453 = vmatprep.subr.bf16.mxu0 %v4149
    %5454 = vmatpush1.bf16.msra.mxu0 %v4148
    %5455 = vmatprep.subr.bf16.mxu0 %v4153
    %5456 = vmatpush1.bf16.msra.mxu0 %v4152
    %5457 = vmatprep.subr.bf16.mxu0 %v4157
    %5458 = vmatpush1.bf16.msra.mxu0 %v4156
    %5459 = vmatprep.subr.bf16.mxu0 %v4161
    %5460 = vmatpush1.bf16.msra.mxu0 %v4160
    %5461 = vmatprep.subr.bf16.mxu0 %v4165
    %5462 = vmatpush1.bf16.msra.mxu0 %v4164
    %5463 = vmatprep.mubr.bf16.mxu0 %v1977
    %5464 = vmatmul.mubr.bf16.gmra.mrb[0].mxu0 %v1976
    %v5465 = vpop.f32.mrb[0].mxu0
    %v5466 = vadd.f32 %v5425, %v5465
    %v5467 = vpop.f32.mrb[0].mxu0
    %v5468 = vadd.f32 %v5427, %v5467
    %v5469 = vpop.f32.mrb[0].mxu0
    %v5470 = vpop.f32.mrb[0].mxu0
    %5471 = vdwg.mxu0
    %5472 = vmatprep.subr.bf16.mxu0 %v4169
    %5473 = vmatpush1.bf16.msra.mxu0 %v4168
    %5474 = vmatprep.subr.bf16.mxu0 %v4173
    %5475 = vmatpush1.bf16.msra.mxu0 %v4172
    %5476 = vmatprep.subr.bf16.mxu0 %v4177
    %5477 = vmatpush1.bf16.msra.mxu0 %v4176
    %5478 = vmatprep.subr.bf16.mxu0 %v4181
    %5479 = vmatpush1.bf16.msra.mxu0 %v4180
    %5480 = vmatprep.subr.bf16.mxu0 %v4185
    %5481 = vmatpush1.bf16.msra.mxu0 %v4184
    %5482 = vmatprep.subr.bf16.mxu0 %v4189
    %5483 = vmatpush1.bf16.msra.mxu0 %v4188
    %5484 = vmatprep.subr.bf16.mxu0 %v4193
    %5485 = vmatpush1.bf16.msra.mxu0 %v4192
    %5486 = vmatprep.subr.bf16.mxu0 %v4197
    %5487 = vmatpush1.bf16.msra.mxu0 %v4196
    %5488 = vmatprep.subr.bf16.mxu0 %v4201
    %5489 = vmatpush1.bf16.msra.mxu0 %v4200
    %5490 = vmatprep.subr.bf16.mxu0 %v4205
    %5491 = vmatpush1.bf16.msra.mxu0 %v4204
    %5492 = vmatprep.subr.bf16.mxu0 %v4209
    %5493 = vmatpush1.bf16.msra.mxu0 %v4208
    %5494 = vmatprep.subr.bf16.mxu0 %v4213
    %5495 = vmatpush1.bf16.msra.mxu0 %v4212
    %5496 = vmatprep.subr.bf16.mxu0 %v4217
    %5497 = vmatpush1.bf16.msra.mxu0 %v4216
    %5498 = vmatprep.subr.bf16.mxu0 %v4221
    %5499 = vmatpush1.bf16.msra.mxu0 %v4220
    %5500 = vmatprep.subr.bf16.mxu0 %v4225
    %5501 = vmatpush1.bf16.msra.mxu0 %v4224
    %5502 = vmatprep.subr.bf16.mxu0 %v4229
    %5503 = vmatpush1.bf16.msra.mxu0 %v4228
    %5504 = vmatprep.mubr.bf16.mxu0 %v1979
    %5505 = vmatmul.mubr.bf16.gmra.mrb[0].mxu0 %v1978
    %v5506 = vpop.f32.mrb[0].mxu0
    %v5507 = vadd.f32 %v5466, %v5506
    %v5508 = vpop.f32.mrb[0].mxu0
    %v5509 = vadd.f32 %v5468, %v5508
    %v5510 = vpop.f32.mrb[0].mxu0
    %v5511 = vpop.f32.mrb[0].mxu0
    %5512 = vdwg.mxu0
    %5513 = vmatprep.subr.bf16.mxu0 %v4233
    %5514 = vmatpush1.bf16.msra.mxu0 %v4232
    %5515 = vmatprep.subr.bf16.mxu0 %v4237
    %5516 = vmatpush1.bf16.msra.mxu0 %v4236
    %5517 = vmatprep.subr.bf16.mxu0 %v4241
    %5518 = vmatpush1.bf16.msra.mxu0 %v4240
    %5519 = vmatprep.subr.bf16.mxu0 %v4245
    %5520 = vmatpush1.bf16.msra.mxu0 %v4244
    %5521 = vmatprep.subr.bf16.mxu0 %v4249
    %5522 = vmatpush1.bf16.msra.mxu0 %v4248
    %5523 = vmatprep.subr.bf16.mxu0 %v4253
    %5524 = vmatpush1.bf16.msra.mxu0 %v4252
    %5525 = vmatprep.subr.bf16.mxu0 %v4257
    %5526 = vmatpush1.bf16.msra.mxu0 %v4256
    %5527 = vmatprep.subr.bf16.mxu0 %v4261
    %5528 = vmatpush1.bf16.msra.mxu0 %v4260
    %5529 = vmatprep.subr.bf16.mxu0 %v4265
    %5530 = vmatpush1.bf16.msra.mxu0 %v4264
    %5531 = vmatprep.subr.bf16.mxu0 %v4269
    %5532 = vmatpush1.bf16.msra.mxu0 %v4268
    %5533 = vmatprep.subr.bf16.mxu0 %v4273
    %5534 = vmatpush1.bf16.msra.mxu0 %v4272
    %5535 = vmatprep.subr.bf16.mxu0 %v4277
    %5536 = vmatpush1.bf16.msra.mxu0 %v4276
    %5537 = vmatprep.subr.bf16.mxu0 %v4281
    %5538 = vmatpush1.bf16.msra.mxu0 %v4280
    %5539 = vmatprep.subr.bf16.mxu0 %v4285
    %5540 = vmatpush1.bf16.msra.mxu0 %v4284
    %5541 = vmatprep.subr.bf16.mxu0 %v4289
    %5542 = vmatpush1.bf16.msra.mxu0 %v4288
    %5543 = vmatprep.subr.bf16.mxu0 %v4293
    %5544 = vmatpush1.bf16.msra.mxu0 %v4292
    %5545 = vmatprep.mubr.bf16.mxu0 %v1981
    %5546 = vmatmul.mubr.bf16.gmra.mrb[0].mxu0 %v1980
    %v5547 = vpop.f32.mrb[0].mxu0
    %v5548 = vadd.f32 %v5507, %v5547
    %v5549 = vpop.f32.mrb[0].mxu0
    %v5550 = vadd.f32 %v5509, %v5549
    %v5551 = vpop.f32.mrb[0].mxu0
    %v5552 = vpop.f32.mrb[0].mxu0
    %5553 = vdwg.mxu0
    %5554 = vmatprep.subr.bf16.mxu0 %v4297
    %5555 = vmatpush1.bf16.msra.mxu0 %v4296
    %5556 = vmatprep.subr.bf16.mxu0 %v4301
    %5557 = vmatpush1.bf16.msra.mxu0 %v4300
    %5558 = vmatprep.subr.bf16.mxu0 %v4305
    %5559 = vmatpush1.bf16.msra.mxu0 %v4304
    %5560 = vmatprep.subr.bf16.mxu0 %v4309
    %5561 = vmatpush1.bf16.msra.mxu0 %v4308
    %5562 = vmatprep.subr.bf16.mxu0 %v4313
    %5563 = vmatpush1.bf16.msra.mxu0 %v4312
    %5564 = vmatprep.subr.bf16.mxu0 %v4317
    %5565 = vmatpush1.bf16.msra.mxu0 %v4316
    %5566 = vmatprep.subr.bf16.mxu0 %v4321
    %5567 = vmatpush1.bf16.msra.mxu0 %v4320
    %5568 = vmatprep.subr.bf16.mxu0 %v4325
    %5569 = vmatpush1.bf16.msra.mxu0 %v4324
    %5570 = vmatprep.subr.bf16.mxu0 %v4329
    %5571 = vmatpush1.bf16.msra.mxu0 %v4328
    %5572 = vmatprep.subr.bf16.mxu0 %v4333
    %5573 = vmatpush1.bf16.msra.mxu0 %v4332
    %5574 = vmatprep.subr.bf16.mxu0 %v4337
    %5575 = vmatpush1.bf16.msra.mxu0 %v4336
    %5576 = vmatprep.subr.bf16.mxu0 %v4341
    %5577 = vmatpush1.bf16.msra.mxu0 %v4340
    %5578 = vmatprep.subr.bf16.mxu0 %v4345
    %5579 = vmatpush1.bf16.msra.mxu0 %v4344
    %5580 = vmatprep.subr.bf16.mxu0 %v4349
    %5581 = vmatpush1.bf16.msra.mxu0 %v4348
    %5582 = vmatprep.subr.bf16.mxu0 %v4353
    %5583 = vmatpush1.bf16.msra.mxu0 %v4352
    %5584 = vmatprep.subr.bf16.mxu0 %v4357
    %5585 = vmatpush1.bf16.msra.mxu0 %v4356
    %5586 = vmatprep.mubr.bf16.mxu0 %v1983
    %5587 = vmatmul.mubr.bf16.gmra.mrb[0].mxu0 %v1982
    %v5588 = vpop.f32.mrb[0].mxu0
    %v5589 = vadd.f32 %v5548, %v5588
    %v5590 = vpop.f32.mrb[0].mxu0
    %v5591 = vadd.f32 %v5550, %v5590
    %v5592 = vpop.f32.mrb[0].mxu0
    %v5593 = vpop.f32.mrb[0].mxu0
    %5594 = vdwg.mxu0
    %5595 = vmatprep.subr.bf16.mxu0 %v4361
    %5596 = vmatpush1.bf16.msra.mxu0 %v4360
    %5597 = vmatprep.subr.bf16.mxu0 %v4365
    %5598 = vmatpush1.bf16.msra.mxu0 %v4364
    %5599 = vmatprep.subr.bf16.mxu0 %v4369
    %5600 = vmatpush1.bf16.msra.mxu0 %v4368
    %5601 = vmatprep.subr.bf16.mxu0 %v4373
    %5602 = vmatpush1.bf16.msra.mxu0 %v4372
    %5603 = vmatprep.subr.bf16.mxu0 %v4377
    %5604 = vmatpush1.bf16.msra.mxu0 %v4376
    %5605 = vmatprep.subr.bf16.mxu0 %v4381
    %5606 = vmatpush1.bf16.msra.mxu0 %v4380
    %5607 = vmatprep.subr.bf16.mxu0 %v4385
    %5608 = vmatpush1.bf16.msra.mxu0 %v4384
    %5609 = vmatprep.subr.bf16.mxu0 %v4389
    %5610 = vmatpush1.bf16.msra.mxu0 %v4388
    %5611 = vmatprep.subr.bf16.mxu0 %v4393
    %5612 = vmatpush1.bf16.msra.mxu0 %v4392
    %5613 = vmatprep.subr.bf16.mxu0 %v4397
    %5614 = vmatpush1.bf16.msra.mxu0 %v4396
    %5615 = vmatprep.subr.bf16.mxu0 %v4401
    %5616 = vmatpush1.bf16.msra.mxu0 %v4400
    %5617 = vmatprep.subr.bf16.mxu0 %v4405
    %5618 = vmatpush1.bf16.msra.mxu0 %v4404
    %5619 = vmatprep.subr.bf16.mxu0 %v4409
    %5620 = vmatpush1.bf16.msra.mxu0 %v4408
    %5621 = vmatprep.subr.bf16.mxu0 %v4413
    %5622 = vmatpush1.bf16.msra.mxu0 %v4412
    %5623 = vmatprep.subr.bf16.mxu0 %v4417
    %5624 = vmatpush1.bf16.msra.mxu0 %v4416
    %5625 = vmatprep.subr.bf16.mxu0 %v4421
    %5626 = vmatpush1.bf16.msra.mxu0 %v4420
    %5627 = vmatprep.mubr.bf16.mxu0 %v1985
    %5628 = vmatmul.mubr.bf16.gmra.mrb[0].mxu0 %v1984
    %v5629 = vpop.f32.mrb[0].mxu0
    %v5630 = vadd.f32 %v5589, %v5629
    %v5631 = vpop.f32.mrb[0].mxu0
    %v5632 = vadd.f32 %v5591, %v5631
    %v5633 = vpop.f32.mrb[0].mxu0
    %v5634 = vpop.f32.mrb[0].mxu0
    %5635 = vdwg.mxu0
    %5636 = vmatprep.subr.bf16.mxu0 %v4425
    %5637 = vmatpush1.bf16.msra.mxu0 %v4424
    %5638 = vmatprep.subr.bf16.mxu0 %v4429
    %5639 = vmatpush1.bf16.msra.mxu0 %v4428
    %5640 = vmatprep.subr.bf16.mxu0 %v4433
    %5641 = vmatpush1.bf16.msra.mxu0 %v4432
    %5642 = vmatprep.subr.bf16.mxu0 %v4437
    %5643 = vmatpush1.bf16.msra.mxu0 %v4436
    %5644 = vmatprep.subr.bf16.mxu0 %v4441
    %5645 = vmatpush1.bf16.msra.mxu0 %v4440
    %5646 = vmatprep.subr.bf16.mxu0 %v4445
    %5647 = vmatpush1.bf16.msra.mxu0 %v4444
    %5648 = vmatprep.subr.bf16.mxu0 %v4449
    %5649 = vmatpush1.bf16.msra.mxu0 %v4448
    %5650 = vmatprep.subr.bf16.mxu0 %v4453
    %5651 = vmatpush1.bf16.msra.mxu0 %v4452
    %5652 = vmatprep.subr.bf16.mxu0 %v4457
    %5653 = vmatpush1.bf16.msra.mxu0 %v4456
    %5654 = vmatprep.subr.bf16.mxu0 %v4461
    %5655 = vmatpush1.bf16.msra.mxu0 %v4460
    %5656 = vmatprep.subr.bf16.mxu0 %v4465
    %5657 = vmatpush1.bf16.msra.mxu0 %v4464
    %5658 = vmatprep.subr.bf16.mxu0 %v4469
    %5659 = vmatpush1.bf16.msra.mxu0 %v4468
    %5660 = vmatprep.subr.bf16.mxu0 %v4473
    %5661 = vmatpush1.bf16.msra.mxu0 %v4472
    %5662 = vmatprep.subr.bf16.mxu0 %v4477
    %5663 = vmatpush1.bf16.msra.mxu0 %v4476
    %5664 = vmatprep.subr.bf16.mxu0 %v4481
    %5665 = vmatpush1.bf16.msra.mxu0 %v4480
    %5666 = vmatprep.subr.bf16.mxu0 %v4485
    %5667 = vmatpush1.bf16.msra.mxu0 %v4484
    %5668 = vmatprep.mubr.bf16.mxu0 %v1987
    %5669 = vmatmul.mubr.bf16.gmra.mrb[0].mxu0 %v1986
    %v5670 = vpop.f32.mrb[0].mxu0
    %v5671 = vadd.f32 %v5630, %v5670
    %v5672 = vpop.f32.mrb[0].mxu0
    %v5673 = vadd.f32 %v5632, %v5672
    %v5674 = vpop.f32.mrb[0].mxu0
    %v5675 = vpop.f32.mrb[0].mxu0
    %5676 = vdwg.mxu0
    %5677 = vmatprep.subr.bf16.mxu0 %v4489
    %5678 = vmatpush1.bf16.msra.mxu0 %v4488
    %5679 = vmatprep.subr.bf16.mxu0 %v4493
    %5680 = vmatpush1.bf16.msra.mxu0 %v4492
    %5681 = vmatprep.subr.bf16.mxu0 %v4497
    %5682 = vmatpush1.bf16.msra.mxu0 %v4496
    %5683 = vmatprep.subr.bf16.mxu0 %v4501
    %5684 = vmatpush1.bf16.msra.mxu0 %v4500
    %5685 = vmatprep.subr.bf16.mxu0 %v4505
    %5686 = vmatpush1.bf16.msra.mxu0 %v4504
    %5687 = vmatprep.subr.bf16.mxu0 %v4509
    %5688 = vmatpush1.bf16.msra.mxu0 %v4508
    %5689 = vmatprep.subr.bf16.mxu0 %v4513
    %5690 = vmatpush1.bf16.msra.mxu0 %v4512
    %5691 = vmatprep.subr.bf16.mxu0 %v4517
    %5692 = vmatpush1.bf16.msra.mxu0 %v4516
    %5693 = vmatprep.subr.bf16.mxu0 %v4521
    %5694 = vmatpush1.bf16.msra.mxu0 %v4520
    %5695 = vmatprep.subr.bf16.mxu0 %v4525
    %5696 = vmatpush1.bf16.msra.mxu0 %v4524
    %5697 = vmatprep.subr.bf16.mxu0 %v4529
    %5698 = vmatpush1.bf16.msra.mxu0 %v4528
    %5699 = vmatprep.subr.bf16.mxu0 %v4533
    %5700 = vmatpush1.bf16.msra.mxu0 %v4532
    %5701 = vmatprep.subr.bf16.mxu0 %v4537
    %5702 = vmatpush1.bf16.msra.mxu0 %v4536
    %5703 = vmatprep.subr.bf16.mxu0 %v4541
    %5704 = vmatpush1.bf16.msra.mxu0 %v4540
    %5705 = vmatprep.subr.bf16.mxu0 %v4545
    %5706 = vmatpush1.bf16.msra.mxu0 %v4544
    %5707 = vmatprep.subr.bf16.mxu0 %v4549
    %5708 = vmatpush1.bf16.msra.mxu0 %v4548
    %5709 = vmatprep.mubr.bf16.mxu0 %v1989
    %5710 = vmatmul.mubr.bf16.gmra.mrb[0].mxu0 %v1988
    %v5711 = vpop.f32.mrb[0].mxu0
    %v5712 = vadd.f32 %v5671, %v5711
    %v5713 = vpop.f32.mrb[0].mxu0
    %v5714 = vadd.f32 %v5673, %v5713
    %v5715 = vpop.f32.mrb[0].mxu0
    %v5716 = vpop.f32.mrb[0].mxu0
    %5717 = vdwg.mxu0
    %vm5718 = vcmp.ge.f32.partialorder %v5384, 0.5
    %vm5719 = vcmp.ge.f32.partialorder %v5386, 0.5
    %vm5720 = vcmp.ge.f32.partialorder %v5712, 0.5
    %vm5721 = vcmp.ge.f32.partialorder %v5714, 0.5
    %v5722 = vsel %vm5718, 0.0, %v5384
    %v5723 = vsel %vm5719, 0.0, %v5386
    %v5724 = vsel %vm5720, 0.0, %v5712
    %v5725 = vsel %vm5721, 0.0, %v5714
    %v5726 = vsel %vm5718, 1, 0
    %v5727 = vsel %vm5719, 1, 0
    %v5728 = vsel %vm5720, 1, 0
    %v5729 = vsel %vm5721, 1, 0
    %v5730 = vcvt.s32.f32 %v5726
    %v5731 = vcvt.s32.f32 %v5727
    %v5732 = vcvt.s32.f32 %v5728
    %v5733 = vcvt.s32.f32 %v5729
    %v5734 = vpack.c.bf16 %v5730, %v5730
    %v5735 = vpack.c.bf16 %v5731, %v5731
    %v5736 = vpack.c.bf16 %v5732, %v5732
    %v5737 = vpack.c.bf16 %v5733, %v5733
    %v5738 = vld [vmem:[%s3] sm:$0xf]
    %v5739 = vld [vmem:[%s3 + $0x4] sm:$0xf]
    %v5740 = vld [vmem:[%s3 + $0x8] sm:$0xf]
    %v5741 = vld [vmem:[%s3 + $0xc] sm:$0xf]
    %v5742 = vld [vmem:[%s3 + $0x10] sm:$0xf]
    %v5743 = vld [vmem:[%s3 + $0x14] sm:$0xf]
    %v5744 = vld [vmem:[%s3 + $0x18] sm:$0xf]
    %v5745 = vld [vmem:[%s3 + $0x1c] sm:$0xf]
    %v5746 = vld [vmem:[%s3 + $0x20] sm:$0xf]
    %v5747 = vld [vmem:[%s3 + $0x24] sm:$0xf]
    %v5748 = vld [vmem:[%s3 + $0x28] sm:$0xf]
    %v5749 = vld [vmem:[%s3 + $0x2c] sm:$0xf]
    %v5750 = vld [vmem:[%s3 + $0x30] sm:$0xf]
    %v5751 = vld [vmem:[%s3 + $0x34] sm:$0xf]
    %v5752 = vld [vmem:[%s3 + $0x38] sm:$0xf]
    %v5753 = vld [vmem:[%s3 + $0x3c] sm:$0xf]
    %v5754 = vld [vmem:[%s3 + $0x40] sm:$0xf]
    %v5755 = vld [vmem:[%s3 + $0x44] sm:$0xf]
    %v5756 = vld [vmem:[%s3 + $0x48] sm:$0xf]
    %v5757 = vld [vmem:[%s3 + $0x4c] sm:$0xf]
    %v5758 = vld [vmem:[%s3 + $0x50] sm:$0xf]
    %v5759 = vld [vmem:[%s3 + $0x54] sm:$0xf]
    %v5760 = vld [vmem:[%s3 + $0x58] sm:$0xf]
    %v5761 = vld [vmem:[%s3 + $0x5c] sm:$0xf]
    %v5762 = vld [vmem:[%s3 + $0x60] sm:$0xf]
    %v5763 = vld [vmem:[%s3 + $0x64] sm:$0xf]
    %v5764 = vld [vmem:[%s3 + $0x68] sm:$0xf]
    %v5765 = vld [vmem:[%s3 + $0x6c] sm:$0xf]
    %v5766 = vld [vmem:[%s3 + $0x70] sm:$0xf]
    %v5767 = vld [vmem:[%s3 + $0x74] sm:$0xf]
    %v5768 = vld [vmem:[%s3 + $0x78] sm:$0xf]
    %v5769 = vld [vmem:[%s3 + $0x7c] sm:$0xf]
    %v5770 = vld [vmem:[%s3 + $0x80] sm:$0xf]
    %v5771 = vld [vmem:[%s3 + $0x84] sm:$0xf]
    %v5772 = vld [vmem:[%s3 + $0x88] sm:$0xf]
    %v5773 = vld [vmem:[%s3 + $0x8c] sm:$0xf]
    %v5774 = vld [vmem:[%s3 + $0x90] sm:$0xf]
    %v5775 = vld [vmem:[%s3 + $0x94] sm:$0xf]
    %v5776 = vld [vmem:[%s3 + $0x98] sm:$0xf]
    %v5777 = vld [vmem:[%s3 + $0x9c] sm:$0xf]
    %v5778 = vld [vmem:[%s3 + $0xa0] sm:$0xf]
    %v5779 = vld [vmem:[%s3 + $0xa4] sm:$0xf]
    %v5780 = vld [vmem:[%s3 + $0xa8] sm:$0xf]
    %v5781 = vld [vmem:[%s3 + $0xac] sm:$0xf]
    %v5782 = vld [vmem:[%s3 + $0xb0] sm:$0xf]
    %v5783 = vld [vmem:[%s3 + $0xb4] sm:$0xf]
    %v5784 = vld [vmem:[%s3 + $0xb8] sm:$0xf]
    %v5785 = vld [vmem:[%s3 + $0xbc] sm:$0xf]
    %v5786 = vld [vmem:[%s3 + $0xc0] sm:$0xf]
    %v5787 = vld [vmem:[%s3 + $0xc4] sm:$0xf]
    %v5788 = vld [vmem:[%s3 + $0xc8] sm:$0xf]
    %v5789 = vld [vmem:[%s3 + $0xcc] sm:$0xf]
    %v5790 = vld [vmem:[%s3 + $0xd0] sm:$0xf]
    %v5791 = vld [vmem:[%s3 + $0xd4] sm:$0xf]
    %v5792 = vld [vmem:[%s3 + $0xd8] sm:$0xf]
    %v5793 = vld [vmem:[%s3 + $0xdc] sm:$0xf]
    %v5794 = vld [vmem:[%s3 + $0xe0] sm:$0xf]
    %v5795 = vld [vmem:[%s3 + $0xe4] sm:$0xf]
    %v5796 = vld [vmem:[%s3 + $0xe8] sm:$0xf]
    %v5797 = vld [vmem:[%s3 + $0xec] sm:$0xf]
    %v5798 = vld [vmem:[%s3 + $0xf0] sm:$0xf]
    %v5799 = vld [vmem:[%s3 + $0xf4] sm:$0xf]
    %v5800 = vld [vmem:[%s3 + $0xf8] sm:$0xf]
    %v5801 = vld [vmem:[%s3 + $0xfc] sm:$0xf]
    %v5866 = vunpack.c.l.b16 %v5738
    %v5867 = vunpack.c.l.b16 %v5739
    %v5868 = vunpack.c.l.b16 %v5740
    %v5869 = vunpack.c.l.b16 %v5741
    %v5870 = vunpack.c.l.b16 %v5742
    %v5871 = vunpack.c.l.b16 %v5743
    %v5872 = vunpack.c.l.b16 %v5744
    %v5873 = vunpack.c.l.b16 %v5745
    %v5874 = vunpack.c.l.b16 %v5746
    %v5875 = vunpack.c.l.b16 %v5747
    %v5876 = vunpack.c.l.b16 %v5748
    %v5877 = vunpack.c.l.b16 %v5749
    %v5878 = vunpack.c.l.b16 %v5750
    %v5879 = vunpack.c.l.b16 %v5751
    %v5880 = vunpack.c.l.b16 %v5752
    %v5881 = vunpack.c.l.b16 %v5753
    %v5882 = vunpack.c.l.b16 %v5754
    %v5883 = vunpack.c.l.b16 %v5755
    %v5884 = vunpack.c.l.b16 %v5756
    %v5885 = vunpack.c.l.b16 %v5757
    %v5886 = vunpack.c.l.b16 %v5758
    %v5887 = vunpack.c.l.b16 %v5759
    %v5888 = vunpack.c.l.b16 %v5760
    %v5889 = vunpack.c.l.b16 %v5761
    %v5890 = vunpack.c.l.b16 %v5762
    %v5891 = vunpack.c.l.b16 %v5763
    %v5892 = vunpack.c.l.b16 %v5764
    %v5893 = vunpack.c.l.b16 %v5765
    %v5894 = vunpack.c.l.b16 %v5766
    %v5895 = vunpack.c.l.b16 %v5767
    %v5896 = vunpack.c.l.b16 %v5768
    %v5897 = vunpack.c.l.b16 %v5769
    %v5898 = vunpack.c.l.b16 %v5770
    %v5899 = vunpack.c.l.b16 %v5771
    %v5900 = vunpack.c.l.b16 %v5772
    %v5901 = vunpack.c.l.b16 %v5773
    %v5902 = vunpack.c.l.b16 %v5774
    %v5903 = vunpack.c.l.b16 %v5775
    %v5904 = vunpack.c.l.b16 %v5776
    %v5905 = vunpack.c.l.b16 %v5777
    %v5906 = vunpack.c.l.b16 %v5778
    %v5907 = vunpack.c.l.b16 %v5779
    %v5908 = vunpack.c.l.b16 %v5780
    %v5909 = vunpack.c.l.b16 %v5781
    %v5910 = vunpack.c.l.b16 %v5782
    %v5911 = vunpack.c.l.b16 %v5783
    %v5912 = vunpack.c.l.b16 %v5784
    %v5913 = vunpack.c.l.b16 %v5785
    %v5914 = vunpack.c.l.b16 %v5786
    %v5915 = vunpack.c.l.b16 %v5787
    %v5916 = vunpack.c.l.b16 %v5788
    %v5917 = vunpack.c.l.b16 %v5789
    %v5918 = vunpack.c.l.b16 %v5790
    %v5919 = vunpack.c.l.b16 %v5791
    %v5920 = vunpack.c.l.b16 %v5792
    %v5921 = vunpack.c.l.b16 %v5793
    %v5922 = vunpack.c.l.b16 %v5794
    %v5923 = vunpack.c.l.b16 %v5795
    %v5924 = vunpack.c.l.b16 %v5796
    %v5925 = vunpack.c.l.b16 %v5797
    %v5926 = vunpack.c.l.b16 %v5798
    %v5927 = vunpack.c.l.b16 %v5799
    %v5928 = vunpack.c.l.b16 %v5800
    %v5929 = vunpack.c.l.b16 %v5801
    %v5930 = vpack.c.b16 %v5867, %v5866
    %v5931 = vpack.c.b16 %v5869, %v5868
    %v5932 = vpack.c.b16 %v5871, %v5870
    %v5933 = vpack.c.b16 %v5873, %v5872
    %v5934 = vpack.c.b16 %v5875, %v5874
    %v5935 = vpack.c.b16 %v5877, %v5876
    %v5936 = vpack.c.b16 %v5879, %v5878
    %v5937 = vpack.c.b16 %v5881, %v5880
    %v5938 = vpack.c.b16 %v5883, %v5882
    %v5939 = vpack.c.b16 %v5885, %v5884
    %v5940 = vpack.c.b16 %v5887, %v5886
    %v5941 = vpack.c.b16 %v5889, %v5888
    %v5942 = vpack.c.b16 %v5891, %v5890
    %v5943 = vpack.c.b16 %v5893, %v5892
    %v5944 = vpack.c.b16 %v5895, %v5894
    %v5945 = vpack.c.b16 %v5897, %v5896
    %v5946 = vpack.c.b16 %v5899, %v5898
    %v5947 = vpack.c.b16 %v5901, %v5900
    %v5948 = vpack.c.b16 %v5903, %v5902
    %v5949 = vpack.c.b16 %v5905, %v5904
    %v5950 = vpack.c.b16 %v5907, %v5906
    %v5951 = vpack.c.b16 %v5909, %v5908
    %v5952 = vpack.c.b16 %v5911, %v5910
    %v5953 = vpack.c.b16 %v5913, %v5912
    %v5954 = vpack.c.b16 %v5915, %v5914
    %v5955 = vpack.c.b16 %v5917, %v5916
    %v5956 = vpack.c.b16 %v5919, %v5918
    %v5957 = vpack.c.b16 %v5921, %v5920
    %v5958 = vpack.c.b16 %v5923, %v5922
    %v5959 = vpack.c.b16 %v5925, %v5924
    %v5960 = vpack.c.b16 %v5927, %v5926
    %v5961 = vpack.c.b16 %v5929, %v5928
    %5994 = vmatprep.subr.bf16.mxu0 0
    %5995 = vmatpush1.bf16.msra.mxu0 %v5930
    %5996 = vmatprep.subr.bf16.mxu0 0
    %5997 = vmatpush1.bf16.msra.mxu0 %v5931
    %5998 = vmatprep.subr.bf16.mxu0 0
    %5999 = vmatpush1.bf16.msra.mxu0 %v5932
    %6000 = vmatprep.subr.bf16.mxu0 0
    %6001 = vmatpush1.bf16.msra.mxu0 %v5933
    %6002 = vmatprep.subr.bf16.mxu0 0
    %6003 = vmatpush1.bf16.msra.mxu0 %v5934
    %6004 = vmatprep.subr.bf16.mxu0 0
    %6005 = vmatpush1.bf16.msra.mxu0 %v5935
    %6006 = vmatprep.subr.bf16.mxu0 0
    %6007 = vmatpush1.bf16.msra.mxu0 %v5936
    %6008 = vmatprep.subr.bf16.mxu0 0
    %6009 = vmatpush1.bf16.msra.mxu0 %v5937
    %6010 = vmatprep.subr.bf16.mxu0 0
    %6011 = vmatpush1.bf16.msra.mxu0 %v5938
    %6012 = vmatprep.subr.bf16.mxu0 0
    %6013 = vmatpush1.bf16.msra.mxu0 %v5939
    %6014 = vmatprep.subr.bf16.mxu0 0
    %6015 = vmatpush1.bf16.msra.mxu0 %v5940
    %6016 = vmatprep.subr.bf16.mxu0 0
    %6017 = vmatpush1.bf16.msra.mxu0 %v5941
    %6018 = vmatprep.subr.bf16.mxu0 0
    %6019 = vmatpush1.bf16.msra.mxu0 %v5942
    %6020 = vmatprep.subr.bf16.mxu0 0
    %6021 = vmatpush1.bf16.msra.mxu0 %v5943
    %6022 = vmatprep.subr.bf16.mxu0 0
    %6023 = vmatpush1.bf16.msra.mxu0 %v5944
    %6024 = vmatprep.subr.bf16.mxu0 0
    %6025 = vmatpush1.bf16.msra.mxu0 %v5945
    %6026 = vmatprep.mubr.bf16.mxu0 %v5735
    %6027 = vmatmul.mubr.bf16.gmra.mrb[0].mxu0 %v5734
    %v6028 = vpop.f32.mrb[0].mxu0
    %v6029 = vadd.f32 0.0, %v6028
    %v6030 = vpop.f32.mrb[0].mxu0
    %v6031 = vpop.f32.mrb[0].mxu0
    %v6032 = vpop.f32.mrb[0].mxu0
    %6033 = vdwg.mxu0
    %6034 = vmatprep.subr.bf16.mxu0 0
    %6035 = vmatpush1.bf16.msra.mxu0 %v5946
    %6036 = vmatprep.subr.bf16.mxu0 0
    %6037 = vmatpush1.bf16.msra.mxu0 %v5947
    %6038 = vmatprep.subr.bf16.mxu0 0
    %6039 = vmatpush1.bf16.msra.mxu0 %v5948
    %6040 = vmatprep.subr.bf16.mxu0 0
    %6041 = vmatpush1.bf16.msra.mxu0 %v5949
    %6042 = vmatprep.subr.bf16.mxu0 0
    %6043 = vmatpush1.bf16.msra.mxu0 %v5950
    %6044 = vmatprep.subr.bf16.mxu0 0
    %6045 = vmatpush1.bf16.msra.mxu0 %v5951
    %6046 = vmatprep.subr.bf16.mxu0 0
    %6047 = vmatpush1.bf16.msra.mxu0 %v5952
    %6048 = vmatprep.subr.bf16.mxu0 0
    %6049 = vmatpush1.bf16.msra.mxu0 %v5953
    %6050 = vmatprep.subr.bf16.mxu0 0
    %6051 = vmatpush1.bf16.msra.mxu0 %v5954
    %6052 = vmatprep.subr.bf16.mxu0 0
    %6053 = vmatpush1.bf16.msra.mxu0 %v5955
    %6054 = vmatprep.subr.bf16.mxu0 0
    %6055 = vmatpush1.bf16.msra.mxu0 %v5956
    %6056 = vmatprep.subr.bf16.mxu0 0
    %6057 = vmatpush1.bf16.msra.mxu0 %v5957
    %6058 = vmatprep.subr.bf16.mxu0 0
    %6059 = vmatpush1.bf16.msra.mxu0 %v5958
    %6060 = vmatprep.subr.bf16.mxu0 0
    %6061 = vmatpush1.bf16.msra.mxu0 %v5959
    %6062 = vmatprep.subr.bf16.mxu0 0
    %6063 = vmatpush1.bf16.msra.mxu0 %v5960
    %6064 = vmatprep.subr.bf16.mxu0 0
    %6065 = vmatpush1.bf16.msra.mxu0 %v5961
    %6066 = vmatprep.mubr.bf16.mxu0 %v5737
    %6067 = vmatmul.mubr.bf16.gmra.mrb[0].mxu0 %v5736
    %v6068 = vpop.f32.mrb[0].mxu0
    %v6069 = vadd.f32 %v6029, %v6068
    %v6070 = vpop.f32.mrb[0].mxu0
    %v6071 = vpop.f32.mrb[0].mxu0
    %v6072 = vpop.f32.mrb[0].mxu0
    %6073 = vdwg.mxu0
    %vm6074 = vcmp.ge.f32.partialorder %v6069, 0.5
    %v6075 = vsel %vm6074, 0.0, %v6069
    %v6076 = vsel %vm6074, 1, 0
    %v6077 = vcvt.s32.f32 %v6076
    %v6078 = vadd.f32 %v6077, 0.0
    %v6095 = vrot.slane %v1601, 2
    %v6096 = vrot.slane %v1603, 2
    %v6097 = vrot.slane %v1642, 2
    %v6098 = vrot.slane %v1644, 2
    %v6099 = vrot.slane %v1683, 2
    %v6100 = vrot.slane %v1685, 2
    %v6101 = vrot.slane %v1724, 2
    %v6102 = vrot.slane %v1726, 2
    %v6103 = vrot.slane %v1765, 2
    %v6104 = vrot.slane %v1767, 2
    %v6105 = vrot.slane %v1806, 2
    %v6106 = vrot.slane %v1808, 2
    %v6107 = vrot.slane %v1847, 2
    %v6108 = vrot.slane %v1849, 2
    %v6109 = vrot.slane %v1888, 2
    %v6110 = vrot.slane %v1890, 2
    %v6127 = vadd.f32 %v1926, %v6095
    %v6128 = vadd.f32 %v1927, %v6096
    %v6129 = vadd.f32 %v1928, %v6097
    %v6130 = vadd.f32 %v1929, %v6098
    %v6131 = vadd.f32 %v1930, %v6099
    %v6132 = vadd.f32 %v1931, %v6100
    %v6133 = vadd.f32 %v1932, %v6101
    %v6134 = vadd.f32 %v1933, %v6102
    %v6135 = vadd.f32 %v1934, %v6103
    %v6136 = vadd.f32 %v1935, %v6104
    %v6137 = vadd.f32 %v1936, %v6105
    %v6138 = vadd.f32 %v1937, %v6106
    %v6139 = vadd.f32 %v1938, %v6107
    %v6140 = vadd.f32 %v1939, %v6108
    %v6141 = vadd.f32 %v1940, %v6109
    %v6142 = vadd.f32 %v1941, %v6110
    %vm6143 = vcmp.ge.f32.partialorder %v6127, 0.5
    %vm6144 = vcmp.ge.f32.partialorder %v6128, 0.5
    %vm6145 = vcmp.ge.f32.partialorder %v6129, 0.5
    %vm6146 = vcmp.ge.f32.partialorder %v6130, 0.5
    %vm6147 = vcmp.ge.f32.partialorder %v6131, 0.5
    %vm6148 = vcmp.ge.f32.partialorder %v6132, 0.5
    %vm6149 = vcmp.ge.f32.partialorder %v6133, 0.5
    %vm6150 = vcmp.ge.f32.partialorder %v6134, 0.5
    %vm6151 = vcmp.ge.f32.partialorder %v6135, 0.5
    %vm6152 = vcmp.ge.f32.partialorder %v6136, 0.5
    %vm6153 = vcmp.ge.f32.partialorder %v6137, 0.5
    %vm6154 = vcmp.ge.f32.partialorder %v6138, 0.5
    %vm6155 = vcmp.ge.f32.partialorder %v6139, 0.5
    %vm6156 = vcmp.ge.f32.partialorder %v6140, 0.5
    %vm6157 = vcmp.ge.f32.partialorder %v6141, 0.5
    %vm6158 = vcmp.ge.f32.partialorder %v6142, 0.5
    %v6159 = vsel %vm6143, 0.0, %v6127
    %v6160 = vsel %vm6144, 0.0, %v6128
    %v6161 = vsel %vm6145, 0.0, %v6129
    %v6162 = vsel %vm6146, 0.0, %v6130
    %v6163 = vsel %vm6147, 0.0, %v6131
    %v6164 = vsel %vm6148, 0.0, %v6132
    %v6165 = vsel %vm6149, 0.0, %v6133
    %v6166 = vsel %vm6150, 0.0, %v6134
    %v6167 = vsel %vm6151, 0.0, %v6135
    %v6168 = vsel %vm6152, 0.0, %v6136
    %v6169 = vsel %vm6153, 0.0, %v6137
    %v6170 = vsel %vm6154, 0.0, %v6138
    %v6171 = vsel %vm6155, 0.0, %v6139
    %v6172 = vsel %vm6156, 0.0, %v6140
    %v6173 = vsel %vm6157, 0.0, %v6141
    %v6174 = vsel %vm6158, 0.0, %v6142
    %v6175 = vsel %vm6143, 1, 0
    %v6176 = vsel %vm6144, 1, 0
    %v6177 = vsel %vm6145, 1, 0
    %v6178 = vsel %vm6146, 1, 0
    %v6179 = vsel %vm6147, 1, 0
    %v6180 = vsel %vm6148, 1, 0
    %v6181 = vsel %vm6149, 1, 0
    %v6182 = vsel %vm6150, 1, 0
    %v6183 = vsel %vm6151, 1, 0
    %v6184 = vsel %vm6152, 1, 0
    %v6185 = vsel %vm6153, 1, 0
    %v6186 = vsel %vm6154, 1, 0
    %v6187 = vsel %vm6155, 1, 0
    %v6188 = vsel %vm6156, 1, 0
    %v6189 = vsel %vm6157, 1, 0
    %v6190 = vsel %vm6158, 1, 0
    %v6191 = vcvt.s32.f32 %v6175
    %v6192 = vcvt.s32.f32 %v6176
    %v6193 = vcvt.s32.f32 %v6177
    %v6194 = vcvt.s32.f32 %v6178
    %v6195 = vcvt.s32.f32 %v6179
    %v6196 = vcvt.s32.f32 %v6180
    %v6197 = vcvt.s32.f32 %v6181
    %v6198 = vcvt.s32.f32 %v6182
    %v6199 = vcvt.s32.f32 %v6183
    %v6200 = vcvt.s32.f32 %v6184
    %v6201 = vcvt.s32.f32 %v6185
    %v6202 = vcvt.s32.f32 %v6186
    %v6203 = vcvt.s32.f32 %v6187
    %v6204 = vcvt.s32.f32 %v6188
    %v6205 = vcvt.s32.f32 %v6189
    %v6206 = vcvt.s32.f32 %v6190
    %v6207 = vpack.c.bf16 %v6191, %v6191
    %v6208 = vpack.c.bf16 %v6192, %v6192
    %v6209 = vpack.c.bf16 %v6193, %v6193
    %v6210 = vpack.c.bf16 %v6194, %v6194
    %v6211 = vpack.c.bf16 %v6195, %v6195
    %v6212 = vpack.c.bf16 %v6196, %v6196
    %v6213 = vpack.c.bf16 %v6197, %v6197
    %v6214 = vpack.c.bf16 %v6198, %v6198
    %v6215 = vpack.c.bf16 %v6199, %v6199
    %v6216 = vpack.c.bf16 %v6200, %v6200
    %v6217 = vpack.c.bf16 %v6201, %v6201
    %v6218 = vpack.c.bf16 %v6202, %v6202
    %v6219 = vpack.c.bf16 %v6203, %v6203
    %v6220 = vpack.c.bf16 %v6204, %v6204
    %v6221 = vpack.c.bf16 %v6205, %v6205
    %v6222 = vpack.c.bf16 %v6206, %v6206
    %6223 = vmatprep.subr.bf16.mxu0 %v4039
    %6224 = vmatpush1.bf16.msra.mxu0 %v4038
    %6225 = vmatprep.subr.bf16.mxu0 %v4043
    %6226 = vmatpush1.bf16.msra.mxu0 %v4042
    %6227 = vmatprep.subr.bf16.mxu0 %v4047
    %6228 = vmatpush1.bf16.msra.mxu0 %v4046
    %6229 = vmatprep.subr.bf16.mxu0 %v4051
    %6230 = vmatpush1.bf16.msra.mxu0 %v4050
    %6231 = vmatprep.subr.bf16.mxu0 %v4055
    %6232 = vmatpush1.bf16.msra.mxu0 %v4054
    %6233 = vmatprep.subr.bf16.mxu0 %v4059
    %6234 = vmatpush1.bf16.msra.mxu0 %v4058
    %6235 = vmatprep.subr.bf16.mxu0 %v4063
    %6236 = vmatpush1.bf16.msra.mxu0 %v4062
    %6237 = vmatprep.subr.bf16.mxu0 %v4067
    %6238 = vmatpush1.bf16.msra.mxu0 %v4066
    %6239 = vmatprep.subr.bf16.mxu0 %v4071
    %6240 = vmatpush1.bf16.msra.mxu0 %v4070
    %6241 = vmatprep.subr.bf16.mxu0 %v4075
    %6242 = vmatpush1.bf16.msra.mxu0 %v4074
    %6243 = vmatprep.subr.bf16.mxu0 %v4079
    %6244 = vmatpush1.bf16.msra.mxu0 %v4078
    %6245 = vmatprep.subr.bf16.mxu0 %v4083
    %6246 = vmatpush1.bf16.msra.mxu0 %v4082
    %6247 = vmatprep.subr.bf16.mxu0 %v4087
    %6248 = vmatpush1.bf16.msra.mxu0 %v4086
    %6249 = vmatprep.subr.bf16.mxu0 %v4091
    %6250 = vmatpush1.bf16.msra.mxu0 %v4090
    %6251 = vmatprep.subr.bf16.mxu0 %v4095
    %6252 = vmatpush1.bf16.msra.mxu0 %v4094
    %6253 = vmatprep.subr.bf16.mxu0 %v4099
    %6254 = vmatpush1.bf16.msra.mxu0 %v4098
    %6255 = vmatprep.mubr.bf16.mxu0 %v6208
    %6256 = vmatmul.mubr.bf16.gmra.mrb[0].mxu0 %v6207
    %v6257 = vpop.f32.mrb[0].mxu0
    %v6258 = vadd.f32 0.0, %v6257
    %v6259 = vpop.f32.mrb[0].mxu0
    %v6260 = vadd.f32 0.0, %v6259
    %v6261 = vpop.f32.mrb[0].mxu0
    %v6262 = vpop.f32.mrb[0].mxu0
    %6263 = vdwg.mxu0
    %6264 = vmatprep.subr.bf16.mxu0 %v4103
    %6265 = vmatpush1.bf16.msra.mxu0 %v4102
    %6266 = vmatprep.subr.bf16.mxu0 %v4107
    %6267 = vmatpush1.bf16.msra.mxu0 %v4106
    %6268 = vmatprep.subr.bf16.mxu0 %v4111
    %6269 = vmatpush1.bf16.msra.mxu0 %v4110
    %6270 = vmatprep.subr.bf16.mxu0 %v4115
    %6271 = vmatpush1.bf16.msra.mxu0 %v4114
    %6272 = vmatprep.subr.bf16.mxu0 %v4119
    %6273 = vmatpush1.bf16.msra.mxu0 %v4118
    %6274 = vmatprep.subr.bf16.mxu0 %v4123
    %6275 = vmatpush1.bf16.msra.mxu0 %v4122
    %6276 = vmatprep.subr.bf16.mxu0 %v4127
    %6277 = vmatpush1.bf16.msra.mxu0 %v4126
    %6278 = vmatprep.subr.bf16.mxu0 %v4131
    %6279 = vmatpush1.bf16.msra.mxu0 %v4130
    %6280 = vmatprep.subr.bf16.mxu0 %v4135
    %6281 = vmatpush1.bf16.msra.mxu0 %v4134
    %6282 = vmatprep.subr.bf16.mxu0 %v4139
    %6283 = vmatpush1.bf16.msra.mxu0 %v4138
    %6284 = vmatprep.subr.bf16.mxu0 %v4143
    %6285 = vmatpush1.bf16.msra.mxu0 %v4142
    %6286 = vmatprep.subr.bf16.mxu0 %v4147
    %6287 = vmatpush1.bf16.msra.mxu0 %v4146
    %6288 = vmatprep.subr.bf16.mxu0 %v4151
    %6289 = vmatpush1.bf16.msra.mxu0 %v4150
    %6290 = vmatprep.subr.bf16.mxu0 %v4155
    %6291 = vmatpush1.bf16.msra.mxu0 %v4154
    %6292 = vmatprep.subr.bf16.mxu0 %v4159
    %6293 = vmatpush1.bf16.msra.mxu0 %v4158
    %6294 = vmatprep.subr.bf16.mxu0 %v4163
    %6295 = vmatpush1.bf16.msra.mxu0 %v4162
    %6296 = vmatprep.mubr.bf16.mxu0 %v6210
    %6297 = vmatmul.mubr.bf16.gmra.mrb[0].mxu0 %v6209
    %v6298 = vpop.f32.mrb[0].mxu0
    %v6299 = vadd.f32 %v6258, %v6298
    %v6300 = vpop.f32.mrb[0].mxu0
    %v6301 = vadd.f32 %v6260, %v6300
    %v6302 = vpop.f32.mrb[0].mxu0
    %v6303 = vpop.f32.mrb[0].mxu0
    %6304 = vdwg.mxu0
    %6305 = vmatprep.subr.bf16.mxu0 %v4167
    %6306 = vmatpush1.bf16.msra.mxu0 %v4166
    %6307 = vmatprep.subr.bf16.mxu0 %v4171
    %6308 = vmatpush1.bf16.msra.mxu0 %v4170
    %6309 = vmatprep.subr.bf16.mxu0 %v4175
    %6310 = vmatpush1.bf16.msra.mxu0 %v4174
    %6311 = vmatprep.subr.bf16.mxu0 %v4179
    %6312 = vmatpush1.bf16.msra.mxu0 %v4178
    %6313 = vmatprep.subr.bf16.mxu0 %v4183
    %6314 = vmatpush1.bf16.msra.mxu0 %v4182
    %6315 = vmatprep.subr.bf16.mxu0 %v4187
    %6316 = vmatpush1.bf16.msra.mxu0 %v4186
    %6317 = vmatprep.subr.bf16.mxu0 %v4191
    %6318 = vmatpush1.bf16.msra.mxu0 %v4190
    %6319 = vmatprep.subr.bf16.mxu0 %v4195
    %6320 = vmatpush1.bf16.msra.mxu0 %v4194
    %6321 = vmatprep.subr.bf16.mxu0 %v4199
    %6322 = vmatpush1.bf16.msra.mxu0 %v4198
    %6323 = vmatprep.subr.bf16.mxu0 %v4203
    %6324 = vmatpush1.bf16.msra.mxu0 %v4202
    %6325 = vmatprep.subr.bf16.mxu0 %v4207
    %6326 = vmatpush1.bf16.msra.mxu0 %v4206
    %6327 = vmatprep.subr.bf16.mxu0 %v4211
    %6328 = vmatpush1.bf16.msra.mxu0 %v4210
    %6329 = vmatprep.subr.bf16.mxu0 %v4215
    %6330 = vmatpush1.bf16.msra.mxu0 %v4214
    %6331 = vmatprep.subr.bf16.mxu0 %v4219
    %6332 = vmatpush1.bf16.msra.mxu0 %v4218
    %6333 = vmatprep.subr.bf16.mxu0 %v4223
    %6334 = vmatpush1.bf16.msra.mxu0 %v4222
    %6335 = vmatprep.subr.bf16.mxu0 %v4227
    %6336 = vmatpush1.bf16.msra.mxu0 %v4226
    %6337 = vmatprep.mubr.bf16.mxu0 %v6212
    %6338 = vmatmul.mubr.bf16.gmra.mrb[0].mxu0 %v6211
    %v6339 = vpop.f32.mrb[0].mxu0
    %v6340 = vadd.f32 %v6299, %v6339
    %v6341 = vpop.f32.mrb[0].mxu0
    %v6342 = vadd.f32 %v6301, %v6341
    %v6343 = vpop.f32.mrb[0].mxu0
    %v6344 = vpop.f32.mrb[0].mxu0
    %6345 = vdwg.mxu0
    %6346 = vmatprep.subr.bf16.mxu0 %v4231
    %6347 = vmatpush1.bf16.msra.mxu0 %v4230
    %6348 = vmatprep.subr.bf16.mxu0 %v4235
    %6349 = vmatpush1.bf16.msra.mxu0 %v4234
    %6350 = vmatprep.subr.bf16.mxu0 %v4239
    %6351 = vmatpush1.bf16.msra.mxu0 %v4238
    %6352 = vmatprep.subr.bf16.mxu0 %v4243
    %6353 = vmatpush1.bf16.msra.mxu0 %v4242
    %6354 = vmatprep.subr.bf16.mxu0 %v4247
    %6355 = vmatpush1.bf16.msra.mxu0 %v4246
    %6356 = vmatprep.subr.bf16.mxu0 %v4251
    %6357 = vmatpush1.bf16.msra.mxu0 %v4250
    %6358 = vmatprep.subr.bf16.mxu0 %v4255
    %6359 = vmatpush1.bf16.msra.mxu0 %v4254
    %6360 = vmatprep.subr.bf16.mxu0 %v4259
    %6361 = vmatpush1.bf16.msra.mxu0 %v4258
    %6362 = vmatprep.subr.bf16.mxu0 %v4263
    %6363 = vmatpush1.bf16.msra.mxu0 %v4262
    %6364 = vmatprep.subr.bf16.mxu0 %v4267
    %6365 = vmatpush1.bf16.msra.mxu0 %v4266
    %6366 = vmatprep.subr.bf16.mxu0 %v4271
    %6367 = vmatpush1.bf16.msra.mxu0 %v4270
    %6368 = vmatprep.subr.bf16.mxu0 %v4275
    %6369 = vmatpush1.bf16.msra.mxu0 %v4274
    %6370 = vmatprep.subr.bf16.mxu0 %v4279
    %6371 = vmatpush1.bf16.msra.mxu0 %v4278
    %6372 = vmatprep.subr.bf16.mxu0 %v4283
    %6373 = vmatpush1.bf16.msra.mxu0 %v4282
    %6374 = vmatprep.subr.bf16.mxu0 %v4287
    %6375 = vmatpush1.bf16.msra.mxu0 %v4286
    %6376 = vmatprep.subr.bf16.mxu0 %v4291
    %6377 = vmatpush1.bf16.msra.mxu0 %v4290
    %6378 = vmatprep.mubr.bf16.mxu0 %v6214
    %6379 = vmatmul.mubr.bf16.gmra.mrb[0].mxu0 %v6213
    %v6380 = vpop.f32.mrb[0].mxu0
    %v6381 = vadd.f32 %v6340, %v6380
    %v6382 = vpop.f32.mrb[0].mxu0
    %v6383 = vadd.f32 %v6342, %v6382
    %v6384 = vpop.f32.mrb[0].mxu0
    %v6385 = vpop.f32.mrb[0].mxu0
    %6386 = vdwg.mxu0
    %6387 = vmatprep.subr.bf16.mxu0 %v4295
    %6388 = vmatpush1.bf16.msra.mxu0 %v4294
    %6389 = vmatprep.subr.bf16.mxu0 %v4299
    %6390 = vmatpush1.bf16.msra.mxu0 %v4298
    %6391 = vmatprep.subr.bf16.mxu0 %v4303
    %6392 = vmatpush1.bf16.msra.mxu0 %v4302
    %6393 = vmatprep.subr.bf16.mxu0 %v4307
    %6394 = vmatpush1.bf16.msra.mxu0 %v4306
    %6395 = vmatprep.subr.bf16.mxu0 %v4311
    %6396 = vmatpush1.bf16.msra.mxu0 %v4310
    %6397 = vmatprep.subr.bf16.mxu0 %v4315
    %6398 = vmatpush1.bf16.msra.mxu0 %v4314
    %6399 = vmatprep.subr.bf16.mxu0 %v4319
    %6400 = vmatpush1.bf16.msra.mxu0 %v4318
    %6401 = vmatprep.subr.bf16.mxu0 %v4323
    %6402 = vmatpush1.bf16.msra.mxu0 %v4322
    %6403 = vmatprep.subr.bf16.mxu0 %v4327
    %6404 = vmatpush1.bf16.msra.mxu0 %v4326
    %6405 = vmatprep.subr.bf16.mxu0 %v4331
    %6406 = vmatpush1.bf16.msra.mxu0 %v4330
    %6407 = vmatprep.subr.bf16.mxu0 %v4335
    %6408 = vmatpush1.bf16.msra.mxu0 %v4334
    %6409 = vmatprep.subr.bf16.mxu0 %v4339
    %6410 = vmatpush1.bf16.msra.mxu0 %v4338
    %6411 = vmatprep.subr.bf16.mxu0 %v4343
    %6412 = vmatpush1.bf16.msra.mxu0 %v4342
    %6413 = vmatprep.subr.bf16.mxu0 %v4347
    %6414 = vmatpush1.bf16.msra.mxu0 %v4346
    %6415 = vmatprep.subr.bf16.mxu0 %v4351
    %6416 = vmatpush1.bf16.msra.mxu0 %v4350
    %6417 = vmatprep.subr.bf16.mxu0 %v4355
    %6418 = vmatpush1.bf16.msra.mxu0 %v4354
    %6419 = vmatprep.mubr.bf16.mxu0 %v6216
    %6420 = vmatmul.mubr.bf16.gmra.mrb[0].mxu0 %v6215
    %v6421 = vpop.f32.mrb[0].mxu0
    %v6422 = vadd.f32 %v6381, %v6421
    %v6423 = vpop.f32.mrb[0].mxu0
    %v6424 = vadd.f32 %v6383, %v6423
    %v6425 = vpop.f32.mrb[0].mxu0
    %v6426 = vpop.f32.mrb[0].mxu0
    %6427 = vdwg.mxu0
    %6428 = vmatprep.subr.bf16.mxu0 %v4359
    %6429 = vmatpush1.bf16.msra.mxu0 %v4358
    %6430 = vmatprep.subr.bf16.mxu0 %v4363
    %6431 = vmatpush1.bf16.msra.mxu0 %v4362
    %6432 = vmatprep.subr.bf16.mxu0 %v4367
    %6433 = vmatpush1.bf16.msra.mxu0 %v4366
    %6434 = vmatprep.subr.bf16.mxu0 %v4371
    %6435 = vmatpush1.bf16.msra.mxu0 %v4370
    %6436 = vmatprep.subr.bf16.mxu0 %v4375
    %6437 = vmatpush1.bf16.msra.mxu0 %v4374
    %6438 = vmatprep.subr.bf16.mxu0 %v4379
    %6439 = vmatpush1.bf16.msra.mxu0 %v4378
    %6440 = vmatprep.subr.bf16.mxu0 %v4383
    %6441 = vmatpush1.bf16.msra.mxu0 %v4382
    %6442 = vmatprep.subr.bf16.mxu0 %v4387
    %6443 = vmatpush1.bf16.msra.mxu0 %v4386
    %6444 = vmatprep.subr.bf16.mxu0 %v4391
    %6445 = vmatpush1.bf16.msra.mxu0 %v4390
    %6446 = vmatprep.subr.bf16.mxu0 %v4395
    %6447 = vmatpush1.bf16.msra.mxu0 %v4394
    %6448 = vmatprep.subr.bf16.mxu0 %v4399
    %6449 = vmatpush1.bf16.msra.mxu0 %v4398
    %6450 = vmatprep.subr.bf16.mxu0 %v4403
    %6451 = vmatpush1.bf16.msra.mxu0 %v4402
    %6452 = vmatprep.subr.bf16.mxu0 %v4407
    %6453 = vmatpush1.bf16.msra.mxu0 %v4406
    %6454 = vmatprep.subr.bf16.mxu0 %v4411
    %6455 = vmatpush1.bf16.msra.mxu0 %v4410
    %6456 = vmatprep.subr.bf16.mxu0 %v4415
    %6457 = vmatpush1.bf16.msra.mxu0 %v4414
    %6458 = vmatprep.subr.bf16.mxu0 %v4419
    %6459 = vmatpush1.bf16.msra.mxu0 %v4418
    %6460 = vmatprep.mubr.bf16.mxu0 %v6218
    %6461 = vmatmul.mubr.bf16.gmra.mrb[0].mxu0 %v6217
    %v6462 = vpop.f32.mrb[0].mxu0
    %v6463 = vadd.f32 %v6422, %v6462
    %v6464 = vpop.f32.mrb[0].mxu0
    %v6465 = vadd.f32 %v6424, %v6464
    %v6466 = vpop.f32.mrb[0].mxu0
    %v6467 = vpop.f32.mrb[0].mxu0
    %6468 = vdwg.mxu0
    %6469 = vmatprep.subr.bf16.mxu0 %v4423
    %6470 = vmatpush1.bf16.msra.mxu0 %v4422
    %6471 = vmatprep.subr.bf16.mxu0 %v4427
    %6472 = vmatpush1.bf16.msra.mxu0 %v4426
    %6473 = vmatprep.subr.bf16.mxu0 %v4431
    %6474 = vmatpush1.bf16.msra.mxu0 %v4430
    %6475 = vmatprep.subr.bf16.mxu0 %v4435
    %6476 = vmatpush1.bf16.msra.mxu0 %v4434
    %6477 = vmatprep.subr.bf16.mxu0 %v4439
    %6478 = vmatpush1.bf16.msra.mxu0 %v4438
    %6479 = vmatprep.subr.bf16.mxu0 %v4443
    %6480 = vmatpush1.bf16.msra.mxu0 %v4442
    %6481 = vmatprep.subr.bf16.mxu0 %v4447
    %6482 = vmatpush1.bf16.msra.mxu0 %v4446
    %6483 = vmatprep.subr.bf16.mxu0 %v4451
    %6484 = vmatpush1.bf16.msra.mxu0 %v4450
    %6485 = vmatprep.subr.bf16.mxu0 %v4455
    %6486 = vmatpush1.bf16.msra.mxu0 %v4454
    %6487 = vmatprep.subr.bf16.mxu0 %v4459
    %6488 = vmatpush1.bf16.msra.mxu0 %v4458
    %6489 = vmatprep.subr.bf16.mxu0 %v4463
    %6490 = vmatpush1.bf16.msra.mxu0 %v4462
    %6491 = vmatprep.subr.bf16.mxu0 %v4467
    %6492 = vmatpush1.bf16.msra.mxu0 %v4466
    %6493 = vmatprep.subr.bf16.mxu0 %v4471
    %6494 = vmatpush1.bf16.msra.mxu0 %v4470
    %6495 = vmatprep.subr.bf16.mxu0 %v4475
    %6496 = vmatpush1.bf16.msra.mxu0 %v4474
    %6497 = vmatprep.subr.bf16.mxu0 %v4479
    %6498 = vmatpush1.bf16.msra.mxu0 %v4478
    %6499 = vmatprep.subr.bf16.mxu0 %v4483
    %6500 = vmatpush1.bf16.msra.mxu0 %v4482
    %6501 = vmatprep.mubr.bf16.mxu0 %v6220
    %6502 = vmatmul.mubr.bf16.gmra.mrb[0].mxu0 %v6219
    %v6503 = vpop.f32.mrb[0].mxu0
    %v6504 = vadd.f32 %v6463, %v6503
    %v6505 = vpop.f32.mrb[0].mxu0
    %v6506 = vadd.f32 %v6465, %v6505
    %v6507 = vpop.f32.mrb[0].mxu0
    %v6508 = vpop.f32.mrb[0].mxu0
    %6509 = vdwg.mxu0
    %6510 = vmatprep.subr.bf16.mxu0 %v4487
    %6511 = vmatpush1.bf16.msra.mxu0 %v4486
    %6512 = vmatprep.subr.bf16.mxu0 %v4491
    %6513 = vmatpush1.bf16.msra.mxu0 %v4490
    %6514 = vmatprep.subr.bf16.mxu0 %v4495
    %6515 = vmatpush1.bf16.msra.mxu0 %v4494
    %6516 = vmatprep.subr.bf16.mxu0 %v4499
    %6517 = vmatpush1.bf16.msra.mxu0 %v4498
    %6518 = vmatprep.subr.bf16.mxu0 %v4503
    %6519 = vmatpush1.bf16.msra.mxu0 %v4502
    %6520 = vmatprep.subr.bf16.mxu0 %v4507
    %6521 = vmatpush1.bf16.msra.mxu0 %v4506
    %6522 = vmatprep.subr.bf16.mxu0 %v4511
    %6523 = vmatpush1.bf16.msra.mxu0 %v4510
    %6524 = vmatprep.subr.bf16.mxu0 %v4515
    %6525 = vmatpush1.bf16.msra.mxu0 %v4514
    %6526 = vmatprep.subr.bf16.mxu0 %v4519
    %6527 = vmatpush1.bf16.msra.mxu0 %v4518
    %6528 = vmatprep.subr.bf16.mxu0 %v4523
    %6529 = vmatpush1.bf16.msra.mxu0 %v4522
    %6530 = vmatprep.subr.bf16.mxu0 %v4527
    %6531 = vmatpush1.bf16.msra.mxu0 %v4526
    %6532 = vmatprep.subr.bf16.mxu0 %v4531
    %6533 = vmatpush1.bf16.msra.mxu0 %v4530
    %6534 = vmatprep.subr.bf16.mxu0 %v4535
    %6535 = vmatpush1.bf16.msra.mxu0 %v4534
    %6536 = vmatprep.subr.bf16.mxu0 %v4539
    %6537 = vmatpush1.bf16.msra.mxu0 %v4538
    %6538 = vmatprep.subr.bf16.mxu0 %v4543
    %6539 = vmatpush1.bf16.msra.mxu0 %v4542
    %6540 = vmatprep.subr.bf16.mxu0 %v4547
    %6541 = vmatpush1.bf16.msra.mxu0 %v4546
    %6542 = vmatprep.mubr.bf16.mxu0 %v6222
    %6543 = vmatmul.mubr.bf16.gmra.mrb[0].mxu0 %v6221
    %v6544 = vpop.f32.mrb[0].mxu0
    %v6545 = vadd.f32 %v6504, %v6544
    %v6546 = vpop.f32.mrb[0].mxu0
    %v6547 = vadd.f32 %v6506, %v6546
    %v6548 = vpop.f32.mrb[0].mxu0
    %v6549 = vpop.f32.mrb[0].mxu0
    %6550 = vdwg.mxu0
    %6551 = vmatprep.subr.bf16.mxu0 %v4041
    %6552 = vmatpush1.bf16.msra.mxu0 %v4040
    %6553 = vmatprep.subr.bf16.mxu0 %v4045
    %6554 = vmatpush1.bf16.msra.mxu0 %v4044
    %6555 = vmatprep.subr.bf16.mxu0 %v4049
    %6556 = vmatpush1.bf16.msra.mxu0 %v4048
    %6557 = vmatprep.subr.bf16.mxu0 %v4053
    %6558 = vmatpush1.bf16.msra.mxu0 %v4052
    %6559 = vmatprep.subr.bf16.mxu0 %v4057
    %6560 = vmatpush1.bf16.msra.mxu0 %v4056
    %6561 = vmatprep.subr.bf16.mxu0 %v4061
    %6562 = vmatpush1.bf16.msra.mxu0 %v4060
    %6563 = vmatprep.subr.bf16.mxu0 %v4065
    %6564 = vmatpush1.bf16.msra.mxu0 %v4064
    %6565 = vmatprep.subr.bf16.mxu0 %v4069
    %6566 = vmatpush1.bf16.msra.mxu0 %v4068
    %6567 = vmatprep.subr.bf16.mxu0 %v4073
    %6568 = vmatpush1.bf16.msra.mxu0 %v4072
    %6569 = vmatprep.subr.bf16.mxu0 %v4077
    %6570 = vmatpush1.bf16.msra.mxu0 %v4076
    %6571 = vmatprep.subr.bf16.mxu0 %v4081
    %6572 = vmatpush1.bf16.msra.mxu0 %v4080
    %6573 = vmatprep.subr.bf16.mxu0 %v4085
    %6574 = vmatpush1.bf16.msra.mxu0 %v4084
    %6575 = vmatprep.subr.bf16.mxu0 %v4089
    %6576 = vmatpush1.bf16.msra.mxu0 %v4088
    %6577 = vmatprep.subr.bf16.mxu0 %v4093
    %6578 = vmatpush1.bf16.msra.mxu0 %v4092
    %6579 = vmatprep.subr.bf16.mxu0 %v4097
    %6580 = vmatpush1.bf16.msra.mxu0 %v4096
    %6581 = vmatprep.subr.bf16.mxu0 %v4101
    %6582 = vmatpush1.bf16.msra.mxu0 %v4100
    %6583 = vmatprep.mubr.bf16.mxu0 %v6208
    %6584 = vmatmul.mubr.bf16.gmra.mrb[0].mxu0 %v6207
    %v6585 = vpop.f32.mrb[0].mxu0
    %v6586 = vadd.f32 0.0, %v6585
    %v6587 = vpop.f32.mrb[0].mxu0
    %v6588 = vadd.f32 0.0, %v6587
    %v6589 = vpop.f32.mrb[0].mxu0
    %v6590 = vpop.f32.mrb[0].mxu0
    %6591 = vdwg.mxu0
    %6592 = vmatprep.subr.bf16.mxu0 %v4105
    %6593 = vmatpush1.bf16.msra.mxu0 %v4104
    %6594 = vmatprep.subr.bf16.mxu0 %v4109
    %6595 = vmatpush1.bf16.msra.mxu0 %v4108
    %6596 = vmatprep.subr.bf16.mxu0 %v4113
    %6597 = vmatpush1.bf16.msra.mxu0 %v4112
    %6598 = vmatprep.subr.bf16.mxu0 %v4117
    %6599 = vmatpush1.bf16.msra.mxu0 %v4116
    %6600 = vmatprep.subr.bf16.mxu0 %v4121
    %6601 = vmatpush1.bf16.msra.mxu0 %v4120
    %6602 = vmatprep.subr.bf16.mxu0 %v4125
    %6603 = vmatpush1.bf16.msra.mxu0 %v4124
    %6604 = vmatprep.subr.bf16.mxu0 %v4129
    %6605 = vmatpush1.bf16.msra.mxu0 %v4128
    %6606 = vmatprep.subr.bf16.mxu0 %v4133
    %6607 = vmatpush1.bf16.msra.mxu0 %v4132
    %6608 = vmatprep.subr.bf16.mxu0 %v4137
    %6609 = vmatpush1.bf16.msra.mxu0 %v4136
    %6610 = vmatprep.subr.bf16.mxu0 %v4141
    %6611 = vmatpush1.bf16.msra.mxu0 %v4140
    %6612 = vmatprep.subr.bf16.mxu0 %v4145
    %6613 = vmatpush1.bf16.msra.mxu0 %v4144
    %6614 = vmatprep.subr.bf16.mxu0 %v4149
    %6615 = vmatpush1.bf16.msra.mxu0 %v4148
    %6616 = vmatprep.subr.bf16.mxu0 %v4153
    %6617 = vmatpush1.bf16.msra.mxu0 %v4152
    %6618 = vmatprep.subr.bf16.mxu0 %v4157
    %6619 = vmatpush1.bf16.msra.mxu0 %v4156
    %6620 = vmatprep.subr.bf16.mxu0 %v4161
    %6621 = vmatpush1.bf16.msra.mxu0 %v4160
    %6622 = vmatprep.subr.bf16.mxu0 %v4165
    %6623 = vmatpush1.bf16.msra.mxu0 %v4164
    %6624 = vmatprep.mubr.bf16.mxu0 %v6210
    %6625 = vmatmul.mubr.bf16.gmra.mrb[0].mxu0 %v6209
    %v6626 = vpop.f32.mrb[0].mxu0
    %v6627 = vadd.f32 %v6586, %v6626
    %v6628 = vpop.f32.mrb[0].mxu0
    %v6629 = vadd.f32 %v6588, %v6628
    %v6630 = vpop.f32.mrb[0].mxu0
    %v6631 = vpop.f32.mrb[0].mxu0
    %6632 = vdwg.mxu0
    %6633 = vmatprep.subr.bf16.mxu0 %v4169
    %6634 = vmatpush1.bf16.msra.mxu0 %v4168
    %6635 = vmatprep.subr.bf16.mxu0 %v4173
    %6636 = vmatpush1.bf16.msra.mxu0 %v4172
    %6637 = vmatprep.subr.bf16.mxu0 %v4177
    %6638 = vmatpush1.bf16.msra.mxu0 %v4176
    %6639 = vmatprep.subr.bf16.mxu0 %v4181
    %6640 = vmatpush1.bf16.msra.mxu0 %v4180
    %6641 = vmatprep.subr.bf16.mxu0 %v4185
    %6642 = vmatpush1.bf16.msra.mxu0 %v4184
    %6643 = vmatprep.subr.bf16.mxu0 %v4189
    %6644 = vmatpush1.bf16.msra.mxu0 %v4188
    %6645 = vmatprep.subr.bf16.mxu0 %v4193
    %6646 = vmatpush1.bf16.msra.mxu0 %v4192
    %6647 = vmatprep.subr.bf16.mxu0 %v4197
    %6648 = vmatpush1.bf16.msra.mxu0 %v4196
    %6649 = vmatprep.subr.bf16.mxu0 %v4201
    %6650 = vmatpush1.bf16.msra.mxu0 %v4200
    %6651 = vmatprep.subr.bf16.mxu0 %v4205
    %6652 = vmatpush1.bf16.msra.mxu0 %v4204
    %6653 = vmatprep.subr.bf16.mxu0 %v4209
    %6654 = vmatpush1.bf16.msra.mxu0 %v4208
    %6655 = vmatprep.subr.bf16.mxu0 %v4213
    %6656 = vmatpush1.bf16.msra.mxu0 %v4212
    %6657 = vmatprep.subr.bf16.mxu0 %v4217
    %6658 = vmatpush1.bf16.msra.mxu0 %v4216
    %6659 = vmatprep.subr.bf16.mxu0 %v4221
    %6660 = vmatpush1.bf16.msra.mxu0 %v4220
    %6661 = vmatprep.subr.bf16.mxu0 %v4225
    %6662 = vmatpush1.bf16.msra.mxu0 %v4224
    %6663 = vmatprep.subr.bf16.mxu0 %v4229
    %6664 = vmatpush1.bf16.msra.mxu0 %v4228
    %6665 = vmatprep.mubr.bf16.mxu0 %v6212
    %6666 = vmatmul.mubr.bf16.gmra.mrb[0].mxu0 %v6211
    %v6667 = vpop.f32.mrb[0].mxu0
    %v6668 = vadd.f32 %v6627, %v6667
    %v6669 = vpop.f32.mrb[0].mxu0
    %v6670 = vadd.f32 %v6629, %v6669
    %v6671 = vpop.f32.mrb[0].mxu0
    %v6672 = vpop.f32.mrb[0].mxu0
    %6673 = vdwg.mxu0
    %6674 = vmatprep.subr.bf16.mxu0 %v4233
    %6675 = vmatpush1.bf16.msra.mxu0 %v4232
    %6676 = vmatprep.subr.bf16.mxu0 %v4237
    %6677 = vmatpush1.bf16.msra.mxu0 %v4236
    %6678 = vmatprep.subr.bf16.mxu0 %v4241
    %6679 = vmatpush1.bf16.msra.mxu0 %v4240
    %6680 = vmatprep.subr.bf16.mxu0 %v4245
    %6681 = vmatpush1.bf16.msra.mxu0 %v4244
    %6682 = vmatprep.subr.bf16.mxu0 %v4249
    %6683 = vmatpush1.bf16.msra.mxu0 %v4248
    %6684 = vmatprep.subr.bf16.mxu0 %v4253
    %6685 = vmatpush1.bf16.msra.mxu0 %v4252
    %6686 = vmatprep.subr.bf16.mxu0 %v4257
    %6687 = vmatpush1.bf16.msra.mxu0 %v4256
    %6688 = vmatprep.subr.bf16.mxu0 %v4261
    %6689 = vmatpush1.bf16.msra.mxu0 %v4260
    %6690 = vmatprep.subr.bf16.mxu0 %v4265
    %6691 = vmatpush1.bf16.msra.mxu0 %v4264
    %6692 = vmatprep.subr.bf16.mxu0 %v4269
    %6693 = vmatpush1.bf16.msra.mxu0 %v4268
    %6694 = vmatprep.subr.bf16.mxu0 %v4273
    %6695 = vmatpush1.bf16.msra.mxu0 %v4272
    %6696 = vmatprep.subr.bf16.mxu0 %v4277
    %6697 = vmatpush1.bf16.msra.mxu0 %v4276
    %6698 = vmatprep.subr.bf16.mxu0 %v4281
    %6699 = vmatpush1.bf16.msra.mxu0 %v4280
    %6700 = vmatprep.subr.bf16.mxu0 %v4285
    %6701 = vmatpush1.bf16.msra.mxu0 %v4284
    %6702 = vmatprep.subr.bf16.mxu0 %v4289
    %6703 = vmatpush1.bf16.msra.mxu0 %v4288
    %6704 = vmatprep.subr.bf16.mxu0 %v4293
    %6705 = vmatpush1.bf16.msra.mxu0 %v4292
    %6706 = vmatprep.mubr.bf16.mxu0 %v6214
    %6707 = vmatmul.mubr.bf16.gmra.mrb[0].mxu0 %v6213
    %v6708 = vpop.f32.mrb[0].mxu0
    %v6709 = vadd.f32 %v6668, %v6708
    %v6710 = vpop.f32.mrb[0].mxu0
    %v6711 = vadd.f32 %v6670, %v6710
    %v6712 = vpop.f32.mrb[0].mxu0
    %v6713 = vpop.f32.mrb[0].mxu0
    %6714 = vdwg.mxu0
    %6715 = vmatprep.subr.bf16.mxu0 %v4297
    %6716 = vmatpush1.bf16.msra.mxu0 %v4296
    %6717 = vmatprep.subr.bf16.mxu0 %v4301
    %6718 = vmatpush1.bf16.msra.mxu0 %v4300
    %6719 = vmatprep.subr.bf16.mxu0 %v4305
    %6720 = vmatpush1.bf16.msra.mxu0 %v4304
    %6721 = vmatprep.subr.bf16.mxu0 %v4309
    %6722 = vmatpush1.bf16.msra.mxu0 %v4308
    %6723 = vmatprep.subr.bf16.mxu0 %v4313
    %6724 = vmatpush1.bf16.msra.mxu0 %v4312
    %6725 = vmatprep.subr.bf16.mxu0 %v4317
    %6726 = vmatpush1.bf16.msra.mxu0 %v4316
    %6727 = vmatprep.subr.bf16.mxu0 %v4321
    %6728 = vmatpush1.bf16.msra.mxu0 %v4320
    %6729 = vmatprep.subr.bf16.mxu0 %v4325
    %6730 = vmatpush1.bf16.msra.mxu0 %v4324
    %6731 = vmatprep.subr.bf16.mxu0 %v4329
    %6732 = vmatpush1.bf16.msra.mxu0 %v4328
    %6733 = vmatprep.subr.bf16.mxu0 %v4333
    %6734 = vmatpush1.bf16.msra.mxu0 %v4332
    %6735 = vmatprep.subr.bf16.mxu0 %v4337
    %6736 = vmatpush1.bf16.msra.mxu0 %v4336
    %6737 = vmatprep.subr.bf16.mxu0 %v4341
    %6738 = vmatpush1.bf16.msra.mxu0 %v4340
    %6739 = vmatprep.subr.bf16.mxu0 %v4345
    %6740 = vmatpush1.bf16.msra.mxu0 %v4344
    %6741 = vmatprep.subr.bf16.mxu0 %v4349
    %6742 = vmatpush1.bf16.msra.mxu0 %v4348
    %6743 = vmatprep.subr.bf16.mxu0 %v4353
    %6744 = vmatpush1.bf16.msra.mxu0 %v4352
    %6745 = vmatprep.subr.bf16.mxu0 %v4357
    %6746 = vmatpush1.bf16.msra.mxu0 %v4356
    %6747 = vmatprep.mubr.bf16.mxu0 %v6216
    %6748 = vmatmul.mubr.bf16.gmra.mrb[0].mxu0 %v6215
    %v6749 = vpop.f32.mrb[0].mxu0
    %v6750 = vadd.f32 %v6709, %v6749
    %v6751 = vpop.f32.mrb[0].mxu0
    %v6752 = vadd.f32 %v6711, %v6751
    %v6753 = vpop.f32.mrb[0].mxu0
    %v6754 = vpop.f32.mrb[0].mxu0
    %6755 = vdwg.mxu0
    %6756 = vmatprep.subr.bf16.mxu0 %v4361
    %6757 = vmatpush1.bf16.msra.mxu0 %v4360
    %6758 = vmatprep.subr.bf16.mxu0 %v4365
    %6759 = vmatpush1.bf16.msra.mxu0 %v4364
    %6760 = vmatprep.subr.bf16.mxu0 %v4369
    %6761 = vmatpush1.bf16.msra.mxu0 %v4368
    %6762 = vmatprep.subr.bf16.mxu0 %v4373
    %6763 = vmatpush1.bf16.msra.mxu0 %v4372
    %6764 = vmatprep.subr.bf16.mxu0 %v4377
    %6765 = vmatpush1.bf16.msra.mxu0 %v4376
    %6766 = vmatprep.subr.bf16.mxu0 %v4381
    %6767 = vmatpush1.bf16.msra.mxu0 %v4380
    %6768 = vmatprep.subr.bf16.mxu0 %v4385
    %6769 = vmatpush1.bf16.msra.mxu0 %v4384
    %6770 = vmatprep.subr.bf16.mxu0 %v4389
    %6771 = vmatpush1.bf16.msra.mxu0 %v4388
    %6772 = vmatprep.subr.bf16.mxu0 %v4393
    %6773 = vmatpush1.bf16.msra.mxu0 %v4392
    %6774 = vmatprep.subr.bf16.mxu0 %v4397
    %6775 = vmatpush1.bf16.msra.mxu0 %v4396
    %6776 = vmatprep.subr.bf16.mxu0 %v4401
    %6777 = vmatpush1.bf16.msra.mxu0 %v4400
    %6778 = vmatprep.subr.bf16.mxu0 %v4405
    %6779 = vmatpush1.bf16.msra.mxu0 %v4404
    %6780 = vmatprep.subr.bf16.mxu0 %v4409
    %6781 = vmatpush1.bf16.msra.mxu0 %v4408
    %6782 = vmatprep.subr.bf16.mxu0 %v4413
    %6783 = vmatpush1.bf16.msra.mxu0 %v4412
    %6784 = vmatprep.subr.bf16.mxu0 %v4417
    %6785 = vmatpush1.bf16.msra.mxu0 %v4416
    %6786 = vmatprep.subr.bf16.mxu0 %v4421
    %6787 = vmatpush1.bf16.msra.mxu0 %v4420
    %6788 = vmatprep.mubr.bf16.mxu0 %v6218
    %6789 = vmatmul.mubr.bf16.gmra.mrb[0].mxu0 %v6217
    %v6790 = vpop.f32.mrb[0].mxu0
    %v6791 = vadd.f32 %v6750, %v6790
    %v6792 = vpop.f32.mrb[0].mxu0
    %v6793 = vadd.f32 %v6752, %v6792
    %v6794 = vpop.f32.mrb[0].mxu0
    %v6795 = vpop.f32.mrb[0].mxu0
    %6796 = vdwg.mxu0
    %6797 = vmatprep.subr.bf16.mxu0 %v4425
    %6798 = vmatpush1.bf16.msra.mxu0 %v4424
    %6799 = vmatprep.subr.bf16.mxu0 %v4429
    %6800 = vmatpush1.bf16.msra.mxu0 %v4428
    %6801 = vmatprep.subr.bf16.mxu0 %v4433
    %6802 = vmatpush1.bf16.msra.mxu0 %v4432
    %6803 = vmatprep.subr.bf16.mxu0 %v4437
    %6804 = vmatpush1.bf16.msra.mxu0 %v4436
    %6805 = vmatprep.subr.bf16.mxu0 %v4441
    %6806 = vmatpush1.bf16.msra.mxu0 %v4440
    %6807 = vmatprep.subr.bf16.mxu0 %v4445
    %6808 = vmatpush1.bf16.msra.mxu0 %v4444
    %6809 = vmatprep.subr.bf16.mxu0 %v4449
    %6810 = vmatpush1.bf16.msra.mxu0 %v4448
    %6811 = vmatprep.subr.bf16.mxu0 %v4453
    %6812 = vmatpush1.bf16.msra.mxu0 %v4452
    %6813 = vmatprep.subr.bf16.mxu0 %v4457
    %6814 = vmatpush1.bf16.msra.mxu0 %v4456
    %6815 = vmatprep.subr.bf16.mxu0 %v4461
    %6816 = vmatpush1.bf16.msra.mxu0 %v4460
    %6817 = vmatprep.subr.bf16.mxu0 %v4465
    %6818 = vmatpush1.bf16.msra.mxu0 %v4464
    %6819 = vmatprep.subr.bf16.mxu0 %v4469
    %6820 = vmatpush1.bf16.msra.mxu0 %v4468
    %6821 = vmatprep.subr.bf16.mxu0 %v4473
    %6822 = vmatpush1.bf16.msra.mxu0 %v4472
    %6823 = vmatprep.subr.bf16.mxu0 %v4477
    %6824 = vmatpush1.bf16.msra.mxu0 %v4476
    %6825 = vmatprep.subr.bf16.mxu0 %v4481
    %6826 = vmatpush1.bf16.msra.mxu0 %v4480
    %6827 = vmatprep.subr.bf16.mxu0 %v4485
    %6828 = vmatpush1.bf16.msra.mxu0 %v4484
    %6829 = vmatprep.mubr.bf16.mxu0 %v6220
    %6830 = vmatmul.mubr.bf16.gmra.mrb[0].mxu0 %v6219
    %v6831 = vpop.f32.mrb[0].mxu0
    %v6832 = vadd.f32 %v6791, %v6831
    %v6833 = vpop.f32.mrb[0].mxu0
    %v6834 = vadd.f32 %v6793, %v6833
    %v6835 = vpop.f32.mrb[0].mxu0
    %v6836 = vpop.f32.mrb[0].mxu0
    %6837 = vdwg.mxu0
    %6838 = vmatprep.subr.bf16.mxu0 %v4489
    %6839 = vmatpush1.bf16.msra.mxu0 %v4488
    %6840 = vmatprep.subr.bf16.mxu0 %v4493
    %6841 = vmatpush1.bf16.msra.mxu0 %v4492
    %6842 = vmatprep.subr.bf16.mxu0 %v4497
    %6843 = vmatpush1.bf16.msra.mxu0 %v4496
    %6844 = vmatprep.subr.bf16.mxu0 %v4501
    %6845 = vmatpush1.bf16.msra.mxu0 %v4500
    %6846 = vmatprep.subr.bf16.mxu0 %v4505
    %6847 = vmatpush1.bf16.msra.mxu0 %v4504
    %6848 = vmatprep.subr.bf16.mxu0 %v4509
    %6849 = vmatpush1.bf16.msra.mxu0 %v4508
    %6850 = vmatprep.subr.bf16.mxu0 %v4513
    %6851 = vmatpush1.bf16.msra.mxu0 %v4512
    %6852 = vmatprep.subr.bf16.mxu0 %v4517
    %6853 = vmatpush1.bf16.msra.mxu0 %v4516
    %6854 = vmatprep.subr.bf16.mxu0 %v4521
    %6855 = vmatpush1.bf16.msra.mxu0 %v4520
    %6856 = vmatprep.subr.bf16.mxu0 %v4525
    %6857 = vmatpush1.bf16.msra.mxu0 %v4524
    %6858 = vmatprep.subr.bf16.mxu0 %v4529
    %6859 = vmatpush1.bf16.msra.mxu0 %v4528
    %6860 = vmatprep.subr.bf16.mxu0 %v4533
    %6861 = vmatpush1.bf16.msra.mxu0 %v4532
    %6862 = vmatprep.subr.bf16.mxu0 %v4537
    %6863 = vmatpush1.bf16.msra.mxu0 %v4536
    %6864 = vmatprep.subr.bf16.mxu0 %v4541
    %6865 = vmatpush1.bf16.msra.mxu0 %v4540
    %6866 = vmatprep.subr.bf16.mxu0 %v4545
    %6867 = vmatpush1.bf16.msra.mxu0 %v4544
    %6868 = vmatprep.subr.bf16.mxu0 %v4549
    %6869 = vmatpush1.bf16.msra.mxu0 %v4548
    %6870 = vmatprep.mubr.bf16.mxu0 %v6222
    %6871 = vmatmul.mubr.bf16.gmra.mrb[0].mxu0 %v6221
    %v6872 = vpop.f32.mrb[0].mxu0
    %v6873 = vadd.f32 %v6832, %v6872
    %v6874 = vpop.f32.mrb[0].mxu0
    %v6875 = vadd.f32 %v6834, %v6874
    %v6876 = vpop.f32.mrb[0].mxu0
    %v6877 = vpop.f32.mrb[0].mxu0
    %6878 = vdwg.mxu0
    %v6879 = vadd.f32 %v5722, %v6545
    %v6880 = vadd.f32 %v5723, %v6547
    %v6881 = vadd.f32 %v5724, %v6873
    %v6882 = vadd.f32 %v5725, %v6875
    %vm6883 = vcmp.ge.f32.partialorder %v6879, 0.5
    %vm6884 = vcmp.ge.f32.partialorder %v6880, 0.5
    %vm6885 = vcmp.ge.f32.partialorder %v6881, 0.5
    %vm6886 = vcmp.ge.f32.partialorder %v6882, 0.5
    %v6887 = vsel %vm6883, 0.0, %v6879
    %v6888 = vsel %vm6884, 0.0, %v6880
    %v6889 = vsel %vm6885, 0.0, %v6881
    %v6890 = vsel %vm6886, 0.0, %v6882
    %v6891 = vsel %vm6883, 1, 0
    %v6892 = vsel %vm6884, 1, 0
    %v6893 = vsel %vm6885, 1, 0
    %v6894 = vsel %vm6886, 1, 0
    %v6895 = vcvt.s32.f32 %v6891
    %v6896 = vcvt.s32.f32 %v6892
    %v6897 = vcvt.s32.f32 %v6893
    %v6898 = vcvt.s32.f32 %v6894
    %v6899 = vpack.c.bf16 %v6895, %v6895
    %v6900 = vpack.c.bf16 %v6896, %v6896
    %v6901 = vpack.c.bf16 %v6897, %v6897
    %v6902 = vpack.c.bf16 %v6898, %v6898
    %6903 = vmatprep.subr.bf16.mxu0 0
    %6904 = vmatpush1.bf16.msra.mxu0 %v5930
    %6905 = vmatprep.subr.bf16.mxu0 0
    %6906 = vmatpush1.bf16.msra.mxu0 %v5931
    %6907 = vmatprep.subr.bf16.mxu0 0
    %6908 = vmatpush1.bf16.msra.mxu0 %v5932
    %6909 = vmatprep.subr.bf16.mxu0 0
    %6910 = vmatpush1.bf16.msra.mxu0 %v5933
    %6911 = vmatprep.subr.bf16.mxu0 0
    %6912 = vmatpush1.bf16.msra.mxu0 %v5934
    %6913 = vmatprep.subr.bf16.mxu0 0
    %6914 = vmatpush1.bf16.msra.mxu0 %v5935
    %6915 = vmatprep.subr.bf16.mxu0 0
    %6916 = vmatpush1.bf16.msra.mxu0 %v5936
    %6917 = vmatprep.subr.bf16.mxu0 0
    %6918 = vmatpush1.bf16.msra.mxu0 %v5937
    %6919 = vmatprep.subr.bf16.mxu0 0
    %6920 = vmatpush1.bf16.msra.mxu0 %v5938
    %6921 = vmatprep.subr.bf16.mxu0 0
    %6922 = vmatpush1.bf16.msra.mxu0 %v5939
    %6923 = vmatprep.subr.bf16.mxu0 0
    %6924 = vmatpush1.bf16.msra.mxu0 %v5940
    %6925 = vmatprep.subr.bf16.mxu0 0
    %6926 = vmatpush1.bf16.msra.mxu0 %v5941
    %6927 = vmatprep.subr.bf16.mxu0 0
    %6928 = vmatpush1.bf16.msra.mxu0 %v5942
    %6929 = vmatprep.subr.bf16.mxu0 0
    %6930 = vmatpush1.bf16.msra.mxu0 %v5943
    %6931 = vmatprep.subr.bf16.mxu0 0
    %6932 = vmatpush1.bf16.msra.mxu0 %v5944
    %6933 = vmatprep.subr.bf16.mxu0 0
    %6934 = vmatpush1.bf16.msra.mxu0 %v5945
    %6935 = vmatprep.mubr.bf16.mxu0 %v6900
    %6936 = vmatmul.mubr.bf16.gmra.mrb[0].mxu0 %v6899
    %v6937 = vpop.f32.mrb[0].mxu0
    %v6938 = vadd.f32 0.0, %v6937
    %v6939 = vpop.f32.mrb[0].mxu0
    %v6940 = vpop.f32.mrb[0].mxu0
    %v6941 = vpop.f32.mrb[0].mxu0
    %6942 = vdwg.mxu0
    %6943 = vmatprep.subr.bf16.mxu0 0
    %6944 = vmatpush1.bf16.msra.mxu0 %v5946
    %6945 = vmatprep.subr.bf16.mxu0 0
    %6946 = vmatpush1.bf16.msra.mxu0 %v5947
    %6947 = vmatprep.subr.bf16.mxu0 0
    %6948 = vmatpush1.bf16.msra.mxu0 %v5948
    %6949 = vmatprep.subr.bf16.mxu0 0
    %6950 = vmatpush1.bf16.msra.mxu0 %v5949
    %6951 = vmatprep.subr.bf16.mxu0 0
    %6952 = vmatpush1.bf16.msra.mxu0 %v5950
    %6953 = vmatprep.subr.bf16.mxu0 0
    %6954 = vmatpush1.bf16.msra.mxu0 %v5951
    %6955 = vmatprep.subr.bf16.mxu0 0
    %6956 = vmatpush1.bf16.msra.mxu0 %v5952
    %6957 = vmatprep.subr.bf16.mxu0 0
    %6958 = vmatpush1.bf16.msra.mxu0 %v5953
    %6959 = vmatprep.subr.bf16.mxu0 0
    %6960 = vmatpush1.bf16.msra.mxu0 %v5954
    %6961 = vmatprep.subr.bf16.mxu0 0
    %6962 = vmatpush1.bf16.msra.mxu0 %v5955
    %6963 = vmatprep.subr.bf16.mxu0 0
    %6964 = vmatpush1.bf16.msra.mxu0 %v5956
    %6965 = vmatprep.subr.bf16.mxu0 0
    %6966 = vmatpush1.bf16.msra.mxu0 %v5957
    %6967 = vmatprep.subr.bf16.mxu0 0
    %6968 = vmatpush1.bf16.msra.mxu0 %v5958
    %6969 = vmatprep.subr.bf16.mxu0 0
    %6970 = vmatpush1.bf16.msra.mxu0 %v5959
    %6971 = vmatprep.subr.bf16.mxu0 0
    %6972 = vmatpush1.bf16.msra.mxu0 %v5960
    %6973 = vmatprep.subr.bf16.mxu0 0
    %6974 = vmatpush1.bf16.msra.mxu0 %v5961
    %6975 = vmatprep.mubr.bf16.mxu0 %v6902
    %6976 = vmatmul.mubr.bf16.gmra.mrb[0].mxu0 %v6901
    %v6977 = vpop.f32.mrb[0].mxu0
    %v6978 = vadd.f32 %v6938, %v6977
    %v6979 = vpop.f32.mrb[0].mxu0
    %v6980 = vpop.f32.mrb[0].mxu0
    %v6981 = vpop.f32.mrb[0].mxu0
    %6982 = vdwg.mxu0
    %v6983 = vadd.f32 %v6075, %v6978
    %vm6984 = vcmp.ge.f32.partialorder %v6983, 0.5
    %v6985 = vsel %vm6984, 0.0, %v6983
    %v6986 = vsel %vm6984, 1, 0
    %v6987 = vcvt.s32.f32 %v6986
    %v6988 = vadd.f32 %v6078, %v6987
    %v6989 = vrot.slane %v1601, 4
    %v6990 = vrot.slane %v1603, 4
    %v6991 = vrot.slane %v1642, 4
    %v6992 = vrot.slane %v1644, 4
    %v6993 = vrot.slane %v1683, 4
    %v6994 = vrot.slane %v1685, 4
    %v6995 = vrot.slane %v1724, 4
    %v6996 = vrot.slane %v1726, 4
    %v6997 = vrot.slane %v1765, 4
    %v6998 = vrot.slane %v1767, 4
    %v6999 = vrot.slane %v1806, 4
    %v7000 = vrot.slane %v1808, 4
    %v7001 = vrot.slane %v1847, 4
    %v7002 = vrot.slane %v1849, 4
    %v7003 = vrot.slane %v1888, 4
    %v7004 = vrot.slane %v1890, 4
    %v7021 = vadd.f32 %v6159, %v6989
    %v7022 = vadd.f32 %v6160, %v6990
    %v7023 = vadd.f32 %v6161, %v6991
    %v7024 = vadd.f32 %v6162, %v6992
    %v7025 = vadd.f32 %v6163, %v6993
    %v7026 = vadd.f32 %v6164, %v6994
    %v7027 = vadd.f32 %v6165, %v6995
    %v7028 = vadd.f32 %v6166, %v6996
    %v7029 = vadd.f32 %v6167, %v6997
    %v7030 = vadd.f32 %v6168, %v6998
    %v7031 = vadd.f32 %v6169, %v6999
    %v7032 = vadd.f32 %v6170, %v7000
    %v7033 = vadd.f32 %v6171, %v7001
    %v7034 = vadd.f32 %v6172, %v7002
    %v7035 = vadd.f32 %v6173, %v7003
    %v7036 = vadd.f32 %v6174, %v7004
    %vm7037 = vcmp.ge.f32.partialorder %v7021, 0.5
    %vm7038 = vcmp.ge.f32.partialorder %v7022, 0.5
    %vm7039 = vcmp.ge.f32.partialorder %v7023, 0.5
    %vm7040 = vcmp.ge.f32.partialorder %v7024, 0.5
    %vm7041 = vcmp.ge.f32.partialorder %v7025, 0.5
    %vm7042 = vcmp.ge.f32.partialorder %v7026, 0.5
    %vm7043 = vcmp.ge.f32.partialorder %v7027, 0.5
    %vm7044 = vcmp.ge.f32.partialorder %v7028, 0.5
    %vm7045 = vcmp.ge.f32.partialorder %v7029, 0.5
    %vm7046 = vcmp.ge.f32.partialorder %v7030, 0.5
    %vm7047 = vcmp.ge.f32.partialorder %v7031, 0.5
    %vm7048 = vcmp.ge.f32.partialorder %v7032, 0.5
    %vm7049 = vcmp.ge.f32.partialorder %v7033, 0.5
    %vm7050 = vcmp.ge.f32.partialorder %v7034, 0.5
    %vm7051 = vcmp.ge.f32.partialorder %v7035, 0.5
    %vm7052 = vcmp.ge.f32.partialorder %v7036, 0.5
    %v7053 = vsel %vm7037, 0.0, %v7021
    %v7054 = vsel %vm7038, 0.0, %v7022
    %v7055 = vsel %vm7039, 0.0, %v7023
    %v7056 = vsel %vm7040, 0.0, %v7024
    %v7057 = vsel %vm7041, 0.0, %v7025
    %v7058 = vsel %vm7042, 0.0, %v7026
    %v7059 = vsel %vm7043, 0.0, %v7027
    %v7060 = vsel %vm7044, 0.0, %v7028
    %v7061 = vsel %vm7045, 0.0, %v7029
    %v7062 = vsel %vm7046, 0.0, %v7030
    %v7063 = vsel %vm7047, 0.0, %v7031
    %v7064 = vsel %vm7048, 0.0, %v7032
    %v7065 = vsel %vm7049, 0.0, %v7033
    %v7066 = vsel %vm7050, 0.0, %v7034
    %v7067 = vsel %vm7051, 0.0, %v7035
    %v7068 = vsel %vm7052, 0.0, %v7036
    %v7069 = vsel %vm7037, 1, 0
    %v7070 = vsel %vm7038, 1, 0
    %v7071 = vsel %vm7039, 1, 0
    %v7072 = vsel %vm7040, 1, 0
    %v7073 = vsel %vm7041, 1, 0
    %v7074 = vsel %vm7042, 1, 0
    %v7075 = vsel %vm7043, 1, 0
    %v7076 = vsel %vm7044, 1, 0
    %v7077 = vsel %vm7045, 1, 0
    %v7078 = vsel %vm7046, 1, 0
    %v7079 = vsel %vm7047, 1, 0
    %v7080 = vsel %vm7048, 1, 0
    %v7081 = vsel %vm7049, 1, 0
    %v7082 = vsel %vm7050, 1, 0
    %v7083 = vsel %vm7051, 1, 0
    %v7084 = vsel %vm7052, 1, 0
    %v7085 = vcvt.s32.f32 %v7069
    %v7086 = vcvt.s32.f32 %v7070
    %v7087 = vcvt.s32.f32 %v7071
    %v7088 = vcvt.s32.f32 %v7072
    %v7089 = vcvt.s32.f32 %v7073
    %v7090 = vcvt.s32.f32 %v7074
    %v7091 = vcvt.s32.f32 %v7075
    %v7092 = vcvt.s32.f32 %v7076
    %v7093 = vcvt.s32.f32 %v7077
    %v7094 = vcvt.s32.f32 %v7078
    %v7095 = vcvt.s32.f32 %v7079
    %v7096 = vcvt.s32.f32 %v7080
    %v7097 = vcvt.s32.f32 %v7081
    %v7098 = vcvt.s32.f32 %v7082
    %v7099 = vcvt.s32.f32 %v7083
    %v7100 = vcvt.s32.f32 %v7084
    %v7101 = vpack.c.bf16 %v7085, %v7085
    %v7102 = vpack.c.bf16 %v7086, %v7086
    %v7103 = vpack.c.bf16 %v7087, %v7087
    %v7104 = vpack.c.bf16 %v7088, %v7088
    %v7105 = vpack.c.bf16 %v7089, %v7089
    %v7106 = vpack.c.bf16 %v7090, %v7090
    %v7107 = vpack.c.bf16 %v7091, %v7091
    %v7108 = vpack.c.bf16 %v7092, %v7092
    %v7109 = vpack.c.bf16 %v7093, %v7093
    %v7110 = vpack.c.bf16 %v7094, %v7094
    %v7111 = vpack.c.bf16 %v7095, %v7095
    %v7112 = vpack.c.bf16 %v7096, %v7096
    %v7113 = vpack.c.bf16 %v7097, %v7097
    %v7114 = vpack.c.bf16 %v7098, %v7098
    %v7115 = vpack.c.bf16 %v7099, %v7099
    %v7116 = vpack.c.bf16 %v7100, %v7100
    %7117 = vmatprep.subr.bf16.mxu0 %v4039
    %7118 = vmatpush1.bf16.msra.mxu0 %v4038
    %7119 = vmatprep.subr.bf16.mxu0 %v4043
    %7120 = vmatpush1.bf16.msra.mxu0 %v4042
    %7121 = vmatprep.subr.bf16.mxu0 %v4047
    %7122 = vmatpush1.bf16.msra.mxu0 %v4046
    %7123 = vmatprep.subr.bf16.mxu0 %v4051
    %7124 = vmatpush1.bf16.msra.mxu0 %v4050
    %7125 = vmatprep.subr.bf16.mxu0 %v4055
    %7126 = vmatpush1.bf16.msra.mxu0 %v4054
    %7127 = vmatprep.subr.bf16.mxu0 %v4059
    %7128 = vmatpush1.bf16.msra.mxu0 %v4058
    %7129 = vmatprep.subr.bf16.mxu0 %v4063
    %7130 = vmatpush1.bf16.msra.mxu0 %v4062
    %7131 = vmatprep.subr.bf16.mxu0 %v4067
    %7132 = vmatpush1.bf16.msra.mxu0 %v4066
    %7133 = vmatprep.subr.bf16.mxu0 %v4071
    %7134 = vmatpush1.bf16.msra.mxu0 %v4070
    %7135 = vmatprep.subr.bf16.mxu0 %v4075
    %7136 = vmatpush1.bf16.msra.mxu0 %v4074
    %7137 = vmatprep.subr.bf16.mxu0 %v4079
    %7138 = vmatpush1.bf16.msra.mxu0 %v4078
    %7139 = vmatprep.subr.bf16.mxu0 %v4083
    %7140 = vmatpush1.bf16.msra.mxu0 %v4082
    %7141 = vmatprep.subr.bf16.mxu0 %v4087
    %7142 = vmatpush1.bf16.msra.mxu0 %v4086
    %7143 = vmatprep.subr.bf16.mxu0 %v4091
    %7144 = vmatpush1.bf16.msra.mxu0 %v4090
    %7145 = vmatprep.subr.bf16.mxu0 %v4095
    %7146 = vmatpush1.bf16.msra.mxu0 %v4094
    %7147 = vmatprep.subr.bf16.mxu0 %v4099
    %7148 = vmatpush1.bf16.msra.mxu0 %v4098
    %7149 = vmatprep.mubr.bf16.mxu0 %v7102
    %7150 = vmatmul.mubr.bf16.gmra.mrb[0].mxu0 %v7101
    %v7151 = vpop.f32.mrb[0].mxu0
    %v7152 = vadd.f32 0.0, %v7151
    %v7153 = vpop.f32.mrb[0].mxu0
    %v7154 = vadd.f32 0.0, %v7153
    %v7155 = vpop.f32.mrb[0].mxu0
    %v7156 = vpop.f32.mrb[0].mxu0
    %7157 = vdwg.mxu0
    %7158 = vmatprep.subr.bf16.mxu0 %v4103
    %7159 = vmatpush1.bf16.msra.mxu0 %v4102
    %7160 = vmatprep.subr.bf16.mxu0 %v4107
    %7161 = vmatpush1.bf16.msra.mxu0 %v4106
    %7162 = vmatprep.subr.bf16.mxu0 %v4111
    %7163 = vmatpush1.bf16.msra.mxu0 %v4110
    %7164 = vmatprep.subr.bf16.mxu0 %v4115
    %7165 = vmatpush1.bf16.msra.mxu0 %v4114
    %7166 = vmatprep.subr.bf16.mxu0 %v4119
    %7167 = vmatpush1.bf16.msra.mxu0 %v4118
    %7168 = vmatprep.subr.bf16.mxu0 %v4123
    %7169 = vmatpush1.bf16.msra.mxu0 %v4122
    %7170 = vmatprep.subr.bf16.mxu0 %v4127
    %7171 = vmatpush1.bf16.msra.mxu0 %v4126
    %7172 = vmatprep.subr.bf16.mxu0 %v4131
    %7173 = vmatpush1.bf16.msra.mxu0 %v4130
    %7174 = vmatprep.subr.bf16.mxu0 %v4135
    %7175 = vmatpush1.bf16.msra.mxu0 %v4134
    %7176 = vmatprep.subr.bf16.mxu0 %v4139
    %7177 = vmatpush1.bf16.msra.mxu0 %v4138
    %7178 = vmatprep.subr.bf16.mxu0 %v4143
    %7179 = vmatpush1.bf16.msra.mxu0 %v4142
    %7180 = vmatprep.subr.bf16.mxu0 %v4147
    %7181 = vmatpush1.bf16.msra.mxu0 %v4146
    %7182 = vmatprep.subr.bf16.mxu0 %v4151
    %7183 = vmatpush1.bf16.msra.mxu0 %v4150
    %7184 = vmatprep.subr.bf16.mxu0 %v4155
    %7185 = vmatpush1.bf16.msra.mxu0 %v4154
    %7186 = vmatprep.subr.bf16.mxu0 %v4159
    %7187 = vmatpush1.bf16.msra.mxu0 %v4158
    %7188 = vmatprep.subr.bf16.mxu0 %v4163
    %7189 = vmatpush1.bf16.msra.mxu0 %v4162
    %7190 = vmatprep.mubr.bf16.mxu0 %v7104
    %7191 = vmatmul.mubr.bf16.gmra.mrb[0].mxu0 %v7103
    %v7192 = vpop.f32.mrb[0].mxu0
    %v7193 = vadd.f32 %v7152, %v7192
    %v7194 = vpop.f32.mrb[0].mxu0
    %v7195 = vadd.f32 %v7154, %v7194
    %v7196 = vpop.f32.mrb[0].mxu0
    %v7197 = vpop.f32.mrb[0].mxu0
    %7198 = vdwg.mxu0
    %7199 = vmatprep.subr.bf16.mxu0 %v4167
    %7200 = vmatpush1.bf16.msra.mxu0 %v4166
    %7201 = vmatprep.subr.bf16.mxu0 %v4171
    %7202 = vmatpush1.bf16.msra.mxu0 %v4170
    %7203 = vmatprep.subr.bf16.mxu0 %v4175
    %7204 = vmatpush1.bf16.msra.mxu0 %v4174
    %7205 = vmatprep.subr.bf16.mxu0 %v4179
    %7206 = vmatpush1.bf16.msra.mxu0 %v4178
    %7207 = vmatprep.subr.bf16.mxu0 %v4183
    %7208 = vmatpush1.bf16.msra.mxu0 %v4182
    %7209 = vmatprep.subr.bf16.mxu0 %v4187
    %7210 = vmatpush1.bf16.msra.mxu0 %v4186
    %7211 = vmatprep.subr.bf16.mxu0 %v4191
    %7212 = vmatpush1.bf16.msra.mxu0 %v4190
    %7213 = vmatprep.subr.bf16.mxu0 %v4195
    %7214 = vmatpush1.bf16.msra.mxu0 %v4194
    %7215 = vmatprep.subr.bf16.mxu0 %v4199
    %7216 = vmatpush1.bf16.msra.mxu0 %v4198
    %7217 = vmatprep.subr.bf16.mxu0 %v4203
    %7218 = vmatpush1.bf16.msra.mxu0 %v4202
    %7219 = vmatprep.subr.bf16.mxu0 %v4207
    %7220 = vmatpush1.bf16.msra.mxu0 %v4206
    %7221 = vmatprep.subr.bf16.mxu0 %v4211
    %7222 = vmatpush1.bf16.msra.mxu0 %v4210
    %7223 = vmatprep.subr.bf16.mxu0 %v4215
    %7224 = vmatpush1.bf16.msra.mxu0 %v4214
    %7225 = vmatprep.subr.bf16.mxu0 %v4219
    %7226 = vmatpush1.bf16.msra.mxu0 %v4218
    %7227 = vmatprep.subr.bf16.mxu0 %v4223
    %7228 = vmatpush1.bf16.msra.mxu0 %v4222
    %7229 = vmatprep.subr.bf16.mxu0 %v4227
    %7230 = vmatpush1.bf16.msra.mxu0 %v4226
    %7231 = vmatprep.mubr.bf16.mxu0 %v7106
    %7232 = vmatmul.mubr.bf16.gmra.mrb[0].mxu0 %v7105
    %v7233 = vpop.f32.mrb[0].mxu0
    %v7234 = vadd.f32 %v7193, %v7233
    %v7235 = vpop.f32.mrb[0].mxu0
    %v7236 = vadd.f32 %v7195, %v7235
    %v7237 = vpop.f32.mrb[0].mxu0
    %v7238 = vpop.f32.mrb[0].mxu0
    %7239 = vdwg.mxu0
    %7240 = vmatprep.subr.bf16.mxu0 %v4231
    %7241 = vmatpush1.bf16.msra.mxu0 %v4230
    %7242 = vmatprep.subr.bf16.mxu0 %v4235
    %7243 = vmatpush1.bf16.msra.mxu0 %v4234
    %7244 = vmatprep.subr.bf16.mxu0 %v4239
    %7245 = vmatpush1.bf16.msra.mxu0 %v4238
    %7246 = vmatprep.subr.bf16.mxu0 %v4243
    %7247 = vmatpush1.bf16.msra.mxu0 %v4242
    %7248 = vmatprep.subr.bf16.mxu0 %v4247
    %7249 = vmatpush1.bf16.msra.mxu0 %v4246
    %7250 = vmatprep.subr.bf16.mxu0 %v4251
    %7251 = vmatpush1.bf16.msra.mxu0 %v4250
    %7252 = vmatprep.subr.bf16.mxu0 %v4255
    %7253 = vmatpush1.bf16.msra.mxu0 %v4254
    %7254 = vmatprep.subr.bf16.mxu0 %v4259
    %7255 = vmatpush1.bf16.msra.mxu0 %v4258
    %7256 = vmatprep.subr.bf16.mxu0 %v4263
    %7257 = vmatpush1.bf16.msra.mxu0 %v4262
    %7258 = vmatprep.subr.bf16.mxu0 %v4267
    %7259 = vmatpush1.bf16.msra.mxu0 %v4266
    %7260 = vmatprep.subr.bf16.mxu0 %v4271
    %7261 = vmatpush1.bf16.msra.mxu0 %v4270
    %7262 = vmatprep.subr.bf16.mxu0 %v4275
    %7263 = vmatpush1.bf16.msra.mxu0 %v4274
    %7264 = vmatprep.subr.bf16.mxu0 %v4279
    %7265 = vmatpush1.bf16.msra.mxu0 %v4278
    %7266 = vmatprep.subr.bf16.mxu0 %v4283
    %7267 = vmatpush1.bf16.msra.mxu0 %v4282
    %7268 = vmatprep.subr.bf16.mxu0 %v4287
    %7269 = vmatpush1.bf16.msra.mxu0 %v4286
    %7270 = vmatprep.subr.bf16.mxu0 %v4291
    %7271 = vmatpush1.bf16.msra.mxu0 %v4290
    %7272 = vmatprep.mubr.bf16.mxu0 %v7108
    %7273 = vmatmul.mubr.bf16.gmra.mrb[0].mxu0 %v7107
    %v7274 = vpop.f32.mrb[0].mxu0
    %v7275 = vadd.f32 %v7234, %v7274
    %v7276 = vpop.f32.mrb[0].mxu0
    %v7277 = vadd.f32 %v7236, %v7276
    %v7278 = vpop.f32.mrb[0].mxu0
    %v7279 = vpop.f32.mrb[0].mxu0
    %7280 = vdwg.mxu0
    %7281 = vmatprep.subr.bf16.mxu0 %v4295
    %7282 = vmatpush1.bf16.msra.mxu0 %v4294
    %7283 = vmatprep.subr.bf16.mxu0 %v4299
    %7284 = vmatpush1.bf16.msra.mxu0 %v4298
    %7285 = vmatprep.subr.bf16.mxu0 %v4303
    %7286 = vmatpush1.bf16.msra.mxu0 %v4302
    %7287 = vmatprep.subr.bf16.mxu0 %v4307
    %7288 = vmatpush1.bf16.msra.mxu0 %v4306
    %7289 = vmatprep.subr.bf16.mxu0 %v4311
    %7290 = vmatpush1.bf16.msra.mxu0 %v4310
    %7291 = vmatprep.subr.bf16.mxu0 %v4315
    %7292 = vmatpush1.bf16.msra.mxu0 %v4314
    %7293 = vmatprep.subr.bf16.mxu0 %v4319
    %7294 = vmatpush1.bf16.msra.mxu0 %v4318
    %7295 = vmatprep.subr.bf16.mxu0 %v4323
    %7296 = vmatpush1.bf16.msra.mxu0 %v4322
    %7297 = vmatprep.subr.bf16.mxu0 %v4327
    %7298 = vmatpush1.bf16.msra.mxu0 %v4326
    %7299 = vmatprep.subr.bf16.mxu0 %v4331
    %7300 = vmatpush1.bf16.msra.mxu0 %v4330
    %7301 = vmatprep.subr.bf16.mxu0 %v4335
    %7302 = vmatpush1.bf16.msra.mxu0 %v4334
    %7303 = vmatprep.subr.bf16.mxu0 %v4339
    %7304 = vmatpush1.bf16.msra.mxu0 %v4338
    %7305 = vmatprep.subr.bf16.mxu0 %v4343
    %7306 = vmatpush1.bf16.msra.mxu0 %v4342
    %7307 = vmatprep.subr.bf16.mxu0 %v4347
    %7308 = vmatpush1.bf16.msra.mxu0 %v4346
    %7309 = vmatprep.subr.bf16.mxu0 %v4351
    %7310 = vmatpush1.bf16.msra.mxu0 %v4350
    %7311 = vmatprep.subr.bf16.mxu0 %v4355
    %7312 = vmatpush1.bf16.msra.mxu0 %v4354
    %7313 = vmatprep.mubr.bf16.mxu0 %v7110
    %7314 = vmatmul.mubr.bf16.gmra.mrb[0].mxu0 %v7109
    %v7315 = vpop.f32.mrb[0].mxu0
    %v7316 = vadd.f32 %v7275, %v7315
    %v7317 = vpop.f32.mrb[0].mxu0
    %v7318 = vadd.f32 %v7277, %v7317
    %v7319 = vpop.f32.mrb[0].mxu0
    %v7320 = vpop.f32.mrb[0].mxu0
    %7321 = vdwg.mxu0
    %7322 = vmatprep.subr.bf16.mxu0 %v4359
    %7323 = vmatpush1.bf16.msra.mxu0 %v4358
    %7324 = vmatprep.subr.bf16.mxu0 %v4363
    %7325 = vmatpush1.bf16.msra.mxu0 %v4362
    %7326 = vmatprep.subr.bf16.mxu0 %v4367
    %7327 = vmatpush1.bf16.msra.mxu0 %v4366
    %7328 = vmatprep.subr.bf16.mxu0 %v4371
    %7329 = vmatpush1.bf16.msra.mxu0 %v4370
    %7330 = vmatprep.subr.bf16.mxu0 %v4375
    %7331 = vmatpush1.bf16.msra.mxu0 %v4374
    %7332 = vmatprep.subr.bf16.mxu0 %v4379
    %7333 = vmatpush1.bf16.msra.mxu0 %v4378
    %7334 = vmatprep.subr.bf16.mxu0 %v4383
    %7335 = vmatpush1.bf16.msra.mxu0 %v4382
    %7336 = vmatprep.subr.bf16.mxu0 %v4387
    %7337 = vmatpush1.bf16.msra.mxu0 %v4386
    %7338 = vmatprep.subr.bf16.mxu0 %v4391
    %7339 = vmatpush1.bf16.msra.mxu0 %v4390
    %7340 = vmatprep.subr.bf16.mxu0 %v4395
    %7341 = vmatpush1.bf16.msra.mxu0 %v4394
    %7342 = vmatprep.subr.bf16.mxu0 %v4399
    %7343 = vmatpush1.bf16.msra.mxu0 %v4398
    %7344 = vmatprep.subr.bf16.mxu0 %v4403
    %7345 = vmatpush1.bf16.msra.mxu0 %v4402
    %7346 = vmatprep.subr.bf16.mxu0 %v4407
    %7347 = vmatpush1.bf16.msra.mxu0 %v4406
    %7348 = vmatprep.subr.bf16.mxu0 %v4411
    %7349 = vmatpush1.bf16.msra.mxu0 %v4410
    %7350 = vmatprep.subr.bf16.mxu0 %v4415
    %7351 = vmatpush1.bf16.msra.mxu0 %v4414
    %7352 = vmatprep.subr.bf16.mxu0 %v4419
    %7353 = vmatpush1.bf16.msra.mxu0 %v4418
    %7354 = vmatprep.mubr.bf16.mxu0 %v7112
    %7355 = vmatmul.mubr.bf16.gmra.mrb[0].mxu0 %v7111
    %v7356 = vpop.f32.mrb[0].mxu0
    %v7357 = vadd.f32 %v7316, %v7356
    %v7358 = vpop.f32.mrb[0].mxu0
    %v7359 = vadd.f32 %v7318, %v7358
    %v7360 = vpop.f32.mrb[0].mxu0
    %v7361 = vpop.f32.mrb[0].mxu0
    %7362 = vdwg.mxu0
    %7363 = vmatprep.subr.bf16.mxu0 %v4423
    %7364 = vmatpush1.bf16.msra.mxu0 %v4422
    %7365 = vmatprep.subr.bf16.mxu0 %v4427
    %7366 = vmatpush1.bf16.msra.mxu0 %v4426
    %7367 = vmatprep.subr.bf16.mxu0 %v4431
    %7368 = vmatpush1.bf16.msra.mxu0 %v4430
    %7369 = vmatprep.subr.bf16.mxu0 %v4435
    %7370 = vmatpush1.bf16.msra.mxu0 %v4434
    %7371 = vmatprep.subr.bf16.mxu0 %v4439
    %7372 = vmatpush1.bf16.msra.mxu0 %v4438
    %7373 = vmatprep.subr.bf16.mxu0 %v4443
    %7374 = vmatpush1.bf16.msra.mxu0 %v4442
    %7375 = vmatprep.subr.bf16.mxu0 %v4447
    %7376 = vmatpush1.bf16.msra.mxu0 %v4446
    %7377 = vmatprep.subr.bf16.mxu0 %v4451
    %7378 = vmatpush1.bf16.msra.mxu0 %v4450
    %7379 = vmatprep.subr.bf16.mxu0 %v4455
    %7380 = vmatpush1.bf16.msra.mxu0 %v4454
    %7381 = vmatprep.subr.bf16.mxu0 %v4459
    %7382 = vmatpush1.bf16.msra.mxu0 %v4458
    %7383 = vmatprep.subr.bf16.mxu0 %v4463
    %7384 = vmatpush1.bf16.msra.mxu0 %v4462
    %7385 = vmatprep.subr.bf16.mxu0 %v4467
    %7386 = vmatpush1.bf16.msra.mxu0 %v4466
    %7387 = vmatprep.subr.bf16.mxu0 %v4471
    %7388 = vmatpush1.bf16.msra.mxu0 %v4470
    %7389 = vmatprep.subr.bf16.mxu0 %v4475
    %7390 = vmatpush1.bf16.msra.mxu0 %v4474
    %7391 = vmatprep.subr.bf16.mxu0 %v4479
    %7392 = vmatpush1.bf16.msra.mxu0 %v4478
    %7393 = vmatprep.subr.bf16.mxu0 %v4483
    %7394 = vmatpush1.bf16.msra.mxu0 %v4482
    %7395 = vmatprep.mubr.bf16.mxu0 %v7114
    %7396 = vmatmul.mubr.bf16.gmra.mrb[0].mxu0 %v7113
    %v7397 = vpop.f32.mrb[0].mxu0
    %v7398 = vadd.f32 %v7357, %v7397
    %v7399 = vpop.f32.mrb[0].mxu0
    %v7400 = vadd.f32 %v7359, %v7399
    %v7401 = vpop.f32.mrb[0].mxu0
    %v7402 = vpop.f32.mrb[0].mxu0
    %7403 = vdwg.mxu0
    %7404 = vmatprep.subr.bf16.mxu0 %v4487
    %7405 = vmatpush1.bf16.msra.mxu0 %v4486
    %7406 = vmatprep.subr.bf16.mxu0 %v4491
    %7407 = vmatpush1.bf16.msra.mxu0 %v4490
    %7408 = vmatprep.subr.bf16.mxu0 %v4495
    %7409 = vmatpush1.bf16.msra.mxu0 %v4494
    %7410 = vmatprep.subr.bf16.mxu0 %v4499
    %7411 = vmatpush1.bf16.msra.mxu0 %v4498
    %7412 = vmatprep.subr.bf16.mxu0 %v4503
    %7413 = vmatpush1.bf16.msra.mxu0 %v4502
    %7414 = vmatprep.subr.bf16.mxu0 %v4507
    %7415 = vmatpush1.bf16.msra.mxu0 %v4506
    %7416 = vmatprep.subr.bf16.mxu0 %v4511
    %7417 = vmatpush1.bf16.msra.mxu0 %v4510
    %7418 = vmatprep.subr.bf16.mxu0 %v4515
    %7419 = vmatpush1.bf16.msra.mxu0 %v4514
    %7420 = vmatprep.subr.bf16.mxu0 %v4519
    %7421 = vmatpush1.bf16.msra.mxu0 %v4518
    %7422 = vmatprep.subr.bf16.mxu0 %v4523
    %7423 = vmatpush1.bf16.msra.mxu0 %v4522
    %7424 = vmatprep.subr.bf16.mxu0 %v4527
    %7425 = vmatpush1.bf16.msra.mxu0 %v4526
    %7426 = vmatprep.subr.bf16.mxu0 %v4531
    %7427 = vmatpush1.bf16.msra.mxu0 %v4530
    %7428 = vmatprep.subr.bf16.mxu0 %v4535
    %7429 = vmatpush1.bf16.msra.mxu0 %v4534
    %7430 = vmatprep.subr.bf16.mxu0 %v4539
    %7431 = vmatpush1.bf16.msra.mxu0 %v4538
    %7432 = vmatprep.subr.bf16.mxu0 %v4543
    %7433 = vmatpush1.bf16.msra.mxu0 %v4542
    %7434 = vmatprep.subr.bf16.mxu0 %v4547
    %7435 = vmatpush1.bf16.msra.mxu0 %v4546
    %7436 = vmatprep.mubr.bf16.mxu0 %v7116
    %7437 = vmatmul.mubr.bf16.gmra.mrb[0].mxu0 %v7115
    %v7438 = vpop.f32.mrb[0].mxu0
    %v7439 = vadd.f32 %v7398, %v7438
    %v7440 = vpop.f32.mrb[0].mxu0
    %v7441 = vadd.f32 %v7400, %v7440
    %v7442 = vpop.f32.mrb[0].mxu0
    %v7443 = vpop.f32.mrb[0].mxu0
    %7444 = vdwg.mxu0
    %7445 = vmatprep.subr.bf16.mxu0 %v4041
    %7446 = vmatpush1.bf16.msra.mxu0 %v4040
    %7447 = vmatprep.subr.bf16.mxu0 %v4045
    %7448 = vmatpush1.bf16.msra.mxu0 %v4044
    %7449 = vmatprep.subr.bf16.mxu0 %v4049
    %7450 = vmatpush1.bf16.msra.mxu0 %v4048
    %7451 = vmatprep.subr.bf16.mxu0 %v4053
    %7452 = vmatpush1.bf16.msra.mxu0 %v4052
    %7453 = vmatprep.subr.bf16.mxu0 %v4057
    %7454 = vmatpush1.bf16.msra.mxu0 %v4056
    %7455 = vmatprep.subr.bf16.mxu0 %v4061
    %7456 = vmatpush1.bf16.msra.mxu0 %v4060
    %7457 = vmatprep.subr.bf16.mxu0 %v4065
    %7458 = vmatpush1.bf16.msra.mxu0 %v4064
    %7459 = vmatprep.subr.bf16.mxu0 %v4069
    %7460 = vmatpush1.bf16.msra.mxu0 %v4068
    %7461 = vmatprep.subr.bf16.mxu0 %v4073
    %7462 = vmatpush1.bf16.msra.mxu0 %v4072
    %7463 = vmatprep.subr.bf16.mxu0 %v4077
    %7464 = vmatpush1.bf16.msra.mxu0 %v4076
    %7465 = vmatprep.subr.bf16.mxu0 %v4081
    %7466 = vmatpush1.bf16.msra.mxu0 %v4080
    %7467 = vmatprep.subr.bf16.mxu0 %v4085
    %7468 = vmatpush1.bf16.msra.mxu0 %v4084
    %7469 = vmatprep.subr.bf16.mxu0 %v4089
    %7470 = vmatpush1.bf16.msra.mxu0 %v4088
    %7471 = vmatprep.subr.bf16.mxu0 %v4093
    %7472 = vmatpush1.bf16.msra.mxu0 %v4092
    %7473 = vmatprep.subr.bf16.mxu0 %v4097
    %7474 = vmatpush1.bf16.msra.mxu0 %v4096
    %7475 = vmatprep.subr.bf16.mxu0 %v4101
    %7476 = vmatpush1.bf16.msra.mxu0 %v4100
    %7477 = vmatprep.mubr.bf16.mxu0 %v7102
    %7478 = vmatmul.mubr.bf16.gmra.mrb[0].mxu0 %v7101
    %v7479 = vpop.f32.mrb[0].mxu0
    %v7480 = vadd.f32 0.0, %v7479
    %v7481 = vpop.f32.mrb[0].mxu0
    %v7482 = vadd.f32 0.0, %v7481
    %v7483 = vpop.f32.mrb[0].mxu0
    %v7484 = vpop.f32.mrb[0].mxu0
    %7485 = vdwg.mxu0
    %7486 = vmatprep.subr.bf16.mxu0 %v4105
    %7487 = vmatpush1.bf16.msra.mxu0 %v4104
    %7488 = vmatprep.subr.bf16.mxu0 %v4109
    %7489 = vmatpush1.bf16.msra.mxu0 %v4108
    %7490 = vmatprep.subr.bf16.mxu0 %v4113
    %7491 = vmatpush1.bf16.msra.mxu0 %v4112
    %7492 = vmatprep.subr.bf16.mxu0 %v4117
    %7493 = vmatpush1.bf16.msra.mxu0 %v4116
    %7494 = vmatprep.subr.bf16.mxu0 %v4121
    %7495 = vmatpush1.bf16.msra.mxu0 %v4120
    %7496 = vmatprep.subr.bf16.mxu0 %v4125
    %7497 = vmatpush1.bf16.msra.mxu0 %v4124
    %7498 = vmatprep.subr.bf16.mxu0 %v4129
    %7499 = vmatpush1.bf16.msra.mxu0 %v4128
    %7500 = vmatprep.subr.bf16.mxu0 %v4133
    %7501 = vmatpush1.bf16.msra.mxu0 %v4132
    %7502 = vmatprep.subr.bf16.mxu0 %v4137
    %7503 = vmatpush1.bf16.msra.mxu0 %v4136
    %7504 = vmatprep.subr.bf16.mxu0 %v4141
    %7505 = vmatpush1.bf16.msra.mxu0 %v4140
    %7506 = vmatprep.subr.bf16.mxu0 %v4145
    %7507 = vmatpush1.bf16.msra.mxu0 %v4144
    %7508 = vmatprep.subr.bf16.mxu0 %v4149
    %7509 = vmatpush1.bf16.msra.mxu0 %v4148
    %7510 = vmatprep.subr.bf16.mxu0 %v4153
    %7511 = vmatpush1.bf16.msra.mxu0 %v4152
    %7512 = vmatprep.subr.bf16.mxu0 %v4157
    %7513 = vmatpush1.bf16.msra.mxu0 %v4156
    %7514 = vmatprep.subr.bf16.mxu0 %v4161
    %7515 = vmatpush1.bf16.msra.mxu0 %v4160
    %7516 = vmatprep.subr.bf16.mxu0 %v4165
    %7517 = vmatpush1.bf16.msra.mxu0 %v4164
    %7518 = vmatprep.mubr.bf16.mxu0 %v7104
    %7519 = vmatmul.mubr.bf16.gmra.mrb[0].mxu0 %v7103
    %v7520 = vpop.f32.mrb[0].mxu0
    %v7521 = vadd.f32 %v7480, %v7520
    %v7522 = vpop.f32.mrb[0].mxu0
    %v7523 = vadd.f32 %v7482, %v7522
    %v7524 = vpop.f32.mrb[0].mxu0
    %v7525 = vpop.f32.mrb[0].mxu0
    %7526 = vdwg.mxu0
    %7527 = vmatprep.subr.bf16.mxu0 %v4169
    %7528 = vmatpush1.bf16.msra.mxu0 %v4168
    %7529 = vmatprep.subr.bf16.mxu0 %v4173
    %7530 = vmatpush1.bf16.msra.mxu0 %v4172
    %7531 = vmatprep.subr.bf16.mxu0 %v4177
    %7532 = vmatpush1.bf16.msra.mxu0 %v4176
    %7533 = vmatprep.subr.bf16.mxu0 %v4181
    %7534 = vmatpush1.bf16.msra.mxu0 %v4180
    %7535 = vmatprep.subr.bf16.mxu0 %v4185
    %7536 = vmatpush1.bf16.msra.mxu0 %v4184
    %7537 = vmatprep.subr.bf16.mxu0 %v4189
    %7538 = vmatpush1.bf16.msra.mxu0 %v4188
    %7539 = vmatprep.subr.bf16.mxu0 %v4193
    %7540 = vmatpush1.bf16.msra.mxu0 %v4192
    %7541 = vmatprep.subr.bf16.mxu0 %v4197
    %7542 = vmatpush1.bf16.msra.mxu0 %v4196
    %7543 = vmatprep.subr.bf16.mxu0 %v4201
    %7544 = vmatpush1.bf16.msra.mxu0 %v4200
    %7545 = vmatprep.subr.bf16.mxu0 %v4205
    %7546 = vmatpush1.bf16.msra.mxu0 %v4204
    %7547 = vmatprep.subr.bf16.mxu0 %v4209
    %7548 = vmatpush1.bf16.msra.mxu0 %v4208
    %7549 = vmatprep.subr.bf16.mxu0 %v4213
    %7550 = vmatpush1.bf16.msra.mxu0 %v4212
    %7551 = vmatprep.subr.bf16.mxu0 %v4217
    %7552 = vmatpush1.bf16.msra.mxu0 %v4216
    %7553 = vmatprep.subr.bf16.mxu0 %v4221
    %7554 = vmatpush1.bf16.msra.mxu0 %v4220
    %7555 = vmatprep.subr.bf16.mxu0 %v4225
    %7556 = vmatpush1.bf16.msra.mxu0 %v4224
    %7557 = vmatprep.subr.bf16.mxu0 %v4229
    %7558 = vmatpush1.bf16.msra.mxu0 %v4228
    %7559 = vmatprep.mubr.bf16.mxu0 %v7106
    %7560 = vmatmul.mubr.bf16.gmra.mrb[0].mxu0 %v7105
    %v7561 = vpop.f32.mrb[0].mxu0
    %v7562 = vadd.f32 %v7521, %v7561
    %v7563 = vpop.f32.mrb[0].mxu0
    %v7564 = vadd.f32 %v7523, %v7563
    %v7565 = vpop.f32.mrb[0].mxu0
    %v7566 = vpop.f32.mrb[0].mxu0
    %7567 = vdwg.mxu0
    %7568 = vmatprep.subr.bf16.mxu0 %v4233
    %7569 = vmatpush1.bf16.msra.mxu0 %v4232
    %7570 = vmatprep.subr.bf16.mxu0 %v4237
    %7571 = vmatpush1.bf16.msra.mxu0 %v4236
    %7572 = vmatprep.subr.bf16.mxu0 %v4241
    %7573 = vmatpush1.bf16.msra.mxu0 %v4240
    %7574 = vmatprep.subr.bf16.mxu0 %v4245
    %7575 = vmatpush1.bf16.msra.mxu0 %v4244
    %7576 = vmatprep.subr.bf16.mxu0 %v4249
    %7577 = vmatpush1.bf16.msra.mxu0 %v4248
    %7578 = vmatprep.subr.bf16.mxu0 %v4253
    %7579 = vmatpush1.bf16.msra.mxu0 %v4252
    %7580 = vmatprep.subr.bf16.mxu0 %v4257
    %7581 = vmatpush1.bf16.msra.mxu0 %v4256
    %7582 = vmatprep.subr.bf16.mxu0 %v4261
    %7583 = vmatpush1.bf16.msra.mxu0 %v4260
    %7584 = vmatprep.subr.bf16.mxu0 %v4265
    %7585 = vmatpush1.bf16.msra.mxu0 %v4264
    %7586 = vmatprep.subr.bf16.mxu0 %v4269
    %7587 = vmatpush1.bf16.msra.mxu0 %v4268
    %7588 = vmatprep.subr.bf16.mxu0 %v4273
    %7589 = vmatpush1.bf16.msra.mxu0 %v4272
    %7590 = vmatprep.subr.bf16.mxu0 %v4277
    %7591 = vmatpush1.bf16.msra.mxu0 %v4276
    %7592 = vmatprep.subr.bf16.mxu0 %v4281
    %7593 = vmatpush1.bf16.msra.mxu0 %v4280
    %7594 = vmatprep.subr.bf16.mxu0 %v4285
    %7595 = vmatpush1.bf16.msra.mxu0 %v4284
    %7596 = vmatprep.subr.bf16.mxu0 %v4289
    %7597 = vmatpush1.bf16.msra.mxu0 %v4288
    %7598 = vmatprep.subr.bf16.mxu0 %v4293
    %7599 = vmatpush1.bf16.msra.mxu0 %v4292
    %7600 = vmatprep.mubr.bf16.mxu0 %v7108
    %7601 = vmatmul.mubr.bf16.gmra.mrb[0].mxu0 %v7107
    %v7602 = vpop.f32.mrb[0].mxu0
    %v7603 = vadd.f32 %v7562, %v7602
    %v7604 = vpop.f32.mrb[0].mxu0
    %v7605 = vadd.f32 %v7564, %v7604
    %v7606 = vpop.f32.mrb[0].mxu0
    %v7607 = vpop.f32.mrb[0].mxu0
    %7608 = vdwg.mxu0
    %7609 = vmatprep.subr.bf16.mxu0 %v4297
    %7610 = vmatpush1.bf16.msra.mxu0 %v4296
    %7611 = vmatprep.subr.bf16.mxu0 %v4301
    %7612 = vmatpush1.bf16.msra.mxu0 %v4300
    %7613 = vmatprep.subr.bf16.mxu0 %v4305
    %7614 = vmatpush1.bf16.msra.mxu0 %v4304
    %7615 = vmatprep.subr.bf16.mxu0 %v4309
    %7616 = vmatpush1.bf16.msra.mxu0 %v4308
    %7617 = vmatprep.subr.bf16.mxu0 %v4313
    %7618 = vmatpush1.bf16.msra.mxu0 %v4312
    %7619 = vmatprep.subr.bf16.mxu0 %v4317
    %7620 = vmatpush1.bf16.msra.mxu0 %v4316
    %7621 = vmatprep.subr.bf16.mxu0 %v4321
    %7622 = vmatpush1.bf16.msra.mxu0 %v4320
    %7623 = vmatprep.subr.bf16.mxu0 %v4325
    %7624 = vmatpush1.bf16.msra.mxu0 %v4324
    %7625 = vmatprep.subr.bf16.mxu0 %v4329
    %7626 = vmatpush1.bf16.msra.mxu0 %v4328
    %7627 = vmatprep.subr.bf16.mxu0 %v4333
    %7628 = vmatpush1.bf16.msra.mxu0 %v4332
    %7629 = vmatprep.subr.bf16.mxu0 %v4337
    %7630 = vmatpush1.bf16.msra.mxu0 %v4336
    %7631 = vmatprep.subr.bf16.mxu0 %v4341
    %7632 = vmatpush1.bf16.msra.mxu0 %v4340
    %7633 = vmatprep.subr.bf16.mxu0 %v4345
    %7634 = vmatpush1.bf16.msra.mxu0 %v4344
    %7635 = vmatprep.subr.bf16.mxu0 %v4349
    %7636 = vmatpush1.bf16.msra.mxu0 %v4348
    %7637 = vmatprep.subr.bf16.mxu0 %v4353
    %7638 = vmatpush1.bf16.msra.mxu0 %v4352
    %7639 = vmatprep.subr.bf16.mxu0 %v4357
    %7640 = vmatpush1.bf16.msra.mxu0 %v4356
    %7641 = vmatprep.mubr.bf16.mxu0 %v7110
    %7642 = vmatmul.mubr.bf16.gmra.mrb[0].mxu0 %v7109
    %v7643 = vpop.f32.mrb[0].mxu0
    %v7644 = vadd.f32 %v7603, %v7643
    %v7645 = vpop.f32.mrb[0].mxu0
    %v7646 = vadd.f32 %v7605, %v7645
    %v7647 = vpop.f32.mrb[0].mxu0
    %v7648 = vpop.f32.mrb[0].mxu0
    %7649 = vdwg.mxu0
    %7650 = vmatprep.subr.bf16.mxu0 %v4361
    %7651 = vmatpush1.bf16.msra.mxu0 %v4360
    %7652 = vmatprep.subr.bf16.mxu0 %v4365
    %7653 = vmatpush1.bf16.msra.mxu0 %v4364
    %7654 = vmatprep.subr.bf16.mxu0 %v4369
    %7655 = vmatpush1.bf16.msra.mxu0 %v4368
    %7656 = vmatprep.subr.bf16.mxu0 %v4373
    %7657 = vmatpush1.bf16.msra.mxu0 %v4372
    %7658 = vmatprep.subr.bf16.mxu0 %v4377
    %7659 = vmatpush1.bf16.msra.mxu0 %v4376
    %7660 = vmatprep.subr.bf16.mxu0 %v4381
    %7661 = vmatpush1.bf16.msra.mxu0 %v4380
    %7662 = vmatprep.subr.bf16.mxu0 %v4385
    %7663 = vmatpush1.bf16.msra.mxu0 %v4384
    %7664 = vmatprep.subr.bf16.mxu0 %v4389
    %7665 = vmatpush1.bf16.msra.mxu0 %v4388
    %7666 = vmatprep.subr.bf16.mxu0 %v4393
    %7667 = vmatpush1.bf16.msra.mxu0 %v4392
    %7668 = vmatprep.subr.bf16.mxu0 %v4397
    %7669 = vmatpush1.bf16.msra.mxu0 %v4396
    %7670 = vmatprep.subr.bf16.mxu0 %v4401
    %7671 = vmatpush1.bf16.msra.mxu0 %v4400
    %7672 = vmatprep.subr.bf16.mxu0 %v4405
    %7673 = vmatpush1.bf16.msra.mxu0 %v4404
    %7674 = vmatprep.subr.bf16.mxu0 %v4409
    %7675 = vmatpush1.bf16.msra.mxu0 %v4408
    %7676 = vmatprep.subr.bf16.mxu0 %v4413
    %7677 = vmatpush1.bf16.msra.mxu0 %v4412
    %7678 = vmatprep.subr.bf16.mxu0 %v4417
    %7679 = vmatpush1.bf16.msra.mxu0 %v4416
    %7680 = vmatprep.subr.bf16.mxu0 %v4421
    %7681 = vmatpush1.bf16.msra.mxu0 %v4420
    %7682 = vmatprep.mubr.bf16.mxu0 %v7112
    %7683 = vmatmul.mubr.bf16.gmra.mrb[0].mxu0 %v7111
    %v7684 = vpop.f32.mrb[0].mxu0
    %v7685 = vadd.f32 %v7644, %v7684
    %v7686 = vpop.f32.mrb[0].mxu0
    %v7687 = vadd.f32 %v7646, %v7686
    %v7688 = vpop.f32.mrb[0].mxu0
    %v7689 = vpop.f32.mrb[0].mxu0
    %7690 = vdwg.mxu0
    %7691 = vmatprep.subr.bf16.mxu0 %v4425
    %7692 = vmatpush1.bf16.msra.mxu0 %v4424
    %7693 = vmatprep.subr.bf16.mxu0 %v4429
    %7694 = vmatpush1.bf16.msra.mxu0 %v4428
    %7695 = vmatprep.subr.bf16.mxu0 %v4433
    %7696 = vmatpush1.bf16.msra.mxu0 %v4432
    %7697 = vmatprep.subr.bf16.mxu0 %v4437
    %7698 = vmatpush1.bf16.msra.mxu0 %v4436
    %7699 = vmatprep.subr.bf16.mxu0 %v4441
    %7700 = vmatpush1.bf16.msra.mxu0 %v4440
    %7701 = vmatprep.subr.bf16.mxu0 %v4445
    %7702 = vmatpush1.bf16.msra.mxu0 %v4444
    %7703 = vmatprep.subr.bf16.mxu0 %v4449
    %7704 = vmatpush1.bf16.msra.mxu0 %v4448
    %7705 = vmatprep.subr.bf16.mxu0 %v4453
    %7706 = vmatpush1.bf16.msra.mxu0 %v4452
    %7707 = vmatprep.subr.bf16.mxu0 %v4457
    %7708 = vmatpush1.bf16.msra.mxu0 %v4456
    %7709 = vmatprep.subr.bf16.mxu0 %v4461
    %7710 = vmatpush1.bf16.msra.mxu0 %v4460
    %7711 = vmatprep.subr.bf16.mxu0 %v4465
    %7712 = vmatpush1.bf16.msra.mxu0 %v4464
    %7713 = vmatprep.subr.bf16.mxu0 %v4469
    %7714 = vmatpush1.bf16.msra.mxu0 %v4468
    %7715 = vmatprep.subr.bf16.mxu0 %v4473
    %7716 = vmatpush1.bf16.msra.mxu0 %v4472
    %7717 = vmatprep.subr.bf16.mxu0 %v4477
    %7718 = vmatpush1.bf16.msra.mxu0 %v4476
    %7719 = vmatprep.subr.bf16.mxu0 %v4481
    %7720 = vmatpush1.bf16.msra.mxu0 %v4480
    %7721 = vmatprep.subr.bf16.mxu0 %v4485
    %7722 = vmatpush1.bf16.msra.mxu0 %v4484
    %7723 = vmatprep.mubr.bf16.mxu0 %v7114
    %7724 = vmatmul.mubr.bf16.gmra.mrb[0].mxu0 %v7113
    %v7725 = vpop.f32.mrb[0].mxu0
    %v7726 = vadd.f32 %v7685, %v7725
    %v7727 = vpop.f32.mrb[0].mxu0
    %v7728 = vadd.f32 %v7687, %v7727
    %v7729 = vpop.f32.mrb[0].mxu0
    %v7730 = vpop.f32.mrb[0].mxu0
    %7731 = vdwg.mxu0
    %7732 = vmatprep.subr.bf16.mxu0 %v4489
    %7733 = vmatpush1.bf16.msra.mxu0 %v4488
    %7734 = vmatprep.subr.bf16.mxu0 %v4493
    %7735 = vmatpush1.bf16.msra.mxu0 %v4492
    %7736 = vmatprep.subr.bf16.mxu0 %v4497
    %7737 = vmatpush1.bf16.msra.mxu0 %v4496
    %7738 = vmatprep.subr.bf16.mxu0 %v4501
    %7739 = vmatpush1.bf16.msra.mxu0 %v4500
    %7740 = vmatprep.subr.bf16.mxu0 %v4505
    %7741 = vmatpush1.bf16.msra.mxu0 %v4504
    %7742 = vmatprep.subr.bf16.mxu0 %v4509
    %7743 = vmatpush1.bf16.msra.mxu0 %v4508
    %7744 = vmatprep.subr.bf16.mxu0 %v4513
    %7745 = vmatpush1.bf16.msra.mxu0 %v4512
    %7746 = vmatprep.subr.bf16.mxu0 %v4517
    %7747 = vmatpush1.bf16.msra.mxu0 %v4516
    %7748 = vmatprep.subr.bf16.mxu0 %v4521
    %7749 = vmatpush1.bf16.msra.mxu0 %v4520
    %7750 = vmatprep.subr.bf16.mxu0 %v4525
    %7751 = vmatpush1.bf16.msra.mxu0 %v4524
    %7752 = vmatprep.subr.bf16.mxu0 %v4529
    %7753 = vmatpush1.bf16.msra.mxu0 %v4528
    %7754 = vmatprep.subr.bf16.mxu0 %v4533
    %7755 = vmatpush1.bf16.msra.mxu0 %v4532
    %7756 = vmatprep.subr.bf16.mxu0 %v4537
    %7757 = vmatpush1.bf16.msra.mxu0 %v4536
    %7758 = vmatprep.subr.bf16.mxu0 %v4541
    %7759 = vmatpush1.bf16.msra.mxu0 %v4540
    %7760 = vmatprep.subr.bf16.mxu0 %v4545
    %7761 = vmatpush1.bf16.msra.mxu0 %v4544
    %7762 = vmatprep.subr.bf16.mxu0 %v4549
    %7763 = vmatpush1.bf16.msra.mxu0 %v4548
    %7764 = vmatprep.mubr.bf16.mxu0 %v7116
    %7765 = vmatmul.mubr.bf16.gmra.mrb[0].mxu0 %v7115
    %v7766 = vpop.f32.mrb[0].mxu0
    %v7767 = vadd.f32 %v7726, %v7766
    %v7768 = vpop.f32.mrb[0].mxu0
    %v7769 = vadd.f32 %v7728, %v7768
    %v7770 = vpop.f32.mrb[0].mxu0
    %v7771 = vpop.f32.mrb[0].mxu0
    %7772 = vdwg.mxu0
    %v7773 = vadd.f32 %v6887, %v7439
    %v7774 = vadd.f32 %v6888, %v7441
    %v7775 = vadd.f32 %v6889, %v7767
    %v7776 = vadd.f32 %v6890, %v7769
    %vm7777 = vcmp.ge.f32.partialorder %v7773, 0.5
    %vm7778 = vcmp.ge.f32.partialorder %v7774, 0.5
    %vm7779 = vcmp.ge.f32.partialorder %v7775, 0.5
    %vm7780 = vcmp.ge.f32.partialorder %v7776, 0.5
    %v7781 = vsel %vm7777, 0.0, %v7773
    %v7782 = vsel %vm7778, 0.0, %v7774
    %v7783 = vsel %vm7779, 0.0, %v7775
    %v7784 = vsel %vm7780, 0.0, %v7776
    %v7785 = vsel %vm7777, 1, 0
    %v7786 = vsel %vm7778, 1, 0
    %v7787 = vsel %vm7779, 1, 0
    %v7788 = vsel %vm7780, 1, 0
    %v7789 = vcvt.s32.f32 %v7785
    %v7790 = vcvt.s32.f32 %v7786
    %v7791 = vcvt.s32.f32 %v7787
    %v7792 = vcvt.s32.f32 %v7788
    %v7793 = vpack.c.bf16 %v7789, %v7789
    %v7794 = vpack.c.bf16 %v7790, %v7790
    %v7795 = vpack.c.bf16 %v7791, %v7791
    %v7796 = vpack.c.bf16 %v7792, %v7792
    %7797 = vmatprep.subr.bf16.mxu0 0
    %7798 = vmatpush1.bf16.msra.mxu0 %v5930
    %7799 = vmatprep.subr.bf16.mxu0 0
    %7800 = vmatpush1.bf16.msra.mxu0 %v5931
    %7801 = vmatprep.subr.bf16.mxu0 0
    %7802 = vmatpush1.bf16.msra.mxu0 %v5932
    %7803 = vmatprep.subr.bf16.mxu0 0
    %7804 = vmatpush1.bf16.msra.mxu0 %v5933
    %7805 = vmatprep.subr.bf16.mxu0 0
    %7806 = vmatpush1.bf16.msra.mxu0 %v5934
    %7807 = vmatprep.subr.bf16.mxu0 0
    %7808 = vmatpush1.bf16.msra.mxu0 %v5935
    %7809 = vmatprep.subr.bf16.mxu0 0
    %7810 = vmatpush1.bf16.msra.mxu0 %v5936
    %7811 = vmatprep.subr.bf16.mxu0 0
    %7812 = vmatpush1.bf16.msra.mxu0 %v5937
    %7813 = vmatprep.subr.bf16.mxu0 0
    %7814 = vmatpush1.bf16.msra.mxu0 %v5938
    %7815 = vmatprep.subr.bf16.mxu0 0
    %7816 = vmatpush1.bf16.msra.mxu0 %v5939
    %7817 = vmatprep.subr.bf16.mxu0 0
    %7818 = vmatpush1.bf16.msra.mxu0 %v5940
    %7819 = vmatprep.subr.bf16.mxu0 0
    %7820 = vmatpush1.bf16.msra.mxu0 %v5941
    %7821 = vmatprep.subr.bf16.mxu0 0
    %7822 = vmatpush1.bf16.msra.mxu0 %v5942
    %7823 = vmatprep.subr.bf16.mxu0 0
    %7824 = vmatpush1.bf16.msra.mxu0 %v5943
    %7825 = vmatprep.subr.bf16.mxu0 0
    %7826 = vmatpush1.bf16.msra.mxu0 %v5944
    %7827 = vmatprep.subr.bf16.mxu0 0
    %7828 = vmatpush1.bf16.msra.mxu0 %v5945
    %7829 = vmatprep.mubr.bf16.mxu0 %v7794
    %7830 = vmatmul.mubr.bf16.gmra.mrb[0].mxu0 %v7793
    %v7831 = vpop.f32.mrb[0].mxu0
    %v7832 = vadd.f32 0.0, %v7831
    %v7833 = vpop.f32.mrb[0].mxu0
    %v7834 = vpop.f32.mrb[0].mxu0
    %v7835 = vpop.f32.mrb[0].mxu0
    %7836 = vdwg.mxu0
    %7837 = vmatprep.subr.bf16.mxu0 0
    %7838 = vmatpush1.bf16.msra.mxu0 %v5946
    %7839 = vmatprep.subr.bf16.mxu0 0
    %7840 = vmatpush1.bf16.msra.mxu0 %v5947
    %7841 = vmatprep.subr.bf16.mxu0 0
    %7842 = vmatpush1.bf16.msra.mxu0 %v5948
    %7843 = vmatprep.subr.bf16.mxu0 0
    %7844 = vmatpush1.bf16.msra.mxu0 %v5949
    %7845 = vmatprep.subr.bf16.mxu0 0
    %7846 = vmatpush1.bf16.msra.mxu0 %v5950
    %7847 = vmatprep.subr.bf16.mxu0 0
    %7848 = vmatpush1.bf16.msra.mxu0 %v5951
    %7849 = vmatprep.subr.bf16.mxu0 0
    %7850 = vmatpush1.bf16.msra.mxu0 %v5952
    %7851 = vmatprep.subr.bf16.mxu0 0
    %7852 = vmatpush1.bf16.msra.mxu0 %v5953
    %7853 = vmatprep.subr.bf16.mxu0 0
    %7854 = vmatpush1.bf16.msra.mxu0 %v5954
    %7855 = vmatprep.subr.bf16.mxu0 0
    %7856 = vmatpush1.bf16.msra.mxu0 %v5955
    %7857 = vmatprep.subr.bf16.mxu0 0
    %7858 = vmatpush1.bf16.msra.mxu0 %v5956
    %7859 = vmatprep.subr.bf16.mxu0 0
    %7860 = vmatpush1.bf16.msra.mxu0 %v5957
    %7861 = vmatprep.subr.bf16.mxu0 0
    %7862 = vmatpush1.bf16.msra.mxu0 %v5958
    %7863 = vmatprep.subr.bf16.mxu0 0
    %7864 = vmatpush1.bf16.msra.mxu0 %v5959
    %7865 = vmatprep.subr.bf16.mxu0 0
    %7866 = vmatpush1.bf16.msra.mxu0 %v5960
    %7867 = vmatprep.subr.bf16.mxu0 0
    %7868 = vmatpush1.bf16.msra.mxu0 %v5961
    %7869 = vmatprep.mubr.bf16.mxu0 %v7796
    %7870 = vmatmul.mubr.bf16.gmra.mrb[0].mxu0 %v7795
    %v7871 = vpop.f32.mrb[0].mxu0
    %v7872 = vadd.f32 %v7832, %v7871
    %v7873 = vpop.f32.mrb[0].mxu0
    %v7874 = vpop.f32.mrb[0].mxu0
    %v7875 = vpop.f32.mrb[0].mxu0
    %7876 = vdwg.mxu0
    %v7877 = vadd.f32 %v6985, %v7872
    %vm7878 = vcmp.ge.f32.partialorder %v7877, 0.5
    %v7879 = vsel %vm7878, 0.0, %v7877
    %v7880 = vsel %vm7878, 1, 0
    %v7881 = vcvt.s32.f32 %v7880
    %v7882 = vadd.f32 %v6988, %v7881
    %v7883 = vrot.slane %v1601, 6
    %v7884 = vrot.slane %v1603, 6
    %v7885 = vrot.slane %v1642, 6
    %v7886 = vrot.slane %v1644, 6
    %v7887 = vrot.slane %v1683, 6
    %v7888 = vrot.slane %v1685, 6
    %v7889 = vrot.slane %v1724, 6
    %v7890 = vrot.slane %v1726, 6
    %v7891 = vrot.slane %v1765, 6
    %v7892 = vrot.slane %v1767, 6
    %v7893 = vrot.slane %v1806, 6
    %v7894 = vrot.slane %v1808, 6
    %v7895 = vrot.slane %v1847, 6
    %v7896 = vrot.slane %v1849, 6
    %v7897 = vrot.slane %v1888, 6
    %v7898 = vrot.slane %v1890, 6
    %v7915 = vadd.f32 %v7053, %v7883
    %v7916 = vadd.f32 %v7054, %v7884
    %v7917 = vadd.f32 %v7055, %v7885
    %v7918 = vadd.f32 %v7056, %v7886
    %v7919 = vadd.f32 %v7057, %v7887
    %v7920 = vadd.f32 %v7058, %v7888
    %v7921 = vadd.f32 %v7059, %v7889
    %v7922 = vadd.f32 %v7060, %v7890
    %v7923 = vadd.f32 %v7061, %v7891
    %v7924 = vadd.f32 %v7062, %v7892
    %v7925 = vadd.f32 %v7063, %v7893
    %v7926 = vadd.f32 %v7064, %v7894
    %v7927 = vadd.f32 %v7065, %v7895
    %v7928 = vadd.f32 %v7066, %v7896
    %v7929 = vadd.f32 %v7067, %v7897
    %v7930 = vadd.f32 %v7068, %v7898
    %vm7931 = vcmp.ge.f32.partialorder %v7915, 0.5
    %vm7932 = vcmp.ge.f32.partialorder %v7916, 0.5
    %vm7933 = vcmp.ge.f32.partialorder %v7917, 0.5
    %vm7934 = vcmp.ge.f32.partialorder %v7918, 0.5
    %vm7935 = vcmp.ge.f32.partialorder %v7919, 0.5
    %vm7936 = vcmp.ge.f32.partialorder %v7920, 0.5
    %vm7937 = vcmp.ge.f32.partialorder %v7921, 0.5
    %vm7938 = vcmp.ge.f32.partialorder %v7922, 0.5
    %vm7939 = vcmp.ge.f32.partialorder %v7923, 0.5
    %vm7940 = vcmp.ge.f32.partialorder %v7924, 0.5
    %vm7941 = vcmp.ge.f32.partialorder %v7925, 0.5
    %vm7942 = vcmp.ge.f32.partialorder %v7926, 0.5
    %vm7943 = vcmp.ge.f32.partialorder %v7927, 0.5
    %vm7944 = vcmp.ge.f32.partialorder %v7928, 0.5
    %vm7945 = vcmp.ge.f32.partialorder %v7929, 0.5
    %vm7946 = vcmp.ge.f32.partialorder %v7930, 0.5
    %v7947 = vsel %vm7931, 1, 0
    %v7948 = vsel %vm7932, 1, 0
    %v7949 = vsel %vm7933, 1, 0
    %v7950 = vsel %vm7934, 1, 0
    %v7951 = vsel %vm7935, 1, 0
    %v7952 = vsel %vm7936, 1, 0
    %v7953 = vsel %vm7937, 1, 0
    %v7954 = vsel %vm7938, 1, 0
    %v7955 = vsel %vm7939, 1, 0
    %v7956 = vsel %vm7940, 1, 0
    %v7957 = vsel %vm7941, 1, 0
    %v7958 = vsel %vm7942, 1, 0
    %v7959 = vsel %vm7943, 1, 0
    %v7960 = vsel %vm7944, 1, 0
    %v7961 = vsel %vm7945, 1, 0
    %v7962 = vsel %vm7946, 1, 0
    %v7963 = vcvt.s32.f32 %v7947
    %v7964 = vcvt.s32.f32 %v7948
    %v7965 = vcvt.s32.f32 %v7949
    %v7966 = vcvt.s32.f32 %v7950
    %v7967 = vcvt.s32.f32 %v7951
    %v7968 = vcvt.s32.f32 %v7952
    %v7969 = vcvt.s32.f32 %v7953
    %v7970 = vcvt.s32.f32 %v7954
    %v7971 = vcvt.s32.f32 %v7955
    %v7972 = vcvt.s32.f32 %v7956
    %v7973 = vcvt.s32.f32 %v7957
    %v7974 = vcvt.s32.f32 %v7958
    %v7975 = vcvt.s32.f32 %v7959
    %v7976 = vcvt.s32.f32 %v7960
    %v7977 = vcvt.s32.f32 %v7961
    %v7978 = vcvt.s32.f32 %v7962
    %v7979 = vpack.c.bf16 %v7963, %v7963
    %v7980 = vpack.c.bf16 %v7964, %v7964
    %v7981 = vpack.c.bf16 %v7965, %v7965
    %v7982 = vpack.c.bf16 %v7966, %v7966
    %v7983 = vpack.c.bf16 %v7967, %v7967
    %v7984 = vpack.c.bf16 %v7968, %v7968
    %v7985 = vpack.c.bf16 %v7969, %v7969
    %v7986 = vpack.c.bf16 %v7970, %v7970
    %v7987 = vpack.c.bf16 %v7971, %v7971
    %v7988 = vpack.c.bf16 %v7972, %v7972
    %v7989 = vpack.c.bf16 %v7973, %v7973
    %v7990 = vpack.c.bf16 %v7974, %v7974
    %v7991 = vpack.c.bf16 %v7975, %v7975
    %v7992 = vpack.c.bf16 %v7976, %v7976
    %v7993 = vpack.c.bf16 %v7977, %v7977
    %v7994 = vpack.c.bf16 %v7978, %v7978
    %7995 = vmatprep.subr.bf16.mxu0 %v4039
    %7996 = vmatpush1.bf16.msra.mxu0 %v4038
    %7997 = vmatprep.subr.bf16.mxu0 %v4043
    %7998 = vmatpush1.bf16.msra.mxu0 %v4042
    %7999 = vmatprep.subr.bf16.mxu0 %v4047
    %8000 = vmatpush1.bf16.msra.mxu0 %v4046
    %8001 = vmatprep.subr.bf16.mxu0 %v4051
    %8002 = vmatpush1.bf16.msra.mxu0 %v4050
    %8003 = vmatprep.subr.bf16.mxu0 %v4055
    %8004 = vmatpush1.bf16.msra.mxu0 %v4054
    %8005 = vmatprep.subr.bf16.mxu0 %v4059
    %8006 = vmatpush1.bf16.msra.mxu0 %v4058
    %8007 = vmatprep.subr.bf16.mxu0 %v4063
    %8008 = vmatpush1.bf16.msra.mxu0 %v4062
    %8009 = vmatprep.subr.bf16.mxu0 %v4067
    %8010 = vmatpush1.bf16.msra.mxu0 %v4066
    %8011 = vmatprep.subr.bf16.mxu0 %v4071
    %8012 = vmatpush1.bf16.msra.mxu0 %v4070
    %8013 = vmatprep.subr.bf16.mxu0 %v4075
    %8014 = vmatpush1.bf16.msra.mxu0 %v4074
    %8015 = vmatprep.subr.bf16.mxu0 %v4079
    %8016 = vmatpush1.bf16.msra.mxu0 %v4078
    %8017 = vmatprep.subr.bf16.mxu0 %v4083
    %8018 = vmatpush1.bf16.msra.mxu0 %v4082
    %8019 = vmatprep.subr.bf16.mxu0 %v4087
    %8020 = vmatpush1.bf16.msra.mxu0 %v4086
    %8021 = vmatprep.subr.bf16.mxu0 %v4091
    %8022 = vmatpush1.bf16.msra.mxu0 %v4090
    %8023 = vmatprep.subr.bf16.mxu0 %v4095
    %8024 = vmatpush1.bf16.msra.mxu0 %v4094
    %8025 = vmatprep.subr.bf16.mxu0 %v4099
    %8026 = vmatpush1.bf16.msra.mxu0 %v4098
    %8027 = vmatprep.mubr.bf16.mxu0 %v7980
    %8028 = vmatmul.mubr.bf16.gmra.mrb[0].mxu0 %v7979
    %v8029 = vpop.f32.mrb[0].mxu0
    %v8030 = vadd.f32 0.0, %v8029
    %v8031 = vpop.f32.mrb[0].mxu0
    %v8032 = vadd.f32 0.0, %v8031
    %v8033 = vpop.f32.mrb[0].mxu0
    %v8034 = vpop.f32.mrb[0].mxu0
    %8035 = vdwg.mxu0
    %8036 = vmatprep.subr.bf16.mxu0 %v4103
    %8037 = vmatpush1.bf16.msra.mxu0 %v4102
    %8038 = vmatprep.subr.bf16.mxu0 %v4107
    %8039 = vmatpush1.bf16.msra.mxu0 %v4106
    %8040 = vmatprep.subr.bf16.mxu0 %v4111
    %8041 = vmatpush1.bf16.msra.mxu0 %v4110
    %8042 = vmatprep.subr.bf16.mxu0 %v4115
    %8043 = vmatpush1.bf16.msra.mxu0 %v4114
    %8044 = vmatprep.subr.bf16.mxu0 %v4119
    %8045 = vmatpush1.bf16.msra.mxu0 %v4118
    %8046 = vmatprep.subr.bf16.mxu0 %v4123
    %8047 = vmatpush1.bf16.msra.mxu0 %v4122
    %8048 = vmatprep.subr.bf16.mxu0 %v4127
    %8049 = vmatpush1.bf16.msra.mxu0 %v4126
    %8050 = vmatprep.subr.bf16.mxu0 %v4131
    %8051 = vmatpush1.bf16.msra.mxu0 %v4130
    %8052 = vmatprep.subr.bf16.mxu0 %v4135
    %8053 = vmatpush1.bf16.msra.mxu0 %v4134
    %8054 = vmatprep.subr.bf16.mxu0 %v4139
    %8055 = vmatpush1.bf16.msra.mxu0 %v4138
    %8056 = vmatprep.subr.bf16.mxu0 %v4143
    %8057 = vmatpush1.bf16.msra.mxu0 %v4142
    %8058 = vmatprep.subr.bf16.mxu0 %v4147
    %8059 = vmatpush1.bf16.msra.mxu0 %v4146
    %8060 = vmatprep.subr.bf16.mxu0 %v4151
    %8061 = vmatpush1.bf16.msra.mxu0 %v4150
    %8062 = vmatprep.subr.bf16.mxu0 %v4155
    %8063 = vmatpush1.bf16.msra.mxu0 %v4154
    %8064 = vmatprep.subr.bf16.mxu0 %v4159
    %8065 = vmatpush1.bf16.msra.mxu0 %v4158
    %8066 = vmatprep.subr.bf16.mxu0 %v4163
    %8067 = vmatpush1.bf16.msra.mxu0 %v4162
    %8068 = vmatprep.mubr.bf16.mxu0 %v7982
    %8069 = vmatmul.mubr.bf16.gmra.mrb[0].mxu0 %v7981
    %v8070 = vpop.f32.mrb[0].mxu0
    %v8071 = vadd.f32 %v8030, %v8070
    %v8072 = vpop.f32.mrb[0].mxu0
    %v8073 = vadd.f32 %v8032, %v8072
    %v8074 = vpop.f32.mrb[0].mxu0
    %v8075 = vpop.f32.mrb[0].mxu0
    %8076 = vdwg.mxu0
    %8077 = vmatprep.subr.bf16.mxu0 %v4167
    %8078 = vmatpush1.bf16.msra.mxu0 %v4166
    %8079 = vmatprep.subr.bf16.mxu0 %v4171
    %8080 = vmatpush1.bf16.msra.mxu0 %v4170
    %8081 = vmatprep.subr.bf16.mxu0 %v4175
    %8082 = vmatpush1.bf16.msra.mxu0 %v4174
    %8083 = vmatprep.subr.bf16.mxu0 %v4179
    %8084 = vmatpush1.bf16.msra.mxu0 %v4178
    %8085 = vmatprep.subr.bf16.mxu0 %v4183
    %8086 = vmatpush1.bf16.msra.mxu0 %v4182
    %8087 = vmatprep.subr.bf16.mxu0 %v4187
    %8088 = vmatpush1.bf16.msra.mxu0 %v4186
    %8089 = vmatprep.subr.bf16.mxu0 %v4191
    %8090 = vmatpush1.bf16.msra.mxu0 %v4190
    %8091 = vmatprep.subr.bf16.mxu0 %v4195
    %8092 = vmatpush1.bf16.msra.mxu0 %v4194
    %8093 = vmatprep.subr.bf16.mxu0 %v4199
    %8094 = vmatpush1.bf16.msra.mxu0 %v4198
    %8095 = vmatprep.subr.bf16.mxu0 %v4203
    %8096 = vmatpush1.bf16.msra.mxu0 %v4202
    %8097 = vmatprep.subr.bf16.mxu0 %v4207
    %8098 = vmatpush1.bf16.msra.mxu0 %v4206
    %8099 = vmatprep.subr.bf16.mxu0 %v4211
    %8100 = vmatpush1.bf16.msra.mxu0 %v4210
    %8101 = vmatprep.subr.bf16.mxu0 %v4215
    %8102 = vmatpush1.bf16.msra.mxu0 %v4214
    %8103 = vmatprep.subr.bf16.mxu0 %v4219
    %8104 = vmatpush1.bf16.msra.mxu0 %v4218
    %8105 = vmatprep.subr.bf16.mxu0 %v4223
    %8106 = vmatpush1.bf16.msra.mxu0 %v4222
    %8107 = vmatprep.subr.bf16.mxu0 %v4227
    %8108 = vmatpush1.bf16.msra.mxu0 %v4226
    %8109 = vmatprep.mubr.bf16.mxu0 %v7984
    %8110 = vmatmul.mubr.bf16.gmra.mrb[0].mxu0 %v7983
    %v8111 = vpop.f32.mrb[0].mxu0
    %v8112 = vadd.f32 %v8071, %v8111
    %v8113 = vpop.f32.mrb[0].mxu0
    %v8114 = vadd.f32 %v8073, %v8113
    %v8115 = vpop.f32.mrb[0].mxu0
    %v8116 = vpop.f32.mrb[0].mxu0
    %8117 = vdwg.mxu0
    %8118 = vmatprep.subr.bf16.mxu0 %v4231
    %8119 = vmatpush1.bf16.msra.mxu0 %v4230
    %8120 = vmatprep.subr.bf16.mxu0 %v4235
    %8121 = vmatpush1.bf16.msra.mxu0 %v4234
    %8122 = vmatprep.subr.bf16.mxu0 %v4239
    %8123 = vmatpush1.bf16.msra.mxu0 %v4238
    %8124 = vmatprep.subr.bf16.mxu0 %v4243
    %8125 = vmatpush1.bf16.msra.mxu0 %v4242
    %8126 = vmatprep.subr.bf16.mxu0 %v4247
    %8127 = vmatpush1.bf16.msra.mxu0 %v4246
    %8128 = vmatprep.subr.bf16.mxu0 %v4251
    %8129 = vmatpush1.bf16.msra.mxu0 %v4250
    %8130 = vmatprep.subr.bf16.mxu0 %v4255
    %8131 = vmatpush1.bf16.msra.mxu0 %v4254
    %8132 = vmatprep.subr.bf16.mxu0 %v4259
    %8133 = vmatpush1.bf16.msra.mxu0 %v4258
    %8134 = vmatprep.subr.bf16.mxu0 %v4263
    %8135 = vmatpush1.bf16.msra.mxu0 %v4262
    %8136 = vmatprep.subr.bf16.mxu0 %v4267
    %8137 = vmatpush1.bf16.msra.mxu0 %v4266
    %8138 = vmatprep.subr.bf16.mxu0 %v4271
    %8139 = vmatpush1.bf16.msra.mxu0 %v4270
    %8140 = vmatprep.subr.bf16.mxu0 %v4275
    %8141 = vmatpush1.bf16.msra.mxu0 %v4274
    %8142 = vmatprep.subr.bf16.mxu0 %v4279
    %8143 = vmatpush1.bf16.msra.mxu0 %v4278
    %8144 = vmatprep.subr.bf16.mxu0 %v4283
    %8145 = vmatpush1.bf16.msra.mxu0 %v4282
    %8146 = vmatprep.subr.bf16.mxu0 %v4287
    %8147 = vmatpush1.bf16.msra.mxu0 %v4286
    %8148 = vmatprep.subr.bf16.mxu0 %v4291
    %8149 = vmatpush1.bf16.msra.mxu0 %v4290
    %8150 = vmatprep.mubr.bf16.mxu0 %v7986
    %8151 = vmatmul.mubr.bf16.gmra.mrb[0].mxu0 %v7985
    %v8152 = vpop.f32.mrb[0].mxu0
    %v8153 = vadd.f32 %v8112, %v8152
    %v8154 = vpop.f32.mrb[0].mxu0
    %v8155 = vadd.f32 %v8114, %v8154
    %v8156 = vpop.f32.mrb[0].mxu0
    %v8157 = vpop.f32.mrb[0].mxu0
    %8158 = vdwg.mxu0
    %8159 = vmatprep.subr.bf16.mxu0 %v4295
    %8160 = vmatpush1.bf16.msra.mxu0 %v4294
    %8161 = vmatprep.subr.bf16.mxu0 %v4299
    %8162 = vmatpush1.bf16.msra.mxu0 %v4298
    %8163 = vmatprep.subr.bf16.mxu0 %v4303
    %8164 = vmatpush1.bf16.msra.mxu0 %v4302
    %8165 = vmatprep.subr.bf16.mxu0 %v4307
    %8166 = vmatpush1.bf16.msra.mxu0 %v4306
    %8167 = vmatprep.subr.bf16.mxu0 %v4311
    %8168 = vmatpush1.bf16.msra.mxu0 %v4310
    %8169 = vmatprep.subr.bf16.mxu0 %v4315
    %8170 = vmatpush1.bf16.msra.mxu0 %v4314
    %8171 = vmatprep.subr.bf16.mxu0 %v4319
    %8172 = vmatpush1.bf16.msra.mxu0 %v4318
    %8173 = vmatprep.subr.bf16.mxu0 %v4323
    %8174 = vmatpush1.bf16.msra.mxu0 %v4322
    %8175 = vmatprep.subr.bf16.mxu0 %v4327
    %8176 = vmatpush1.bf16.msra.mxu0 %v4326
    %8177 = vmatprep.subr.bf16.mxu0 %v4331
    %8178 = vmatpush1.bf16.msra.mxu0 %v4330
    %8179 = vmatprep.subr.bf16.mxu0 %v4335
    %8180 = vmatpush1.bf16.msra.mxu0 %v4334
    %8181 = vmatprep.subr.bf16.mxu0 %v4339
    %8182 = vmatpush1.bf16.msra.mxu0 %v4338
    %8183 = vmatprep.subr.bf16.mxu0 %v4343
    %8184 = vmatpush1.bf16.msra.mxu0 %v4342
    %8185 = vmatprep.subr.bf16.mxu0 %v4347
    %8186 = vmatpush1.bf16.msra.mxu0 %v4346
    %8187 = vmatprep.subr.bf16.mxu0 %v4351
    %8188 = vmatpush1.bf16.msra.mxu0 %v4350
    %8189 = vmatprep.subr.bf16.mxu0 %v4355
    %8190 = vmatpush1.bf16.msra.mxu0 %v4354
    %8191 = vmatprep.mubr.bf16.mxu0 %v7988
    %8192 = vmatmul.mubr.bf16.gmra.mrb[0].mxu0 %v7987
    %v8193 = vpop.f32.mrb[0].mxu0
    %v8194 = vadd.f32 %v8153, %v8193
    %v8195 = vpop.f32.mrb[0].mxu0
    %v8196 = vadd.f32 %v8155, %v8195
    %v8197 = vpop.f32.mrb[0].mxu0
    %v8198 = vpop.f32.mrb[0].mxu0
    %8199 = vdwg.mxu0
    %8200 = vmatprep.subr.bf16.mxu0 %v4359
    %8201 = vmatpush1.bf16.msra.mxu0 %v4358
    %8202 = vmatprep.subr.bf16.mxu0 %v4363
    %8203 = vmatpush1.bf16.msra.mxu0 %v4362
    %8204 = vmatprep.subr.bf16.mxu0 %v4367
    %8205 = vmatpush1.bf16.msra.mxu0 %v4366
    %8206 = vmatprep.subr.bf16.mxu0 %v4371
    %8207 = vmatpush1.bf16.msra.mxu0 %v4370
    %8208 = vmatprep.subr.bf16.mxu0 %v4375
    %8209 = vmatpush1.bf16.msra.mxu0 %v4374
    %8210 = vmatprep.subr.bf16.mxu0 %v4379
    %8211 = vmatpush1.bf16.msra.mxu0 %v4378
    %8212 = vmatprep.subr.bf16.mxu0 %v4383
    %8213 = vmatpush1.bf16.msra.mxu0 %v4382
    %8214 = vmatprep.subr.bf16.mxu0 %v4387
    %8215 = vmatpush1.bf16.msra.mxu0 %v4386
    %8216 = vmatprep.subr.bf16.mxu0 %v4391
    %8217 = vmatpush1.bf16.msra.mxu0 %v4390
    %8218 = vmatprep.subr.bf16.mxu0 %v4395
    %8219 = vmatpush1.bf16.msra.mxu0 %v4394
    %8220 = vmatprep.subr.bf16.mxu0 %v4399
    %8221 = vmatpush1.bf16.msra.mxu0 %v4398
    %8222 = vmatprep.subr.bf16.mxu0 %v4403
    %8223 = vmatpush1.bf16.msra.mxu0 %v4402
    %8224 = vmatprep.subr.bf16.mxu0 %v4407
    %8225 = vmatpush1.bf16.msra.mxu0 %v4406
    %8226 = vmatprep.subr.bf16.mxu0 %v4411
    %8227 = vmatpush1.bf16.msra.mxu0 %v4410
    %8228 = vmatprep.subr.bf16.mxu0 %v4415
    %8229 = vmatpush1.bf16.msra.mxu0 %v4414
    %8230 = vmatprep.subr.bf16.mxu0 %v4419
    %8231 = vmatpush1.bf16.msra.mxu0 %v4418
    %8232 = vmatprep.mubr.bf16.mxu0 %v7990
    %8233 = vmatmul.mubr.bf16.gmra.mrb[0].mxu0 %v7989
    %v8234 = vpop.f32.mrb[0].mxu0
    %v8235 = vadd.f32 %v8194, %v8234
    %v8236 = vpop.f32.mrb[0].mxu0
    %v8237 = vadd.f32 %v8196, %v8236
    %v8238 = vpop.f32.mrb[0].mxu0
    %v8239 = vpop.f32.mrb[0].mxu0
    %8240 = vdwg.mxu0
    %8241 = vmatprep.subr.bf16.mxu0 %v4423
    %8242 = vmatpush1.bf16.msra.mxu0 %v4422
    %8243 = vmatprep.subr.bf16.mxu0 %v4427
    %8244 = vmatpush1.bf16.msra.mxu0 %v4426
    %8245 = vmatprep.subr.bf16.mxu0 %v4431
    %8246 = vmatpush1.bf16.msra.mxu0 %v4430
    %8247 = vmatprep.subr.bf16.mxu0 %v4435
    %8248 = vmatpush1.bf16.msra.mxu0 %v4434
    %8249 = vmatprep.subr.bf16.mxu0 %v4439
    %8250 = vmatpush1.bf16.msra.mxu0 %v4438
    %8251 = vmatprep.subr.bf16.mxu0 %v4443
    %8252 = vmatpush1.bf16.msra.mxu0 %v4442
    %8253 = vmatprep.subr.bf16.mxu0 %v4447
    %8254 = vmatpush1.bf16.msra.mxu0 %v4446
    %8255 = vmatprep.subr.bf16.mxu0 %v4451
    %8256 = vmatpush1.bf16.msra.mxu0 %v4450
    %8257 = vmatprep.subr.bf16.mxu0 %v4455
    %8258 = vmatpush1.bf16.msra.mxu0 %v4454
    %8259 = vmatprep.subr.bf16.mxu0 %v4459
    %8260 = vmatpush1.bf16.msra.mxu0 %v4458
    %8261 = vmatprep.subr.bf16.mxu0 %v4463
    %8262 = vmatpush1.bf16.msra.mxu0 %v4462
    %8263 = vmatprep.subr.bf16.mxu0 %v4467
    %8264 = vmatpush1.bf16.msra.mxu0 %v4466
    %8265 = vmatprep.subr.bf16.mxu0 %v4471
    %8266 = vmatpush1.bf16.msra.mxu0 %v4470
    %8267 = vmatprep.subr.bf16.mxu0 %v4475
    %8268 = vmatpush1.bf16.msra.mxu0 %v4474
    %8269 = vmatprep.subr.bf16.mxu0 %v4479
    %8270 = vmatpush1.bf16.msra.mxu0 %v4478
    %8271 = vmatprep.subr.bf16.mxu0 %v4483
    %8272 = vmatpush1.bf16.msra.mxu0 %v4482
    %8273 = vmatprep.mubr.bf16.mxu0 %v7992
    %8274 = vmatmul.mubr.bf16.gmra.mrb[0].mxu0 %v7991
    %v8275 = vpop.f32.mrb[0].mxu0
    %v8276 = vadd.f32 %v8235, %v8275
    %v8277 = vpop.f32.mrb[0].mxu0
    %v8278 = vadd.f32 %v8237, %v8277
    %v8279 = vpop.f32.mrb[0].mxu0
    %v8280 = vpop.f32.mrb[0].mxu0
    %8281 = vdwg.mxu0
    %8282 = vmatprep.subr.bf16.mxu0 %v4487
    %8283 = vmatpush1.bf16.msra.mxu0 %v4486
    %8284 = vmatprep.subr.bf16.mxu0 %v4491
    %8285 = vmatpush1.bf16.msra.mxu0 %v4490
    %8286 = vmatprep.subr.bf16.mxu0 %v4495
    %8287 = vmatpush1.bf16.msra.mxu0 %v4494
    %8288 = vmatprep.subr.bf16.mxu0 %v4499
    %8289 = vmatpush1.bf16.msra.mxu0 %v4498
    %8290 = vmatprep.subr.bf16.mxu0 %v4503
    %8291 = vmatpush1.bf16.msra.mxu0 %v4502
    %8292 = vmatprep.subr.bf16.mxu0 %v4507
    %8293 = vmatpush1.bf16.msra.mxu0 %v4506
    %8294 = vmatprep.subr.bf16.mxu0 %v4511
    %8295 = vmatpush1.bf16.msra.mxu0 %v4510
    %8296 = vmatprep.subr.bf16.mxu0 %v4515
    %8297 = vmatpush1.bf16.msra.mxu0 %v4514
    %8298 = vmatprep.subr.bf16.mxu0 %v4519
    %8299 = vmatpush1.bf16.msra.mxu0 %v4518
    %8300 = vmatprep.subr.bf16.mxu0 %v4523
    %8301 = vmatpush1.bf16.msra.mxu0 %v4522
    %8302 = vmatprep.subr.bf16.mxu0 %v4527
    %8303 = vmatpush1.bf16.msra.mxu0 %v4526
    %8304 = vmatprep.subr.bf16.mxu0 %v4531
    %8305 = vmatpush1.bf16.msra.mxu0 %v4530
    %8306 = vmatprep.subr.bf16.mxu0 %v4535
    %8307 = vmatpush1.bf16.msra.mxu0 %v4534
    %8308 = vmatprep.subr.bf16.mxu0 %v4539
    %8309 = vmatpush1.bf16.msra.mxu0 %v4538
    %8310 = vmatprep.subr.bf16.mxu0 %v4543
    %8311 = vmatpush1.bf16.msra.mxu0 %v4542
    %8312 = vmatprep.subr.bf16.mxu0 %v4547
    %8313 = vmatpush1.bf16.msra.mxu0 %v4546
    %8314 = vmatprep.mubr.bf16.mxu0 %v7994
    %8315 = vmatmul.mubr.bf16.gmra.mrb[0].mxu0 %v7993
    %v8316 = vpop.f32.mrb[0].mxu0
    %v8317 = vadd.f32 %v8276, %v8316
    %v8318 = vpop.f32.mrb[0].mxu0
    %v8319 = vadd.f32 %v8278, %v8318
    %v8320 = vpop.f32.mrb[0].mxu0
    %v8321 = vpop.f32.mrb[0].mxu0
    %8322 = vdwg.mxu0
    %8323 = vmatprep.subr.bf16.mxu0 %v4041
    %8324 = vmatpush1.bf16.msra.mxu0 %v4040
    %8325 = vmatprep.subr.bf16.mxu0 %v4045
    %8326 = vmatpush1.bf16.msra.mxu0 %v4044
    %8327 = vmatprep.subr.bf16.mxu0 %v4049
    %8328 = vmatpush1.bf16.msra.mxu0 %v4048
    %8329 = vmatprep.subr.bf16.mxu0 %v4053
    %8330 = vmatpush1.bf16.msra.mxu0 %v4052
    %8331 = vmatprep.subr.bf16.mxu0 %v4057
    %8332 = vmatpush1.bf16.msra.mxu0 %v4056
    %8333 = vmatprep.subr.bf16.mxu0 %v4061
    %8334 = vmatpush1.bf16.msra.mxu0 %v4060
    %8335 = vmatprep.subr.bf16.mxu0 %v4065
    %8336 = vmatpush1.bf16.msra.mxu0 %v4064
    %8337 = vmatprep.subr.bf16.mxu0 %v4069
    %8338 = vmatpush1.bf16.msra.mxu0 %v4068
    %8339 = vmatprep.subr.bf16.mxu0 %v4073
    %8340 = vmatpush1.bf16.msra.mxu0 %v4072
    %8341 = vmatprep.subr.bf16.mxu0 %v4077
    %8342 = vmatpush1.bf16.msra.mxu0 %v4076
    %8343 = vmatprep.subr.bf16.mxu0 %v4081
    %8344 = vmatpush1.bf16.msra.mxu0 %v4080
    %8345 = vmatprep.subr.bf16.mxu0 %v4085
    %8346 = vmatpush1.bf16.msra.mxu0 %v4084
    %8347 = vmatprep.subr.bf16.mxu0 %v4089
    %8348 = vmatpush1.bf16.msra.mxu0 %v4088
    %8349 = vmatprep.subr.bf16.mxu0 %v4093
    %8350 = vmatpush1.bf16.msra.mxu0 %v4092
    %8351 = vmatprep.subr.bf16.mxu0 %v4097
    %8352 = vmatpush1.bf16.msra.mxu0 %v4096
    %8353 = vmatprep.subr.bf16.mxu0 %v4101
    %8354 = vmatpush1.bf16.msra.mxu0 %v4100
    %8355 = vmatprep.mubr.bf16.mxu0 %v7980
    %8356 = vmatmul.mubr.bf16.gmra.mrb[0].mxu0 %v7979
    %v8357 = vpop.f32.mrb[0].mxu0
    %v8358 = vadd.f32 0.0, %v8357
    %v8359 = vpop.f32.mrb[0].mxu0
    %v8360 = vadd.f32 0.0, %v8359
    %v8361 = vpop.f32.mrb[0].mxu0
    %v8362 = vpop.f32.mrb[0].mxu0
    %8363 = vdwg.mxu0
    %8364 = vmatprep.subr.bf16.mxu0 %v4105
    %8365 = vmatpush1.bf16.msra.mxu0 %v4104
    %8366 = vmatprep.subr.bf16.mxu0 %v4109
    %8367 = vmatpush1.bf16.msra.mxu0 %v4108
    %8368 = vmatprep.subr.bf16.mxu0 %v4113
    %8369 = vmatpush1.bf16.msra.mxu0 %v4112
    %8370 = vmatprep.subr.bf16.mxu0 %v4117
    %8371 = vmatpush1.bf16.msra.mxu0 %v4116
    %8372 = vmatprep.subr.bf16.mxu0 %v4121
    %8373 = vmatpush1.bf16.msra.mxu0 %v4120
    %8374 = vmatprep.subr.bf16.mxu0 %v4125
    %8375 = vmatpush1.bf16.msra.mxu0 %v4124
    %8376 = vmatprep.subr.bf16.mxu0 %v4129
    %8377 = vmatpush1.bf16.msra.mxu0 %v4128
    %8378 = vmatprep.subr.bf16.mxu0 %v4133
    %8379 = vmatpush1.bf16.msra.mxu0 %v4132
    %8380 = vmatprep.subr.bf16.mxu0 %v4137
    %8381 = vmatpush1.bf16.msra.mxu0 %v4136
    %8382 = vmatprep.subr.bf16.mxu0 %v4141
    %8383 = vmatpush1.bf16.msra.mxu0 %v4140
    %8384 = vmatprep.subr.bf16.mxu0 %v4145
    %8385 = vmatpush1.bf16.msra.mxu0 %v4144
    %8386 = vmatprep.subr.bf16.mxu0 %v4149
    %8387 = vmatpush1.bf16.msra.mxu0 %v4148
    %8388 = vmatprep.subr.bf16.mxu0 %v4153
    %8389 = vmatpush1.bf16.msra.mxu0 %v4152
    %8390 = vmatprep.subr.bf16.mxu0 %v4157
    %8391 = vmatpush1.bf16.msra.mxu0 %v4156
    %8392 = vmatprep.subr.bf16.mxu0 %v4161
    %8393 = vmatpush1.bf16.msra.mxu0 %v4160
    %8394 = vmatprep.subr.bf16.mxu0 %v4165
    %8395 = vmatpush1.bf16.msra.mxu0 %v4164
    %8396 = vmatprep.mubr.bf16.mxu0 %v7982
    %8397 = vmatmul.mubr.bf16.gmra.mrb[0].mxu0 %v7981
    %v8398 = vpop.f32.mrb[0].mxu0
    %v8399 = vadd.f32 %v8358, %v8398
    %v8400 = vpop.f32.mrb[0].mxu0
    %v8401 = vadd.f32 %v8360, %v8400
    %v8402 = vpop.f32.mrb[0].mxu0
    %v8403 = vpop.f32.mrb[0].mxu0
    %8404 = vdwg.mxu0
    %8405 = vmatprep.subr.bf16.mxu0 %v4169
    %8406 = vmatpush1.bf16.msra.mxu0 %v4168
    %8407 = vmatprep.subr.bf16.mxu0 %v4173
    %8408 = vmatpush1.bf16.msra.mxu0 %v4172
    %8409 = vmatprep.subr.bf16.mxu0 %v4177
    %8410 = vmatpush1.bf16.msra.mxu0 %v4176
    %8411 = vmatprep.subr.bf16.mxu0 %v4181
    %8412 = vmatpush1.bf16.msra.mxu0 %v4180
    %8413 = vmatprep.subr.bf16.mxu0 %v4185
    %8414 = vmatpush1.bf16.msra.mxu0 %v4184
    %8415 = vmatprep.subr.bf16.mxu0 %v4189
    %8416 = vmatpush1.bf16.msra.mxu0 %v4188
    %8417 = vmatprep.subr.bf16.mxu0 %v4193
    %8418 = vmatpush1.bf16.msra.mxu0 %v4192
    %8419 = vmatprep.subr.bf16.mxu0 %v4197
    %8420 = vmatpush1.bf16.msra.mxu0 %v4196
    %8421 = vmatprep.subr.bf16.mxu0 %v4201
    %8422 = vmatpush1.bf16.msra.mxu0 %v4200
    %8423 = vmatprep.subr.bf16.mxu0 %v4205
    %8424 = vmatpush1.bf16.msra.mxu0 %v4204
    %8425 = vmatprep.subr.bf16.mxu0 %v4209
    %8426 = vmatpush1.bf16.msra.mxu0 %v4208
    %8427 = vmatprep.subr.bf16.mxu0 %v4213
    %8428 = vmatpush1.bf16.msra.mxu0 %v4212
    %8429 = vmatprep.subr.bf16.mxu0 %v4217
    %8430 = vmatpush1.bf16.msra.mxu0 %v4216
    %8431 = vmatprep.subr.bf16.mxu0 %v4221
    %8432 = vmatpush1.bf16.msra.mxu0 %v4220
    %8433 = vmatprep.subr.bf16.mxu0 %v4225
    %8434 = vmatpush1.bf16.msra.mxu0 %v4224
    %8435 = vmatprep.subr.bf16.mxu0 %v4229
    %8436 = vmatpush1.bf16.msra.mxu0 %v4228
    %8437 = vmatprep.mubr.bf16.mxu0 %v7984
    %8438 = vmatmul.mubr.bf16.gmra.mrb[0].mxu0 %v7983
    %v8439 = vpop.f32.mrb[0].mxu0
    %v8440 = vadd.f32 %v8399, %v8439
    %v8441 = vpop.f32.mrb[0].mxu0
    %v8442 = vadd.f32 %v8401, %v8441
    %v8443 = vpop.f32.mrb[0].mxu0
    %v8444 = vpop.f32.mrb[0].mxu0
    %8445 = vdwg.mxu0
    %8446 = vmatprep.subr.bf16.mxu0 %v4233
    %8447 = vmatpush1.bf16.msra.mxu0 %v4232
    %8448 = vmatprep.subr.bf16.mxu0 %v4237
    %8449 = vmatpush1.bf16.msra.mxu0 %v4236
    %8450 = vmatprep.subr.bf16.mxu0 %v4241
    %8451 = vmatpush1.bf16.msra.mxu0 %v4240
    %8452 = vmatprep.subr.bf16.mxu0 %v4245
    %8453 = vmatpush1.bf16.msra.mxu0 %v4244
    %8454 = vmatprep.subr.bf16.mxu0 %v4249
    %8455 = vmatpush1.bf16.msra.mxu0 %v4248
    %8456 = vmatprep.subr.bf16.mxu0 %v4253
    %8457 = vmatpush1.bf16.msra.mxu0 %v4252
    %8458 = vmatprep.subr.bf16.mxu0 %v4257
    %8459 = vmatpush1.bf16.msra.mxu0 %v4256
    %8460 = vmatprep.subr.bf16.mxu0 %v4261
    %8461 = vmatpush1.bf16.msra.mxu0 %v4260
    %8462 = vmatprep.subr.bf16.mxu0 %v4265
    %8463 = vmatpush1.bf16.msra.mxu0 %v4264
    %8464 = vmatprep.subr.bf16.mxu0 %v4269
    %8465 = vmatpush1.bf16.msra.mxu0 %v4268
    %8466 = vmatprep.subr.bf16.mxu0 %v4273
    %8467 = vmatpush1.bf16.msra.mxu0 %v4272
    %8468 = vmatprep.subr.bf16.mxu0 %v4277
    %8469 = vmatpush1.bf16.msra.mxu0 %v4276
    %8470 = vmatprep.subr.bf16.mxu0 %v4281
    %8471 = vmatpush1.bf16.msra.mxu0 %v4280
    %8472 = vmatprep.subr.bf16.mxu0 %v4285
    %8473 = vmatpush1.bf16.msra.mxu0 %v4284
    %8474 = vmatprep.subr.bf16.mxu0 %v4289
    %8475 = vmatpush1.bf16.msra.mxu0 %v4288
    %8476 = vmatprep.subr.bf16.mxu0 %v4293
    %8477 = vmatpush1.bf16.msra.mxu0 %v4292
    %8478 = vmatprep.mubr.bf16.mxu0 %v7986
    %8479 = vmatmul.mubr.bf16.gmra.mrb[0].mxu0 %v7985
    %v8480 = vpop.f32.mrb[0].mxu0
    %v8481 = vadd.f32 %v8440, %v8480
    %v8482 = vpop.f32.mrb[0].mxu0
    %v8483 = vadd.f32 %v8442, %v8482
    %v8484 = vpop.f32.mrb[0].mxu0
    %v8485 = vpop.f32.mrb[0].mxu0
    %8486 = vdwg.mxu0
    %8487 = vmatprep.subr.bf16.mxu0 %v4297
    %8488 = vmatpush1.bf16.msra.mxu0 %v4296
    %8489 = vmatprep.subr.bf16.mxu0 %v4301
    %8490 = vmatpush1.bf16.msra.mxu0 %v4300
    %8491 = vmatprep.subr.bf16.mxu0 %v4305
    %8492 = vmatpush1.bf16.msra.mxu0 %v4304
    %8493 = vmatprep.subr.bf16.mxu0 %v4309
    %8494 = vmatpush1.bf16.msra.mxu0 %v4308
    %8495 = vmatprep.subr.bf16.mxu0 %v4313
    %8496 = vmatpush1.bf16.msra.mxu0 %v4312
    %8497 = vmatprep.subr.bf16.mxu0 %v4317
    %8498 = vmatpush1.bf16.msra.mxu0 %v4316
    %8499 = vmatprep.subr.bf16.mxu0 %v4321
    %8500 = vmatpush1.bf16.msra.mxu0 %v4320
    %8501 = vmatprep.subr.bf16.mxu0 %v4325
    %8502 = vmatpush1.bf16.msra.mxu0 %v4324
    %8503 = vmatprep.subr.bf16.mxu0 %v4329
    %8504 = vmatpush1.bf16.msra.mxu0 %v4328
    %8505 = vmatprep.subr.bf16.mxu0 %v4333
    %8506 = vmatpush1.bf16.msra.mxu0 %v4332
    %8507 = vmatprep.subr.bf16.mxu0 %v4337
    %8508 = vmatpush1.bf16.msra.mxu0 %v4336
    %8509 = vmatprep.subr.bf16.mxu0 %v4341
    %8510 = vmatpush1.bf16.msra.mxu0 %v4340
    %8511 = vmatprep.subr.bf16.mxu0 %v4345
    %8512 = vmatpush1.bf16.msra.mxu0 %v4344
    %8513 = vmatprep.subr.bf16.mxu0 %v4349
    %8514 = vmatpush1.bf16.msra.mxu0 %v4348
    %8515 = vmatprep.subr.bf16.mxu0 %v4353
    %8516 = vmatpush1.bf16.msra.mxu0 %v4352
    %8517 = vmatprep.subr.bf16.mxu0 %v4357
    %8518 = vmatpush1.bf16.msra.mxu0 %v4356
    %8519 = vmatprep.mubr.bf16.mxu0 %v7988
    %8520 = vmatmul.mubr.bf16.gmra.mrb[0].mxu0 %v7987
    %v8521 = vpop.f32.mrb[0].mxu0
    %v8522 = vadd.f32 %v8481, %v8521
    %v8523 = vpop.f32.mrb[0].mxu0
    %v8524 = vadd.f32 %v8483, %v8523
    %v8525 = vpop.f32.mrb[0].mxu0
    %v8526 = vpop.f32.mrb[0].mxu0
    %8527 = vdwg.mxu0
    %8528 = vmatprep.subr.bf16.mxu0 %v4361
    %8529 = vmatpush1.bf16.msra.mxu0 %v4360
    %8530 = vmatprep.subr.bf16.mxu0 %v4365
    %8531 = vmatpush1.bf16.msra.mxu0 %v4364
    %8532 = vmatprep.subr.bf16.mxu0 %v4369
    %8533 = vmatpush1.bf16.msra.mxu0 %v4368
    %8534 = vmatprep.subr.bf16.mxu0 %v4373
    %8535 = vmatpush1.bf16.msra.mxu0 %v4372
    %8536 = vmatprep.subr.bf16.mxu0 %v4377
    %8537 = vmatpush1.bf16.msra.mxu0 %v4376
    %8538 = vmatprep.subr.bf16.mxu0 %v4381
    %8539 = vmatpush1.bf16.msra.mxu0 %v4380
    %8540 = vmatprep.subr.bf16.mxu0 %v4385
    %8541 = vmatpush1.bf16.msra.mxu0 %v4384
    %8542 = vmatprep.subr.bf16.mxu0 %v4389
    %8543 = vmatpush1.bf16.msra.mxu0 %v4388
    %8544 = vmatprep.subr.bf16.mxu0 %v4393
    %8545 = vmatpush1.bf16.msra.mxu0 %v4392
    %8546 = vmatprep.subr.bf16.mxu0 %v4397
    %8547 = vmatpush1.bf16.msra.mxu0 %v4396
    %8548 = vmatprep.subr.bf16.mxu0 %v4401
    %8549 = vmatpush1.bf16.msra.mxu0 %v4400
    %8550 = vmatprep.subr.bf16.mxu0 %v4405
    %8551 = vmatpush1.bf16.msra.mxu0 %v4404
    %8552 = vmatprep.subr.bf16.mxu0 %v4409
    %8553 = vmatpush1.bf16.msra.mxu0 %v4408
    %8554 = vmatprep.subr.bf16.mxu0 %v4413
    %8555 = vmatpush1.bf16.msra.mxu0 %v4412
    %8556 = vmatprep.subr.bf16.mxu0 %v4417
    %8557 = vmatpush1.bf16.msra.mxu0 %v4416
    %8558 = vmatprep.subr.bf16.mxu0 %v4421
    %8559 = vmatpush1.bf16.msra.mxu0 %v4420
    %8560 = vmatprep.mubr.bf16.mxu0 %v7990
    %8561 = vmatmul.mubr.bf16.gmra.mrb[0].mxu0 %v7989
    %v8562 = vpop.f32.mrb[0].mxu0
    %v8563 = vadd.f32 %v8522, %v8562
    %v8564 = vpop.f32.mrb[0].mxu0
    %v8565 = vadd.f32 %v8524, %v8564
    %v8566 = vpop.f32.mrb[0].mxu0
    %v8567 = vpop.f32.mrb[0].mxu0
    %8568 = vdwg.mxu0
    %8569 = vmatprep.subr.bf16.mxu0 %v4425
    %8570 = vmatpush1.bf16.msra.mxu0 %v4424
    %8571 = vmatprep.subr.bf16.mxu0 %v4429
    %8572 = vmatpush1.bf16.msra.mxu0 %v4428
    %8573 = vmatprep.subr.bf16.mxu0 %v4433
    %8574 = vmatpush1.bf16.msra.mxu0 %v4432
    %8575 = vmatprep.subr.bf16.mxu0 %v4437
    %8576 = vmatpush1.bf16.msra.mxu0 %v4436
    %8577 = vmatprep.subr.bf16.mxu0 %v4441
    %8578 = vmatpush1.bf16.msra.mxu0 %v4440
    %8579 = vmatprep.subr.bf16.mxu0 %v4445
    %8580 = vmatpush1.bf16.msra.mxu0 %v4444
    %8581 = vmatprep.subr.bf16.mxu0 %v4449
    %8582 = vmatpush1.bf16.msra.mxu0 %v4448
    %8583 = vmatprep.subr.bf16.mxu0 %v4453
    %8584 = vmatpush1.bf16.msra.mxu0 %v4452
    %8585 = vmatprep.subr.bf16.mxu0 %v4457
    %8586 = vmatpush1.bf16.msra.mxu0 %v4456
    %8587 = vmatprep.subr.bf16.mxu0 %v4461
    %8588 = vmatpush1.bf16.msra.mxu0 %v4460
    %8589 = vmatprep.subr.bf16.mxu0 %v4465
    %8590 = vmatpush1.bf16.msra.mxu0 %v4464
    %8591 = vmatprep.subr.bf16.mxu0 %v4469
    %8592 = vmatpush1.bf16.msra.mxu0 %v4468
    %8593 = vmatprep.subr.bf16.mxu0 %v4473
    %8594 = vmatpush1.bf16.msra.mxu0 %v4472
    %8595 = vmatprep.subr.bf16.mxu0 %v4477
    %8596 = vmatpush1.bf16.msra.mxu0 %v4476
    %8597 = vmatprep.subr.bf16.mxu0 %v4481
    %8598 = vmatpush1.bf16.msra.mxu0 %v4480
    %8599 = vmatprep.subr.bf16.mxu0 %v4485
    %8600 = vmatpush1.bf16.msra.mxu0 %v4484
    %8601 = vmatprep.mubr.bf16.mxu0 %v7992
    %8602 = vmatmul.mubr.bf16.gmra.mrb[0].mxu0 %v7991
    %v8603 = vpop.f32.mrb[0].mxu0
    %v8604 = vadd.f32 %v8563, %v8603
    %v8605 = vpop.f32.mrb[0].mxu0
    %v8606 = vadd.f32 %v8565, %v8605
    %v8607 = vpop.f32.mrb[0].mxu0
    %v8608 = vpop.f32.mrb[0].mxu0
    %8609 = vdwg.mxu0
    %8610 = vmatprep.subr.bf16.mxu0 %v4489
    %8611 = vmatpush1.bf16.msra.mxu0 %v4488
    %8612 = vmatprep.subr.bf16.mxu0 %v4493
    %8613 = vmatpush1.bf16.msra.mxu0 %v4492
    %8614 = vmatprep.subr.bf16.mxu0 %v4497
    %8615 = vmatpush1.bf16.msra.mxu0 %v4496
    %8616 = vmatprep.subr.bf16.mxu0 %v4501
    %8617 = vmatpush1.bf16.msra.mxu0 %v4500
    %8618 = vmatprep.subr.bf16.mxu0 %v4505
    %8619 = vmatpush1.bf16.msra.mxu0 %v4504
    %8620 = vmatprep.subr.bf16.mxu0 %v4509
    %8621 = vmatpush1.bf16.msra.mxu0 %v4508
    %8622 = vmatprep.subr.bf16.mxu0 %v4513
    %8623 = vmatpush1.bf16.msra.mxu0 %v4512
    %8624 = vmatprep.subr.bf16.mxu0 %v4517
    %8625 = vmatpush1.bf16.msra.mxu0 %v4516
    %8626 = vmatprep.subr.bf16.mxu0 %v4521
    %8627 = vmatpush1.bf16.msra.mxu0 %v4520
    %8628 = vmatprep.subr.bf16.mxu0 %v4525
    %8629 = vmatpush1.bf16.msra.mxu0 %v4524
    %8630 = vmatprep.subr.bf16.mxu0 %v4529
    %8631 = vmatpush1.bf16.msra.mxu0 %v4528
    %8632 = vmatprep.subr.bf16.mxu0 %v4533
    %8633 = vmatpush1.bf16.msra.mxu0 %v4532
    %8634 = vmatprep.subr.bf16.mxu0 %v4537
    %8635 = vmatpush1.bf16.msra.mxu0 %v4536
    %8636 = vmatprep.subr.bf16.mxu0 %v4541
    %8637 = vmatpush1.bf16.msra.mxu0 %v4540
    %8638 = vmatprep.subr.bf16.mxu0 %v4545
    %8639 = vmatpush1.bf16.msra.mxu0 %v4544
    %8640 = vmatprep.subr.bf16.mxu0 %v4549
    %8641 = vmatpush1.bf16.msra.mxu0 %v4548
    %8642 = vmatprep.mubr.bf16.mxu0 %v7994
    %8643 = vmatmul.mubr.bf16.gmra.mrb[0].mxu0 %v7993
    %v8644 = vpop.f32.mrb[0].mxu0
    %v8645 = vadd.f32 %v8604, %v8644
    %v8646 = vpop.f32.mrb[0].mxu0
    %v8647 = vadd.f32 %v8606, %v8646
    %v8648 = vpop.f32.mrb[0].mxu0
    %v8649 = vpop.f32.mrb[0].mxu0
    %8650 = vdwg.mxu0
    %v8651 = vadd.f32 %v7781, %v8317
    %v8652 = vadd.f32 %v7782, %v8319
    %v8653 = vadd.f32 %v7783, %v8645
    %v8654 = vadd.f32 %v7784, %v8647
    %vm8655 = vcmp.ge.f32.partialorder %v8651, 0.5
    %vm8656 = vcmp.ge.f32.partialorder %v8652, 0.5
    %vm8657 = vcmp.ge.f32.partialorder %v8653, 0.5
    %vm8658 = vcmp.ge.f32.partialorder %v8654, 0.5
    %v8659 = vsel %vm8655, 1, 0
    %v8660 = vsel %vm8656, 1, 0
    %v8661 = vsel %vm8657, 1, 0
    %v8662 = vsel %vm8658, 1, 0
    %v8663 = vcvt.s32.f32 %v8659
    %v8664 = vcvt.s32.f32 %v8660
    %v8665 = vcvt.s32.f32 %v8661
    %v8666 = vcvt.s32.f32 %v8662
    %v8667 = vpack.c.bf16 %v8663, %v8663
    %v8668 = vpack.c.bf16 %v8664, %v8664
    %v8669 = vpack.c.bf16 %v8665, %v8665
    %v8670 = vpack.c.bf16 %v8666, %v8666
    %8671 = vmatprep.subr.bf16.mxu0 0
    %8672 = vmatpush1.bf16.msra.mxu0 %v5930
    %8673 = vmatprep.subr.bf16.mxu0 0
    %8674 = vmatpush1.bf16.msra.mxu0 %v5931
    %8675 = vmatprep.subr.bf16.mxu0 0
    %8676 = vmatpush1.bf16.msra.mxu0 %v5932
    %8677 = vmatprep.subr.bf16.mxu0 0
    %8678 = vmatpush1.bf16.msra.mxu0 %v5933
    %8679 = vmatprep.subr.bf16.mxu0 0
    %8680 = vmatpush1.bf16.msra.mxu0 %v5934
    %8681 = vmatprep.subr.bf16.mxu0 0
    %8682 = vmatpush1.bf16.msra.mxu0 %v5935
    %8683 = vmatprep.subr.bf16.mxu0 0
    %8684 = vmatpush1.bf16.msra.mxu0 %v5936
    %8685 = vmatprep.subr.bf16.mxu0 0
    %8686 = vmatpush1.bf16.msra.mxu0 %v5937
    %8687 = vmatprep.subr.bf16.mxu0 0
    %8688 = vmatpush1.bf16.msra.mxu0 %v5938
    %8689 = vmatprep.subr.bf16.mxu0 0
    %8690 = vmatpush1.bf16.msra.mxu0 %v5939
    %8691 = vmatprep.subr.bf16.mxu0 0
    %8692 = vmatpush1.bf16.msra.mxu0 %v5940
    %8693 = vmatprep.subr.bf16.mxu0 0
    %8694 = vmatpush1.bf16.msra.mxu0 %v5941
    %8695 = vmatprep.subr.bf16.mxu0 0
    %8696 = vmatpush1.bf16.msra.mxu0 %v5942
    %8697 = vmatprep.subr.bf16.mxu0 0
    %8698 = vmatpush1.bf16.msra.mxu0 %v5943
    %8699 = vmatprep.subr.bf16.mxu0 0
    %8700 = vmatpush1.bf16.msra.mxu0 %v5944
    %8701 = vmatprep.subr.bf16.mxu0 0
    %8702 = vmatpush1.bf16.msra.mxu0 %v5945
    %8703 = vmatprep.mubr.bf16.mxu0 %v8668
    %8704 = vmatmul.mubr.bf16.gmra.mrb[0].mxu0 %v8667
    %v8705 = vpop.f32.mrb[0].mxu0
    %v8706 = vadd.f32 0.0, %v8705
    %v8707 = vpop.f32.mrb[0].mxu0
    %v8708 = vpop.f32.mrb[0].mxu0
    %v8709 = vpop.f32.mrb[0].mxu0
    %8710 = vdwg.mxu0
    %8711 = vmatprep.subr.bf16.mxu0 0
    %8712 = vmatpush1.bf16.msra.mxu0 %v5946
    %8713 = vmatprep.subr.bf16.mxu0 0
    %8714 = vmatpush1.bf16.msra.mxu0 %v5947
    %8715 = vmatprep.subr.bf16.mxu0 0
    %8716 = vmatpush1.bf16.msra.mxu0 %v5948
    %8717 = vmatprep.subr.bf16.mxu0 0
    %8718 = vmatpush1.bf16.msra.mxu0 %v5949
    %8719 = vmatprep.subr.bf16.mxu0 0
    %8720 = vmatpush1.bf16.msra.mxu0 %v5950
    %8721 = vmatprep.subr.bf16.mxu0 0
    %8722 = vmatpush1.bf16.msra.mxu0 %v5951
    %8723 = vmatprep.subr.bf16.mxu0 0
    %8724 = vmatpush1.bf16.msra.mxu0 %v5952
    %8725 = vmatprep.subr.bf16.mxu0 0
    %8726 = vmatpush1.bf16.msra.mxu0 %v5953
    %8727 = vmatprep.subr.bf16.mxu0 0
    %8728 = vmatpush1.bf16.msra.mxu0 %v5954
    %8729 = vmatprep.subr.bf16.mxu0 0
    %8730 = vmatpush1.bf16.msra.mxu0 %v5955
    %8731 = vmatprep.subr.bf16.mxu0 0
    %8732 = vmatpush1.bf16.msra.mxu0 %v5956
    %8733 = vmatprep.subr.bf16.mxu0 0
    %8734 = vmatpush1.bf16.msra.mxu0 %v5957
    %8735 = vmatprep.subr.bf16.mxu0 0
    %8736 = vmatpush1.bf16.msra.mxu0 %v5958
    %8737 = vmatprep.subr.bf16.mxu0 0
    %8738 = vmatpush1.bf16.msra.mxu0 %v5959
    %8739 = vmatprep.subr.bf16.mxu0 0
    %8740 = vmatpush1.bf16.msra.mxu0 %v5960
    %8741 = vmatprep.subr.bf16.mxu0 0
    %8742 = vmatpush1.bf16.msra.mxu0 %v5961
    %8743 = vmatprep.mubr.bf16.mxu0 %v8670
    %8744 = vmatmul.mubr.bf16.gmra.mrb[0].mxu0 %v8669
    %v8745 = vpop.f32.mrb[0].mxu0
    %v8746 = vadd.f32 %v8706, %v8745
    %v8747 = vpop.f32.mrb[0].mxu0
    %v8748 = vpop.f32.mrb[0].mxu0
    %v8749 = vpop.f32.mrb[0].mxu0
    %8750 = vdwg.mxu0
    %v8751 = vadd.f32 %v7879, %v8746
    %vm8752 = vcmp.ge.f32.partialorder %v8751, 0.5
    %v8753 = vsel %vm8752, 1, 0
    %v8754 = vcvt.s32.f32 %v8753
    %v8755 = vadd.f32 %v7882, %v8754
    %v8756 = vpack.c.bf16 %v8755, %v8755
    %v8757 = vld [vmem:[%s4] sm:$0xf]
    %v8758 = vld [vmem:[%s4 + $0x4] sm:$0xf]
    %v8759 = vld [vmem:[%s4 + $0x8] sm:$0xf]
    %v8760 = vld [vmem:[%s4 + $0xc] sm:$0xf]
    %v8761 = vld [vmem:[%s4 + $0x10] sm:$0xf]
    %v8762 = vld [vmem:[%s4 + $0x14] sm:$0xf]
    %v8763 = vld [vmem:[%s4 + $0x18] sm:$0xf]
    %v8764 = vld [vmem:[%s4 + $0x1c] sm:$0xf]
    %v8765 = vld [vmem:[%s4 + $0x20] sm:$0xf]
    %v8766 = vld [vmem:[%s4 + $0x24] sm:$0xf]
    %v8767 = vld [vmem:[%s4 + $0x28] sm:$0xf]
    %v8768 = vld [vmem:[%s4 + $0x2c] sm:$0x1]
    %v8781 = vunpack.c.l.b16 %v8757
    %v8782 = vunpack.c.l.b16 %v8758
    %v8783 = vunpack.c.l.b16 %v8759
    %v8784 = vunpack.c.l.b16 %v8760
    %v8785 = vunpack.c.l.b16 %v8761
    %v8786 = vunpack.c.l.b16 %v8762
    %v8787 = vunpack.c.l.b16 %v8763
    %v8788 = vunpack.c.l.b16 %v8764
    %v8789 = vunpack.c.l.b16 %v8765
    %v8790 = vunpack.c.l.b16 %v8766
    %v8791 = vunpack.c.l.b16 %v8767
    %v8792 = vunpack.c.l.b16 %v8768
    %v8793 = vpack.c.b16 %v8782, %v8781
    %v8794 = vpack.c.b16 %v8784, %v8783
    %v8795 = vpack.c.b16 %v8786, %v8785
    %v8796 = vpack.c.b16 %v8788, %v8787
    %v8797 = vpack.c.b16 %v8790, %v8789
    %v8798 = vpack.c.b16 %v8792, %v8791
    %vm8804 = vcmask 736256
    %v8806 = vsel %vm8804, %v8756, 0
    %vm8808 = vcmask 1044480
    %v8810 = vsel %vm8808, %v8798, 0
    %8812 = vmatprep.subr.bf16.mxu0 0
    %8813 = vmatpush1.bf16.msra.mxu0 %v8793
    %8814 = vmatprep.subr.bf16.mxu0 0
    %8815 = vmatpush1.bf16.msra.mxu0 %v8794
    %8816 = vmatprep.subr.bf16.mxu0 0
    %8817 = vmatpush1.bf16.msra.mxu0 %v8795
    %8818 = vmatprep.subr.bf16.mxu0 0
    %8819 = vmatpush1.bf16.msra.mxu0 %v8796
    %8820 = vmatprep.subr.bf16.mxu0 0
    %8821 = vmatpush1.bf16.msra.mxu0 %v8797
    %8822 = vmatprep.subr.bf16.mxu0 0
    %8823 = vmatpush1.bf16.msra.mxu0 %v8810
    %8824 = vmatprep.subr.bf16.mxu0 0
    %8825 = vmatpush1.bf16.msra.mxu0 0
    %8826 = vmatprep.subr.bf16.mxu0 0
    %8827 = vmatpush1.bf16.msra.mxu0 0
    %8828 = vmatprep.subr.bf16.mxu0 0
    %8829 = vmatpush1.bf16.msra.mxu0 0
    %8830 = vmatprep.subr.bf16.mxu0 0
    %8831 = vmatpush1.bf16.msra.mxu0 0
    %8832 = vmatprep.subr.bf16.mxu0 0
    %8833 = vmatpush1.bf16.msra.mxu0 0
    %8834 = vmatprep.subr.bf16.mxu0 0
    %8835 = vmatpush1.bf16.msra.mxu0 0
    %8836 = vmatprep.subr.bf16.mxu0 0
    %8837 = vmatpush1.bf16.msra.mxu0 0
    %8838 = vmatprep.subr.bf16.mxu0 0
    %8839 = vmatpush1.bf16.msra.mxu0 0
    %8840 = vmatprep.subr.bf16.mxu0 0
    %8841 = vmatpush1.bf16.msra.mxu0 0
    %8842 = vmatprep.subr.bf16.mxu0 0
    %8843 = vmatpush1.bf16.msra.mxu0 0
    %8844 = vmatprep.mubr.bf16.mxu0 0
    %8845 = vmatmul.mubr.bf16.gmra.mrb[0].mxu0 %v8806
    %v8846 = vpop.f32.mrb[0].mxu0
    %v8847 = vadd.f32 0.0, %v8846
    %v8848 = vpop.f32.mrb[0].mxu0
    %v8849 = vpop.f32.mrb[0].mxu0
    %v8850 = vpop.f32.mrb[0].mxu0
    %8851 = vdwg.mxu0
    %v8852 = vmul.f32 %v8847, 0.025
    %vm8853 = vcmask 66560
    %8854 = vst.msk [vmem:[#allocation2] sm:$0x3] %vm8853, %v8852
    // Predicated region
    $region22: #{python_net_forward.9} parent=1 // pred_check
      _
    $region23: #{python_net_forward.9} parent=1 // pred_check_branch
      %8856 = sbr.rel (0) target = $region25
    $region24: #{python_net_forward.9} parent=1 // pred_region
      %s8858 = ssub.s32 32, 32
      %8859 = vsyncadd [#allocation3], %s8858
      %s8861 = sshll.u32 [#allocation2], 4
      %s8862 = int_to_ptr.vmem [resolvable:$true] %s8861
      %8864 = dma.vmem_to_hbm [thread:$0]  %s8862, 32, %s5, [#allocation3]
    $region25: #{python_net_forward.9} parent=1 // pred_fallthru
      _
    // Predicated region
    $region26: #{python_net_forward.9} parent=1 // pred_check
      _
    $region27: #{python_net_forward.9} parent=1 // pred_check_branch
      %8866 = sbr.rel (0) target = $region29
    $region28: #{python_net_forward.9} parent=1 // pred_region
      %8867 = dma.done [#allocation3], 32
    $region29: #{python_net_forward.9} parent=1 // pred_fallthru
      _
    %8868 = vsyncpa [#allocation3], 1

</llo_original>
